<compile_context>
chip_gen: v7x
topology: tpu7x:2x2x1
jax: 0.10.0
libtpu: 0.0.40
codegen_flags: <defaults>
</compile_context>

<pallas_src>
import functools

import jax
import jax.numpy as jnp
from jax import lax
from jax.experimental import pallas as pl
from jax.experimental.pallas import tpu as pltpu

# Not binding for the tiles used here (<~4 MiB per step); safe on v7x's 64 MiB physical VMEM.
_VMEM_LIMIT = 32 * 1024 * 1024


def _round_up(x, m):
    return ((x + m - 1) // m) * m


def _pick_tm(ms, nb):
    """Pick an M tile that divides ms (preferring >=2 tiles when batch==1 for megacore)."""
    best = None
    for c in (512, 256, 128):
        if ms % c == 0:
            if best is None:
                best = c
            if nb >= 2 or ms // c >= 2:
                return c, ms
    if best is not None:
        return best, ms
    if ms % 8 == 0 and ms <= 2048:
        return ms, ms
    # Rare awkward sizes: pad M up to a 128 multiple (zero rows -> zero stats contribution).
    return 128, _round_up(ms, 128)


def _pick_spatial_tile(hw, target=4096):
    """Largest divisor of hw that is a multiple of 8 and <= target; full hw if hw <= target."""
    if hw <= target:
        return hw
    t = (target // 8) * 8
    while t >= 8:
        if hw % t == 0:
            return t
        t -= 8
    return hw  # awkward hw: single full block (fine for realistic image sizes)


def _pick_lane_tile(p, target=8192):
    """Largest divisor of p that is a multiple of 128 and <= target; full p otherwise."""
    if p % 128:
        return p
    t = (min(p, target) // 128) * 128
    while t >= 128:
        if p % t == 0:
            return t
        t -= 128
    return p


# ----------------------------------------------------------------------------
# Pallas kernel 1: conv matmul (im2col A x resident weights B) with fused
# InstanceNorm stats partials in the epilogue.  bf16 operands, f32 accumulate.
# ----------------------------------------------------------------------------
def _conv_mm_kernel(a_ref, b_ref, o_ref, stat_ref):
    acc = jnp.dot(a_ref[...], b_ref[...], preferred_element_type=jnp.float32)  # (tm, Cout) f32
    o_ref[...] = acc.astype(o_ref.dtype)
    stat_ref[0:1, :] = jnp.sum(acc, axis=0, keepdims=True)          # per-channel sum
    stat_ref[1:2, :] = jnp.sum(acc * acc, axis=0, keepdims=True)    # per-channel sum of squares


def conv_matmul(a, b, tm):
    # a: (Nb, Mp, Kp) bf16 im2col patches, b: (Kp, Cout) bf16 weights (fully VMEM-resident).
    nb, mp, kp = a.shape
    cout = b.shape[1]
    nm = mp // tm
    out, stats = pl.pallas_call(
        _conv_mm_kernel,
        out_shape=(jax.ShapeDtypeStruct((nb, mp, cout), jnp.bfloat16),
                   jax.ShapeDtypeStruct((nb, nm, 2, cout), jnp.float32)),
        grid=(nb, nm),
        in_specs=[
            pl.BlockSpec((None, tm, kp), lambda n, m: (n, m, 0)),
            pl.BlockSpec((kp, cout), lambda n, m: (0, 0)),
        ],
        out_specs=(
            pl.BlockSpec((None, tm, cout), lambda n, m: (n, m, 0)),
            pl.BlockSpec((None, None, 2, cout), lambda n, m: (n, m, 0, 0)),
        ),
        compiler_params=pltpu.CompilerParams(
            dimension_semantics=("parallel", "parallel"),
            vmem_limit_bytes=_VMEM_LIMIT,
        ),
        cost_estimate=pl.CostEstimate(
            flops=2 * nb * mp * kp * cout,
            transcendentals=0,
            bytes_accessed=nb * mp * kp * 2 + kp * cout * 2
                           + nb * mp * cout * 2 + nb * nm * 2 * cout * 4,
        ),
    )(a, b)
    return out, stats


# ----------------------------------------------------------------------------
# Pallas kernels 2+3: InstanceNorm apply (scale/shift precomputed from the fused
# stats), optional ReLU or fused residual add.  bf16 storage, f32 compute.
# ----------------------------------------------------------------------------
def _in_apply_kernel(x_ref, ss_ref, o_ref, *, relu):
    x = x_ref[...].astype(jnp.float32)                 # (thw, C)
    y = x * ss_ref[0:1, :] + ss_ref[1:2, :]
    if relu:
        y = jnp.maximum(y, 0.0)
    o_ref[...] = y.astype(o_ref.dtype)


def _in_apply_res_kernel(x_ref, ss_ref, r_ref, o_ref):
    x = x_ref[...].astype(jnp.float32)
    y = x * ss_ref[0:1, :] + ss_ref[1:2, :] + r_ref[...].astype(jnp.float32)
    o_ref[...] = y.astype(o_ref.dtype)


def _finalize_scale_shift(stats_partials, gamma, beta, hw, eps):
    # stats_partials: (Nb, nm, 2, C) f32 -> per-(sample, channel) scale/shift, (Nb, 2, C) f32.
    s = jnp.sum(stats_partials, axis=1)                # (Nb, 2, C)
    mean = s[:, 0] / hw
    var = s[:, 1] / hw - mean * mean                   # biased variance (torch InstanceNorm)
    rstd = lax.rsqrt(jnp.maximum(var, 0.0) + eps)
    scale = rstd * gamma[None, :]
    shift = beta[None, :] - mean * scale
    return jnp.stack([scale, shift], axis=1)           # (Nb, 2, C)


def _in_apply(y2d, scale_shift, *, relu, residual=None):
    nb, hw, c = y2d.shape
    thw = _pick_spatial_tile(hw)
    nt = hw // thw
    x_spec = pl.BlockSpec((None, thw, c), lambda n, t: (n, t, 0))
    ss_spec = pl.BlockSpec((None, 2, c), lambda n, t: (n, 0, 0))
    out_spec = pl.BlockSpec((None, thw, c), lambda n, t: (n, t, 0))
    cp = pltpu.CompilerParams(dimension_semantics=("parallel", "parallel"),
                              vmem_limit_bytes=_VMEM_LIMIT)
    if residual is None:
        return pl.pallas_call(
            functools.partial(_in_apply_kernel, relu=relu),
            out_shape=jax.ShapeDtypeStruct((nb, hw, c), jnp.bfloat16),
            grid=(nb, nt),
            in_specs=[x_spec, ss_spec],
            out_specs=out_spec,
            compiler_params=cp,
        )(y2d, scale_shift)
    r_spec = pl.BlockSpec((None, thw, c), lambda n, t: (n, t, 0))
    return pl.pallas_call(
        _in_apply_res_kernel,
        out_shape=jax.ShapeDtypeStruct((nb, hw, c), jnp.bfloat16),
        grid=(nb, nt),
        in_specs=[x_spec, ss_spec, r_spec],
        out_specs=out_spec,
        compiler_params=cp,
    )(y2d, scale_shift, residual)


# ----------------------------------------------------------------------------
# Pallas kernel 4: head = final-conv bias + residual add + per-channel clamp of
# batch 0 (matching y[0][c].clamp_(...)).  Lane-dense (Nb*C rows, H*W lanes).
# ----------------------------------------------------------------------------
_CLAMP_LO = ((0 - 0.485) / 0.299, (0 - 0.456) / 0.224, (0 - 0.406) / 0.225)
_CLAMP_HI = ((1 - 0.485) / 0.299, (1 - 0.456) / 0.224, (1 - 0.406) / 0.225)


def _head_kernel(y_ref, r_ref, bias_ref, lo_ref, hi_ref, o_ref):
    s = y_ref[...].astype(jnp.float32) + r_ref[...] + bias_ref[...]
    o_ref[...] = jnp.minimum(jnp.maximum(s, lo_ref[...]), hi_ref[...])


def head_add_bias_residual_clamp(y_last2d, x_nchw, bias, ho, wo):
    # y_last2d: (Nb, Ho*Wo, 3) bf16 final conv output (bias-free).  Returns NCHW f32.
    nb = y_last2d.shape[0]
    p = ho * wo
    r = nb * 3
    y2d = jnp.transpose(y_last2d, (0, 2, 1)).reshape(r, p)          # (R, P) bf16
    r2d = x_nchw.reshape(r, p).astype(jnp.float32)

    big = float(jnp.finfo(jnp.float32).max)
    lo = jnp.concatenate([jnp.asarray(_CLAMP_LO, jnp.float32),
                          jnp.full(((nb - 1) * 3,), -big, jnp.float32)]).reshape(r, 1)
    hi = jnp.concatenate([jnp.asarray(_CLAMP_HI, jnp.float32),
                          jnp.full(((nb - 1) * 3,), big, jnp.float32)]).reshape(r, 1)
    brow = jnp.tile(bias.astype(jnp.float32), (nb,)).reshape(r, 1)

    tp = _pick_lane_tile(p)
    out = pl.pallas_call(
        _head_kernel,
        out_shape=jax.ShapeDtypeStruct((r, p), jnp.float32),
        grid=(p // tp,),
        in_specs=[
            pl.BlockSpec((r, tp), lambda i: (0, i)),
            pl.BlockSpec((r, tp), lambda i: (0, i)),
            pl.BlockSpec((r, 1), lambda i: (0, 0)),
            pl.BlockSpec((r, 1), lambda i: (0, 0)),
            pl.BlockSpec((r, 1), lambda i: (0, 0)),
        ],
        out_specs=pl.BlockSpec((r, tp), lambda i: (0, i)),
        compiler_params=pltpu.CompilerParams(
            dimension_semantics=("parallel",),
            vmem_limit_bytes=_VMEM_LIMIT,
        ),
    )(y2d, r2d, brow, lo, hi)
    return out.reshape(nb, 3, ho, wo)                               # already NCHW


# ----------------------------------------------------------------------------
# Conv building blocks (reflection pad + im2col glue in XLA, matmul in Pallas)
# ----------------------------------------------------------------------------
def _extract_patches(xp, k, stride, ho, wo, kpad):
    # xp: (N, Hp, Wp, C) reflection-padded bf16 input -> (N, Ho, Wo, k*k*C + kpad)
    cols = []
    for kh in range(k):
        for kw in range(k):
            cols.append(
                xp[:, kh:kh + stride * (ho - 1) + 1:stride,
                      kw:kw + stride * (wo - 1) + 1:stride, :]
            )
    if kpad:
        cols.append(jnp.zeros(cols[0].shape[:3] + (kpad,), xp.dtype))
    return jnp.concatenate(cols, axis=-1)


def _conv(x, w, stride):
    # ConvLayer: ReflectionPad2d(k//2) + Conv2d(stride=stride), bias-free.
    # x: (Nb, H, W, Cin) bf16; w: (k, k, Cin, Cout) f32.
    k = w.shape[0]
    cout = w.shape[3]
    pad = k // 2
    xp = jnp.pad(x, ((0, 0), (pad, pad), (pad, pad), (0, 0)), mode="reflect")
    nb, hp, wp, cin = xp.shape
    ho = (hp - k) // stride + 1
    wo = (wp - k) // stride + 1
    kk = k * k * cin
    kp = _round_up(kk, 128)
    patches = _extract_patches(xp, k, stride, ho, wo, kp - kk)      # (Nb, Ho, Wo, Kp) bf16
    a = patches.reshape(nb, ho * wo, kp)
    bmat = jnp.pad(w.reshape(kk, cout), ((0, kp - kk), (0, 0))).astype(jnp.bfloat16)

    ms = ho * wo
    tm, msp = _pick_tm(ms, nb)
    if msp != ms:
        a = jnp.pad(a, ((0, 0), (0, msp - ms), (0, 0)))
    out2d, stats = conv_matmul(a, bmat, tm)
    return out2d, stats, nb, ho, wo, cout


def conv_in(x, w, gamma, beta, *, stride=1, relu=False, residual=None, eps=1e-5):
    # conv (bias-free) + InstanceNorm (+ fused residual add) (+ ReLU).
    y2d, stats, nb, ho, wo, cout = _conv(x, w, stride)
    hw = ho * wo
    if y2d.shape[1] != hw:
        y2d = y2d[:, :hw]
    ss = _finalize_scale_shift(stats, gamma, beta, hw, eps)
    r2d = None if residual is None else residual.reshape(nb, hw, cout)
    y = _in_apply(y2d, ss, relu=relu, residual=r2d)
    return y.reshape(nb, ho, wo, cout)


def _upsample2(x):
    # Nearest-neighbor 2x upsample (Resize_Conv).
    # TODO(synk): fold into the conv patch gather so this copy is never materialized in HBM.
    return jnp.repeat(jnp.repeat(x, 2, axis=1), 2, axis=2)


def residual_block(x, p):
    y = conv_in(x, p["w1"], p["g1"], p["be1"], stride=1, relu=True)
    y = conv_in(y, p["w2"], p["g2"], p["be2"], stride=1, relu=False, residual=x)
    return y


# ----------------------------------------------------------------------------
# Parameter init (deterministic, synthetic)
# ----------------------------------------------------------------------------
def _conv_init(key, k, cin, cout):
    kw, kb = jax.random.split(key)
    fan_in = float(k * k * cin)
    w = jax.random.normal(kw, (k, k, cin, cout), jnp.float32) / jnp.sqrt(fan_in)
    b = 0.01 * jax.random.normal(kb, (cout,), jnp.float32)
    return w, b


def _in_init(key, c):
    kg, kb = jax.random.split(key)
    g = 1.0 + 0.1 * jax.random.normal(kg, (c,), jnp.float32)
    b = 0.1 * jax.random.normal(kb, (c,), jnp.float32)
    return g, b


def init_params(key):
    keys = jax.random.split(key, 32)
    it = iter(keys)
    p = {}
    p["conv1"] = _conv_init(next(it), 9, 3, 32)
    p["in1"] = _in_init(next(it), 32)
    p["conv2"] = _conv_init(next(it), 3, 32, 64)
    p["in2"] = _in_init(next(it), 64)
    p["conv3"] = _conv_init(next(it), 3, 64, 128)
    p["in3"] = _in_init(next(it), 128)
    for name in ("res1", "res2", "res3"):
        w1, b1 = _conv_init(next(it), 3, 128, 128)
        g1, be1 = _in_init(next(it), 128)
        w2, b2 = _conv_init(next(it), 3, 128, 128)
        g2, be2 = _in_init(next(it), 128)
        p[name] = dict(w1=w1, b1=b1, g1=g1, be1=be1, w2=w2, b2=b2, g2=g2, be2=be2)
    p["upsam1"] = _conv_init(next(it), 3, 128, 64)
    p["in4"] = _in_init(next(it), 64)
    p["upsam2"] = _conv_init(next(it), 3, 64, 32)
    p["in5"] = _in_init(next(it), 32)
    p["upsam3"] = _conv_init(next(it), 3, 32, 3)
    return p


# ----------------------------------------------------------------------------
# Refine_Subnet forward
# ----------------------------------------------------------------------------
def refine_subnet_forward(params, x_nchw):
    # residual = in_x.clone()  (returned unchanged as x_nchw)
    x = jnp.transpose(x_nchw, (0, 2, 3, 1)).astype(jnp.bfloat16)    # NCHW -> NHWC, bf16

    # Conv biases before InstanceNorm are dropped: the IN mean subtraction cancels them
    # exactly, so this is mathematically identical to the PyTorch module (in bf16/f32-mix).
    y = conv_in(x, params["conv1"][0], *params["in1"], stride=1, relu=True)
    y = conv_in(y, params["conv2"][0], *params["in2"], stride=2, relu=True)
    y = conv_in(y, params["conv3"][0], *params["in3"], stride=2, relu=True)

    y = residual_block(y, params["res1"])
    y = residual_block(y, params["res2"])
    y = residual_block(y, params["res3"])

    y = conv_in(_upsample2(y), params["upsam1"][0], *params["in4"], stride=1, relu=True)
    y = conv_in(_upsample2(y), params["upsam2"][0], *params["in5"], stride=1, relu=True)

    # Final conv (no IN): keep the bias out of the matmul; it is fused into the head.
    y2d, _unused_stats, nb, ho, wo, _ = _conv(y, params["upsam3"][0], stride=1)
    p = ho * wo
    if y2d.shape[1] != p:
        y2d = y2d[:, :p]

    y_nchw = head_add_bias_residual_clamp(y2d, x_nchw, params["upsam3"][1], ho, wo)
    return y_nchw, x_nchw                                           # (y, residual)


if __name__ == "__main__":
    key = jax.random.PRNGKey(0)
    pkey, xkey = jax.random.split(key)
    params = init_params(pkey)

    # Small input consistent with the module: NCHW, 3 channels, spatial 16 (divisible by 4).
    x = jax.random.normal(xkey, (2, 3, 16, 16), jnp.float32)

    fwd = jax.jit(refine_subnet_forward)
    y, res = fwd(params, x)
    jax.block_until_ready((y, res))

    assert y.shape == (2, 3, 16, 16) and res.shape == (2, 3, 16, 16)
    assert y.dtype == jnp.float32
    assert bool(jnp.all(jnp.isfinite(y)))
    # batch-0 channels must respect the clamp ranges
    for c, (lo, hi) in enumerate(zip(_CLAMP_LO, _CLAMP_HI)):
        assert float(y[0, c].min()) >= lo - 1e-5
        assert float(y[0, c].max()) <= hi + 1e-5
    # residual is returned untouched
    assert bool(jnp.all(res == x))

    print("KERNEL_OK")
</pallas_src>

<mosaic_0001>
module attributes {stable_mosaic.version = 11 : i64} {
  func.func @_conv_mm_kernel(%arg0: i32, %arg1: i32, %arg2: memref<1x256x256xbf16, #tpu.memory_space<vmem>>, %arg3: memref<256x32xbf16, #tpu.memory_space<vmem>>, %arg4: memref<1x256x32xbf16, #tpu.memory_space<vmem>>, %arg5: memref<1x1x2x32xf32, #tpu.memory_space<vmem>>) attributes {dimension_semantics = [#tpu.dimension_semantics<parallel>, #tpu.dimension_semantics<parallel>], iteration_bounds = array<i64: 2, 1>, scalar_prefetch = 0 : i64, scratch_operands = 0 : i64, tpu.core_type = #tpu.core_type<tc>, window_params = [{transform_indices = @transform_0, window_bounds = array<i64: 1, 256, 256>}, {pipeline_mode = #tpu.pipeline_mode<synchronous>, transform_indices = @transform_1, window_bounds = array<i64: 256, 32>}, {transform_indices = @transform_2, window_bounds = array<i64: 1, 256, 32>}, {transform_indices = @transform_3, window_bounds = array<i64: 1, 1, 2, 32>}]} {
    %c0 = arith.constant 0 : index
    %c0_0 = arith.constant 0 : index
    %c0_1 = arith.constant 0 : index
    %0 = vector.load %arg2[%c0, %c0_0, %c0_1] : memref<1x256x256xbf16, #tpu.memory_space<vmem>>, vector<1x256x256xbf16>
    %1 = vector.shape_cast %0 : vector<1x256x256xbf16> to vector<256x256xbf16>
    %c0_2 = arith.constant 0 : index
    %c0_3 = arith.constant 0 : index
    %2 = vector.load %arg3[%c0_2, %c0_3] : memref<256x32xbf16, #tpu.memory_space<vmem>>, vector<256x32xbf16>
    %cst = arith.constant dense<0.000000e+00> : vector<256x32xf32>
    %3 = tpu.matmul %1, %2, %cst {dimension_numbers = #tpu.dot_dimension_numbers<[1], [0], [0], [1], [0, 0, 1, 1], [], []>} : vector<256x256xbf16>, vector<256x32xbf16>, vector<256x32xf32> -> vector<256x32xf32>
    %4 = arith.truncf %3 : vector<256x32xf32> to vector<256x32xbf16>
    %c0_4 = arith.constant 0 : index
    %c0_5 = arith.constant 0 : index
    %c0_6 = arith.constant 0 : index
    %5 = vector.load %arg4[%c0_4, %c0_5, %c0_6] : memref<1x256x32xbf16, #tpu.memory_space<vmem>>, vector<1x256x32xbf16>
    %6 = vector.shape_cast %5 : vector<1x256x32xbf16> to vector<256x32xbf16>
    %7 = vector.shape_cast %4 : vector<256x32xbf16> to vector<1x256x32xbf16>
    tpu.vector_store %arg4[%c0_4, %c0_5, %c0_6], %7 {strides = array<i32>} : memref<1x256x32xbf16, #tpu.memory_space<vmem>>, vector<1x256x32xbf16>,
    %cst_7 = arith.constant dense<0.000000e+00> : vector<32xf32>
    %8 = vector.multi_reduction <add>, %3, %cst_7 [0] : vector<256x32xf32> to vector<32xf32>
    %9 = vector.shape_cast %8 : vector<32xf32> to vector<1x32xf32>
    %c0_8 = arith.constant 0 : index
    %c0_9 = arith.constant 0 : index
    %c0_10 = arith.constant 0 : index
    %c0_11 = arith.constant 0 : index
    %10 = vector.load %arg5[%c0_8, %c0_9, %c0_10, %c0_11] : memref<1x1x2x32xf32, #tpu.memory_space<vmem>>, vector<1x1x1x32xf32>
    %11 = vector.shape_cast %10 : vector<1x1x1x32xf32> to vector<1x32xf32>
    %12 = vector.shape_cast %9 : vector<1x32xf32> to vector<1x1x1x32xf32>
    tpu.vector_store %arg5[%c0_8, %c0_9, %c0_10, %c0_11], %12 {strides = array<i32>} : memref<1x1x2x32xf32, #tpu.memory_space<vmem>>, vector<1x1x1x32xf32>,
    %13 = arith.mulf %3, %3 : vector<256x32xf32>
    %cst_12 = arith.constant dense<0.000000e+00> : vector<32xf32>
    %14 = vector.multi_reduction <add>, %13, %cst_12 [0] : vector<256x32xf32> to vector<32xf32>
    %15 = vector.shape_cast %14 : vector<32xf32> to vector<1x32xf32>
    %c0_13 = arith.constant 0 : index
    %c0_14 = arith.constant 0 : index
    %c1 = arith.constant 1 : index
    %c0_15 = arith.constant 0 : index
    %16 = vector.load %arg5[%c0_13, %c0_14, %c1, %c0_15] : memref<1x1x2x32xf32, #tpu.memory_space<vmem>>, vector<1x1x1x32xf32>
    %17 = vector.shape_cast %16 : vector<1x1x1x32xf32> to vector<1x32xf32>
    %18 = vector.shape_cast %15 : vector<1x32xf32> to vector<1x1x1x32xf32>
    tpu.vector_store %arg5[%c0_13, %c0_14, %c1, %c0_15], %18 {strides = array<i32>} : memref<1x1x2x32xf32, #tpu.memory_space<vmem>>, vector<1x1x1x32xf32>,
    return
  }
  func.func @transform_0(%arg0: i32, %arg1: i32) -> (i32, i32, i32) {
    %c0_i32 = arith.constant 0 : i32
    %c0_i32_0 = arith.constant 0 : i32
    return %arg0, %arg1, %c0_i32 : i32, i32, i32
  }
  func.func @transform_1(%arg0: i32, %arg1: i32) -> (i32, i32) {
    %c0_i32 = arith.constant 0 : i32
    %c0_i32_0 = arith.constant 0 : i32
    %c0_i32_1 = arith.constant 0 : i32
    return %c0_i32, %c0_i32_0 : i32, i32
  }
  func.func @transform_2(%arg0: i32, %arg1: i32) -> (i32, i32, i32) {
    %c0_i32 = arith.constant 0 : i32
    %c0_i32_0 = arith.constant 0 : i32
    return %arg0, %arg1, %c0_i32 : i32, i32, i32
  }
  func.func @transform_3(%arg0: i32, %arg1: i32) -> (i32, i32, i32, i32) {
    %c0_i32 = arith.constant 0 : i32
    %c0_i32_0 = arith.constant 0 : i32
    %c0_i32_1 = arith.constant 0 : i32
    return %arg0, %arg1, %c0_i32, %c0_i32_0 : i32, i32, i32, i32
  }
}

module attributes {stable_mosaic.version = 11 : i64} {
  func.func @_in_apply_kernel(%arg0: i32, %arg1: i32, %arg2: memref<1x256x32xbf16, #tpu.memory_space<vmem>>, %arg3: memref<1x2x32xf32, #tpu.memory_space<vmem>>, %arg4: memref<1x256x32xbf16, #tpu.memory_space<vmem>>) attributes {dimension_semantics = [#tpu.dimension_semantics<parallel>, #tpu.dimension_semantics<parallel>], iteration_bounds = array<i64: 2, 1>, scalar_prefetch = 0 : i64, scratch_operands = 0 : i64, tpu.core_type = #tpu.core_type<tc>, window_params = [{transform_indices = @transform_0, window_bounds = array<i64: 1, 256, 32>}, {transform_indices = @transform_1, window_bounds = array<i64: 1, 2, 32>}, {transform_indices = @transform_2, window_bounds = array<i64: 1, 256, 32>}]} {
    %c0 = arith.constant 0 : index
    %c0_0 = arith.constant 0 : index
    %c0_1 = arith.constant 0 : index
    %0 = vector.load %arg2[%c0, %c0_0, %c0_1] : memref<1x256x32xbf16, #tpu.memory_space<vmem>>, vector<1x256x32xbf16>
    %1 = vector.shape_cast %0 : vector<1x256x32xbf16> to vector<256x32xbf16>
    %2 = arith.extf %1 : vector<256x32xbf16> to vector<256x32xf32>
    %c0_2 = arith.constant 0 : index
    %c0_3 = arith.constant 0 : index
    %c0_4 = arith.constant 0 : index
    %3 = vector.load %arg3[%c0_2, %c0_3, %c0_4] : memref<1x2x32xf32, #tpu.memory_space<vmem>>, vector<1x1x32xf32>
    %4 = vector.shape_cast %3 : vector<1x1x32xf32> to vector<1x32xf32>
    %5 = vector.broadcast %4 : vector<1x32xf32> to vector<256x32xf32>
    %6 = arith.mulf %2, %5 : vector<256x32xf32>
    %c0_5 = arith.constant 0 : index
    %c1 = arith.constant 1 : index
    %c0_6 = arith.constant 0 : index
    %7 = vector.load %arg3[%c0_5, %c1, %c0_6] : memref<1x2x32xf32, #tpu.memory_space<vmem>>, vector<1x1x32xf32>
    %8 = vector.shape_cast %7 : vector<1x1x32xf32> to vector<1x32xf32>
    %9 = vector.broadcast %8 : vector<1x32xf32> to vector<256x32xf32>
    %10 = arith.addf %6, %9 : vector<256x32xf32>
    %cst = arith.constant 0.000000e+00 : f32
    %11 = vector.broadcast %cst : f32 to vector<256x32xf32>
    %12 = arith.maximumf %10, %11 : vector<256x32xf32>
    %13 = arith.truncf %12 : vector<256x32xf32> to vector<256x32xbf16>
    %c0_7 = arith.constant 0 : index
    %c0_8 = arith.constant 0 : index
    %c0_9 = arith.constant 0 : index
    %14 = vector.load %arg4[%c0_7, %c0_8, %c0_9] : memref<1x256x32xbf16, #tpu.memory_space<vmem>>, vector<1x256x32xbf16>
    %15 = vector.shape_cast %14 : vector<1x256x32xbf16> to vector<256x32xbf16>
    %16 = vector.shape_cast %13 : vector<256x32xbf16> to vector<1x256x32xbf16>
    tpu.vector_store %arg4[%c0_7, %c0_8, %c0_9], %16 {strides = array<i32>} : memref<1x256x32xbf16, #tpu.memory_space<vmem>>, vector<1x256x32xbf16>,
    return
  }
  func.func @transform_0(%arg0: i32, %arg1: i32) -> (i32, i32, i32) {
    %c0_i32 = arith.constant 0 : i32
    %c0_i32_0 = arith.constant 0 : i32
    return %arg0, %arg1, %c0_i32 : i32, i32, i32
  }
  func.func @transform_1(%arg0: i32, %arg1: i32) -> (i32, i32, i32) {
    %c0_i32 = arith.constant 0 : i32
    %c0_i32_0 = arith.constant 0 : i32
    %c0_i32_1 = arith.constant 0 : i32
    return %arg0, %c0_i32, %c0_i32_0 : i32, i32, i32
  }
  func.func @transform_2(%arg0: i32, %arg1: i32) -> (i32, i32, i32) {
    %c0_i32 = arith.constant 0 : i32
    %c0_i32_0 = arith.constant 0 : i32
    return %arg0, %arg1, %c0_i32 : i32, i32, i32
  }
}

module attributes {stable_mosaic.version = 11 : i64} {
  func.func @_in_apply_kernel(%arg0: i32, %arg1: i32, %arg2: memref<1x64x64xbf16, #tpu.memory_space<vmem>>, %arg3: memref<1x2x64xf32, #tpu.memory_space<vmem>>, %arg4: memref<1x64x64xbf16, #tpu.memory_space<vmem>>) attributes {dimension_semantics = [#tpu.dimension_semantics<parallel>, #tpu.dimension_semantics<parallel>], iteration_bounds = array<i64: 2, 1>, scalar_prefetch = 0 : i64, scratch_operands = 0 : i64, tpu.core_type = #tpu.core_type<tc>, window_params = [{transform_indices = @transform_0, window_bounds = array<i64: 1, 64, 64>}, {transform_indices = @transform_1, window_bounds = array<i64: 1, 2, 64>}, {transform_indices = @transform_2, window_bounds = array<i64: 1, 64, 64>}]} {
    %c0 = arith.constant 0 : index
    %c0_0 = arith.constant 0 : index
    %c0_1 = arith.constant 0 : index
    %0 = vector.load %arg2[%c0, %c0_0, %c0_1] : memref<1x64x64xbf16, #tpu.memory_space<vmem>>, vector<1x64x64xbf16>
    %1 = vector.shape_cast %0 : vector<1x64x64xbf16> to vector<64x64xbf16>
    %2 = arith.extf %1 : vector<64x64xbf16> to vector<64x64xf32>
    %c0_2 = arith.constant 0 : index
    %c0_3 = arith.constant 0 : index
    %c0_4 = arith.constant 0 : index
    %3 = vector.load %arg3[%c0_2, %c0_3, %c0_4] : memref<1x2x64xf32, #tpu.memory_space<vmem>>, vector<1x1x64xf32>
    %4 = vector.shape_cast %3 : vector<1x1x64xf32> to vector<1x64xf32>
    %5 = vector.broadcast %4 : vector<1x64xf32> to vector<64x64xf32>
    %6 = arith.mulf %2, %5 : vector<64x64xf32>
    %c0_5 = arith.constant 0 : index
    %c1 = arith.constant 1 : index
    %c0_6 = arith.constant 0 : index
    %7 = vector.load %arg3[%c0_5, %c1, %c0_6] : memref<1x2x64xf32, #tpu.memory_space<vmem>>, vector<1x1x64xf32>
    %8 = vector.shape_cast %7 : vector<1x1x64xf32> to vector<1x64xf32>
    %9 = vector.broadcast %8 : vector<1x64xf32> to vector<64x64xf32>
    %10 = arith.addf %6, %9 : vector<64x64xf32>
    %cst = arith.constant 0.000000e+00 : f32
    %11 = vector.broadcast %cst : f32 to vector<64x64xf32>
    %12 = arith.maximumf %10, %11 : vector<64x64xf32>
    %13 = arith.truncf %12 : vector<64x64xf32> to vector<64x64xbf16>
    %c0_7 = arith.constant 0 : index
    %c0_8 = arith.constant 0 : index
    %c0_9 = arith.constant 0 : index
    %14 = vector.load %arg4[%c0_7, %c0_8, %c0_9] : memref<1x64x64xbf16, #tpu.memory_space<vmem>>, vector<1x64x64xbf16>
    %15 = vector.shape_cast %14 : vector<1x64x64xbf16> to vector<64x64xbf16>
    %16 = vector.shape_cast %13 : vector<64x64xbf16> to vector<1x64x64xbf16>
    tpu.vector_store %arg4[%c0_7, %c0_8, %c0_9], %16 {strides = array<i32>} : memref<1x64x64xbf16, #tpu.memory_space<vmem>>, vector<1x64x64xbf16>,
    return
  }
  func.func @transform_0(%arg0: i32, %arg1: i32) -> (i32, i32, i32) {
    %c0_i32 = arith.constant 0 : i32
    %c0_i32_0 = arith.constant 0 : i32
    return %arg0, %arg1, %c0_i32 : i32, i32, i32
  }
  func.func @transform_1(%arg0: i32, %arg1: i32) -> (i32, i32, i32) {
    %c0_i32 = arith.constant 0 : i32
    %c0_i32_0 = arith.constant 0 : i32
    %c0_i32_1 = arith.constant 0 : i32
    return %arg0, %c0_i32, %c0_i32_0 : i32, i32, i32
  }
  func.func @transform_2(%arg0: i32, %arg1: i32) -> (i32, i32, i32) {
    %c0_i32 = arith.constant 0 : i32
    %c0_i32_0 = arith.constant 0 : i32
    return %arg0, %arg1, %c0_i32 : i32, i32, i32
  }
}

module attributes {stable_mosaic.version = 11 : i64} {
  func.func @_conv_mm_kernel(%arg0: i32, %arg1: i32, %arg2: memref<1x64x384xbf16, #tpu.memory_space<vmem>>, %arg3: memref<384x64xbf16, #tpu.memory_space<vmem>>, %arg4: memref<1x64x64xbf16, #tpu.memory_space<vmem>>, %arg5: memref<1x1x2x64xf32, #tpu.memory_space<vmem>>) attributes {dimension_semantics = [#tpu.dimension_semantics<parallel>, #tpu.dimension_semantics<parallel>], iteration_bounds = array<i64: 2, 1>, scalar_prefetch = 0 : i64, scratch_operands = 0 : i64, tpu.core_type = #tpu.core_type<tc>, window_params = [{transform_indices = @transform_0, window_bounds = array<i64: 1, 64, 384>}, {pipeline_mode = #tpu.pipeline_mode<synchronous>, transform_indices = @transform_1, window_bounds = array<i64: 384, 64>}, {transform_indices = @transform_2, window_bounds = array<i64: 1, 64, 64>}, {transform_indices = @transform_3, window_bounds = array<i64: 1, 1, 2, 64>}]} {
    %c0 = arith.constant 0 : index
    %c0_0 = arith.constant 0 : index
    %c0_1 = arith.constant 0 : index
    %0 = vector.load %arg2[%c0, %c0_0, %c0_1] : memref<1x64x384xbf16, #tpu.memory_space<vmem>>, vector<1x64x384xbf16>
    %1 = vector.shape_cast %0 : vector<1x64x384xbf16> to vector<64x384xbf16>
    %c0_2 = arith.constant 0 : index
    %c0_3 = arith.constant 0 : index
    %2 = vector.load %arg3[%c0_2, %c0_3] : memref<384x64xbf16, #tpu.memory_space<vmem>>, vector<384x64xbf16>
    %cst = arith.constant dense<0.000000e+00> : vector<64x64xf32>
    %3 = tpu.matmul %1, %2, %cst {dimension_numbers = #tpu.dot_dimension_numbers<[1], [0], [0], [1], [0, 0, 1, 1], [], []>} : vector<64x384xbf16>, vector<384x64xbf16>, vector<64x64xf32> -> vector<64x64xf32>
    %4 = arith.truncf %3 : vector<64x64xf32> to vector<64x64xbf16>
    %c0_4 = arith.constant 0 : index
    %c0_5 = arith.constant 0 : index
    %c0_6 = arith.constant 0 : index
    %5 = vector.load %arg4[%c0_4, %c0_5, %c0_6] : memref<1x64x64xbf16, #tpu.memory_space<vmem>>, vector<1x64x64xbf16>
    %6 = vector.shape_cast %5 : vector<1x64x64xbf16> to vector<64x64xbf16>
    %7 = vector.shape_cast %4 : vector<64x64xbf16> to vector<1x64x64xbf16>
    tpu.vector_store %arg4[%c0_4, %c0_5, %c0_6], %7 {strides = array<i32>} : memref<1x64x64xbf16, #tpu.memory_space<vmem>>, vector<1x64x64xbf16>,
    %cst_7 = arith.constant dense<0.000000e+00> : vector<64xf32>
    %8 = vector.multi_reduction <add>, %3, %cst_7 [0] : vector<64x64xf32> to vector<64xf32>
    %9 = vector.shape_cast %8 : vector<64xf32> to vector<1x64xf32>
    %c0_8 = arith.constant 0 : index
    %c0_9 = arith.constant 0 : index
    %c0_10 = arith.constant 0 : index
    %c0_11 = arith.constant 0 : index
    %10 = vector.load %arg5[%c0_8, %c0_9, %c0_10, %c0_11] : memref<1x1x2x64xf32, #tpu.memory_space<vmem>>, vector<1x1x1x64xf32>
    %11 = vector.shape_cast %10 : vector<1x1x1x64xf32> to vector<1x64xf32>
    %12 = vector.shape_cast %9 : vector<1x64xf32> to vector<1x1x1x64xf32>
    tpu.vector_store %arg5[%c0_8, %c0_9, %c0_10, %c0_11], %12 {strides = array<i32>} : memref<1x1x2x64xf32, #tpu.memory_space<vmem>>, vector<1x1x1x64xf32>,
    %13 = arith.mulf %3, %3 : vector<64x64xf32>
    %cst_12 = arith.constant dense<0.000000e+00> : vector<64xf32>
    %14 = vector.multi_reduction <add>, %13, %cst_12 [0] : vector<64x64xf32> to vector<64xf32>
    %15 = vector.shape_cast %14 : vector<64xf32> to vector<1x64xf32>
    %c0_13 = arith.constant 0 : index
    %c0_14 = arith.constant 0 : index
    %c1 = arith.constant 1 : index
    %c0_15 = arith.constant 0 : index
    %16 = vector.load %arg5[%c0_13, %c0_14, %c1, %c0_15] : memref<1x1x2x64xf32, #tpu.memory_space<vmem>>, vector<1x1x1x64xf32>
    %17 = vector.shape_cast %16 : vector<1x1x1x64xf32> to vector<1x64xf32>
    %18 = vector.shape_cast %15 : vector<1x64xf32> to vector<1x1x1x64xf32>
    tpu.vector_store %arg5[%c0_13, %c0_14, %c1, %c0_15], %18 {strides = array<i32>} : memref<1x1x2x64xf32, #tpu.memory_space<vmem>>, vector<1x1x1x64xf32>,
    return
  }
  func.func @transform_0(%arg0: i32, %arg1: i32) -> (i32, i32, i32) {
    %c0_i32 = arith.constant 0 : i32
    %c0_i32_0 = arith.constant 0 : i32
    return %arg0, %arg1, %c0_i32 : i32, i32, i32
  }
  func.func @transform_1(%arg0: i32, %arg1: i32) -> (i32, i32) {
    %c0_i32 = arith.constant 0 : i32
    %c0_i32_0 = arith.constant 0 : i32
    %c0_i32_1 = arith.constant 0 : i32
    return %c0_i32, %c0_i32_0 : i32, i32
  }
  func.func @transform_2(%arg0: i32, %arg1: i32) -> (i32, i32, i32) {
    %c0_i32 = arith.constant 0 : i32
    %c0_i32_0 = arith.constant 0 : i32
    return %arg0, %arg1, %c0_i32 : i32, i32, i32
  }
  func.func @transform_3(%arg0: i32, %arg1: i32) -> (i32, i32, i32, i32) {
    %c0_i32 = arith.constant 0 : i32
    %c0_i32_0 = arith.constant 0 : i32
    %c0_i32_1 = arith.constant 0 : i32
    return %arg0, %arg1, %c0_i32, %c0_i32_0 : i32, i32, i32, i32
  }
}

module attributes {stable_mosaic.version = 11 : i64} {
  func.func @_conv_mm_kernel(%arg0: i32, %arg1: i32, %arg2: memref<1x16x640xbf16, #tpu.memory_space<vmem>>, %arg3: memref<640x128xbf16, #tpu.memory_space<vmem>>, %arg4: memref<1x16x128xbf16, #tpu.memory_space<vmem>>, %arg5: memref<1x1x2x128xf32, #tpu.memory_space<vmem>>) attributes {dimension_semantics = [#tpu.dimension_semantics<parallel>, #tpu.dimension_semantics<parallel>], iteration_bounds = array<i64: 2, 1>, scalar_prefetch = 0 : i64, scratch_operands = 0 : i64, tpu.core_type = #tpu.core_type<tc>, window_params = [{transform_indices = @transform_0, window_bounds = array<i64: 1, 16, 640>}, {pipeline_mode = #tpu.pipeline_mode<synchronous>, transform_indices = @transform_1, window_bounds = array<i64: 640, 128>}, {transform_indices = @transform_2, window_bounds = array<i64: 1, 16, 128>}, {transform_indices = @transform_3, window_bounds = array<i64: 1, 1, 2, 128>}]} {
    %c0 = arith.constant 0 : index
    %c0_0 = arith.constant 0 : index
    %c0_1 = arith.constant 0 : index
    %0 = vector.load %arg2[%c0, %c0_0, %c0_1] : memref<1x16x640xbf16, #tpu.memory_space<vmem>>, vector<1x16x640xbf16>
    %1 = vector.shape_cast %0 : vector<1x16x640xbf16> to vector<16x640xbf16>
    %c0_2 = arith.constant 0 : index
    %c0_3 = arith.constant 0 : index
    %2 = vector.load %arg3[%c0_2, %c0_3] : memref<640x128xbf16, #tpu.memory_space<vmem>>, vector<640x128xbf16>
    %cst = arith.constant dense<0.000000e+00> : vector<16x128xf32>
    %3 = tpu.matmul %1, %2, %cst {dimension_numbers = #tpu.dot_dimension_numbers<[1], [0], [0], [1], [0, 0, 1, 1], [], []>} : vector<16x640xbf16>, vector<640x128xbf16>, vector<16x128xf32> -> vector<16x128xf32>
    %4 = arith.truncf %3 : vector<16x128xf32> to vector<16x128xbf16>
    %c0_4 = arith.constant 0 : index
    %c0_5 = arith.constant 0 : index
    %c0_6 = arith.constant 0 : index
    %5 = vector.load %arg4[%c0_4, %c0_5, %c0_6] : memref<1x16x128xbf16, #tpu.memory_space<vmem>>, vector<1x16x128xbf16>
    %6 = vector.shape_cast %5 : vector<1x16x128xbf16> to vector<16x128xbf16>
    %7 = vector.shape_cast %4 : vector<16x128xbf16> to vector<1x16x128xbf16>
    tpu.vector_store %arg4[%c0_4, %c0_5, %c0_6], %7 {strides = array<i32>} : memref<1x16x128xbf16, #tpu.memory_space<vmem>>, vector<1x16x128xbf16>,
    %cst_7 = arith.constant dense<0.000000e+00> : vector<128xf32>
    %8 = vector.multi_reduction <add>, %3, %cst_7 [0] : vector<16x128xf32> to vector<128xf32>
    %9 = vector.shape_cast %8 : vector<128xf32> to vector<1x128xf32>
    %c0_8 = arith.constant 0 : index
    %c0_9 = arith.constant 0 : index
    %c0_10 = arith.constant 0 : index
    %c0_11 = arith.constant 0 : index
    %10 = vector.load %arg5[%c0_8, %c0_9, %c0_10, %c0_11] : memref<1x1x2x128xf32, #tpu.memory_space<vmem>>, vector<1x1x1x128xf32>
    %11 = vector.shape_cast %10 : vector<1x1x1x128xf32> to vector<1x128xf32>
    %12 = vector.shape_cast %9 : vector<1x128xf32> to vector<1x1x1x128xf32>
    tpu.vector_store %arg5[%c0_8, %c0_9, %c0_10, %c0_11], %12 {strides = array<i32>} : memref<1x1x2x128xf32, #tpu.memory_space<vmem>>, vector<1x1x1x128xf32>,
    %13 = arith.mulf %3, %3 : vector<16x128xf32>
    %cst_12 = arith.constant dense<0.000000e+00> : vector<128xf32>
    %14 = vector.multi_reduction <add>, %13, %cst_12 [0] : vector<16x128xf32> to vector<128xf32>
    %15 = vector.shape_cast %14 : vector<128xf32> to vector<1x128xf32>
    %c0_13 = arith.constant 0 : index
    %c0_14 = arith.constant 0 : index
    %c1 = arith.constant 1 : index
    %c0_15 = arith.constant 0 : index
    %16 = vector.load %arg5[%c0_13, %c0_14, %c1, %c0_15] : memref<1x1x2x128xf32, #tpu.memory_space<vmem>>, vector<1x1x1x128xf32>
    %17 = vector.shape_cast %16 : vector<1x1x1x128xf32> to vector<1x128xf32>
    %18 = vector.shape_cast %15 : vector<1x128xf32> to vector<1x1x1x128xf32>
    tpu.vector_store %arg5[%c0_13, %c0_14, %c1, %c0_15], %18 {strides = array<i32>} : memref<1x1x2x128xf32, #tpu.memory_space<vmem>>, vector<1x1x1x128xf32>,
    return
  }
  func.func @transform_0(%arg0: i32, %arg1: i32) -> (i32, i32, i32) {
    %c0_i32 = arith.constant 0 : i32
    %c0_i32_0 = arith.constant 0 : i32
    return %arg0, %arg1, %c0_i32 : i32, i32, i32
  }
  func.func @transform_1(%arg0: i32, %arg1: i32) -> (i32, i32) {
    %c0_i32 = arith.constant 0 : i32
    %c0_i32_0 = arith.constant 0 : i32
    %c0_i32_1 = arith.constant 0 : i32
    return %c0_i32, %c0_i32_0 : i32, i32
  }
  func.func @transform_2(%arg0: i32, %arg1: i32) -> (i32, i32, i32) {
    %c0_i32 = arith.constant 0 : i32
    %c0_i32_0 = arith.constant 0 : i32
    return %arg0, %arg1, %c0_i32 : i32, i32, i32
  }
  func.func @transform_3(%arg0: i32, %arg1: i32) -> (i32, i32, i32, i32) {
    %c0_i32 = arith.constant 0 : i32
    %c0_i32_0 = arith.constant 0 : i32
    %c0_i32_1 = arith.constant 0 : i32
    return %arg0, %arg1, %c0_i32, %c0_i32_0 : i32, i32, i32, i32
  }
}

module attributes {stable_mosaic.version = 11 : i64} {
  func.func @_in_apply_kernel(%arg0: i32, %arg1: i32, %arg2: memref<1x16x128xbf16, #tpu.memory_space<vmem>>, %arg3: memref<1x2x128xf32, #tpu.memory_space<vmem>>, %arg4: memref<1x16x128xbf16, #tpu.memory_space<vmem>>) attributes {dimension_semantics = [#tpu.dimension_semantics<parallel>, #tpu.dimension_semantics<parallel>], iteration_bounds = array<i64: 2, 1>, scalar_prefetch = 0 : i64, scratch_operands = 0 : i64, tpu.core_type = #tpu.core_type<tc>, window_params = [{transform_indices = @transform_0, window_bounds = array<i64: 1, 16, 128>}, {transform_indices = @transform_1, window_bounds = array<i64: 1, 2, 128>}, {transform_indices = @transform_2, window_bounds = array<i64: 1, 16, 128>}]} {
    %c0 = arith.constant 0 : index
    %c0_0 = arith.constant 0 : index
    %c0_1 = arith.constant 0 : index
    %0 = vector.load %arg2[%c0, %c0_0, %c0_1] : memref<1x16x128xbf16, #tpu.memory_space<vmem>>, vector<1x16x128xbf16>
    %1 = vector.shape_cast %0 : vector<1x16x128xbf16> to vector<16x128xbf16>
    %2 = arith.extf %1 : vector<16x128xbf16> to vector<16x128xf32>
    %c0_2 = arith.constant 0 : index
    %c0_3 = arith.constant 0 : index
    %c0_4 = arith.constant 0 : index
    %3 = vector.load %arg3[%c0_2, %c0_3, %c0_4] : memref<1x2x128xf32, #tpu.memory_space<vmem>>, vector<1x1x128xf32>
    %4 = vector.shape_cast %3 : vector<1x1x128xf32> to vector<1x128xf32>
    %5 = vector.broadcast %4 : vector<1x128xf32> to vector<16x128xf32>
    %6 = arith.mulf %2, %5 : vector<16x128xf32>
    %c0_5 = arith.constant 0 : index
    %c1 = arith.constant 1 : index
    %c0_6 = arith.constant 0 : index
    %7 = vector.load %arg3[%c0_5, %c1, %c0_6] : memref<1x2x128xf32, #tpu.memory_space<vmem>>, vector<1x1x128xf32>
    %8 = vector.shape_cast %7 : vector<1x1x128xf32> to vector<1x128xf32>
    %9 = vector.broadcast %8 : vector<1x128xf32> to vector<16x128xf32>
    %10 = arith.addf %6, %9 : vector<16x128xf32>
    %cst = arith.constant 0.000000e+00 : f32
    %11 = vector.broadcast %cst : f32 to vector<16x128xf32>
    %12 = arith.maximumf %10, %11 : vector<16x128xf32>
    %13 = arith.truncf %12 : vector<16x128xf32> to vector<16x128xbf16>
    %c0_7 = arith.constant 0 : index
    %c0_8 = arith.constant 0 : index
    %c0_9 = arith.constant 0 : index
    %14 = vector.load %arg4[%c0_7, %c0_8, %c0_9] : memref<1x16x128xbf16, #tpu.memory_space<vmem>>, vector<1x16x128xbf16>
    %15 = vector.shape_cast %14 : vector<1x16x128xbf16> to vector<16x128xbf16>
    %16 = vector.shape_cast %13 : vector<16x128xbf16> to vector<1x16x128xbf16>
    tpu.vector_store %arg4[%c0_7, %c0_8, %c0_9], %16 {strides = array<i32>} : memref<1x16x128xbf16, #tpu.memory_space<vmem>>, vector<1x16x128xbf16>,
    return
  }
  func.func @transform_0(%arg0: i32, %arg1: i32) -> (i32, i32, i32) {
    %c0_i32 = arith.constant 0 : i32
    %c0_i32_0 = arith.constant 0 : i32
    return %arg0, %arg1, %c0_i32 : i32, i32, i32
  }
  func.func @transform_1(%arg0: i32, %arg1: i32) -> (i32, i32, i32) {
    %c0_i32 = arith.constant 0 : i32
    %c0_i32_0 = arith.constant 0 : i32
    %c0_i32_1 = arith.constant 0 : i32
    return %arg0, %c0_i32, %c0_i32_0 : i32, i32, i32
  }
  func.func @transform_2(%arg0: i32, %arg1: i32) -> (i32, i32, i32) {
    %c0_i32 = arith.constant 0 : i32
    %c0_i32_0 = arith.constant 0 : i32
    return %arg0, %arg1, %c0_i32 : i32, i32, i32
  }
}

module attributes {stable_mosaic.version = 11 : i64} {
  func.func @_conv_mm_kernel(%arg0: i32, %arg1: i32, %arg2: memref<1x16x1152xbf16, #tpu.memory_space<vmem>>, %arg3: memref<1152x128xbf16, #tpu.memory_space<vmem>>, %arg4: memref<1x16x128xbf16, #tpu.memory_space<vmem>>, %arg5: memref<1x1x2x128xf32, #tpu.memory_space<vmem>>) attributes {dimension_semantics = [#tpu.dimension_semantics<parallel>, #tpu.dimension_semantics<parallel>], iteration_bounds = array<i64: 2, 1>, scalar_prefetch = 0 : i64, scratch_operands = 0 : i64, tpu.core_type = #tpu.core_type<tc>, window_params = [{transform_indices = @transform_0, window_bounds = array<i64: 1, 16, 1152>}, {pipeline_mode = #tpu.pipeline_mode<synchronous>, transform_indices = @transform_1, window_bounds = array<i64: 1152, 128>}, {transform_indices = @transform_2, window_bounds = array<i64: 1, 16, 128>}, {transform_indices = @transform_3, window_bounds = array<i64: 1, 1, 2, 128>}]} {
    %c0 = arith.constant 0 : index
    %c0_0 = arith.constant 0 : index
    %c0_1 = arith.constant 0 : index
    %0 = vector.load %arg2[%c0, %c0_0, %c0_1] : memref<1x16x1152xbf16, #tpu.memory_space<vmem>>, vector<1x16x1152xbf16>
    %1 = vector.shape_cast %0 : vector<1x16x1152xbf16> to vector<16x1152xbf16>
    %c0_2 = arith.constant 0 : index
    %c0_3 = arith.constant 0 : index
    %2 = vector.load %arg3[%c0_2, %c0_3] : memref<1152x128xbf16, #tpu.memory_space<vmem>>, vector<1152x128xbf16>
    %cst = arith.constant dense<0.000000e+00> : vector<16x128xf32>
    %3 = tpu.matmul %1, %2, %cst {dimension_numbers = #tpu.dot_dimension_numbers<[1], [0], [0], [1], [0, 0, 1, 1], [], []>} : vector<16x1152xbf16>, vector<1152x128xbf16>, vector<16x128xf32> -> vector<16x128xf32>
    %4 = arith.truncf %3 : vector<16x128xf32> to vector<16x128xbf16>
    %c0_4 = arith.constant 0 : index
    %c0_5 = arith.constant 0 : index
    %c0_6 = arith.constant 0 : index
    %5 = vector.load %arg4[%c0_4, %c0_5, %c0_6] : memref<1x16x128xbf16, #tpu.memory_space<vmem>>, vector<1x16x128xbf16>
    %6 = vector.shape_cast %5 : vector<1x16x128xbf16> to vector<16x128xbf16>
    %7 = vector.shape_cast %4 : vector<16x128xbf16> to vector<1x16x128xbf16>
    tpu.vector_store %arg4[%c0_4, %c0_5, %c0_6], %7 {strides = array<i32>} : memref<1x16x128xbf16, #tpu.memory_space<vmem>>, vector<1x16x128xbf16>,
    %cst_7 = arith.constant dense<0.000000e+00> : vector<128xf32>
    %8 = vector.multi_reduction <add>, %3, %cst_7 [0] : vector<16x128xf32> to vector<128xf32>
    %9 = vector.shape_cast %8 : vector<128xf32> to vector<1x128xf32>
    %c0_8 = arith.constant 0 : index
    %c0_9 = arith.constant 0 : index
    %c0_10 = arith.constant 0 : index
    %c0_11 = arith.constant 0 : index
    %10 = vector.load %arg5[%c0_8, %c0_9, %c0_10, %c0_11] : memref<1x1x2x128xf32, #tpu.memory_space<vmem>>, vector<1x1x1x128xf32>
    %11 = vector.shape_cast %10 : vector<1x1x1x128xf32> to vector<1x128xf32>
    %12 = vector.shape_cast %9 : vector<1x128xf32> to vector<1x1x1x128xf32>
    tpu.vector_store %arg5[%c0_8, %c0_9, %c0_10, %c0_11], %12 {strides = array<i32>} : memref<1x1x2x128xf32, #tpu.memory_space<vmem>>, vector<1x1x1x128xf32>,
    %13 = arith.mulf %3, %3 : vector<16x128xf32>
    %cst_12 = arith.constant dense<0.000000e+00> : vector<128xf32>
    %14 = vector.multi_reduction <add>, %13, %cst_12 [0] : vector<16x128xf32> to vector<128xf32>
    %15 = vector.shape_cast %14 : vector<128xf32> to vector<1x128xf32>
    %c0_13 = arith.constant 0 : index
    %c0_14 = arith.constant 0 : index
    %c1 = arith.constant 1 : index
    %c0_15 = arith.constant 0 : index
    %16 = vector.load %arg5[%c0_13, %c0_14, %c1, %c0_15] : memref<1x1x2x128xf32, #tpu.memory_space<vmem>>, vector<1x1x1x128xf32>
    %17 = vector.shape_cast %16 : vector<1x1x1x128xf32> to vector<1x128xf32>
    %18 = vector.shape_cast %15 : vector<1x128xf32> to vector<1x1x1x128xf32>
    tpu.vector_store %arg5[%c0_13, %c0_14, %c1, %c0_15], %18 {strides = array<i32>} : memref<1x1x2x128xf32, #tpu.memory_space<vmem>>, vector<1x1x1x128xf32>,
    return
  }
  func.func @transform_0(%arg0: i32, %arg1: i32) -> (i32, i32, i32) {
    %c0_i32 = arith.constant 0 : i32
    %c0_i32_0 = arith.constant 0 : i32
    return %arg0, %arg1, %c0_i32 : i32, i32, i32
  }
  func.func @transform_1(%arg0: i32, %arg1: i32) -> (i32, i32) {
    %c0_i32 = arith.constant 0 : i32
    %c0_i32_0 = arith.constant 0 : i32
    %c0_i32_1 = arith.constant 0 : i32
    return %c0_i32, %c0_i32_0 : i32, i32
  }
  func.func @transform_2(%arg0: i32, %arg1: i32) -> (i32, i32, i32) {
    %c0_i32 = arith.constant 0 : i32
    %c0_i32_0 = arith.constant 0 : i32
    return %arg0, %arg1, %c0_i32 : i32, i32, i32
  }
  func.func @transform_3(%arg0: i32, %arg1: i32) -> (i32, i32, i32, i32) {
    %c0_i32 = arith.constant 0 : i32
    %c0_i32_0 = arith.constant 0 : i32
    %c0_i32_1 = arith.constant 0 : i32
    return %arg0, %arg1, %c0_i32, %c0_i32_0 : i32, i32, i32, i32
  }
}

module attributes {stable_mosaic.version = 11 : i64} {
  func.func @_in_apply_res_kernel(%arg0: i32, %arg1: i32, %arg2: memref<1x16x128xbf16, #tpu.memory_space<vmem>>, %arg3: memref<1x2x128xf32, #tpu.memory_space<vmem>>, %arg4: memref<1x16x128xbf16, #tpu.memory_space<vmem>>, %arg5: memref<1x16x128xbf16, #tpu.memory_space<vmem>>) attributes {dimension_semantics = [#tpu.dimension_semantics<parallel>, #tpu.dimension_semantics<parallel>], iteration_bounds = array<i64: 2, 1>, scalar_prefetch = 0 : i64, scratch_operands = 0 : i64, tpu.core_type = #tpu.core_type<tc>, window_params = [{transform_indices = @transform_0, window_bounds = array<i64: 1, 16, 128>}, {transform_indices = @transform_1, window_bounds = array<i64: 1, 2, 128>}, {transform_indices = @transform_2, window_bounds = array<i64: 1, 16, 128>}, {transform_indices = @transform_3, window_bounds = array<i64: 1, 16, 128>}]} {
    %c0 = arith.constant 0 : index
    %c0_0 = arith.constant 0 : index
    %c0_1 = arith.constant 0 : index
    %0 = vector.load %arg2[%c0, %c0_0, %c0_1] : memref<1x16x128xbf16, #tpu.memory_space<vmem>>, vector<1x16x128xbf16>
    %1 = vector.shape_cast %0 : vector<1x16x128xbf16> to vector<16x128xbf16>
    %2 = arith.extf %1 : vector<16x128xbf16> to vector<16x128xf32>
    %c0_2 = arith.constant 0 : index
    %c0_3 = arith.constant 0 : index
    %c0_4 = arith.constant 0 : index
    %3 = vector.load %arg3[%c0_2, %c0_3, %c0_4] : memref<1x2x128xf32, #tpu.memory_space<vmem>>, vector<1x1x128xf32>
    %4 = vector.shape_cast %3 : vector<1x1x128xf32> to vector<1x128xf32>
    %5 = vector.broadcast %4 : vector<1x128xf32> to vector<16x128xf32>
    %6 = arith.mulf %2, %5 : vector<16x128xf32>
    %c0_5 = arith.constant 0 : index
    %c1 = arith.constant 1 : index
    %c0_6 = arith.constant 0 : index
    %7 = vector.load %arg3[%c0_5, %c1, %c0_6] : memref<1x2x128xf32, #tpu.memory_space<vmem>>, vector<1x1x128xf32>
    %8 = vector.shape_cast %7 : vector<1x1x128xf32> to vector<1x128xf32>
    %9 = vector.broadcast %8 : vector<1x128xf32> to vector<16x128xf32>
    %10 = arith.addf %6, %9 : vector<16x128xf32>
    %c0_7 = arith.constant 0 : index
    %c0_8 = arith.constant 0 : index
    %c0_9 = arith.constant 0 : index
    %11 = vector.load %arg4[%c0_7, %c0_8, %c0_9] : memref<1x16x128xbf16, #tpu.memory_space<vmem>>, vector<1x16x128xbf16>
    %12 = vector.shape_cast %11 : vector<1x16x128xbf16> to vector<16x128xbf16>
    %13 = arith.extf %12 : vector<16x128xbf16> to vector<16x128xf32>
    %14 = arith.addf %10, %13 : vector<16x128xf32>
    %15 = arith.truncf %14 : vector<16x128xf32> to vector<16x128xbf16>
    %c0_10 = arith.constant 0 : index
    %c0_11 = arith.constant 0 : index
    %c0_12 = arith.constant 0 : index
    %16 = vector.load %arg5[%c0_10, %c0_11, %c0_12] : memref<1x16x128xbf16, #tpu.memory_space<vmem>>, vector<1x16x128xbf16>
    %17 = vector.shape_cast %16 : vector<1x16x128xbf16> to vector<16x128xbf16>
    %18 = vector.shape_cast %15 : vector<16x128xbf16> to vector<1x16x128xbf16>
    tpu.vector_store %arg5[%c0_10, %c0_11, %c0_12], %18 {strides = array<i32>} : memref<1x16x128xbf16, #tpu.memory_space<vmem>>, vector<1x16x128xbf16>,
    return
  }
  func.func @transform_0(%arg0: i32, %arg1: i32) -> (i32, i32, i32) {
    %c0_i32 = arith.constant 0 : i32
    %c0_i32_0 = arith.constant 0 : i32
    return %arg0, %arg1, %c0_i32 : i32, i32, i32
  }
  func.func @transform_1(%arg0: i32, %arg1: i32) -> (i32, i32, i32) {
    %c0_i32 = arith.constant 0 : i32
    %c0_i32_0 = arith.constant 0 : i32
    %c0_i32_1 = arith.constant 0 : i32
    return %arg0, %c0_i32, %c0_i32_0 : i32, i32, i32
  }
  func.func @transform_2(%arg0: i32, %arg1: i32) -> (i32, i32, i32) {
    %c0_i32 = arith.constant 0 : i32
    %c0_i32_0 = arith.constant 0 : i32
    return %arg0, %arg1, %c0_i32 : i32, i32, i32
  }
  func.func @transform_3(%arg0: i32, %arg1: i32) -> (i32, i32, i32) {
    %c0_i32 = arith.constant 0 : i32
    %c0_i32_0 = arith.constant 0 : i32
    return %arg0, %arg1, %c0_i32 : i32, i32, i32
  }
}

module attributes {stable_mosaic.version = 11 : i64} {
  func.func @_conv_mm_kernel(%arg0: i32, %arg1: i32, %arg2: memref<1x64x1152xbf16, #tpu.memory_space<vmem>>, %arg3: memref<1152x64xbf16, #tpu.memory_space<vmem>>, %arg4: memref<1x64x64xbf16, #tpu.memory_space<vmem>>, %arg5: memref<1x1x2x64xf32, #tpu.memory_space<vmem>>) attributes {dimension_semantics = [#tpu.dimension_semantics<parallel>, #tpu.dimension_semantics<parallel>], iteration_bounds = array<i64: 2, 1>, scalar_prefetch = 0 : i64, scratch_operands = 0 : i64, tpu.core_type = #tpu.core_type<tc>, window_params = [{transform_indices = @transform_0, window_bounds = array<i64: 1, 64, 1152>}, {pipeline_mode = #tpu.pipeline_mode<synchronous>, transform_indices = @transform_1, window_bounds = array<i64: 1152, 64>}, {transform_indices = @transform_2, window_bounds = array<i64: 1, 64, 64>}, {transform_indices = @transform_3, window_bounds = array<i64: 1, 1, 2, 64>}]} {
    %c0 = arith.constant 0 : index
    %c0_0 = arith.constant 0 : index
    %c0_1 = arith.constant 0 : index
    %0 = vector.load %arg2[%c0, %c0_0, %c0_1] : memref<1x64x1152xbf16, #tpu.memory_space<vmem>>, vector<1x64x1152xbf16>
    %1 = vector.shape_cast %0 : vector<1x64x1152xbf16> to vector<64x1152xbf16>
    %c0_2 = arith.constant 0 : index
    %c0_3 = arith.constant 0 : index
    %2 = vector.load %arg3[%c0_2, %c0_3] : memref<1152x64xbf16, #tpu.memory_space<vmem>>, vector<1152x64xbf16>
    %cst = arith.constant dense<0.000000e+00> : vector<64x64xf32>
    %3 = tpu.matmul %1, %2, %cst {dimension_numbers = #tpu.dot_dimension_numbers<[1], [0], [0], [1], [0, 0, 1, 1], [], []>} : vector<64x1152xbf16>, vector<1152x64xbf16>, vector<64x64xf32> -> vector<64x64xf32>
    %4 = arith.truncf %3 : vector<64x64xf32> to vector<64x64xbf16>
    %c0_4 = arith.constant 0 : index
    %c0_5 = arith.constant 0 : index
    %c0_6 = arith.constant 0 : index
    %5 = vector.load %arg4[%c0_4, %c0_5, %c0_6] : memref<1x64x64xbf16, #tpu.memory_space<vmem>>, vector<1x64x64xbf16>
    %6 = vector.shape_cast %5 : vector<1x64x64xbf16> to vector<64x64xbf16>
    %7 = vector.shape_cast %4 : vector<64x64xbf16> to vector<1x64x64xbf16>
    tpu.vector_store %arg4[%c0_4, %c0_5, %c0_6], %7 {strides = array<i32>} : memref<1x64x64xbf16, #tpu.memory_space<vmem>>, vector<1x64x64xbf16>,
    %cst_7 = arith.constant dense<0.000000e+00> : vector<64xf32>
    %8 = vector.multi_reduction <add>, %3, %cst_7 [0] : vector<64x64xf32> to vector<64xf32>
    %9 = vector.shape_cast %8 : vector<64xf32> to vector<1x64xf32>
    %c0_8 = arith.constant 0 : index
    %c0_9 = arith.constant 0 : index
    %c0_10 = arith.constant 0 : index
    %c0_11 = arith.constant 0 : index
    %10 = vector.load %arg5[%c0_8, %c0_9, %c0_10, %c0_11] : memref<1x1x2x64xf32, #tpu.memory_space<vmem>>, vector<1x1x1x64xf32>
    %11 = vector.shape_cast %10 : vector<1x1x1x64xf32> to vector<1x64xf32>
    %12 = vector.shape_cast %9 : vector<1x64xf32> to vector<1x1x1x64xf32>
    tpu.vector_store %arg5[%c0_8, %c0_9, %c0_10, %c0_11], %12 {strides = array<i32>} : memref<1x1x2x64xf32, #tpu.memory_space<vmem>>, vector<1x1x1x64xf32>,
    %13 = arith.mulf %3, %3 : vector<64x64xf32>
    %cst_12 = arith.constant dense<0.000000e+00> : vector<64xf32>
    %14 = vector.multi_reduction <add>, %13, %cst_12 [0] : vector<64x64xf32> to vector<64xf32>
    %15 = vector.shape_cast %14 : vector<64xf32> to vector<1x64xf32>
    %c0_13 = arith.constant 0 : index
    %c0_14 = arith.constant 0 : index
    %c1 = arith.constant 1 : index
    %c0_15 = arith.constant 0 : index
    %16 = vector.load %arg5[%c0_13, %c0_14, %c1, %c0_15] : memref<1x1x2x64xf32, #tpu.memory_space<vmem>>, vector<1x1x1x64xf32>
    %17 = vector.shape_cast %16 : vector<1x1x1x64xf32> to vector<1x64xf32>
    %18 = vector.shape_cast %15 : vector<1x64xf32> to vector<1x1x1x64xf32>
    tpu.vector_store %arg5[%c0_13, %c0_14, %c1, %c0_15], %18 {strides = array<i32>} : memref<1x1x2x64xf32, #tpu.memory_space<vmem>>, vector<1x1x1x64xf32>,
    return
  }
  func.func @transform_0(%arg0: i32, %arg1: i32) -> (i32, i32, i32) {
    %c0_i32 = arith.constant 0 : i32
    %c0_i32_0 = arith.constant 0 : i32
    return %arg0, %arg1, %c0_i32 : i32, i32, i32
  }
  func.func @transform_1(%arg0: i32, %arg1: i32) -> (i32, i32) {
    %c0_i32 = arith.constant 0 : i32
    %c0_i32_0 = arith.constant 0 : i32
    %c0_i32_1 = arith.constant 0 : i32
    return %c0_i32, %c0_i32_0 : i32, i32
  }
  func.func @transform_2(%arg0: i32, %arg1: i32) -> (i32, i32, i32) {
    %c0_i32 = arith.constant 0 : i32
    %c0_i32_0 = arith.constant 0 : i32
    return %arg0, %arg1, %c0_i32 : i32, i32, i32
  }
  func.func @transform_3(%arg0: i32, %arg1: i32) -> (i32, i32, i32, i32) {
    %c0_i32 = arith.constant 0 : i32
    %c0_i32_0 = arith.constant 0 : i32
    %c0_i32_1 = arith.constant 0 : i32
    return %arg0, %arg1, %c0_i32, %c0_i32_0 : i32, i32, i32, i32
  }
}

module attributes {stable_mosaic.version = 11 : i64} {
  func.func @_conv_mm_kernel(%arg0: i32, %arg1: i32, %arg2: memref<1x256x640xbf16, #tpu.memory_space<vmem>>, %arg3: memref<640x32xbf16, #tpu.memory_space<vmem>>, %arg4: memref<1x256x32xbf16, #tpu.memory_space<vmem>>, %arg5: memref<1x1x2x32xf32, #tpu.memory_space<vmem>>) attributes {dimension_semantics = [#tpu.dimension_semantics<parallel>, #tpu.dimension_semantics<parallel>], iteration_bounds = array<i64: 2, 1>, scalar_prefetch = 0 : i64, scratch_operands = 0 : i64, tpu.core_type = #tpu.core_type<tc>, window_params = [{transform_indices = @transform_0, window_bounds = array<i64: 1, 256, 640>}, {pipeline_mode = #tpu.pipeline_mode<synchronous>, transform_indices = @transform_1, window_bounds = array<i64: 640, 32>}, {transform_indices = @transform_2, window_bounds = array<i64: 1, 256, 32>}, {transform_indices = @transform_3, window_bounds = array<i64: 1, 1, 2, 32>}]} {
    %c0 = arith.constant 0 : index
    %c0_0 = arith.constant 0 : index
    %c0_1 = arith.constant 0 : index
    %0 = vector.load %arg2[%c0, %c0_0, %c0_1] : memref<1x256x640xbf16, #tpu.memory_space<vmem>>, vector<1x256x640xbf16>
    %1 = vector.shape_cast %0 : vector<1x256x640xbf16> to vector<256x640xbf16>
    %c0_2 = arith.constant 0 : index
    %c0_3 = arith.constant 0 : index
    %2 = vector.load %arg3[%c0_2, %c0_3] : memref<640x32xbf16, #tpu.memory_space<vmem>>, vector<640x32xbf16>
    %cst = arith.constant dense<0.000000e+00> : vector<256x32xf32>
    %3 = tpu.matmul %1, %2, %cst {dimension_numbers = #tpu.dot_dimension_numbers<[1], [0], [0], [1], [0, 0, 1, 1], [], []>} : vector<256x640xbf16>, vector<640x32xbf16>, vector<256x32xf32> -> vector<256x32xf32>
    %4 = arith.truncf %3 : vector<256x32xf32> to vector<256x32xbf16>
    %c0_4 = arith.constant 0 : index
    %c0_5 = arith.constant 0 : index
    %c0_6 = arith.constant 0 : index
    %5 = vector.load %arg4[%c0_4, %c0_5, %c0_6] : memref<1x256x32xbf16, #tpu.memory_space<vmem>>, vector<1x256x32xbf16>
    %6 = vector.shape_cast %5 : vector<1x256x32xbf16> to vector<256x32xbf16>
    %7 = vector.shape_cast %4 : vector<256x32xbf16> to vector<1x256x32xbf16>
    tpu.vector_store %arg4[%c0_4, %c0_5, %c0_6], %7 {strides = array<i32>} : memref<1x256x32xbf16, #tpu.memory_space<vmem>>, vector<1x256x32xbf16>,
    %cst_7 = arith.constant dense<0.000000e+00> : vector<32xf32>
    %8 = vector.multi_reduction <add>, %3, %cst_7 [0] : vector<256x32xf32> to vector<32xf32>
    %9 = vector.shape_cast %8 : vector<32xf32> to vector<1x32xf32>
    %c0_8 = arith.constant 0 : index
    %c0_9 = arith.constant 0 : index
    %c0_10 = arith.constant 0 : index
    %c0_11 = arith.constant 0 : index
    %10 = vector.load %arg5[%c0_8, %c0_9, %c0_10, %c0_11] : memref<1x1x2x32xf32, #tpu.memory_space<vmem>>, vector<1x1x1x32xf32>
    %11 = vector.shape_cast %10 : vector<1x1x1x32xf32> to vector<1x32xf32>
    %12 = vector.shape_cast %9 : vector<1x32xf32> to vector<1x1x1x32xf32>
    tpu.vector_store %arg5[%c0_8, %c0_9, %c0_10, %c0_11], %12 {strides = array<i32>} : memref<1x1x2x32xf32, #tpu.memory_space<vmem>>, vector<1x1x1x32xf32>,
    %13 = arith.mulf %3, %3 : vector<256x32xf32>
    %cst_12 = arith.constant dense<0.000000e+00> : vector<32xf32>
    %14 = vector.multi_reduction <add>, %13, %cst_12 [0] : vector<256x32xf32> to vector<32xf32>
    %15 = vector.shape_cast %14 : vector<32xf32> to vector<1x32xf32>
    %c0_13 = arith.constant 0 : index
    %c0_14 = arith.constant 0 : index
    %c1 = arith.constant 1 : index
    %c0_15 = arith.constant 0 : index
    %16 = vector.load %arg5[%c0_13, %c0_14, %c1, %c0_15] : memref<1x1x2x32xf32, #tpu.memory_space<vmem>>, vector<1x1x1x32xf32>
    %17 = vector.shape_cast %16 : vector<1x1x1x32xf32> to vector<1x32xf32>
    %18 = vector.shape_cast %15 : vector<1x32xf32> to vector<1x1x1x32xf32>
    tpu.vector_store %arg5[%c0_13, %c0_14, %c1, %c0_15], %18 {strides = array<i32>} : memref<1x1x2x32xf32, #tpu.memory_space<vmem>>, vector<1x1x1x32xf32>,
    return
  }
  func.func @transform_0(%arg0: i32, %arg1: i32) -> (i32, i32, i32) {
    %c0_i32 = arith.constant 0 : i32
    %c0_i32_0 = arith.constant 0 : i32
    return %arg0, %arg1, %c0_i32 : i32, i32, i32
  }
  func.func @transform_1(%arg0: i32, %arg1: i32) -> (i32, i32) {
    %c0_i32 = arith.constant 0 : i32
    %c0_i32_0 = arith.constant 0 : i32
    %c0_i32_1 = arith.constant 0 : i32
    return %c0_i32, %c0_i32_0 : i32, i32
  }
  func.func @transform_2(%arg0: i32, %arg1: i32) -> (i32, i32, i32) {
    %c0_i32 = arith.constant 0 : i32
    %c0_i32_0 = arith.constant 0 : i32
    return %arg0, %arg1, %c0_i32 : i32, i32, i32
  }
  func.func @transform_3(%arg0: i32, %arg1: i32) -> (i32, i32, i32, i32) {
    %c0_i32 = arith.constant 0 : i32
    %c0_i32_0 = arith.constant 0 : i32
    %c0_i32_1 = arith.constant 0 : i32
    return %arg0, %arg1, %c0_i32, %c0_i32_0 : i32, i32, i32, i32
  }
}

module attributes {stable_mosaic.version = 11 : i64} {
  func.func @_conv_mm_kernel(%arg0: i32, %arg1: i32, %arg2: memref<1x256x384xbf16, #tpu.memory_space<vmem>>, %arg3: memref<384x3xbf16, #tpu.memory_space<vmem>>, %arg4: memref<1x256x3xbf16, #tpu.memory_space<vmem>>, %arg5: memref<1x1x2x3xf32, #tpu.memory_space<vmem>>) attributes {dimension_semantics = [#tpu.dimension_semantics<parallel>, #tpu.dimension_semantics<parallel>], iteration_bounds = array<i64: 2, 1>, scalar_prefetch = 0 : i64, scratch_operands = 0 : i64, tpu.core_type = #tpu.core_type<tc>, window_params = [{transform_indices = @transform_0, window_bounds = array<i64: 1, 256, 384>}, {pipeline_mode = #tpu.pipeline_mode<synchronous>, transform_indices = @transform_1, window_bounds = array<i64: 384, 3>}, {transform_indices = @transform_2, window_bounds = array<i64: 1, 256, 3>}, {transform_indices = @transform_3, window_bounds = array<i64: 1, 1, 2, 3>}]} {
    %c0 = arith.constant 0 : index
    %c0_0 = arith.constant 0 : index
    %c0_1 = arith.constant 0 : index
    %0 = vector.load %arg2[%c0, %c0_0, %c0_1] : memref<1x256x384xbf16, #tpu.memory_space<vmem>>, vector<1x256x384xbf16>
    %1 = vector.shape_cast %0 : vector<1x256x384xbf16> to vector<256x384xbf16>
    %c0_2 = arith.constant 0 : index
    %c0_3 = arith.constant 0 : index
    %2 = vector.load %arg3[%c0_2, %c0_3] : memref<384x3xbf16, #tpu.memory_space<vmem>>, vector<384x3xbf16>
    %cst = arith.constant dense<0.000000e+00> : vector<256x3xf32>
    %3 = tpu.matmul %1, %2, %cst {dimension_numbers = #tpu.dot_dimension_numbers<[1], [0], [0], [1], [0, 0, 1, 1], [], []>} : vector<256x384xbf16>, vector<384x3xbf16>, vector<256x3xf32> -> vector<256x3xf32>
    %4 = arith.truncf %3 : vector<256x3xf32> to vector<256x3xbf16>
    %c0_4 = arith.constant 0 : index
    %c0_5 = arith.constant 0 : index
    %c0_6 = arith.constant 0 : index
    %5 = vector.load %arg4[%c0_4, %c0_5, %c0_6] : memref<1x256x3xbf16, #tpu.memory_space<vmem>>, vector<1x256x3xbf16>
    %6 = vector.shape_cast %5 : vector<1x256x3xbf16> to vector<256x3xbf16>
    %7 = vector.shape_cast %4 : vector<256x3xbf16> to vector<1x256x3xbf16>
    tpu.vector_store %arg4[%c0_4, %c0_5, %c0_6], %7 {strides = array<i32>} : memref<1x256x3xbf16, #tpu.memory_space<vmem>>, vector<1x256x3xbf16>,
    %cst_7 = arith.constant dense<0.000000e+00> : vector<3xf32>
    %8 = vector.multi_reduction <add>, %3, %cst_7 [0] : vector<256x3xf32> to vector<3xf32>
    %9 = vector.shape_cast %8 : vector<3xf32> to vector<1x3xf32>
    %c0_8 = arith.constant 0 : index
    %c0_9 = arith.constant 0 : index
    %c0_10 = arith.constant 0 : index
    %c0_11 = arith.constant 0 : index
    %10 = vector.load %arg5[%c0_8, %c0_9, %c0_10, %c0_11] : memref<1x1x2x3xf32, #tpu.memory_space<vmem>>, vector<1x1x1x3xf32>
    %11 = vector.shape_cast %10 : vector<1x1x1x3xf32> to vector<1x3xf32>
    %12 = vector.shape_cast %9 : vector<1x3xf32> to vector<1x1x1x3xf32>
    tpu.vector_store %arg5[%c0_8, %c0_9, %c0_10, %c0_11], %12 {strides = array<i32>} : memref<1x1x2x3xf32, #tpu.memory_space<vmem>>, vector<1x1x1x3xf32>,
    %13 = arith.mulf %3, %3 : vector<256x3xf32>
    %cst_12 = arith.constant dense<0.000000e+00> : vector<3xf32>
    %14 = vector.multi_reduction <add>, %13, %cst_12 [0] : vector<256x3xf32> to vector<3xf32>
    %15 = vector.shape_cast %14 : vector<3xf32> to vector<1x3xf32>
    %c0_13 = arith.constant 0 : index
    %c0_14 = arith.constant 0 : index
    %c1 = arith.constant 1 : index
    %c0_15 = arith.constant 0 : index
    %16 = vector.load %arg5[%c0_13, %c0_14, %c1, %c0_15] : memref<1x1x2x3xf32, #tpu.memory_space<vmem>>, vector<1x1x1x3xf32>
    %17 = vector.shape_cast %16 : vector<1x1x1x3xf32> to vector<1x3xf32>
    %18 = vector.shape_cast %15 : vector<1x3xf32> to vector<1x1x1x3xf32>
    tpu.vector_store %arg5[%c0_13, %c0_14, %c1, %c0_15], %18 {strides = array<i32>} : memref<1x1x2x3xf32, #tpu.memory_space<vmem>>, vector<1x1x1x3xf32>,
    return
  }
  func.func @transform_0(%arg0: i32, %arg1: i32) -> (i32, i32, i32) {
    %c0_i32 = arith.constant 0 : i32
    %c0_i32_0 = arith.constant 0 : i32
    return %arg0, %arg1, %c0_i32 : i32, i32, i32
  }
  func.func @transform_1(%arg0: i32, %arg1: i32) -> (i32, i32) {
    %c0_i32 = arith.constant 0 : i32
    %c0_i32_0 = arith.constant 0 : i32
    %c0_i32_1 = arith.constant 0 : i32
    return %c0_i32, %c0_i32_0 : i32, i32
  }
  func.func @transform_2(%arg0: i32, %arg1: i32) -> (i32, i32, i32) {
    %c0_i32 = arith.constant 0 : i32
    %c0_i32_0 = arith.constant 0 : i32
    return %arg0, %arg1, %c0_i32 : i32, i32, i32
  }
  func.func @transform_3(%arg0: i32, %arg1: i32) -> (i32, i32, i32, i32) {
    %c0_i32 = arith.constant 0 : i32
    %c0_i32_0 = arith.constant 0 : i32
    %c0_i32_1 = arith.constant 0 : i32
    return %arg0, %arg1, %c0_i32, %c0_i32_0 : i32, i32, i32, i32
  }
}

module attributes {stable_mosaic.version = 11 : i64} {
  func.func @_head_kernel(%arg0: i32, %arg1: memref<6x256xbf16, #tpu.memory_space<vmem>>, %arg2: memref<6x256xf32, #tpu.memory_space<vmem>>, %arg3: memref<6x1xf32, #tpu.memory_space<vmem>>, %arg4: memref<6x1xf32, #tpu.memory_space<vmem>>, %arg5: memref<6x1xf32, #tpu.memory_space<vmem>>, %arg6: memref<6x256xf32, #tpu.memory_space<vmem>>) attributes {dimension_semantics = [#tpu.dimension_semantics<parallel>], iteration_bounds = array<i64: 1>, scalar_prefetch = 0 : i64, scratch_operands = 0 : i64, tpu.core_type = #tpu.core_type<tc>, window_params = [{transform_indices = @transform_0, window_bounds = array<i64: 6, 256>}, {transform_indices = @transform_1, window_bounds = array<i64: 6, 256>}, {pipeline_mode = #tpu.pipeline_mode<synchronous>, transform_indices = @transform_2, window_bounds = array<i64: 6, 1>}, {pipeline_mode = #tpu.pipeline_mode<synchronous>, transform_indices = @transform_3, window_bounds = array<i64: 6, 1>}, {pipeline_mode = #tpu.pipeline_mode<synchronous>, transform_indices = @transform_4, window_bounds = array<i64: 6, 1>}, {transform_indices = @transform_5, window_bounds = array<i64: 6, 256>}]} {
    %c0 = arith.constant 0 : index
    %c0_0 = arith.constant 0 : index
    %0 = vector.load %arg1[%c0, %c0_0] : memref<6x256xbf16, #tpu.memory_space<vmem>>, vector<6x256xbf16>
    %1 = arith.extf %0 : vector<6x256xbf16> to vector<6x256xf32>
    %c0_1 = arith.constant 0 : index
    %c0_2 = arith.constant 0 : index
    %2 = vector.load %arg2[%c0_1, %c0_2] : memref<6x256xf32, #tpu.memory_space<vmem>>, vector<6x256xf32>
    %3 = arith.addf %1, %2 : vector<6x256xf32>
    %c0_3 = arith.constant 0 : index
    %c0_4 = arith.constant 0 : index
    %4 = vector.load %arg3[%c0_3, %c0_4] : memref<6x1xf32, #tpu.memory_space<vmem>>, vector<6x1xf32>
    %5 = vector.broadcast %4 : vector<6x1xf32> to vector<6x256xf32>
    %6 = arith.addf %3, %5 : vector<6x256xf32>
    %c0_5 = arith.constant 0 : index
    %c0_6 = arith.constant 0 : index
    %7 = vector.load %arg4[%c0_5, %c0_6] : memref<6x1xf32, #tpu.memory_space<vmem>>, vector<6x1xf32>
    %8 = vector.broadcast %7 : vector<6x1xf32> to vector<6x256xf32>
    %9 = arith.maximumf %6, %8 : vector<6x256xf32>
    %c0_7 = arith.constant 0 : index
    %c0_8 = arith.constant 0 : index
    %10 = vector.load %arg5[%c0_7, %c0_8] : memref<6x1xf32, #tpu.memory_space<vmem>>, vector<6x1xf32>
    %11 = vector.broadcast %10 : vector<6x1xf32> to vector<6x256xf32>
    %12 = arith.minimumf %9, %11 : vector<6x256xf32>
    %c0_9 = arith.constant 0 : index
    %c0_10 = arith.constant 0 : index
    %13 = vector.load %arg6[%c0_9, %c0_10] : memref<6x256xf32, #tpu.memory_space<vmem>>, vector<6x256xf32>
    tpu.vector_store %arg6[%c0_9, %c0_10], %12 {strides = array<i32>} : memref<6x256xf32, #tpu.memory_space<vmem>>, vector<6x256xf32>,
    return
  }
  func.func @transform_0(%arg0: i32) -> (i32, i32) {
    %c0_i32 = arith.constant 0 : i32
    %c0_i32_0 = arith.constant 0 : i32
    return %c0_i32, %arg0 : i32, i32
  }
  func.func @transform_1(%arg0: i32) -> (i32, i32) {
    %c0_i32 = arith.constant 0 : i32
    %c0_i32_0 = arith.constant 0 : i32
    return %c0_i32, %arg0 : i32, i32
  }
  func.func @transform_2(%arg0: i32) -> (i32, i32) {
    %c0_i32 = arith.constant 0 : i32
    %c0_i32_0 = arith.constant 0 : i32
    %c0_i32_1 = arith.constant 0 : i32
    return %c0_i32, %c0_i32_0 : i32, i32
  }
  func.func @transform_3(%arg0: i32) -> (i32, i32) {
    %c0_i32 = arith.constant 0 : i32
    %c0_i32_0 = arith.constant 0 : i32
    %c0_i32_1 = arith.constant 0 : i32
    return %c0_i32, %c0_i32_0 : i32, i32
  }
  func.func @transform_4(%arg0: i32) -> (i32, i32) {
    %c0_i32 = arith.constant 0 : i32
    %c0_i32_0 = arith.constant 0 : i32
    %c0_i32_1 = arith.constant 0 : i32
    return %c0_i32, %c0_i32_0 : i32, i32
  }
  func.func @transform_5(%arg0: i32) -> (i32, i32) {
    %c0_i32 = arith.constant 0 : i32
    %c0_i32_0 = arith.constant 0 : i32
    return %c0_i32, %arg0 : i32, i32
  }
}

</mosaic_0001>

<llo_original>
// kernel: refine_subnet_forward.25
$region0: #{refine_subnet_forward.25}
  #allocation0 [shape = 'u32[]', space=smem, size = 0x4, offset = 0x4, fixed_abs, tag = 'smem constant byte address 0x4 - core index']
  #allocation1 [shape = 'u32[144,128]{1,0:T(1,128)}', space=vmem, size = 0x12000, scoped, tag = 'internal scratch']
  %s0 = inlined_call_operand.vmem [shape: bf16[2,256,32], index: 0, kind: input, shape index: {}]
  %s1 = inlined_call_operand.vmem [shape: f32[2,2,32], index: 1, kind: input, shape index: {}]
  %s2 = inlined_call_operand.vmem [shape: bf16[2,256,32], index: 2, kind: output, shape index: {}]
  %s3 = sld [smem:[#allocation0]]
  $region41: #{refine_subnet_forward.25} parent=0
    _
  %s5 = ssub.s32 1, %s3
  %s6 = scalar_select 0, %s5, %s3
  loop: start=0, step=1, limit=4
  $region2: #{refine_subnet_forward.25} parent=0 // loop_pre_header
    _
  $region3: #{refine_subnet_forward.25} parent=0 // loop_header
    %s8 = sphi 0, %s12
    %p9 = scmp.ge.s32.totalorder %s8, 4
    %s15 = sphi 0, %s27
    %s16 = sphi 0, %s23
    %s17 = sphi 0, %s15
    %s18 = sphi 0, %s16
    %s19 = sphi 0, %s17
    %s20 = sphi 0, %s18
    %s32 = sphi 0, %s34
    %s35 = sphi 0, %s32
    %s36 = sphi 0, %s35
    %s52 = sphi 0, %s36
    %s58 = sphi 0, %s60
    %s61 = sphi 0, %s58
    %s62 = sphi 0, %s61
    %s78 = sphi 0, %s62
    %s86 = sphi 0, %s88
    %s89 = sphi 0, %s86
    %s90 = sphi 0, %s89
    %s106 = sphi 0, %s90
  $region4: #{refine_subnet_forward.25} parent=0 // loop_header_branch
    %11 = sbr.rel (%p9) target = $region8
  $region5: #{refine_subnet_forward.25} parent=0 // loop_body
    %s13 = ssub.s32 %s8, 1
    %s14 = ssub.s32 %s8, 2
    %s21 = sadd.s32 1, %s16
    %p22 = scmp.ge.s32.totalorder %s21, 1
    %s23 = scalar_select %p22, 0, %s21
    %s24 = sadd.s32 1, %s15
    %s25 = scalar_select %p22, %s24, %s15
    %p26 = scmp.ge.s32.totalorder %s25, 2
    %s27 = scalar_select %p26, 0, %s25
    %s28 = ssub.s32 %s15, %s27
    %s29 = ssub.s32 %s16, %s23
    %s30 = sor.u32 %s28, %s29
    %p31 = scmp.eq.s32.totalorder %s30, 0
    %s33 = sadd.s32 %s32, 1
    %s34 = scalar_select %p31, %s32, %s33
    %p37 = pneg %p31
    %p38 = scmp.eq.s32.totalorder %s8, 1
    %p39 = por %p37, %p38
    %p40 = scmp.ne.s32.totalorder %s32, %s35
    %p41 = scmp.eq.s32.totalorder %s8, 0
    %p42 = por %p40, %p41
    %p43 = scmp.ne.s32.totalorder %s32, %s35
    %p44 = scmp.eq.s32.totalorder %s13, 1
    %p45 = por %p43, %p44
    %p46 = scmp.ne.s32.totalorder %s35, %s36
    %p47 = scmp.eq.s32.totalorder %s13, 0
    %p48 = por %p46, %p47
    %p49 = scmp.ne.s32.totalorder %s35, %s36
    %p50 = scmp.eq.s32.totalorder %s14, 1
    %p51 = por %p49, %p50
    %p53 = scmp.ne.s32.totalorder %s36, %s52
    %p54 = scmp.eq.s32.totalorder %s14, 0
    %p55 = por %p53, %p54
    %s56 = ssub.s32 %s15, %s27
    %p57 = scmp.eq.s32.totalorder %s56, 0
    %s59 = sadd.s32 %s58, 1
    %s60 = scalar_select %p57, %s58, %s59
    %p63 = pneg %p57
    %p64 = scmp.eq.s32.totalorder %s8, 1
    %p65 = por %p63, %p64
    %p66 = scmp.ne.s32.totalorder %s58, %s61
    %p67 = scmp.eq.s32.totalorder %s8, 0
    %p68 = por %p66, %p67
    %p69 = scmp.ne.s32.totalorder %s58, %s61
    %p70 = scmp.eq.s32.totalorder %s13, 1
    %p71 = por %p69, %p70
    %p72 = scmp.ne.s32.totalorder %s61, %s62
    %p73 = scmp.eq.s32.totalorder %s13, 0
    %p74 = por %p72, %p73
    %p75 = scmp.ne.s32.totalorder %s61, %s62
    %p76 = scmp.eq.s32.totalorder %s14, 1
    %p77 = por %p75, %p76
    %p79 = scmp.ne.s32.totalorder %s62, %s78
    %p80 = scmp.eq.s32.totalorder %s14, 0
    %p81 = por %p79, %p80
    %s82 = ssub.s32 %s15, %s27
    %s83 = ssub.s32 %s16, %s23
    %s84 = sor.u32 %s82, %s83
    %p85 = scmp.eq.s32.totalorder %s84, 0
    %s87 = sadd.s32 %s86, 1
    %s88 = scalar_select %p85, %s86, %s87
    %p91 = pneg %p85
    %p92 = scmp.eq.s32.totalorder %s8, 1
    %p93 = por %p91, %p92
    %p94 = scmp.ne.s32.totalorder %s86, %s89
    %p95 = scmp.eq.s32.totalorder %s8, 0
    %p96 = por %p94, %p95
    %p97 = scmp.ne.s32.totalorder %s86, %s89
    %p98 = scmp.eq.s32.totalorder %s13, 1
    %p99 = por %p97, %p98
    %p100 = scmp.ne.s32.totalorder %s89, %s90
    %p101 = scmp.eq.s32.totalorder %s13, 0
    %p102 = por %p100, %p101
    %p103 = scmp.ne.s32.totalorder %s89, %s90
    %p104 = scmp.eq.s32.totalorder %s14, 1
    %p105 = por %p103, %p104
    %p107 = scmp.ne.s32.totalorder %s90, %s106
    %p108 = scmp.eq.s32.totalorder %s14, 0
    %p109 = por %p107, %p108
    %p110 = scmp.le.s32.totalorder 1, %s8
    %p111 = scmp.lt.s32.totalorder %s8, 3
    %p112 = pnand %p110, %p111
    %p113 = pneg %p112
    // Predicated region
    $region9: #{refine_subnet_forward.25} parent=5 // pred_check
      _
    $region10: #{refine_subnet_forward.25} parent=5 // pred_check_branch
      %115 = sbr.rel (%p112) target = $region12
    $region11: #{refine_subnet_forward.25} parent=5 // pred_region
      %s116 = ssub.s32 %s8, 1
    $region12: #{refine_subnet_forward.25} parent=5 // pred_fallthru
      _
    %p117 = scmp.lt.s32.totalorder %s8, 2
    // Predicated region
    $region13: #{refine_subnet_forward.25} parent=5 // pred_check
      %p118 = pneg %p117
    $region14: #{refine_subnet_forward.25} parent=5 // pred_check_branch
      %120 = sbr.rel (%p118) target = $region16
    $region15: #{refine_subnet_forward.25} parent=5 // pred_region
      // Predicated region
      $region17: #{refine_subnet_forward.25} parent=15 // pred_check
        %p121 = pneg %p42
      $region18: #{refine_subnet_forward.25} parent=15 // pred_check_branch
        %123 = sbr.rel (%p121) target = $region20
      $region19: #{refine_subnet_forward.25} parent=15 // pred_region
        %s124 = smul.u32 32, %s16
        %p125 = scmp.lt.s32.totalorder %s15, 1
        %s126 = scalar_select %p125, %s15, 1
        %p127 = scmp.lt.s32.totalorder %s124, 31
        %s128 = scalar_select %p127, %s124, 31
        %s129 = smul.addr %s126, 32
        %s130 = sadd.s32 %s128, %s129
        %s131 = smul.addr %s130, 4
        %s132 = scalar_lea.vmem %s0, %s131
        %s133 = smul.u32 32, %s16
      $region20: #{refine_subnet_forward.25} parent=15 // pred_fallthru
        _
      // Predicated region
      $region21: #{refine_subnet_forward.25} parent=15 // pred_check
        %p134 = pneg %p68
      $region22: #{refine_subnet_forward.25} parent=15 // pred_check_branch
        %136 = sbr.rel (%p134) target = $region24
      $region23: #{refine_subnet_forward.25} parent=15 // pred_region
        %p137 = scmp.lt.s32.totalorder %s15, 1
        %s138 = scalar_select %p137, %s15, 1
        %s139 = smul.addr %s138, 2
        %s140 = scalar_lea.vmem %s1, %s139
      $region24: #{refine_subnet_forward.25} parent=15 // pred_fallthru
        _
    $region16: #{refine_subnet_forward.25} parent=5 // pred_fallthru
      _
    %p141 = scmp.le.s32.totalorder 1, %s8
    %p142 = scmp.lt.s32.totalorder %s8, 3
    %p143 = pnand %p141, %p142
    %p144 = pneg %p143
    // Predicated region
    $region25: #{refine_subnet_forward.25} parent=5 // pred_check
      _
    $region26: #{refine_subnet_forward.25} parent=5 // pred_check_branch
      %146 = sbr.rel (%p143) target = $region28
    $region27: #{refine_subnet_forward.25} parent=5 // pred_region
      %s147 = ssub.s32 %s8, 1
      %s148 = smul.u32 32, %s18
      %p149 = scmp.lt.s32.totalorder %s17, 1
      %s150 = scalar_select %p149, %s17, 1
      %p151 = scmp.lt.s32.totalorder %s148, 31
      %s152 = scalar_select %p151, %s148, 31
      %s153 = smul.addr %s150, 32
      %s154 = sadd.s32 %s152, %s153
      %s155 = smul.addr %s154, 4
      %s156 = scalar_lea.vmem %s0, %s155
      %p157 = pneg %p48
      %p158 = pneg %p45
      %p159 = scmp.lt.s32.totalorder %s17, 1
      %s160 = scalar_select %p159, %s17, 1
      %s161 = smul.addr %s160, 2
      %s162 = scalar_lea.vmem %s1, %s161
      %p163 = pneg %p74
      %p164 = pneg %p71
      %p165 = pneg %p102
      %p166 = pneg %p99
      %s167 = smul.u32 32, %s18
      %p168 = scmp.lt.s32.totalorder %s17, 1
      %s169 = scalar_select %p168, %s17, 1
      %p170 = scmp.lt.s32.totalorder %s167, 31
      %s171 = scalar_select %p170, %s167, 31
      %s172 = smul.addr %s169, 32
      %s173 = sadd.s32 %s171, %s172
      %s174 = smul.addr %s173, 4
      %s175 = scalar_lea.vmem %s2, %s174
      %s176 = smul.u32 32, %s18
      %p177 = scmp.lt.s32.totalorder %s17, 1
      %s178 = scalar_select %p177, %s17, 1
      %p179 = scmp.lt.s32.totalorder %s176, 31
      %s180 = scalar_select %p179, %s176, 31
      %s181 = smul.addr %s178, 32
      %s182 = sadd.s32 %s180, %s181
      %s183 = smul.addr %s182, 4
      %s184 = scalar_lea.vmem %s0, %s183
      %s185 = smul.u32 32, %s18
      %p186 = scmp.lt.s32.totalorder %s17, 1
      %s187 = scalar_select %p186, %s17, 1
      %s188 = smul.addr %s187, 2
      %s189 = scalar_lea.vmem %s1, %s188
      %s190 = smul.u32 32, %s18
      %p191 = scmp.lt.s32.totalorder %s17, 1
      %s192 = scalar_select %p191, %s17, 1
      %p193 = scmp.lt.s32.totalorder %s190, 31
      %s194 = scalar_select %p193, %s190, 31
      %s195 = smul.addr %s192, 32
      %s196 = sadd.s32 %s194, %s195
      %s197 = smul.addr %s196, 4
      %s198 = scalar_lea.vmem %s2, %s197
      %s199 = smul.u32 32, %s18
      %v200 = vld [vmem:[%s184] sm:$0xf]
      %v201 = vld [vmem:[%s184 + $0x4] sm:$0xf]
      %v202 = vld [vmem:[%s184 + $0x8] sm:$0xf]
      %v203 = vld [vmem:[%s184 + $0xc] sm:$0xf]
      %v204 = vld [vmem:[%s184 + $0x10] sm:$0xf]
      %v205 = vld [vmem:[%s184 + $0x14] sm:$0xf]
      %v206 = vld [vmem:[%s184 + $0x18] sm:$0xf]
      %v207 = vld [vmem:[%s184 + $0x1c] sm:$0xf]
      %v208 = vld [vmem:[%s184 + $0x20] sm:$0xf]
      %v209 = vld [vmem:[%s184 + $0x24] sm:$0xf]
      %v210 = vld [vmem:[%s184 + $0x28] sm:$0xf]
      %v211 = vld [vmem:[%s184 + $0x2c] sm:$0xf]
      %v212 = vld [vmem:[%s184 + $0x30] sm:$0xf]
      %v213 = vld [vmem:[%s184 + $0x34] sm:$0xf]
      %v214 = vld [vmem:[%s184 + $0x38] sm:$0xf]
      %v215 = vld [vmem:[%s184 + $0x3c] sm:$0xf]
      %v216 = vld [vmem:[%s184 + $0x40] sm:$0xf]
      %v217 = vld [vmem:[%s184 + $0x44] sm:$0xf]
      %v218 = vld [vmem:[%s184 + $0x48] sm:$0xf]
      %v219 = vld [vmem:[%s184 + $0x4c] sm:$0xf]
      %v220 = vld [vmem:[%s184 + $0x50] sm:$0xf]
      %v221 = vld [vmem:[%s184 + $0x54] sm:$0xf]
      %v222 = vld [vmem:[%s184 + $0x58] sm:$0xf]
      %v223 = vld [vmem:[%s184 + $0x5c] sm:$0xf]
      %v224 = vld [vmem:[%s184 + $0x60] sm:$0xf]
      %v225 = vld [vmem:[%s184 + $0x64] sm:$0xf]
      %v226 = vld [vmem:[%s184 + $0x68] sm:$0xf]
      %v227 = vld [vmem:[%s184 + $0x6c] sm:$0xf]
      %v228 = vld [vmem:[%s184 + $0x70] sm:$0xf]
      %v229 = vld [vmem:[%s184 + $0x74] sm:$0xf]
      %v230 = vld [vmem:[%s184 + $0x78] sm:$0xf]
      %v231 = vld [vmem:[%s184 + $0x7c] sm:$0xf]
      %v232 = vunpack.c.l.bf16 %v200
      %v233 = vunpack.c.l.bf16 %v201
      %v234 = vunpack.c.l.bf16 %v202
      %v235 = vunpack.c.l.bf16 %v203
      %v236 = vunpack.c.l.bf16 %v204
      %v237 = vunpack.c.l.bf16 %v205
      %v238 = vunpack.c.l.bf16 %v206
      %v239 = vunpack.c.l.bf16 %v207
      %v240 = vunpack.c.l.bf16 %v208
      %v241 = vunpack.c.l.bf16 %v209
      %v242 = vunpack.c.l.bf16 %v210
      %v243 = vunpack.c.l.bf16 %v211
      %v244 = vunpack.c.l.bf16 %v212
      %v245 = vunpack.c.l.bf16 %v213
      %v246 = vunpack.c.l.bf16 %v214
      %v247 = vunpack.c.l.bf16 %v215
      %v248 = vunpack.c.l.bf16 %v216
      %v249 = vunpack.c.l.bf16 %v217
      %v250 = vunpack.c.l.bf16 %v218
      %v251 = vunpack.c.l.bf16 %v219
      %v252 = vunpack.c.l.bf16 %v220
      %v253 = vunpack.c.l.bf16 %v221
      %v254 = vunpack.c.l.bf16 %v222
      %v255 = vunpack.c.l.bf16 %v223
      %v256 = vunpack.c.l.bf16 %v224
      %v257 = vunpack.c.l.bf16 %v225
      %v258 = vunpack.c.l.bf16 %v226
      %v259 = vunpack.c.l.bf16 %v227
      %v260 = vunpack.c.l.bf16 %v228
      %v261 = vunpack.c.l.bf16 %v229
      %v262 = vunpack.c.l.bf16 %v230
      %v263 = vunpack.c.l.bf16 %v231
      %v264 = vld [vmem:[%s189] sm:$0x1]
      %v265 = vlaneseq
      %v266 = vshrl.u32 %v265, 7
      %v267 = vsub.s32 0, %v266
      %v268 = vrot.slane %v264, %v267
      %v269 = vmul.f32 %v232, %v268
      %v270 = vmul.f32 %v233, %v268
      %v271 = vmul.f32 %v234, %v268
      %v272 = vmul.f32 %v235, %v268
      %v273 = vmul.f32 %v236, %v268
      %v274 = vmul.f32 %v237, %v268
      %v275 = vmul.f32 %v238, %v268
      %v276 = vmul.f32 %v239, %v268
      %v277 = vmul.f32 %v240, %v268
      %v278 = vmul.f32 %v241, %v268
      %v279 = vmul.f32 %v242, %v268
      %v280 = vmul.f32 %v243, %v268
      %v281 = vmul.f32 %v244, %v268
      %v282 = vmul.f32 %v245, %v268
      %v283 = vmul.f32 %v246, %v268
      %v284 = vmul.f32 %v247, %v268
      %v285 = vmul.f32 %v248, %v268
      %v286 = vmul.f32 %v249, %v268
      %v287 = vmul.f32 %v250, %v268
      %v288 = vmul.f32 %v251, %v268
      %v289 = vmul.f32 %v252, %v268
      %v290 = vmul.f32 %v253, %v268
      %v291 = vmul.f32 %v254, %v268
      %v292 = vmul.f32 %v255, %v268
      %v293 = vmul.f32 %v256, %v268
      %v294 = vmul.f32 %v257, %v268
      %v295 = vmul.f32 %v258, %v268
      %v296 = vmul.f32 %v259, %v268
      %v297 = vmul.f32 %v260, %v268
      %v298 = vmul.f32 %v261, %v268
      %v299 = vmul.f32 %v262, %v268
      %v300 = vmul.f32 %v263, %v268
      %v301 = vld [vmem:[%s189 + $0x1] sm:$0x1]
      %v302 = vlaneseq
      %v303 = vshrl.u32 %v302, 7
      %v304 = vsub.s32 0, %v303
      %v305 = vrot.slane %v301, %v304
      %v306 = vadd.f32 %v269, %v305
      %v307 = vadd.f32 %v270, %v305
      %v308 = vadd.f32 %v271, %v305
      %v309 = vadd.f32 %v272, %v305
      %v310 = vadd.f32 %v273, %v305
      %v311 = vadd.f32 %v274, %v305
      %v312 = vadd.f32 %v275, %v305
      %v313 = vadd.f32 %v276, %v305
      %v314 = vadd.f32 %v277, %v305
      %v315 = vadd.f32 %v278, %v305
      %v316 = vadd.f32 %v279, %v305
      %v317 = vadd.f32 %v280, %v305
      %v318 = vadd.f32 %v281, %v305
      %v319 = vadd.f32 %v282, %v305
      %v320 = vadd.f32 %v283, %v305
      %v321 = vadd.f32 %v284, %v305
      %v322 = vadd.f32 %v285, %v305
      %v323 = vadd.f32 %v286, %v305
      %v324 = vadd.f32 %v287, %v305
      %v325 = vadd.f32 %v288, %v305
      %v326 = vadd.f32 %v289, %v305
      %v327 = vadd.f32 %v290, %v305
      %v328 = vadd.f32 %v291, %v305
      %v329 = vadd.f32 %v292, %v305
      %v330 = vadd.f32 %v293, %v305
      %v331 = vadd.f32 %v294, %v305
      %v332 = vadd.f32 %v295, %v305
      %v333 = vadd.f32 %v296, %v305
      %v334 = vadd.f32 %v297, %v305
      %v335 = vadd.f32 %v298, %v305
      %v336 = vadd.f32 %v299, %v305
      %v337 = vadd.f32 %v300, %v305
      %v338 = vmax.f32 %v306, 0.0
      %v339 = vmax.f32 %v307, 0.0
      %v340 = vmax.f32 %v308, 0.0
      %v341 = vmax.f32 %v309, 0.0
      %v342 = vmax.f32 %v310, 0.0
      %v343 = vmax.f32 %v311, 0.0
      %v344 = vmax.f32 %v312, 0.0
      %v345 = vmax.f32 %v313, 0.0
      %v346 = vmax.f32 %v314, 0.0
      %v347 = vmax.f32 %v315, 0.0
      %v348 = vmax.f32 %v316, 0.0
      %v349 = vmax.f32 %v317, 0.0
      %v350 = vmax.f32 %v318, 0.0
      %v351 = vmax.f32 %v319, 0.0
      %v352 = vmax.f32 %v320, 0.0
      %v353 = vmax.f32 %v321, 0.0
      %v354 = vmax.f32 %v322, 0.0
      %v355 = vmax.f32 %v323, 0.0
      %v356 = vmax.f32 %v324, 0.0
      %v357 = vmax.f32 %v325, 0.0
      %v358 = vmax.f32 %v326, 0.0
      %v359 = vmax.f32 %v327, 0.0
      %v360 = vmax.f32 %v328, 0.0
      %v361 = vmax.f32 %v329, 0.0
      %v362 = vmax.f32 %v330, 0.0
      %v363 = vmax.f32 %v331, 0.0
      %v364 = vmax.f32 %v332, 0.0
      %v365 = vmax.f32 %v333, 0.0
      %v366 = vmax.f32 %v334, 0.0
      %v367 = vmax.f32 %v335, 0.0
      %v368 = vmax.f32 %v336, 0.0
      %v369 = vmax.f32 %v337, 0.0
      %v370 = vpack.c.bf16 %v339, %v338
      %v371 = vpack.c.bf16 %v341, %v340
      %v372 = vpack.c.bf16 %v343, %v342
      %v373 = vpack.c.bf16 %v345, %v344
      %v374 = vpack.c.bf16 %v347, %v346
      %v375 = vpack.c.bf16 %v349, %v348
      %v376 = vpack.c.bf16 %v351, %v350
      %v377 = vpack.c.bf16 %v353, %v352
      %v378 = vpack.c.bf16 %v355, %v354
      %v379 = vpack.c.bf16 %v357, %v356
      %v380 = vpack.c.bf16 %v359, %v358
      %v381 = vpack.c.bf16 %v361, %v360
      %v382 = vpack.c.bf16 %v363, %v362
      %v383 = vpack.c.bf16 %v365, %v364
      %v384 = vpack.c.bf16 %v367, %v366
      %v385 = vpack.c.bf16 %v369, %v368
      %v402 = vunpack.c.l.b16 %v370
      %v403 = vunpack.c.h.b16 %v370
      %v404 = vunpack.c.l.b16 %v371
      %v405 = vunpack.c.h.b16 %v371
      %v406 = vunpack.c.l.b16 %v372
      %v407 = vunpack.c.h.b16 %v372
      %v408 = vunpack.c.l.b16 %v373
      %v409 = vunpack.c.h.b16 %v373
      %v410 = vunpack.c.l.b16 %v374
      %v411 = vunpack.c.h.b16 %v374
      %v412 = vunpack.c.l.b16 %v375
      %v413 = vunpack.c.h.b16 %v375
      %v414 = vunpack.c.l.b16 %v376
      %v415 = vunpack.c.h.b16 %v376
      %v416 = vunpack.c.l.b16 %v377
      %v417 = vunpack.c.h.b16 %v377
      %v418 = vunpack.c.l.b16 %v378
      %v419 = vunpack.c.h.b16 %v378
      %v420 = vunpack.c.l.b16 %v379
      %v421 = vunpack.c.h.b16 %v379
      %v422 = vunpack.c.l.b16 %v380
      %v423 = vunpack.c.h.b16 %v380
      %v424 = vunpack.c.l.b16 %v381
      %v425 = vunpack.c.h.b16 %v381
      %v426 = vunpack.c.l.b16 %v382
      %v427 = vunpack.c.h.b16 %v382
      %v428 = vunpack.c.l.b16 %v383
      %v429 = vunpack.c.h.b16 %v383
      %v430 = vunpack.c.l.b16 %v384
      %v431 = vunpack.c.h.b16 %v384
      %v432 = vunpack.c.l.b16 %v385
      %v433 = vunpack.c.h.b16 %v385
      %v434 = vpack.c.b16 %v402, %v402
      %v435 = vpack.c.b16 %v403, %v403
      %v436 = vpack.c.b16 %v404, %v404
      %v437 = vpack.c.b16 %v405, %v405
      %v438 = vpack.c.b16 %v406, %v406
      %v439 = vpack.c.b16 %v407, %v407
      %v440 = vpack.c.b16 %v408, %v408
      %v441 = vpack.c.b16 %v409, %v409
      %v442 = vpack.c.b16 %v410, %v410
      %v443 = vpack.c.b16 %v411, %v411
      %v444 = vpack.c.b16 %v412, %v412
      %v445 = vpack.c.b16 %v413, %v413
      %v446 = vpack.c.b16 %v414, %v414
      %v447 = vpack.c.b16 %v415, %v415
      %v448 = vpack.c.b16 %v416, %v416
      %v449 = vpack.c.b16 %v417, %v417
      %v450 = vpack.c.b16 %v418, %v418
      %v451 = vpack.c.b16 %v419, %v419
      %v452 = vpack.c.b16 %v420, %v420
      %v453 = vpack.c.b16 %v421, %v421
      %v454 = vpack.c.b16 %v422, %v422
      %v455 = vpack.c.b16 %v423, %v423
      %v456 = vpack.c.b16 %v424, %v424
      %v457 = vpack.c.b16 %v425, %v425
      %v458 = vpack.c.b16 %v426, %v426
      %v459 = vpack.c.b16 %v427, %v427
      %v460 = vpack.c.b16 %v428, %v428
      %v461 = vpack.c.b16 %v429, %v429
      %v462 = vpack.c.b16 %v430, %v430
      %v463 = vpack.c.b16 %v431, %v431
      %v464 = vpack.c.b16 %v432, %v432
      %v465 = vpack.c.b16 %v433, %v433
      %vm498 = vcmask 257024
      %499 = vst.msk [vmem:[%s198] sm:$0xf] %vm498, %v434
      %500 = vst.msk [vmem:[%s198 + $0x4] sm:$0xf] %vm498, %v435
      %501 = vst.msk [vmem:[%s198 + $0x8] sm:$0xf] %vm498, %v436
      %502 = vst.msk [vmem:[%s198 + $0xc] sm:$0xf] %vm498, %v437
      %503 = vst.msk [vmem:[%s198 + $0x10] sm:$0xf] %vm498, %v438
      %504 = vst.msk [vmem:[%s198 + $0x14] sm:$0xf] %vm498, %v439
      %505 = vst.msk [vmem:[%s198 + $0x18] sm:$0xf] %vm498, %v440
      %506 = vst.msk [vmem:[%s198 + $0x1c] sm:$0xf] %vm498, %v441
      %507 = vst.msk [vmem:[%s198 + $0x20] sm:$0xf] %vm498, %v442
      %508 = vst.msk [vmem:[%s198 + $0x24] sm:$0xf] %vm498, %v443
      %509 = vst.msk [vmem:[%s198 + $0x28] sm:$0xf] %vm498, %v444
      %510 = vst.msk [vmem:[%s198 + $0x2c] sm:$0xf] %vm498, %v445
      %511 = vst.msk [vmem:[%s198 + $0x30] sm:$0xf] %vm498, %v446
      %512 = vst.msk [vmem:[%s198 + $0x34] sm:$0xf] %vm498, %v447
      %513 = vst.msk [vmem:[%s198 + $0x38] sm:$0xf] %vm498, %v448
      %514 = vst.msk [vmem:[%s198 + $0x3c] sm:$0xf] %vm498, %v449
      %515 = vst.msk [vmem:[%s198 + $0x40] sm:$0xf] %vm498, %v450
      %516 = vst.msk [vmem:[%s198 + $0x44] sm:$0xf] %vm498, %v451
      %517 = vst.msk [vmem:[%s198 + $0x48] sm:$0xf] %vm498, %v452
      %518 = vst.msk [vmem:[%s198 + $0x4c] sm:$0xf] %vm498, %v453
      %519 = vst.msk [vmem:[%s198 + $0x50] sm:$0xf] %vm498, %v454
      %520 = vst.msk [vmem:[%s198 + $0x54] sm:$0xf] %vm498, %v455
      %521 = vst.msk [vmem:[%s198 + $0x58] sm:$0xf] %vm498, %v456
      %522 = vst.msk [vmem:[%s198 + $0x5c] sm:$0xf] %vm498, %v457
      %523 = vst.msk [vmem:[%s198 + $0x60] sm:$0xf] %vm498, %v458
      %524 = vst.msk [vmem:[%s198 + $0x64] sm:$0xf] %vm498, %v459
      %525 = vst.msk [vmem:[%s198 + $0x68] sm:$0xf] %vm498, %v460
      %526 = vst.msk [vmem:[%s198 + $0x6c] sm:$0xf] %vm498, %v461
      %527 = vst.msk [vmem:[%s198 + $0x70] sm:$0xf] %vm498, %v462
      %528 = vst.msk [vmem:[%s198 + $0x74] sm:$0xf] %vm498, %v463
      %529 = vst.msk [vmem:[%s198 + $0x78] sm:$0xf] %vm498, %v464
      %530 = vst.msk [vmem:[%s198 + $0x7c] sm:$0xf] %vm498, %v465
      %s531 = smul.u32 32, %s18
      %p532 = scmp.lt.s32.totalorder %s17, 1
      %s533 = scalar_select %p532, %s17, 1
      %p534 = scmp.lt.s32.totalorder %s531, 31
      %s535 = scalar_select %p534, %s531, 31
      %s536 = smul.addr %s533, 32
      %s537 = sadd.s32 %s535, %s536
      %s538 = smul.addr %s537, 4
      %s539 = scalar_lea.vmem %s2, %s538
      // Predicated region
      $region29: #{refine_subnet_forward.25} parent=27 // pred_check
        %p540 = pneg %p99
      $region30: #{refine_subnet_forward.25} parent=27 // pred_check_branch
        %542 = sbr.rel (%p540) target = $region32
      $region31: #{refine_subnet_forward.25} parent=27 // pred_region
        %s543 = smul.u32 32, %s18
      $region32: #{refine_subnet_forward.25} parent=27 // pred_fallthru
        _
    $region28: #{refine_subnet_forward.25} parent=5 // pred_fallthru
      _
    %p544 = scmp.le.s32.totalorder 2, %s8
    // Predicated region
    $region33: #{refine_subnet_forward.25} parent=5 // pred_check
      %p545 = pneg %p544
    $region34: #{refine_subnet_forward.25} parent=5 // pred_check_branch
      %547 = sbr.rel (%p545) target = $region36
    $region35: #{refine_subnet_forward.25} parent=5 // pred_region
      %s548 = ssub.s32 %s8, 2
      // Predicated region
      $region37: #{refine_subnet_forward.25} parent=35 // pred_check
        %p549 = pneg %p105
      $region38: #{refine_subnet_forward.25} parent=35 // pred_check_branch
        %551 = sbr.rel (%p549) target = $region40
      $region39: #{refine_subnet_forward.25} parent=35 // pred_region
        %s552 = smul.u32 32, %s20
        %p553 = scmp.lt.s32.totalorder %s19, 1
        %s554 = scalar_select %p553, %s19, 1
        %p555 = scmp.lt.s32.totalorder %s552, 31
        %s556 = scalar_select %p555, %s552, 31
        %s557 = smul.addr %s554, 32
        %s558 = sadd.s32 %s556, %s557
        %s559 = smul.addr %s558, 4
        %s560 = scalar_lea.vmem %s2, %s559
      $region40: #{refine_subnet_forward.25} parent=35 // pred_fallthru
        _
    $region36: #{refine_subnet_forward.25} parent=5 // pred_fallthru
      _
  $region6: #{refine_subnet_forward.25} parent=0 // loop_footer
    %s12 = sadd.s32 1, %s8
  $region7: #{refine_subnet_forward.25} parent=0 // loop_footer_branch
    %7 = sbr.rel target = $region3
  $region8: #{refine_subnet_forward.25} parent=0 // loop_exit
    _

// kernel: refine_subnet_forward.24
$region0: #{refine_subnet_forward.24}
  #allocation0 [shape = 'u32[]', space=smem, size = 0x4, offset = 0x4, fixed_abs, tag = 'smem constant byte address 0x4 - core index']
  #allocation1 [shape = 'u32[144,128]{1,0:T(1,128)}', space=vmem, size = 0x12000, scoped, tag = 'internal scratch']
  %s0 = inlined_call_operand.vmem [shape: bf16[2,256,256], index: 0, kind: input, shape index: {}]
  %s1 = inlined_call_operand.vmem [shape: bf16[256,32], index: 1, kind: input, shape index: {}]
  %s2 = inlined_call_operand.vmem [shape: bf16[2,256,32], index: 2, kind: output, shape index: {0}]
  %s3 = inlined_call_operand.vmem [shape: f32[2,1,2,32], index: 3, kind: output, shape index: {1}]
  %4 = xla_tuple %s2, %s3
  %s5 = sld [smem:[#allocation0]]
  $region49: #{refine_subnet_forward.24} parent=0
    _
  %s7 = ssub.s32 1, %s5
  %s8 = scalar_select 0, %s7, %s5
  loop: start=0, step=1, limit=4
  $region2: #{refine_subnet_forward.24} parent=0 // loop_pre_header
    _
  $region3: #{refine_subnet_forward.24} parent=0 // loop_header
    %s10 = sphi 0, %s14
    %p11 = scmp.ge.s32.totalorder %s10, 4
    %s17 = sphi 0, %s29
    %s18 = sphi 0, %s25
    %s19 = sphi 0, %s17
    %s20 = sphi 0, %s18
    %s21 = sphi 0, %s19
    %s22 = sphi 0, %s20
    %s34 = sphi 0, %s36
    %s37 = sphi 0, %s34
    %s38 = sphi 0, %s37
    %s54 = sphi 0, %s38
    %s58 = sphi 0, %s58
    %s60 = sphi 0, %s58
    %s61 = sphi 0, %s60
    %s75 = sphi 0, %s61
    %s83 = sphi 0, %s85
    %s86 = sphi 0, %s83
    %s87 = sphi 0, %s86
    %s103 = sphi 0, %s87
    %s111 = sphi 0, %s113
    %s114 = sphi 0, %s111
    %s115 = sphi 0, %s114
    %s131 = sphi 0, %s115
  $region4: #{refine_subnet_forward.24} parent=0 // loop_header_branch
    %13 = sbr.rel (%p11) target = $region8
  $region5: #{refine_subnet_forward.24} parent=0 // loop_body
    %s15 = ssub.s32 %s10, 1
    %s16 = ssub.s32 %s10, 2
    %s23 = sadd.s32 1, %s18
    %p24 = scmp.ge.s32.totalorder %s23, 1
    %s25 = scalar_select %p24, 0, %s23
    %s26 = sadd.s32 1, %s17
    %s27 = scalar_select %p24, %s26, %s17
    %p28 = scmp.ge.s32.totalorder %s27, 2
    %s29 = scalar_select %p28, 0, %s27
    %s30 = ssub.s32 %s17, %s29
    %s31 = ssub.s32 %s18, %s25
    %s32 = sor.u32 %s30, %s31
    %p33 = scmp.eq.s32.totalorder %s32, 0
    %s35 = sadd.s32 %s34, 1
    %s36 = scalar_select %p33, %s34, %s35
    %p39 = pneg %p33
    %p40 = scmp.eq.s32.totalorder %s10, 1
    %p41 = por %p39, %p40
    %p42 = scmp.ne.s32.totalorder %s34, %s37
    %p43 = scmp.eq.s32.totalorder %s10, 0
    %p44 = por %p42, %p43
    %p45 = scmp.ne.s32.totalorder %s34, %s37
    %p46 = scmp.eq.s32.totalorder %s15, 1
    %p47 = por %p45, %p46
    %p48 = scmp.ne.s32.totalorder %s37, %s38
    %p49 = scmp.eq.s32.totalorder %s15, 0
    %p50 = por %p48, %p49
    %p51 = scmp.ne.s32.totalorder %s37, %s38
    %p52 = scmp.eq.s32.totalorder %s16, 1
    %p53 = por %p51, %p52
    %p55 = scmp.ne.s32.totalorder %s38, %s54
    %p56 = scmp.eq.s32.totalorder %s16, 0
    %p57 = por %p55, %p56
    %s59 = sadd.s32 %s58, 1
    %p62 = scmp.eq.s32.totalorder %s10, 1
    %p63 = scmp.ne.s32.totalorder %s58, %s60
    %p64 = scmp.eq.s32.totalorder %s10, 0
    %p65 = por %p63, %p64
    %p66 = scmp.ne.s32.totalorder %s58, %s60
    %p67 = scmp.eq.s32.totalorder %s15, 1
    %p68 = por %p66, %p67
    %p69 = scmp.ne.s32.totalorder %s60, %s61
    %p70 = scmp.eq.s32.totalorder %s15, 0
    %p71 = por %p69, %p70
    %p72 = scmp.ne.s32.totalorder %s60, %s61
    %p73 = scmp.eq.s32.totalorder %s16, 1
    %p74 = por %p72, %p73
    %p76 = scmp.ne.s32.totalorder %s61, %s75
    %p77 = scmp.eq.s32.totalorder %s16, 0
    %p78 = por %p76, %p77
    %s79 = ssub.s32 %s17, %s29
    %s80 = ssub.s32 %s18, %s25
    %s81 = sor.u32 %s79, %s80
    %p82 = scmp.eq.s32.totalorder %s81, 0
    %s84 = sadd.s32 %s83, 1
    %s85 = scalar_select %p82, %s83, %s84
    %p88 = pneg %p82
    %p89 = scmp.eq.s32.totalorder %s10, 1
    %p90 = por %p88, %p89
    %p91 = scmp.ne.s32.totalorder %s83, %s86
    %p92 = scmp.eq.s32.totalorder %s10, 0
    %p93 = por %p91, %p92
    %p94 = scmp.ne.s32.totalorder %s83, %s86
    %p95 = scmp.eq.s32.totalorder %s15, 1
    %p96 = por %p94, %p95
    %p97 = scmp.ne.s32.totalorder %s86, %s87
    %p98 = scmp.eq.s32.totalorder %s15, 0
    %p99 = por %p97, %p98
    %p100 = scmp.ne.s32.totalorder %s86, %s87
    %p101 = scmp.eq.s32.totalorder %s16, 1
    %p102 = por %p100, %p101
    %p104 = scmp.ne.s32.totalorder %s87, %s103
    %p105 = scmp.eq.s32.totalorder %s16, 0
    %p106 = por %p104, %p105
    %s107 = ssub.s32 %s17, %s29
    %s108 = ssub.s32 %s18, %s25
    %s109 = sor.u32 %s107, %s108
    %p110 = scmp.eq.s32.totalorder %s109, 0
    %s112 = sadd.s32 %s111, 1
    %s113 = scalar_select %p110, %s111, %s112
    %p116 = pneg %p110
    %p117 = scmp.eq.s32.totalorder %s10, 1
    %p118 = por %p116, %p117
    %p119 = scmp.ne.s32.totalorder %s111, %s114
    %p120 = scmp.eq.s32.totalorder %s10, 0
    %p121 = por %p119, %p120
    %p122 = scmp.ne.s32.totalorder %s111, %s114
    %p123 = scmp.eq.s32.totalorder %s15, 1
    %p124 = por %p122, %p123
    %p125 = scmp.ne.s32.totalorder %s114, %s115
    %p126 = scmp.eq.s32.totalorder %s15, 0
    %p127 = por %p125, %p126
    %p128 = scmp.ne.s32.totalorder %s114, %s115
    %p129 = scmp.eq.s32.totalorder %s16, 1
    %p130 = por %p128, %p129
    %p132 = scmp.ne.s32.totalorder %s115, %s131
    %p133 = scmp.eq.s32.totalorder %s16, 0
    %p134 = por %p132, %p133
    %p135 = scmp.le.s32.totalorder 1, %s10
    %p136 = scmp.lt.s32.totalorder %s10, 3
    %p137 = pnand %p135, %p136
    %p138 = pneg %p137
    // Predicated region
    $region9: #{refine_subnet_forward.24} parent=5 // pred_check
      _
    $region10: #{refine_subnet_forward.24} parent=5 // pred_check_branch
      %140 = sbr.rel (%p137) target = $region12
    $region11: #{refine_subnet_forward.24} parent=5 // pred_region
      %s141 = ssub.s32 %s10, 1
      // Predicated region
      $region13: #{refine_subnet_forward.24} parent=11 // pred_check
        %p142 = pneg %p71
      $region14: #{refine_subnet_forward.24} parent=11 // pred_check_branch
        %144 = sbr.rel (%p142) target = $region16
      $region15: #{refine_subnet_forward.24} parent=11 // pred_region
        _
      $region16: #{refine_subnet_forward.24} parent=11 // pred_fallthru
        _
    $region12: #{refine_subnet_forward.24} parent=5 // pred_fallthru
      _
    %p145 = scmp.lt.s32.totalorder %s10, 2
    // Predicated region
    $region17: #{refine_subnet_forward.24} parent=5 // pred_check
      %p146 = pneg %p145
    $region18: #{refine_subnet_forward.24} parent=5 // pred_check_branch
      %148 = sbr.rel (%p146) target = $region20
    $region19: #{refine_subnet_forward.24} parent=5 // pred_region
      // Predicated region
      $region21: #{refine_subnet_forward.24} parent=19 // pred_check
        %p149 = pneg %p44
      $region22: #{refine_subnet_forward.24} parent=19 // pred_check_branch
        %151 = sbr.rel (%p149) target = $region24
      $region23: #{refine_subnet_forward.24} parent=19 // pred_region
        %s152 = smul.u32 32, %s18
        %p153 = scmp.lt.s32.totalorder %s17, 1
        %s154 = scalar_select %p153, %s17, 1
        %p155 = scmp.lt.s32.totalorder %s152, 31
        %s156 = scalar_select %p155, %s152, 31
        %s157 = smul.addr %s156, 2
        %s158 = smul.addr %s154, 64
        %s159 = sadd.s32 %s157, %s158
        %s160 = smul.addr %s159, 4
        %s161 = scalar_lea.vmem %s0, %s160
        %s162 = smul.u32 32, %s18
      $region24: #{refine_subnet_forward.24} parent=19 // pred_fallthru
        _
    $region20: #{refine_subnet_forward.24} parent=5 // pred_fallthru
      _
    %p163 = scmp.le.s32.totalorder 1, %s10
    %p164 = scmp.lt.s32.totalorder %s10, 3
    %p165 = pnand %p163, %p164
    %p166 = pneg %p165
    // Predicated region
    $region25: #{refine_subnet_forward.24} parent=5 // pred_check
      _
    $region26: #{refine_subnet_forward.24} parent=5 // pred_check_branch
      %168 = sbr.rel (%p165) target = $region28
    $region27: #{refine_subnet_forward.24} parent=5 // pred_region
      %s169 = ssub.s32 %s10, 1
      %s170 = smul.u32 32, %s20
      %p171 = scmp.lt.s32.totalorder %s19, 1
      %s172 = scalar_select %p171, %s19, 1
      %p173 = scmp.lt.s32.totalorder %s170, 31
      %s174 = scalar_select %p173, %s170, 31
      %s175 = smul.addr %s174, 2
      %s176 = smul.addr %s172, 64
      %s177 = sadd.s32 %s175, %s176
      %s178 = smul.addr %s177, 4
      %s179 = scalar_lea.vmem %s0, %s178
      %p180 = pneg %p50
      %p181 = pneg %p47
      %p182 = pneg %p71
      %p183 = pneg %p68
      %p184 = pneg %p99
      %p185 = pneg %p96
      %s186 = smul.u32 32, %s20
      %p187 = scmp.lt.s32.totalorder %s19, 1
      %s188 = scalar_select %p187, %s19, 1
      %p189 = scmp.lt.s32.totalorder %s186, 31
      %s190 = scalar_select %p189, %s186, 31
      %s191 = smul.addr %s188, 32
      %s192 = sadd.s32 %s190, %s191
      %s193 = smul.addr %s192, 4
      %s194 = scalar_lea.vmem %s2, %s193
      %p195 = pneg %p127
      %p196 = pneg %p124
      %p197 = scmp.lt.s32.totalorder %s19, 1
      %s198 = scalar_select %p197, %s19, 1
      %p199 = scmp.lt.s32.totalorder %s20, 0
      %s200 = scalar_select %p199, %s20, 0
      %s201 = sadd.s32 %s200, %s198
      %s202 = smul.addr %s201, 2
      %s203 = scalar_lea.vmem %s3, %s202
      %s204 = smul.u32 32, %s20
      %p205 = scmp.lt.s32.totalorder %s19, 1
      %s206 = scalar_select %p205, %s19, 1
      %p207 = scmp.lt.s32.totalorder %s204, 31
      %s208 = scalar_select %p207, %s204, 31
      %s209 = smul.addr %s208, 2
      %s210 = smul.addr %s206, 64
      %s211 = sadd.s32 %s209, %s210
      %s212 = smul.addr %s211, 4
      %s213 = scalar_lea.vmem %s0, %s212
      %s214 = smul.u32 32, %s20
      %s215 = smul.u32 32, %s20
      %p216 = scmp.lt.s32.totalorder %s19, 1
      %s217 = scalar_select %p216, %s19, 1
      %p218 = scmp.lt.s32.totalorder %s215, 31
      %s219 = scalar_select %p218, %s215, 31
      %s220 = smul.addr %s217, 32
      %s221 = sadd.s32 %s219, %s220
      %s222 = smul.addr %s221, 4
      %s223 = scalar_lea.vmem %s2, %s222
      %s224 = smul.u32 32, %s20
      %p225 = scmp.lt.s32.totalorder %s19, 1
      %s226 = scalar_select %p225, %s19, 1
      %p227 = scmp.lt.s32.totalorder %s20, 0
      %s228 = scalar_select %p227, %s20, 0
      %s229 = sadd.s32 %s228, %s226
      %s230 = smul.addr %s229, 2
      %s231 = scalar_lea.vmem %s3, %s230
      %v233 = vld [vmem:[%s213] sm:$0xff]
      %v234 = vld [vmem:[%s213 + $0x8] sm:$0xff]
      %v235 = vld [vmem:[%s213 + $0x10] sm:$0xff]
      %v236 = vld [vmem:[%s213 + $0x18] sm:$0xff]
      %v237 = vld [vmem:[%s213 + $0x20] sm:$0xff]
      %v238 = vld [vmem:[%s213 + $0x28] sm:$0xff]
      %v239 = vld [vmem:[%s213 + $0x30] sm:$0xff]
      %v240 = vld [vmem:[%s213 + $0x38] sm:$0xff]
      %v241 = vld [vmem:[%s213 + $0x40] sm:$0xff]
      %v242 = vld [vmem:[%s213 + $0x48] sm:$0xff]
      %v243 = vld [vmem:[%s213 + $0x50] sm:$0xff]
      %v244 = vld [vmem:[%s213 + $0x58] sm:$0xff]
      %v245 = vld [vmem:[%s213 + $0x60] sm:$0xff]
      %v246 = vld [vmem:[%s213 + $0x68] sm:$0xff]
      %v247 = vld [vmem:[%s213 + $0x70] sm:$0xff]
      %v248 = vld [vmem:[%s213 + $0x78] sm:$0xff]
      %v249 = vld [vmem:[%s213 + $0x80] sm:$0xff]
      %v250 = vld [vmem:[%s213 + $0x88] sm:$0xff]
      %v251 = vld [vmem:[%s213 + $0x90] sm:$0xff]
      %v252 = vld [vmem:[%s213 + $0x98] sm:$0xff]
      %v253 = vld [vmem:[%s213 + $0xa0] sm:$0xff]
      %v254 = vld [vmem:[%s213 + $0xa8] sm:$0xff]
      %v255 = vld [vmem:[%s213 + $0xb0] sm:$0xff]
      %v256 = vld [vmem:[%s213 + $0xb8] sm:$0xff]
      %v257 = vld [vmem:[%s213 + $0xc0] sm:$0xff]
      %v258 = vld [vmem:[%s213 + $0xc8] sm:$0xff]
      %v259 = vld [vmem:[%s213 + $0xd0] sm:$0xff]
      %v260 = vld [vmem:[%s213 + $0xd8] sm:$0xff]
      %v261 = vld [vmem:[%s213 + $0xe0] sm:$0xff]
      %v262 = vld [vmem:[%s213 + $0xe8] sm:$0xff]
      %v263 = vld [vmem:[%s213 + $0xf0] sm:$0xff]
      %v264 = vld [vmem:[%s213 + $0xf8] sm:$0xff]
      %v265 = vld [vmem:[%s1] sm:$0xf]
      %v266 = vld [vmem:[%s1 + $0x4] sm:$0xf]
      %v267 = vld [vmem:[%s1 + $0x8] sm:$0xf]
      %v268 = vld [vmem:[%s1 + $0xc] sm:$0xf]
      %v269 = vld [vmem:[%s1 + $0x10] sm:$0xf]
      %v270 = vld [vmem:[%s1 + $0x14] sm:$0xf]
      %v271 = vld [vmem:[%s1 + $0x18] sm:$0xf]
      %v272 = vld [vmem:[%s1 + $0x1c] sm:$0xf]
      %v273 = vld [vmem:[%s1 + $0x20] sm:$0xf]
      %v274 = vld [vmem:[%s1 + $0x24] sm:$0xf]
      %v275 = vld [vmem:[%s1 + $0x28] sm:$0xf]
      %v276 = vld [vmem:[%s1 + $0x2c] sm:$0xf]
      %v277 = vld [vmem:[%s1 + $0x30] sm:$0xf]
      %v278 = vld [vmem:[%s1 + $0x34] sm:$0xf]
      %v279 = vld [vmem:[%s1 + $0x38] sm:$0xf]
      %v280 = vld [vmem:[%s1 + $0x3c] sm:$0xf]
      %v281 = vld [vmem:[%s1 + $0x40] sm:$0xf]
      %v282 = vld [vmem:[%s1 + $0x44] sm:$0xf]
      %v283 = vld [vmem:[%s1 + $0x48] sm:$0xf]
      %v284 = vld [vmem:[%s1 + $0x4c] sm:$0xf]
      %v285 = vld [vmem:[%s1 + $0x50] sm:$0xf]
      %v286 = vld [vmem:[%s1 + $0x54] sm:$0xf]
      %v287 = vld [vmem:[%s1 + $0x58] sm:$0xf]
      %v288 = vld [vmem:[%s1 + $0x5c] sm:$0xf]
      %v289 = vld [vmem:[%s1 + $0x60] sm:$0xf]
      %v290 = vld [vmem:[%s1 + $0x64] sm:$0xf]
      %v291 = vld [vmem:[%s1 + $0x68] sm:$0xf]
      %v292 = vld [vmem:[%s1 + $0x6c] sm:$0xf]
      %v293 = vld [vmem:[%s1 + $0x70] sm:$0xf]
      %v294 = vld [vmem:[%s1 + $0x74] sm:$0xf]
      %v295 = vld [vmem:[%s1 + $0x78] sm:$0xf]
      %v296 = vld [vmem:[%s1 + $0x7c] sm:$0xf]
      %v329 = vunpack.c.l.b16 %v233
      %v330 = vunpack.c.h.b16 %v233
      %v331 = vunpack.c.l.b16 %v234
      %v332 = vunpack.c.h.b16 %v234
      %v333 = vunpack.c.l.b16 %v235
      %v334 = vunpack.c.h.b16 %v235
      %v335 = vunpack.c.l.b16 %v236
      %v336 = vunpack.c.h.b16 %v236
      %v337 = vunpack.c.l.b16 %v237
      %v338 = vunpack.c.h.b16 %v237
      %v339 = vunpack.c.l.b16 %v238
      %v340 = vunpack.c.h.b16 %v238
      %v341 = vunpack.c.l.b16 %v239
      %v342 = vunpack.c.h.b16 %v239
      %v343 = vunpack.c.l.b16 %v240
      %v344 = vunpack.c.h.b16 %v240
      %v345 = vunpack.c.l.b16 %v241
      %v346 = vunpack.c.h.b16 %v241
      %v347 = vunpack.c.l.b16 %v242
      %v348 = vunpack.c.h.b16 %v242
      %v349 = vunpack.c.l.b16 %v243
      %v350 = vunpack.c.h.b16 %v243
      %v351 = vunpack.c.l.b16 %v244
      %v352 = vunpack.c.h.b16 %v244
      %v353 = vunpack.c.l.b16 %v245
      %v354 = vunpack.c.h.b16 %v245
      %v355 = vunpack.c.l.b16 %v246
      %v356 = vunpack.c.h.b16 %v246
      %v357 = vunpack.c.l.b16 %v247
      %v358 = vunpack.c.h.b16 %v247
      %v359 = vunpack.c.l.b16 %v248
      %v360 = vunpack.c.h.b16 %v248
      %v361 = vunpack.c.l.b16 %v249
      %v362 = vunpack.c.h.b16 %v249
      %v363 = vunpack.c.l.b16 %v250
      %v364 = vunpack.c.h.b16 %v250
      %v365 = vunpack.c.l.b16 %v251
      %v366 = vunpack.c.h.b16 %v251
      %v367 = vunpack.c.l.b16 %v252
      %v368 = vunpack.c.h.b16 %v252
      %v369 = vunpack.c.l.b16 %v253
      %v370 = vunpack.c.h.b16 %v253
      %v371 = vunpack.c.l.b16 %v254
      %v372 = vunpack.c.h.b16 %v254
      %v373 = vunpack.c.l.b16 %v255
      %v374 = vunpack.c.h.b16 %v255
      %v375 = vunpack.c.l.b16 %v256
      %v376 = vunpack.c.h.b16 %v256
      %v377 = vunpack.c.l.b16 %v257
      %v378 = vunpack.c.h.b16 %v257
      %v379 = vunpack.c.l.b16 %v258
      %v380 = vunpack.c.h.b16 %v258
      %v381 = vunpack.c.l.b16 %v259
      %v382 = vunpack.c.h.b16 %v259
      %v383 = vunpack.c.l.b16 %v260
      %v384 = vunpack.c.h.b16 %v260
      %v385 = vunpack.c.l.b16 %v261
      %v386 = vunpack.c.h.b16 %v261
      %v387 = vunpack.c.l.b16 %v262
      %v388 = vunpack.c.h.b16 %v262
      %v389 = vunpack.c.l.b16 %v263
      %v390 = vunpack.c.h.b16 %v263
      %v391 = vunpack.c.l.b16 %v264
      %v392 = vunpack.c.h.b16 %v264
      %v393 = vpack.c.b16 %v331, %v329
      %v394 = vpack.c.b16 %v332, %v330
      %v395 = vpack.c.b16 %v335, %v333
      %v396 = vpack.c.b16 %v336, %v334
      %v397 = vpack.c.b16 %v339, %v337
      %v398 = vpack.c.b16 %v340, %v338
      %v399 = vpack.c.b16 %v343, %v341
      %v400 = vpack.c.b16 %v344, %v342
      %v401 = vpack.c.b16 %v347, %v345
      %v402 = vpack.c.b16 %v348, %v346
      %v403 = vpack.c.b16 %v351, %v349
      %v404 = vpack.c.b16 %v352, %v350
      %v405 = vpack.c.b16 %v355, %v353
      %v406 = vpack.c.b16 %v356, %v354
      %v407 = vpack.c.b16 %v359, %v357
      %v408 = vpack.c.b16 %v360, %v358
      %v409 = vpack.c.b16 %v363, %v361
      %v410 = vpack.c.b16 %v364, %v362
      %v411 = vpack.c.b16 %v367, %v365
      %v412 = vpack.c.b16 %v368, %v366
      %v413 = vpack.c.b16 %v371, %v369
      %v414 = vpack.c.b16 %v372, %v370
      %v415 = vpack.c.b16 %v375, %v373
      %v416 = vpack.c.b16 %v376, %v374
      %v417 = vpack.c.b16 %v379, %v377
      %v418 = vpack.c.b16 %v380, %v378
      %v419 = vpack.c.b16 %v383, %v381
      %v420 = vpack.c.b16 %v384, %v382
      %v421 = vpack.c.b16 %v387, %v385
      %v422 = vpack.c.b16 %v388, %v386
      %v423 = vpack.c.b16 %v391, %v389
      %v424 = vpack.c.b16 %v392, %v390
      %v489 = vunpack.c.l.b16 %v265
      %v490 = vunpack.c.l.b16 %v266
      %v491 = vunpack.c.l.b16 %v267
      %v492 = vunpack.c.l.b16 %v268
      %v493 = vunpack.c.l.b16 %v269
      %v494 = vunpack.c.l.b16 %v270
      %v495 = vunpack.c.l.b16 %v271
      %v496 = vunpack.c.l.b16 %v272
      %v497 = vunpack.c.l.b16 %v273
      %v498 = vunpack.c.l.b16 %v274
      %v499 = vunpack.c.l.b16 %v275
      %v500 = vunpack.c.l.b16 %v276
      %v501 = vunpack.c.l.b16 %v277
      %v502 = vunpack.c.l.b16 %v278
      %v503 = vunpack.c.l.b16 %v279
      %v504 = vunpack.c.l.b16 %v280
      %v505 = vunpack.c.l.b16 %v281
      %v506 = vunpack.c.l.b16 %v282
      %v507 = vunpack.c.l.b16 %v283
      %v508 = vunpack.c.l.b16 %v284
      %v509 = vunpack.c.l.b16 %v285
      %v510 = vunpack.c.l.b16 %v286
      %v511 = vunpack.c.l.b16 %v287
      %v512 = vunpack.c.l.b16 %v288
      %v513 = vunpack.c.l.b16 %v289
      %v514 = vunpack.c.l.b16 %v290
      %v515 = vunpack.c.l.b16 %v291
      %v516 = vunpack.c.l.b16 %v292
      %v517 = vunpack.c.l.b16 %v293
      %v518 = vunpack.c.l.b16 %v294
      %v519 = vunpack.c.l.b16 %v295
      %v520 = vunpack.c.l.b16 %v296
      %v521 = vpack.c.b16 %v490, %v489
      %v522 = vpack.c.b16 %v492, %v491
      %v523 = vpack.c.b16 %v494, %v493
      %v524 = vpack.c.b16 %v496, %v495
      %v525 = vpack.c.b16 %v498, %v497
      %v526 = vpack.c.b16 %v500, %v499
      %v527 = vpack.c.b16 %v502, %v501
      %v528 = vpack.c.b16 %v504, %v503
      %v529 = vpack.c.b16 %v506, %v505
      %v530 = vpack.c.b16 %v508, %v507
      %v531 = vpack.c.b16 %v510, %v509
      %v532 = vpack.c.b16 %v512, %v511
      %v533 = vpack.c.b16 %v514, %v513
      %v534 = vpack.c.b16 %v516, %v515
      %v535 = vpack.c.b16 %v518, %v517
      %v536 = vpack.c.b16 %v520, %v519
      %553 = vmatprep.subr.bf16.mxu0 0
      %554 = vmatpush1.bf16.msra.mxu0 %v521
      %555 = vmatprep.subr.bf16.mxu0 0
      %556 = vmatpush1.bf16.msra.mxu0 %v522
      %557 = vmatprep.subr.bf16.mxu0 0
      %558 = vmatpush1.bf16.msra.mxu0 %v523
      %559 = vmatprep.subr.bf16.mxu0 0
      %560 = vmatpush1.bf16.msra.mxu0 %v524
      %561 = vmatprep.subr.bf16.mxu0 0
      %562 = vmatpush1.bf16.msra.mxu0 %v525
      %563 = vmatprep.subr.bf16.mxu0 0
      %564 = vmatpush1.bf16.msra.mxu0 %v526
      %565 = vmatprep.subr.bf16.mxu0 0
      %566 = vmatpush1.bf16.msra.mxu0 %v527
      %567 = vmatprep.subr.bf16.mxu0 0
      %568 = vmatpush1.bf16.msra.mxu0 %v528
      %569 = vmatprep.subr.bf16.mxu0 0
      %570 = vmatpush1.bf16.msra.mxu0 %v529
      %571 = vmatprep.subr.bf16.mxu0 0
      %572 = vmatpush1.bf16.msra.mxu0 %v530
      %573 = vmatprep.subr.bf16.mxu0 0
      %574 = vmatpush1.bf16.msra.mxu0 %v531
      %575 = vmatprep.subr.bf16.mxu0 0
      %576 = vmatpush1.bf16.msra.mxu0 %v532
      %577 = vmatprep.subr.bf16.mxu0 0
      %578 = vmatpush1.bf16.msra.mxu0 %v533
      %579 = vmatprep.subr.bf16.mxu0 0
      %580 = vmatpush1.bf16.msra.mxu0 %v534
      %581 = vmatprep.subr.bf16.mxu0 0
      %582 = vmatpush1.bf16.msra.mxu0 %v535
      %583 = vmatprep.subr.bf16.mxu0 0
      %584 = vmatpush1.bf16.msra.mxu0 %v536
      %585 = vmatprep.mubr.bf16.mxu0 %v394
      %586 = vmatmul.mubr.bf16.gmra.mrb[0].mxu0 %v393
      %v587 = vpop.f32.mrb[0].mxu0
      %v588 = vadd.f32 0.0, %v587
      %v589 = vpop.f32.mrb[0].mxu0
      %v590 = vpop.f32.mrb[0].mxu0
      %v591 = vadd.f32 0.0, %v590
      %v592 = vpop.f32.mrb[0].mxu0
      %593 = vmatprep.mubr.bf16.mxu0 %v396
      %594 = vmatmul.mubr.bf16.gmra.mrb[0].mxu0 %v395
      %v595 = vpop.f32.mrb[0].mxu0
      %v596 = vadd.f32 0.0, %v595
      %v597 = vpop.f32.mrb[0].mxu0
      %v598 = vpop.f32.mrb[0].mxu0
      %v599 = vadd.f32 0.0, %v598
      %v600 = vpop.f32.mrb[0].mxu0
      %601 = vmatprep.mubr.bf16.mxu0 %v398
      %602 = vmatmul.mubr.bf16.gmra.mrb[0].mxu0 %v397
      %v603 = vpop.f32.mrb[0].mxu0
      %v604 = vadd.f32 0.0, %v603
      %v605 = vpop.f32.mrb[0].mxu0
      %v606 = vpop.f32.mrb[0].mxu0
      %v607 = vadd.f32 0.0, %v606
      %v608 = vpop.f32.mrb[0].mxu0
      %609 = vmatprep.mubr.bf16.mxu0 %v400
      %610 = vmatmul.mubr.bf16.gmra.mrb[0].mxu0 %v399
      %v611 = vpop.f32.mrb[0].mxu0
      %v612 = vadd.f32 0.0, %v611
      %v613 = vpop.f32.mrb[0].mxu0
      %v614 = vpop.f32.mrb[0].mxu0
      %v615 = vadd.f32 0.0, %v614
      %v616 = vpop.f32.mrb[0].mxu0
      %617 = vmatprep.mubr.bf16.mxu0 %v402
      %618 = vmatmul.mubr.bf16.gmra.mrb[0].mxu0 %v401
      %v619 = vpop.f32.mrb[0].mxu0
      %v620 = vadd.f32 0.0, %v619
      %v621 = vpop.f32.mrb[0].mxu0
      %v622 = vpop.f32.mrb[0].mxu0
      %v623 = vadd.f32 0.0, %v622
      %v624 = vpop.f32.mrb[0].mxu0
      %625 = vmatprep.mubr.bf16.mxu0 %v404
      %626 = vmatmul.mubr.bf16.gmra.mrb[0].mxu0 %v403
      %v627 = vpop.f32.mrb[0].mxu0
      %v628 = vadd.f32 0.0, %v627
      %v629 = vpop.f32.mrb[0].mxu0
      %v630 = vpop.f32.mrb[0].mxu0
      %v631 = vadd.f32 0.0, %v630
      %v632 = vpop.f32.mrb[0].mxu0
      %633 = vmatprep.mubr.bf16.mxu0 %v406
      %634 = vmatmul.mubr.bf16.gmra.mrb[0].mxu0 %v405
      %v635 = vpop.f32.mrb[0].mxu0
      %v636 = vadd.f32 0.0, %v635
      %v637 = vpop.f32.mrb[0].mxu0
      %v638 = vpop.f32.mrb[0].mxu0
      %v639 = vadd.f32 0.0, %v638
      %v640 = vpop.f32.mrb[0].mxu0
      %641 = vmatprep.mubr.bf16.mxu0 %v408
      %642 = vmatmul.mubr.bf16.gmra.mrb[0].mxu0 %v407
      %v643 = vpop.f32.mrb[0].mxu0
      %v644 = vadd.f32 0.0, %v643
      %v645 = vpop.f32.mrb[0].mxu0
      %v646 = vpop.f32.mrb[0].mxu0
      %v647 = vadd.f32 0.0, %v646
      %v648 = vpop.f32.mrb[0].mxu0
      %649 = vmatprep.mubr.bf16.mxu0 %v410
      %650 = vmatmul.mubr.bf16.gmra.mrb[0].mxu0 %v409
      %v651 = vpop.f32.mrb[0].mxu0
      %v652 = vadd.f32 0.0, %v651
      %v653 = vpop.f32.mrb[0].mxu0
      %v654 = vpop.f32.mrb[0].mxu0
      %v655 = vadd.f32 0.0, %v654
      %v656 = vpop.f32.mrb[0].mxu0
      %657 = vmatprep.mubr.bf16.mxu0 %v412
      %658 = vmatmul.mubr.bf16.gmra.mrb[0].mxu0 %v411
      %v659 = vpop.f32.mrb[0].mxu0
      %v660 = vadd.f32 0.0, %v659
      %v661 = vpop.f32.mrb[0].mxu0
      %v662 = vpop.f32.mrb[0].mxu0
      %v663 = vadd.f32 0.0, %v662
      %v664 = vpop.f32.mrb[0].mxu0
      %665 = vmatprep.mubr.bf16.mxu0 %v414
      %666 = vmatmul.mubr.bf16.gmra.mrb[0].mxu0 %v413
      %v667 = vpop.f32.mrb[0].mxu0
      %v668 = vadd.f32 0.0, %v667
      %v669 = vpop.f32.mrb[0].mxu0
      %v670 = vpop.f32.mrb[0].mxu0
      %v671 = vadd.f32 0.0, %v670
      %v672 = vpop.f32.mrb[0].mxu0
      %673 = vmatprep.mubr.bf16.mxu0 %v416
      %674 = vmatmul.mubr.bf16.gmra.mrb[0].mxu0 %v415
      %v675 = vpop.f32.mrb[0].mxu0
      %v676 = vadd.f32 0.0, %v675
      %v677 = vpop.f32.mrb[0].mxu0
      %v678 = vpop.f32.mrb[0].mxu0
      %v679 = vadd.f32 0.0, %v678
      %v680 = vpop.f32.mrb[0].mxu0
      %681 = vmatprep.mubr.bf16.mxu0 %v418
      %682 = vmatmul.mubr.bf16.gmra.mrb[0].mxu0 %v417
      %v683 = vpop.f32.mrb[0].mxu0
      %v684 = vadd.f32 0.0, %v683
      %v685 = vpop.f32.mrb[0].mxu0
      %v686 = vpop.f32.mrb[0].mxu0
      %v687 = vadd.f32 0.0, %v686
      %v688 = vpop.f32.mrb[0].mxu0
      %689 = vmatprep.mubr.bf16.mxu0 %v420
      %690 = vmatmul.mubr.bf16.gmra.mrb[0].mxu0 %v419
      %v691 = vpop.f32.mrb[0].mxu0
      %v692 = vadd.f32 0.0, %v691
      %v693 = vpop.f32.mrb[0].mxu0
      %v694 = vpop.f32.mrb[0].mxu0
      %v695 = vadd.f32 0.0, %v694
      %v696 = vpop.f32.mrb[0].mxu0
      %697 = vmatprep.mubr.bf16.mxu0 %v422
      %698 = vmatmul.mubr.bf16.gmra.mrb[0].mxu0 %v421
      %v699 = vpop.f32.mrb[0].mxu0
      %v700 = vadd.f32 0.0, %v699
      %v701 = vpop.f32.mrb[0].mxu0
      %v702 = vpop.f32.mrb[0].mxu0
      %v703 = vadd.f32 0.0, %v702
      %v704 = vpop.f32.mrb[0].mxu0
      %705 = vmatprep.mubr.bf16.mxu0 %v424
      %706 = vmatmul.mubr.bf16.gmra.mrb[0].mxu0 %v423
      %v707 = vpop.f32.mrb[0].mxu0
      %v708 = vadd.f32 0.0, %v707
      %v709 = vpop.f32.mrb[0].mxu0
      %v710 = vpop.f32.mrb[0].mxu0
      %v711 = vadd.f32 0.0, %v710
      %v712 = vpop.f32.mrb[0].mxu0
      %713 = vdwg.mxu0
      %v714 = vpack.c.bf16 %v591, %v588
      %v715 = vpack.c.bf16 %v599, %v596
      %v716 = vpack.c.bf16 %v607, %v604
      %v717 = vpack.c.bf16 %v615, %v612
      %v718 = vpack.c.bf16 %v623, %v620
      %v719 = vpack.c.bf16 %v631, %v628
      %v720 = vpack.c.bf16 %v639, %v636
      %v721 = vpack.c.bf16 %v647, %v644
      %v722 = vpack.c.bf16 %v655, %v652
      %v723 = vpack.c.bf16 %v663, %v660
      %v724 = vpack.c.bf16 %v671, %v668
      %v725 = vpack.c.bf16 %v679, %v676
      %v726 = vpack.c.bf16 %v687, %v684
      %v727 = vpack.c.bf16 %v695, %v692
      %v728 = vpack.c.bf16 %v703, %v700
      %v729 = vpack.c.bf16 %v711, %v708
      %v746 = vunpack.c.l.b16 %v714
      %v747 = vunpack.c.h.b16 %v714
      %v748 = vunpack.c.l.b16 %v715
      %v749 = vunpack.c.h.b16 %v715
      %v750 = vunpack.c.l.b16 %v716
      %v751 = vunpack.c.h.b16 %v716
      %v752 = vunpack.c.l.b16 %v717
      %v753 = vunpack.c.h.b16 %v717
      %v754 = vunpack.c.l.b16 %v718
      %v755 = vunpack.c.h.b16 %v718
      %v756 = vunpack.c.l.b16 %v719
      %v757 = vunpack.c.h.b16 %v719
      %v758 = vunpack.c.l.b16 %v720
      %v759 = vunpack.c.h.b16 %v720
      %v760 = vunpack.c.l.b16 %v721
      %v761 = vunpack.c.h.b16 %v721
      %v762 = vunpack.c.l.b16 %v722
      %v763 = vunpack.c.h.b16 %v722
      %v764 = vunpack.c.l.b16 %v723
      %v765 = vunpack.c.h.b16 %v723
      %v766 = vunpack.c.l.b16 %v724
      %v767 = vunpack.c.h.b16 %v724
      %v768 = vunpack.c.l.b16 %v725
      %v769 = vunpack.c.h.b16 %v725
      %v770 = vunpack.c.l.b16 %v726
      %v771 = vunpack.c.h.b16 %v726
      %v772 = vunpack.c.l.b16 %v727
      %v773 = vunpack.c.h.b16 %v727
      %v774 = vunpack.c.l.b16 %v728
      %v775 = vunpack.c.h.b16 %v728
      %v776 = vunpack.c.l.b16 %v729
      %v777 = vunpack.c.h.b16 %v729
      %v778 = vpack.c.b16 %v746, %v746
      %v779 = vpack.c.b16 %v747, %v747
      %v780 = vpack.c.b16 %v748, %v748
      %v781 = vpack.c.b16 %v749, %v749
      %v782 = vpack.c.b16 %v750, %v750
      %v783 = vpack.c.b16 %v751, %v751
      %v784 = vpack.c.b16 %v752, %v752
      %v785 = vpack.c.b16 %v753, %v753
      %v786 = vpack.c.b16 %v754, %v754
      %v787 = vpack.c.b16 %v755, %v755
      %v788 = vpack.c.b16 %v756, %v756
      %v789 = vpack.c.b16 %v757, %v757
      %v790 = vpack.c.b16 %v758, %v758
      %v791 = vpack.c.b16 %v759, %v759
      %v792 = vpack.c.b16 %v760, %v760
      %v793 = vpack.c.b16 %v761, %v761
      %v794 = vpack.c.b16 %v762, %v762
      %v795 = vpack.c.b16 %v763, %v763
      %v796 = vpack.c.b16 %v764, %v764
      %v797 = vpack.c.b16 %v765, %v765
      %v798 = vpack.c.b16 %v766, %v766
      %v799 = vpack.c.b16 %v767, %v767
      %v800 = vpack.c.b16 %v768, %v768
      %v801 = vpack.c.b16 %v769, %v769
      %v802 = vpack.c.b16 %v770, %v770
      %v803 = vpack.c.b16 %v771, %v771
      %v804 = vpack.c.b16 %v772, %v772
      %v805 = vpack.c.b16 %v773, %v773
      %v806 = vpack.c.b16 %v774, %v774
      %v807 = vpack.c.b16 %v775, %v775
      %v808 = vpack.c.b16 %v776, %v776
      %v809 = vpack.c.b16 %v777, %v777
      %vm842 = vcmask 257024
      %843 = vst.msk [vmem:[%s223] sm:$0xf] %vm842, %v778
      %844 = vst.msk [vmem:[%s223 + $0x4] sm:$0xf] %vm842, %v779
      %845 = vst.msk [vmem:[%s223 + $0x8] sm:$0xf] %vm842, %v780
      %846 = vst.msk [vmem:[%s223 + $0xc] sm:$0xf] %vm842, %v781
      %847 = vst.msk [vmem:[%s223 + $0x10] sm:$0xf] %vm842, %v782
      %848 = vst.msk [vmem:[%s223 + $0x14] sm:$0xf] %vm842, %v783
      %849 = vst.msk [vmem:[%s223 + $0x18] sm:$0xf] %vm842, %v784
      %850 = vst.msk [vmem:[%s223 + $0x1c] sm:$0xf] %vm842, %v785
      %851 = vst.msk [vmem:[%s223 + $0x20] sm:$0xf] %vm842, %v786
      %852 = vst.msk [vmem:[%s223 + $0x24] sm:$0xf] %vm842, %v787
      %853 = vst.msk [vmem:[%s223 + $0x28] sm:$0xf] %vm842, %v788
      %854 = vst.msk [vmem:[%s223 + $0x2c] sm:$0xf] %vm842, %v789
      %855 = vst.msk [vmem:[%s223 + $0x30] sm:$0xf] %vm842, %v790
      %856 = vst.msk [vmem:[%s223 + $0x34] sm:$0xf] %vm842, %v791
      %857 = vst.msk [vmem:[%s223 + $0x38] sm:$0xf] %vm842, %v792
      %858 = vst.msk [vmem:[%s223 + $0x3c] sm:$0xf] %vm842, %v793
      %859 = vst.msk [vmem:[%s223 + $0x40] sm:$0xf] %vm842, %v794
      %860 = vst.msk [vmem:[%s223 + $0x44] sm:$0xf] %vm842, %v795
      %861 = vst.msk [vmem:[%s223 + $0x48] sm:$0xf] %vm842, %v796
      %862 = vst.msk [vmem:[%s223 + $0x4c] sm:$0xf] %vm842, %v797
      %863 = vst.msk [vmem:[%s223 + $0x50] sm:$0xf] %vm842, %v798
      %864 = vst.msk [vmem:[%s223 + $0x54] sm:$0xf] %vm842, %v799
      %865 = vst.msk [vmem:[%s223 + $0x58] sm:$0xf] %vm842, %v800
      %866 = vst.msk [vmem:[%s223 + $0x5c] sm:$0xf] %vm842, %v801
      %867 = vst.msk [vmem:[%s223 + $0x60] sm:$0xf] %vm842, %v802
      %868 = vst.msk [vmem:[%s223 + $0x64] sm:$0xf] %vm842, %v803
      %869 = vst.msk [vmem:[%s223 + $0x68] sm:$0xf] %vm842, %v804
      %870 = vst.msk [vmem:[%s223 + $0x6c] sm:$0xf] %vm842, %v805
      %871 = vst.msk [vmem:[%s223 + $0x70] sm:$0xf] %vm842, %v806
      %872 = vst.msk [vmem:[%s223 + $0x74] sm:$0xf] %vm842, %v807
      %873 = vst.msk [vmem:[%s223 + $0x78] sm:$0xf] %vm842, %v808
      %874 = vst.msk [vmem:[%s223 + $0x7c] sm:$0xf] %vm842, %v809
      %vm875 = vcmask 261120
      %v876 = vsel %vm875, %v588, 0.0
      %v877 = vsel %vm875, %v591, 0.0
      %v878 = vadd.f32 %v876, %v877
      %v879 = vsel %vm875, %v596, 0.0
      %v880 = vadd.f32 %v878, %v879
      %v881 = vsel %vm875, %v599, 0.0
      %v882 = vadd.f32 %v880, %v881
      %v883 = vsel %vm875, %v604, 0.0
      %v884 = vadd.f32 %v882, %v883
      %v885 = vsel %vm875, %v607, 0.0
      %v886 = vadd.f32 %v884, %v885
      %v887 = vsel %vm875, %v612, 0.0
      %v888 = vadd.f32 %v886, %v887
      %v889 = vsel %vm875, %v615, 0.0
      %v890 = vadd.f32 %v888, %v889
      %v891 = vsel %vm875, %v620, 0.0
      %v892 = vadd.f32 %v890, %v891
      %v893 = vsel %vm875, %v623, 0.0
      %v894 = vadd.f32 %v892, %v893
      %v895 = vsel %vm875, %v628, 0.0
      %v896 = vadd.f32 %v894, %v895
      %v897 = vsel %vm875, %v631, 0.0
      %v898 = vadd.f32 %v896, %v897
      %v899 = vsel %vm875, %v636, 0.0
      %v900 = vadd.f32 %v898, %v899
      %v901 = vsel %vm875, %v639, 0.0
      %v902 = vadd.f32 %v900, %v901
      %v903 = vsel %vm875, %v644, 0.0
      %v904 = vadd.f32 %v902, %v903
      %v905 = vsel %vm875, %v647, 0.0
      %v906 = vadd.f32 %v904, %v905
      %v907 = vsel %vm875, %v652, 0.0
      %v908 = vadd.f32 %v906, %v907
      %v909 = vsel %vm875, %v655, 0.0
      %v910 = vadd.f32 %v908, %v909
      %v911 = vsel %vm875, %v660, 0.0
      %v912 = vadd.f32 %v910, %v911
      %v913 = vsel %vm875, %v663, 0.0
      %v914 = vadd.f32 %v912, %v913
      %v915 = vsel %vm875, %v668, 0.0
      %v916 = vadd.f32 %v914, %v915
      %v917 = vsel %vm875, %v671, 0.0
      %v918 = vadd.f32 %v916, %v917
      %v919 = vsel %vm875, %v676, 0.0
      %v920 = vadd.f32 %v918, %v919
      %v921 = vsel %vm875, %v679, 0.0
      %v922 = vadd.f32 %v920, %v921
      %v923 = vsel %vm875, %v684, 0.0
      %v924 = vadd.f32 %v922, %v923
      %v925 = vsel %vm875, %v687, 0.0
      %v926 = vadd.f32 %v924, %v925
      %v927 = vsel %vm875, %v692, 0.0
      %v928 = vadd.f32 %v926, %v927
      %v929 = vsel %vm875, %v695, 0.0
      %v930 = vadd.f32 %v928, %v929
      %v931 = vsel %vm875, %v700, 0.0
      %v932 = vadd.f32 %v930, %v931
      %v933 = vsel %vm875, %v703, 0.0
      %v934 = vadd.f32 %v932, %v933
      %v935 = vsel %vm875, %v708, 0.0
      %v936 = vadd.f32 %v934, %v935
      %v937 = vsel %vm875, %v711, 0.0
      %v938 = vadd.f32 %v936, %v937
      %v939 = vrot.slane %v938, 4
      %v940 = vadd.f32 %v938, %v939
      %v941 = vrot.slane %v940, 2
      %v942 = vadd.f32 %v940, %v941
      %v943 = vrot.slane %v942, 1
      %v944 = vadd.f32 %v942, %v943
      %vm945 = vcmask 253952
      %946 = vst.msk [vmem:[%s231] sm:$0x1] %vm945, %v944
      %v947 = vmul.f32 %v588, %v588
      %v948 = vmul.f32 %v591, %v591
      %v949 = vmul.f32 %v596, %v596
      %v950 = vmul.f32 %v599, %v599
      %v951 = vmul.f32 %v604, %v604
      %v952 = vmul.f32 %v607, %v607
      %v953 = vmul.f32 %v612, %v612
      %v954 = vmul.f32 %v615, %v615
      %v955 = vmul.f32 %v620, %v620
      %v956 = vmul.f32 %v623, %v623
      %v957 = vmul.f32 %v628, %v628
      %v958 = vmul.f32 %v631, %v631
      %v959 = vmul.f32 %v636, %v636
      %v960 = vmul.f32 %v639, %v639
      %v961 = vmul.f32 %v644, %v644
      %v962 = vmul.f32 %v647, %v647
      %v963 = vmul.f32 %v652, %v652
      %v964 = vmul.f32 %v655, %v655
      %v965 = vmul.f32 %v660, %v660
      %v966 = vmul.f32 %v663, %v663
      %v967 = vmul.f32 %v668, %v668
      %v968 = vmul.f32 %v671, %v671
      %v969 = vmul.f32 %v676, %v676
      %v970 = vmul.f32 %v679, %v679
      %v971 = vmul.f32 %v684, %v684
      %v972 = vmul.f32 %v687, %v687
      %v973 = vmul.f32 %v692, %v692
      %v974 = vmul.f32 %v695, %v695
      %v975 = vmul.f32 %v700, %v700
      %v976 = vmul.f32 %v703, %v703
      %v977 = vmul.f32 %v708, %v708
      %v978 = vmul.f32 %v711, %v711
      %v979 = vsel %vm875, %v947, 0.0
      %v980 = vsel %vm875, %v948, 0.0
      %v981 = vadd.f32 %v979, %v980
      %v982 = vsel %vm875, %v949, 0.0
      %v983 = vadd.f32 %v981, %v982
      %v984 = vsel %vm875, %v950, 0.0
      %v985 = vadd.f32 %v983, %v984
      %v986 = vsel %vm875, %v951, 0.0
      %v987 = vadd.f32 %v985, %v986
      %v988 = vsel %vm875, %v952, 0.0
      %v989 = vadd.f32 %v987, %v988
      %v990 = vsel %vm875, %v953, 0.0
      %v991 = vadd.f32 %v989, %v990
      %v992 = vsel %vm875, %v954, 0.0
      %v993 = vadd.f32 %v991, %v992
      %v994 = vsel %vm875, %v955, 0.0
      %v995 = vadd.f32 %v993, %v994
      %v996 = vsel %vm875, %v956, 0.0
      %v997 = vadd.f32 %v995, %v996
      %v998 = vsel %vm875, %v957, 0.0
      %v999 = vadd.f32 %v997, %v998
      %v1000 = vsel %vm875, %v958, 0.0
      %v1001 = vadd.f32 %v999, %v1000
      %v1002 = vsel %vm875, %v959, 0.0
      %v1003 = vadd.f32 %v1001, %v1002
      %v1004 = vsel %vm875, %v960, 0.0
      %v1005 = vadd.f32 %v1003, %v1004
      %v1006 = vsel %vm875, %v961, 0.0
      %v1007 = vadd.f32 %v1005, %v1006
      %v1008 = vsel %vm875, %v962, 0.0
      %v1009 = vadd.f32 %v1007, %v1008
      %v1010 = vsel %vm875, %v963, 0.0
      %v1011 = vadd.f32 %v1009, %v1010
      %v1012 = vsel %vm875, %v964, 0.0
      %v1013 = vadd.f32 %v1011, %v1012
      %v1014 = vsel %vm875, %v965, 0.0
      %v1015 = vadd.f32 %v1013, %v1014
      %v1016 = vsel %vm875, %v966, 0.0
      %v1017 = vadd.f32 %v1015, %v1016
      %v1018 = vsel %vm875, %v967, 0.0
      %v1019 = vadd.f32 %v1017, %v1018
      %v1020 = vsel %vm875, %v968, 0.0
      %v1021 = vadd.f32 %v1019, %v1020
      %v1022 = vsel %vm875, %v969, 0.0
      %v1023 = vadd.f32 %v1021, %v1022
      %v1024 = vsel %vm875, %v970, 0.0
      %v1025 = vadd.f32 %v1023, %v1024
      %v1026 = vsel %vm875, %v971, 0.0
      %v1027 = vadd.f32 %v1025, %v1026
      %v1028 = vsel %vm875, %v972, 0.0
      %v1029 = vadd.f32 %v1027, %v1028
      %v1030 = vsel %vm875, %v973, 0.0
      %v1031 = vadd.f32 %v1029, %v1030
      %v1032 = vsel %vm875, %v974, 0.0
      %v1033 = vadd.f32 %v1031, %v1032
      %v1034 = vsel %vm875, %v975, 0.0
      %v1035 = vadd.f32 %v1033, %v1034
      %v1036 = vsel %vm875, %v976, 0.0
      %v1037 = vadd.f32 %v1035, %v1036
      %v1038 = vsel %vm875, %v977, 0.0
      %v1039 = vadd.f32 %v1037, %v1038
      %v1040 = vsel %vm875, %v978, 0.0
      %v1041 = vadd.f32 %v1039, %v1040
      %v1042 = vrot.slane %v1041, 4
      %v1043 = vadd.f32 %v1041, %v1042
      %v1044 = vrot.slane %v1043, 2
      %v1045 = vadd.f32 %v1043, %v1044
      %v1046 = vrot.slane %v1045, 1
      %v1047 = vadd.f32 %v1045, %v1046
      %1048 = vst.msk [vmem:[%s231 + $0x1] sm:$0x1] %vm945, %v1047
      %s1049 = smul.u32 32, %s20
      %p1050 = scmp.lt.s32.totalorder %s19, 1
      %s1051 = scalar_select %p1050, %s19, 1
      %p1052 = scmp.lt.s32.totalorder %s1049, 31
      %s1053 = scalar_select %p1052, %s1049, 31
      %s1054 = smul.addr %s1051, 32
      %s1055 = sadd.s32 %s1053, %s1054
      %s1056 = smul.addr %s1055, 4
      %s1057 = scalar_lea.vmem %s2, %s1056
      %p1058 = scmp.lt.s32.totalorder %s19, 1
      %s1059 = scalar_select %p1058, %s19, 1
      %p1060 = scmp.lt.s32.totalorder %s20, 0
      %s1061 = scalar_select %p1060, %s20, 0
      %s1062 = sadd.s32 %s1061, %s1059
      %s1063 = smul.addr %s1062, 2
      %s1064 = scalar_lea.vmem %s3, %s1063
      // Predicated region
      $region29: #{refine_subnet_forward.24} parent=27 // pred_check
        %p1065 = pneg %p96
      $region30: #{refine_subnet_forward.24} parent=27 // pred_check_branch
        %1067 = sbr.rel (%p1065) target = $region32
      $region31: #{refine_subnet_forward.24} parent=27 // pred_region
        %s1068 = smul.u32 32, %s20
      $region32: #{refine_subnet_forward.24} parent=27 // pred_fallthru
        _
      // Predicated region
      $region33: #{refine_subnet_forward.24} parent=27 // pred_check
        %p1069 = pneg %p124
      $region34: #{refine_subnet_forward.24} parent=27 // pred_check_branch
        %1071 = sbr.rel (%p1069) target = $region36
      $region35: #{refine_subnet_forward.24} parent=27 // pred_region
        _
      $region36: #{refine_subnet_forward.24} parent=27 // pred_fallthru
        _
    $region28: #{refine_subnet_forward.24} parent=5 // pred_fallthru
      _
    %p1072 = scmp.le.s32.totalorder 2, %s10
    // Predicated region
    $region37: #{refine_subnet_forward.24} parent=5 // pred_check
      %p1073 = pneg %p1072
    $region38: #{refine_subnet_forward.24} parent=5 // pred_check_branch
      %1075 = sbr.rel (%p1073) target = $region40
    $region39: #{refine_subnet_forward.24} parent=5 // pred_region
      %s1076 = ssub.s32 %s10, 2
      // Predicated region
      $region41: #{refine_subnet_forward.24} parent=39 // pred_check
        %p1077 = pneg %p102
      $region42: #{refine_subnet_forward.24} parent=39 // pred_check_branch
        %1079 = sbr.rel (%p1077) target = $region44
      $region43: #{refine_subnet_forward.24} parent=39 // pred_region
        %s1080 = smul.u32 32, %s22
        %p1081 = scmp.lt.s32.totalorder %s21, 1
        %s1082 = scalar_select %p1081, %s21, 1
        %p1083 = scmp.lt.s32.totalorder %s1080, 31
        %s1084 = scalar_select %p1083, %s1080, 31
        %s1085 = smul.addr %s1082, 32
        %s1086 = sadd.s32 %s1084, %s1085
        %s1087 = smul.addr %s1086, 4
        %s1088 = scalar_lea.vmem %s2, %s1087
      $region44: #{refine_subnet_forward.24} parent=39 // pred_fallthru
        _
      // Predicated region
      $region45: #{refine_subnet_forward.24} parent=39 // pred_check
        %p1089 = pneg %p130
      $region46: #{refine_subnet_forward.24} parent=39 // pred_check_branch
        %1091 = sbr.rel (%p1089) target = $region48
      $region47: #{refine_subnet_forward.24} parent=39 // pred_region
        %p1092 = scmp.lt.s32.totalorder %s21, 1
        %s1093 = scalar_select %p1092, %s21, 1
        %p1094 = scmp.lt.s32.totalorder %s22, 0
        %s1095 = scalar_select %p1094, %s22, 0
        %s1096 = sadd.s32 %s1095, %s1093
        %s1097 = smul.addr %s1096, 2
        %s1098 = scalar_lea.vmem %s3, %s1097
      $region48: #{refine_subnet_forward.24} parent=39 // pred_fallthru
        _
    $region40: #{refine_subnet_forward.24} parent=5 // pred_fallthru
      _
  $region6: #{refine_subnet_forward.24} parent=0 // loop_footer
    %s14 = sadd.s32 1, %s10
  $region7: #{refine_subnet_forward.24} parent=0 // loop_footer_branch
    %9 = sbr.rel target = $region3
  $region8: #{refine_subnet_forward.24} parent=0 // loop_exit
    _

// kernel: refine_subnet_forward.27
$region0: #{refine_subnet_forward.27}
  #allocation0 [shape = 'u32[]', space=smem, size = 0x4, offset = 0x4, fixed_abs, tag = 'smem constant byte address 0x4 - core index']
  #allocation1 [shape = 'u32[144,128]{1,0:T(1,128)}', space=vmem, size = 0x12000, scoped, tag = 'internal scratch']
  %s0 = inlined_call_operand.vmem [shape: bf16[2,64,64], index: 0, kind: input, shape index: {}]
  %s1 = inlined_call_operand.vmem [shape: f32[2,2,64], index: 1, kind: input, shape index: {}]
  %s2 = inlined_call_operand.vmem [shape: bf16[2,64,64], index: 2, kind: output, shape index: {}]
  %s3 = sld [smem:[#allocation0]]
  $region41: #{refine_subnet_forward.27} parent=0
    _
  %s5 = ssub.s32 1, %s3
  %s6 = scalar_select 0, %s5, %s3
  loop: start=0, step=1, limit=4
  $region2: #{refine_subnet_forward.27} parent=0 // loop_pre_header
    _
  $region3: #{refine_subnet_forward.27} parent=0 // loop_header
    %s8 = sphi 0, %s12
    %p9 = scmp.ge.s32.totalorder %s8, 4
    %s15 = sphi 0, %s27
    %s16 = sphi 0, %s23
    %s17 = sphi 0, %s15
    %s18 = sphi 0, %s16
    %s19 = sphi 0, %s17
    %s20 = sphi 0, %s18
    %s32 = sphi 0, %s34
    %s35 = sphi 0, %s32
    %s36 = sphi 0, %s35
    %s52 = sphi 0, %s36
    %s58 = sphi 0, %s60
    %s61 = sphi 0, %s58
    %s62 = sphi 0, %s61
    %s78 = sphi 0, %s62
    %s86 = sphi 0, %s88
    %s89 = sphi 0, %s86
    %s90 = sphi 0, %s89
    %s106 = sphi 0, %s90
  $region4: #{refine_subnet_forward.27} parent=0 // loop_header_branch
    %11 = sbr.rel (%p9) target = $region8
  $region5: #{refine_subnet_forward.27} parent=0 // loop_body
    %s13 = ssub.s32 %s8, 1
    %s14 = ssub.s32 %s8, 2
    %s21 = sadd.s32 1, %s16
    %p22 = scmp.ge.s32.totalorder %s21, 1
    %s23 = scalar_select %p22, 0, %s21
    %s24 = sadd.s32 1, %s15
    %s25 = scalar_select %p22, %s24, %s15
    %p26 = scmp.ge.s32.totalorder %s25, 2
    %s27 = scalar_select %p26, 0, %s25
    %s28 = ssub.s32 %s15, %s27
    %s29 = ssub.s32 %s16, %s23
    %s30 = sor.u32 %s28, %s29
    %p31 = scmp.eq.s32.totalorder %s30, 0
    %s33 = sadd.s32 %s32, 1
    %s34 = scalar_select %p31, %s32, %s33
    %p37 = pneg %p31
    %p38 = scmp.eq.s32.totalorder %s8, 1
    %p39 = por %p37, %p38
    %p40 = scmp.ne.s32.totalorder %s32, %s35
    %p41 = scmp.eq.s32.totalorder %s8, 0
    %p42 = por %p40, %p41
    %p43 = scmp.ne.s32.totalorder %s32, %s35
    %p44 = scmp.eq.s32.totalorder %s13, 1
    %p45 = por %p43, %p44
    %p46 = scmp.ne.s32.totalorder %s35, %s36
    %p47 = scmp.eq.s32.totalorder %s13, 0
    %p48 = por %p46, %p47
    %p49 = scmp.ne.s32.totalorder %s35, %s36
    %p50 = scmp.eq.s32.totalorder %s14, 1
    %p51 = por %p49, %p50
    %p53 = scmp.ne.s32.totalorder %s36, %s52
    %p54 = scmp.eq.s32.totalorder %s14, 0
    %p55 = por %p53, %p54
    %s56 = ssub.s32 %s15, %s27
    %p57 = scmp.eq.s32.totalorder %s56, 0
    %s59 = sadd.s32 %s58, 1
    %s60 = scalar_select %p57, %s58, %s59
    %p63 = pneg %p57
    %p64 = scmp.eq.s32.totalorder %s8, 1
    %p65 = por %p63, %p64
    %p66 = scmp.ne.s32.totalorder %s58, %s61
    %p67 = scmp.eq.s32.totalorder %s8, 0
    %p68 = por %p66, %p67
    %p69 = scmp.ne.s32.totalorder %s58, %s61
    %p70 = scmp.eq.s32.totalorder %s13, 1
    %p71 = por %p69, %p70
    %p72 = scmp.ne.s32.totalorder %s61, %s62
    %p73 = scmp.eq.s32.totalorder %s13, 0
    %p74 = por %p72, %p73
    %p75 = scmp.ne.s32.totalorder %s61, %s62
    %p76 = scmp.eq.s32.totalorder %s14, 1
    %p77 = por %p75, %p76
    %p79 = scmp.ne.s32.totalorder %s62, %s78
    %p80 = scmp.eq.s32.totalorder %s14, 0
    %p81 = por %p79, %p80
    %s82 = ssub.s32 %s15, %s27
    %s83 = ssub.s32 %s16, %s23
    %s84 = sor.u32 %s82, %s83
    %p85 = scmp.eq.s32.totalorder %s84, 0
    %s87 = sadd.s32 %s86, 1
    %s88 = scalar_select %p85, %s86, %s87
    %p91 = pneg %p85
    %p92 = scmp.eq.s32.totalorder %s8, 1
    %p93 = por %p91, %p92
    %p94 = scmp.ne.s32.totalorder %s86, %s89
    %p95 = scmp.eq.s32.totalorder %s8, 0
    %p96 = por %p94, %p95
    %p97 = scmp.ne.s32.totalorder %s86, %s89
    %p98 = scmp.eq.s32.totalorder %s13, 1
    %p99 = por %p97, %p98
    %p100 = scmp.ne.s32.totalorder %s89, %s90
    %p101 = scmp.eq.s32.totalorder %s13, 0
    %p102 = por %p100, %p101
    %p103 = scmp.ne.s32.totalorder %s89, %s90
    %p104 = scmp.eq.s32.totalorder %s14, 1
    %p105 = por %p103, %p104
    %p107 = scmp.ne.s32.totalorder %s90, %s106
    %p108 = scmp.eq.s32.totalorder %s14, 0
    %p109 = por %p107, %p108
    %p110 = scmp.le.s32.totalorder 1, %s8
    %p111 = scmp.lt.s32.totalorder %s8, 3
    %p112 = pnand %p110, %p111
    %p113 = pneg %p112
    // Predicated region
    $region9: #{refine_subnet_forward.27} parent=5 // pred_check
      _
    $region10: #{refine_subnet_forward.27} parent=5 // pred_check_branch
      %115 = sbr.rel (%p112) target = $region12
    $region11: #{refine_subnet_forward.27} parent=5 // pred_region
      %s116 = ssub.s32 %s8, 1
    $region12: #{refine_subnet_forward.27} parent=5 // pred_fallthru
      _
    %p117 = scmp.lt.s32.totalorder %s8, 2
    // Predicated region
    $region13: #{refine_subnet_forward.27} parent=5 // pred_check
      %p118 = pneg %p117
    $region14: #{refine_subnet_forward.27} parent=5 // pred_check_branch
      %120 = sbr.rel (%p118) target = $region16
    $region15: #{refine_subnet_forward.27} parent=5 // pred_region
      // Predicated region
      $region17: #{refine_subnet_forward.27} parent=15 // pred_check
        %p121 = pneg %p42
      $region18: #{refine_subnet_forward.27} parent=15 // pred_check_branch
        %123 = sbr.rel (%p121) target = $region20
      $region19: #{refine_subnet_forward.27} parent=15 // pred_region
        %s124 = smul.u32 8, %s16
        %p125 = scmp.lt.s32.totalorder %s15, 1
        %s126 = scalar_select %p125, %s15, 1
        %p127 = scmp.lt.s32.totalorder %s124, 7
        %s128 = scalar_select %p127, %s124, 7
        %s129 = smul.addr %s126, 8
        %s130 = sadd.s32 %s128, %s129
        %s131 = smul.addr %s130, 4
        %s132 = scalar_lea.vmem %s0, %s131
        %s133 = smul.u32 8, %s16
      $region20: #{refine_subnet_forward.27} parent=15 // pred_fallthru
        _
      // Predicated region
      $region21: #{refine_subnet_forward.27} parent=15 // pred_check
        %p134 = pneg %p68
      $region22: #{refine_subnet_forward.27} parent=15 // pred_check_branch
        %136 = sbr.rel (%p134) target = $region24
      $region23: #{refine_subnet_forward.27} parent=15 // pred_region
        %p137 = scmp.lt.s32.totalorder %s15, 1
        %s138 = scalar_select %p137, %s15, 1
        %s139 = smul.addr %s138, 2
        %s140 = scalar_lea.vmem %s1, %s139
      $region24: #{refine_subnet_forward.27} parent=15 // pred_fallthru
        _
    $region16: #{refine_subnet_forward.27} parent=5 // pred_fallthru
      _
    %p141 = scmp.le.s32.totalorder 1, %s8
    %p142 = scmp.lt.s32.totalorder %s8, 3
    %p143 = pnand %p141, %p142
    %p144 = pneg %p143
    // Predicated region
    $region25: #{refine_subnet_forward.27} parent=5 // pred_check
      _
    $region26: #{refine_subnet_forward.27} parent=5 // pred_check_branch
      %146 = sbr.rel (%p143) target = $region28
    $region27: #{refine_subnet_forward.27} parent=5 // pred_region
      %s147 = ssub.s32 %s8, 1
      %s148 = smul.u32 8, %s18
      %p149 = scmp.lt.s32.totalorder %s17, 1
      %s150 = scalar_select %p149, %s17, 1
      %p151 = scmp.lt.s32.totalorder %s148, 7
      %s152 = scalar_select %p151, %s148, 7
      %s153 = smul.addr %s150, 8
      %s154 = sadd.s32 %s152, %s153
      %s155 = smul.addr %s154, 4
      %s156 = scalar_lea.vmem %s0, %s155
      %p157 = pneg %p48
      %p158 = pneg %p45
      %p159 = scmp.lt.s32.totalorder %s17, 1
      %s160 = scalar_select %p159, %s17, 1
      %s161 = smul.addr %s160, 2
      %s162 = scalar_lea.vmem %s1, %s161
      %p163 = pneg %p74
      %p164 = pneg %p71
      %p165 = pneg %p102
      %p166 = pneg %p99
      %s167 = smul.u32 8, %s18
      %p168 = scmp.lt.s32.totalorder %s17, 1
      %s169 = scalar_select %p168, %s17, 1
      %p170 = scmp.lt.s32.totalorder %s167, 7
      %s171 = scalar_select %p170, %s167, 7
      %s172 = smul.addr %s169, 8
      %s173 = sadd.s32 %s171, %s172
      %s174 = smul.addr %s173, 4
      %s175 = scalar_lea.vmem %s2, %s174
      %s176 = smul.u32 8, %s18
      %p177 = scmp.lt.s32.totalorder %s17, 1
      %s178 = scalar_select %p177, %s17, 1
      %p179 = scmp.lt.s32.totalorder %s176, 7
      %s180 = scalar_select %p179, %s176, 7
      %s181 = smul.addr %s178, 8
      %s182 = sadd.s32 %s180, %s181
      %s183 = smul.addr %s182, 4
      %s184 = scalar_lea.vmem %s0, %s183
      %s185 = smul.u32 8, %s18
      %p186 = scmp.lt.s32.totalorder %s17, 1
      %s187 = scalar_select %p186, %s17, 1
      %s188 = smul.addr %s187, 2
      %s189 = scalar_lea.vmem %s1, %s188
      %s190 = smul.u32 8, %s18
      %p191 = scmp.lt.s32.totalorder %s17, 1
      %s192 = scalar_select %p191, %s17, 1
      %p193 = scmp.lt.s32.totalorder %s190, 7
      %s194 = scalar_select %p193, %s190, 7
      %s195 = smul.addr %s192, 8
      %s196 = sadd.s32 %s194, %s195
      %s197 = smul.addr %s196, 4
      %s198 = scalar_lea.vmem %s2, %s197
      %s199 = smul.u32 8, %s18
      %v200 = vld [vmem:[%s184] sm:$0xf]
      %v201 = vld [vmem:[%s184 + $0x4] sm:$0xf]
      %v202 = vld [vmem:[%s184 + $0x8] sm:$0xf]
      %v203 = vld [vmem:[%s184 + $0xc] sm:$0xf]
      %v204 = vld [vmem:[%s184 + $0x10] sm:$0xf]
      %v205 = vld [vmem:[%s184 + $0x14] sm:$0xf]
      %v206 = vld [vmem:[%s184 + $0x18] sm:$0xf]
      %v207 = vld [vmem:[%s184 + $0x1c] sm:$0xf]
      %v208 = vunpack.c.l.bf16 %v200
      %v209 = vunpack.c.l.bf16 %v201
      %v210 = vunpack.c.l.bf16 %v202
      %v211 = vunpack.c.l.bf16 %v203
      %v212 = vunpack.c.l.bf16 %v204
      %v213 = vunpack.c.l.bf16 %v205
      %v214 = vunpack.c.l.bf16 %v206
      %v215 = vunpack.c.l.bf16 %v207
      %v216 = vld [vmem:[%s189] sm:$0x1]
      %v217 = vlaneseq
      %v218 = vshrl.u32 %v217, 7
      %v219 = vsub.s32 0, %v218
      %v220 = vrot.slane %v216, %v219
      %v221 = vmul.f32 %v208, %v220
      %v222 = vmul.f32 %v209, %v220
      %v223 = vmul.f32 %v210, %v220
      %v224 = vmul.f32 %v211, %v220
      %v225 = vmul.f32 %v212, %v220
      %v226 = vmul.f32 %v213, %v220
      %v227 = vmul.f32 %v214, %v220
      %v228 = vmul.f32 %v215, %v220
      %v229 = vld [vmem:[%s189 + $0x1] sm:$0x1]
      %v230 = vlaneseq
      %v231 = vshrl.u32 %v230, 7
      %v232 = vsub.s32 0, %v231
      %v233 = vrot.slane %v229, %v232
      %v234 = vadd.f32 %v221, %v233
      %v235 = vadd.f32 %v222, %v233
      %v236 = vadd.f32 %v223, %v233
      %v237 = vadd.f32 %v224, %v233
      %v238 = vadd.f32 %v225, %v233
      %v239 = vadd.f32 %v226, %v233
      %v240 = vadd.f32 %v227, %v233
      %v241 = vadd.f32 %v228, %v233
      %v242 = vmax.f32 %v234, 0.0
      %v243 = vmax.f32 %v235, 0.0
      %v244 = vmax.f32 %v236, 0.0
      %v245 = vmax.f32 %v237, 0.0
      %v246 = vmax.f32 %v238, 0.0
      %v247 = vmax.f32 %v239, 0.0
      %v248 = vmax.f32 %v240, 0.0
      %v249 = vmax.f32 %v241, 0.0
      %v250 = vpack.c.bf16 %v243, %v242
      %v251 = vpack.c.bf16 %v245, %v244
      %v252 = vpack.c.bf16 %v247, %v246
      %v253 = vpack.c.bf16 %v249, %v248
      %v258 = vunpack.c.l.b16 %v250
      %v259 = vunpack.c.h.b16 %v250
      %v260 = vunpack.c.l.b16 %v251
      %v261 = vunpack.c.h.b16 %v251
      %v262 = vunpack.c.l.b16 %v252
      %v263 = vunpack.c.h.b16 %v252
      %v264 = vunpack.c.l.b16 %v253
      %v265 = vunpack.c.h.b16 %v253
      %v266 = vpack.c.b16 %v258, %v258
      %v267 = vpack.c.b16 %v259, %v259
      %v268 = vpack.c.b16 %v260, %v260
      %v269 = vpack.c.b16 %v261, %v261
      %v270 = vpack.c.b16 %v262, %v262
      %v271 = vpack.c.b16 %v263, %v263
      %v272 = vpack.c.b16 %v264, %v264
      %v273 = vpack.c.b16 %v265, %v265
      %vm282 = vcmask 519168
      %283 = vst.msk [vmem:[%s198] sm:$0xf] %vm282, %v266
      %284 = vst.msk [vmem:[%s198 + $0x4] sm:$0xf] %vm282, %v267
      %285 = vst.msk [vmem:[%s198 + $0x8] sm:$0xf] %vm282, %v268
      %286 = vst.msk [vmem:[%s198 + $0xc] sm:$0xf] %vm282, %v269
      %287 = vst.msk [vmem:[%s198 + $0x10] sm:$0xf] %vm282, %v270
      %288 = vst.msk [vmem:[%s198 + $0x14] sm:$0xf] %vm282, %v271
      %289 = vst.msk [vmem:[%s198 + $0x18] sm:$0xf] %vm282, %v272
      %290 = vst.msk [vmem:[%s198 + $0x1c] sm:$0xf] %vm282, %v273
      %s291 = smul.u32 8, %s18
      %p292 = scmp.lt.s32.totalorder %s17, 1
      %s293 = scalar_select %p292, %s17, 1
      %p294 = scmp.lt.s32.totalorder %s291, 7
      %s295 = scalar_select %p294, %s291, 7
      %s296 = smul.addr %s293, 8
      %s297 = sadd.s32 %s295, %s296
      %s298 = smul.addr %s297, 4
      %s299 = scalar_lea.vmem %s2, %s298
      // Predicated region
      $region29: #{refine_subnet_forward.27} parent=27 // pred_check
        %p300 = pneg %p99
      $region30: #{refine_subnet_forward.27} parent=27 // pred_check_branch
        %302 = sbr.rel (%p300) target = $region32
      $region31: #{refine_subnet_forward.27} parent=27 // pred_region
        %s303 = smul.u32 8, %s18
      $region32: #{refine_subnet_forward.27} parent=27 // pred_fallthru
        _
    $region28: #{refine_subnet_forward.27} parent=5 // pred_fallthru
      _
    %p304 = scmp.le.s32.totalorder 2, %s8
    // Predicated region
    $region33: #{refine_subnet_forward.27} parent=5 // pred_check
      %p305 = pneg %p304
    $region34: #{refine_subnet_forward.27} parent=5 // pred_check_branch
      %307 = sbr.rel (%p305) target = $region36
    $region35: #{refine_subnet_forward.27} parent=5 // pred_region
      %s308 = ssub.s32 %s8, 2
      // Predicated region
      $region37: #{refine_subnet_forward.27} parent=35 // pred_check
        %p309 = pneg %p105
      $region38: #{refine_subnet_forward.27} parent=35 // pred_check_branch
        %311 = sbr.rel (%p309) target = $region40
      $region39: #{refine_subnet_forward.27} parent=35 // pred_region
        %s312 = smul.u32 8, %s20
        %p313 = scmp.lt.s32.totalorder %s19, 1
        %s314 = scalar_select %p313, %s19, 1
        %p315 = scmp.lt.s32.totalorder %s312, 7
        %s316 = scalar_select %p315, %s312, 7
        %s317 = smul.addr %s314, 8
        %s318 = sadd.s32 %s316, %s317
        %s319 = smul.addr %s318, 4
        %s320 = scalar_lea.vmem %s2, %s319
      $region40: #{refine_subnet_forward.27} parent=35 // pred_fallthru
        _
    $region36: #{refine_subnet_forward.27} parent=5 // pred_fallthru
      _
  $region6: #{refine_subnet_forward.27} parent=0 // loop_footer
    %s12 = sadd.s32 1, %s8
  $region7: #{refine_subnet_forward.27} parent=0 // loop_footer_branch
    %7 = sbr.rel target = $region3
  $region8: #{refine_subnet_forward.27} parent=0 // loop_exit
    _

// kernel: refine_subnet_forward.26
$region0: #{refine_subnet_forward.26}
  #allocation0 [shape = 'u32[]', space=smem, size = 0x4, offset = 0x4, fixed_abs, tag = 'smem constant byte address 0x4 - core index']
  #allocation1 [shape = 'u32[144,128]{1,0:T(1,128)}', space=vmem, size = 0x12000, scoped, tag = 'internal scratch']
  %s0 = inlined_call_operand.vmem [shape: bf16[2,64,384], index: 0, kind: input, shape index: {}]
  %s1 = inlined_call_operand.vmem [shape: bf16[384,64], index: 1, kind: input, shape index: {}]
  %s2 = inlined_call_operand.vmem [shape: bf16[2,64,64], index: 2, kind: output, shape index: {0}]
  %s3 = inlined_call_operand.vmem [shape: f32[2,1,2,64], index: 3, kind: output, shape index: {1}]
  %4 = xla_tuple %s2, %s3
  %s5 = sld [smem:[#allocation0]]
  $region49: #{refine_subnet_forward.26} parent=0
    _
  %s7 = ssub.s32 1, %s5
  %s8 = scalar_select 0, %s7, %s5
  loop: start=0, step=1, limit=4
  $region2: #{refine_subnet_forward.26} parent=0 // loop_pre_header
    _
  $region3: #{refine_subnet_forward.26} parent=0 // loop_header
    %s10 = sphi 0, %s14
    %p11 = scmp.ge.s32.totalorder %s10, 4
    %s17 = sphi 0, %s29
    %s18 = sphi 0, %s25
    %s19 = sphi 0, %s17
    %s20 = sphi 0, %s18
    %s21 = sphi 0, %s19
    %s22 = sphi 0, %s20
    %s34 = sphi 0, %s36
    %s37 = sphi 0, %s34
    %s38 = sphi 0, %s37
    %s54 = sphi 0, %s38
    %s58 = sphi 0, %s58
    %s60 = sphi 0, %s58
    %s61 = sphi 0, %s60
    %s75 = sphi 0, %s61
    %s83 = sphi 0, %s85
    %s86 = sphi 0, %s83
    %s87 = sphi 0, %s86
    %s103 = sphi 0, %s87
    %s111 = sphi 0, %s113
    %s114 = sphi 0, %s111
    %s115 = sphi 0, %s114
    %s131 = sphi 0, %s115
  $region4: #{refine_subnet_forward.26} parent=0 // loop_header_branch
    %13 = sbr.rel (%p11) target = $region8
  $region5: #{refine_subnet_forward.26} parent=0 // loop_body
    %s15 = ssub.s32 %s10, 1
    %s16 = ssub.s32 %s10, 2
    %s23 = sadd.s32 1, %s18
    %p24 = scmp.ge.s32.totalorder %s23, 1
    %s25 = scalar_select %p24, 0, %s23
    %s26 = sadd.s32 1, %s17
    %s27 = scalar_select %p24, %s26, %s17
    %p28 = scmp.ge.s32.totalorder %s27, 2
    %s29 = scalar_select %p28, 0, %s27
    %s30 = ssub.s32 %s17, %s29
    %s31 = ssub.s32 %s18, %s25
    %s32 = sor.u32 %s30, %s31
    %p33 = scmp.eq.s32.totalorder %s32, 0
    %s35 = sadd.s32 %s34, 1
    %s36 = scalar_select %p33, %s34, %s35
    %p39 = pneg %p33
    %p40 = scmp.eq.s32.totalorder %s10, 1
    %p41 = por %p39, %p40
    %p42 = scmp.ne.s32.totalorder %s34, %s37
    %p43 = scmp.eq.s32.totalorder %s10, 0
    %p44 = por %p42, %p43
    %p45 = scmp.ne.s32.totalorder %s34, %s37
    %p46 = scmp.eq.s32.totalorder %s15, 1
    %p47 = por %p45, %p46
    %p48 = scmp.ne.s32.totalorder %s37, %s38
    %p49 = scmp.eq.s32.totalorder %s15, 0
    %p50 = por %p48, %p49
    %p51 = scmp.ne.s32.totalorder %s37, %s38
    %p52 = scmp.eq.s32.totalorder %s16, 1
    %p53 = por %p51, %p52
    %p55 = scmp.ne.s32.totalorder %s38, %s54
    %p56 = scmp.eq.s32.totalorder %s16, 0
    %p57 = por %p55, %p56
    %s59 = sadd.s32 %s58, 1
    %p62 = scmp.eq.s32.totalorder %s10, 1
    %p63 = scmp.ne.s32.totalorder %s58, %s60
    %p64 = scmp.eq.s32.totalorder %s10, 0
    %p65 = por %p63, %p64
    %p66 = scmp.ne.s32.totalorder %s58, %s60
    %p67 = scmp.eq.s32.totalorder %s15, 1
    %p68 = por %p66, %p67
    %p69 = scmp.ne.s32.totalorder %s60, %s61
    %p70 = scmp.eq.s32.totalorder %s15, 0
    %p71 = por %p69, %p70
    %p72 = scmp.ne.s32.totalorder %s60, %s61
    %p73 = scmp.eq.s32.totalorder %s16, 1
    %p74 = por %p72, %p73
    %p76 = scmp.ne.s32.totalorder %s61, %s75
    %p77 = scmp.eq.s32.totalorder %s16, 0
    %p78 = por %p76, %p77
    %s79 = ssub.s32 %s17, %s29
    %s80 = ssub.s32 %s18, %s25
    %s81 = sor.u32 %s79, %s80
    %p82 = scmp.eq.s32.totalorder %s81, 0
    %s84 = sadd.s32 %s83, 1
    %s85 = scalar_select %p82, %s83, %s84
    %p88 = pneg %p82
    %p89 = scmp.eq.s32.totalorder %s10, 1
    %p90 = por %p88, %p89
    %p91 = scmp.ne.s32.totalorder %s83, %s86
    %p92 = scmp.eq.s32.totalorder %s10, 0
    %p93 = por %p91, %p92
    %p94 = scmp.ne.s32.totalorder %s83, %s86
    %p95 = scmp.eq.s32.totalorder %s15, 1
    %p96 = por %p94, %p95
    %p97 = scmp.ne.s32.totalorder %s86, %s87
    %p98 = scmp.eq.s32.totalorder %s15, 0
    %p99 = por %p97, %p98
    %p100 = scmp.ne.s32.totalorder %s86, %s87
    %p101 = scmp.eq.s32.totalorder %s16, 1
    %p102 = por %p100, %p101
    %p104 = scmp.ne.s32.totalorder %s87, %s103
    %p105 = scmp.eq.s32.totalorder %s16, 0
    %p106 = por %p104, %p105
    %s107 = ssub.s32 %s17, %s29
    %s108 = ssub.s32 %s18, %s25
    %s109 = sor.u32 %s107, %s108
    %p110 = scmp.eq.s32.totalorder %s109, 0
    %s112 = sadd.s32 %s111, 1
    %s113 = scalar_select %p110, %s111, %s112
    %p116 = pneg %p110
    %p117 = scmp.eq.s32.totalorder %s10, 1
    %p118 = por %p116, %p117
    %p119 = scmp.ne.s32.totalorder %s111, %s114
    %p120 = scmp.eq.s32.totalorder %s10, 0
    %p121 = por %p119, %p120
    %p122 = scmp.ne.s32.totalorder %s111, %s114
    %p123 = scmp.eq.s32.totalorder %s15, 1
    %p124 = por %p122, %p123
    %p125 = scmp.ne.s32.totalorder %s114, %s115
    %p126 = scmp.eq.s32.totalorder %s15, 0
    %p127 = por %p125, %p126
    %p128 = scmp.ne.s32.totalorder %s114, %s115
    %p129 = scmp.eq.s32.totalorder %s16, 1
    %p130 = por %p128, %p129
    %p132 = scmp.ne.s32.totalorder %s115, %s131
    %p133 = scmp.eq.s32.totalorder %s16, 0
    %p134 = por %p132, %p133
    %p135 = scmp.le.s32.totalorder 1, %s10
    %p136 = scmp.lt.s32.totalorder %s10, 3
    %p137 = pnand %p135, %p136
    %p138 = pneg %p137
    // Predicated region
    $region9: #{refine_subnet_forward.26} parent=5 // pred_check
      _
    $region10: #{refine_subnet_forward.26} parent=5 // pred_check_branch
      %140 = sbr.rel (%p137) target = $region12
    $region11: #{refine_subnet_forward.26} parent=5 // pred_region
      %s141 = ssub.s32 %s10, 1
      // Predicated region
      $region13: #{refine_subnet_forward.26} parent=11 // pred_check
        %p142 = pneg %p71
      $region14: #{refine_subnet_forward.26} parent=11 // pred_check_branch
        %144 = sbr.rel (%p142) target = $region16
      $region15: #{refine_subnet_forward.26} parent=11 // pred_region
        _
      $region16: #{refine_subnet_forward.26} parent=11 // pred_fallthru
        _
    $region12: #{refine_subnet_forward.26} parent=5 // pred_fallthru
      _
    %p145 = scmp.lt.s32.totalorder %s10, 2
    // Predicated region
    $region17: #{refine_subnet_forward.26} parent=5 // pred_check
      %p146 = pneg %p145
    $region18: #{refine_subnet_forward.26} parent=5 // pred_check_branch
      %148 = sbr.rel (%p146) target = $region20
    $region19: #{refine_subnet_forward.26} parent=5 // pred_region
      // Predicated region
      $region21: #{refine_subnet_forward.26} parent=19 // pred_check
        %p149 = pneg %p44
      $region22: #{refine_subnet_forward.26} parent=19 // pred_check_branch
        %151 = sbr.rel (%p149) target = $region24
      $region23: #{refine_subnet_forward.26} parent=19 // pred_region
        %s152 = smul.u32 8, %s18
        %p153 = scmp.lt.s32.totalorder %s17, 1
        %s154 = scalar_select %p153, %s17, 1
        %p155 = scmp.lt.s32.totalorder %s152, 7
        %s156 = scalar_select %p155, %s152, 7
        %s157 = smul.addr %s156, 3
        %s158 = smul.addr %s154, 24
        %s159 = sadd.s32 %s157, %s158
        %s160 = smul.addr %s159, 4
        %s161 = scalar_lea.vmem %s0, %s160
        %s162 = smul.u32 8, %s18
      $region24: #{refine_subnet_forward.26} parent=19 // pred_fallthru
        _
    $region20: #{refine_subnet_forward.26} parent=5 // pred_fallthru
      _
    %p163 = scmp.le.s32.totalorder 1, %s10
    %p164 = scmp.lt.s32.totalorder %s10, 3
    %p165 = pnand %p163, %p164
    %p166 = pneg %p165
    // Predicated region
    $region25: #{refine_subnet_forward.26} parent=5 // pred_check
      _
    $region26: #{refine_subnet_forward.26} parent=5 // pred_check_branch
      %168 = sbr.rel (%p165) target = $region28
    $region27: #{refine_subnet_forward.26} parent=5 // pred_region
      %s169 = ssub.s32 %s10, 1
      %s170 = smul.u32 8, %s20
      %p171 = scmp.lt.s32.totalorder %s19, 1
      %s172 = scalar_select %p171, %s19, 1
      %p173 = scmp.lt.s32.totalorder %s170, 7
      %s174 = scalar_select %p173, %s170, 7
      %s175 = smul.addr %s174, 3
      %s176 = smul.addr %s172, 24
      %s177 = sadd.s32 %s175, %s176
      %s178 = smul.addr %s177, 4
      %s179 = scalar_lea.vmem %s0, %s178
      %p180 = pneg %p50
      %p181 = pneg %p47
      %p182 = pneg %p71
      %p183 = pneg %p68
      %p184 = pneg %p99
      %p185 = pneg %p96
      %s186 = smul.u32 8, %s20
      %p187 = scmp.lt.s32.totalorder %s19, 1
      %s188 = scalar_select %p187, %s19, 1
      %p189 = scmp.lt.s32.totalorder %s186, 7
      %s190 = scalar_select %p189, %s186, 7
      %s191 = smul.addr %s188, 8
      %s192 = sadd.s32 %s190, %s191
      %s193 = smul.addr %s192, 4
      %s194 = scalar_lea.vmem %s2, %s193
      %p195 = pneg %p127
      %p196 = pneg %p124
      %p197 = scmp.lt.s32.totalorder %s19, 1
      %s198 = scalar_select %p197, %s19, 1
      %p199 = scmp.lt.s32.totalorder %s20, 0
      %s200 = scalar_select %p199, %s20, 0
      %s201 = sadd.s32 %s200, %s198
      %s202 = smul.addr %s201, 2
      %s203 = scalar_lea.vmem %s3, %s202
      %s204 = smul.u32 8, %s20
      %p205 = scmp.lt.s32.totalorder %s19, 1
      %s206 = scalar_select %p205, %s19, 1
      %p207 = scmp.lt.s32.totalorder %s204, 7
      %s208 = scalar_select %p207, %s204, 7
      %s209 = smul.addr %s208, 3
      %s210 = smul.addr %s206, 24
      %s211 = sadd.s32 %s209, %s210
      %s212 = smul.addr %s211, 4
      %s213 = scalar_lea.vmem %s0, %s212
      %s214 = smul.u32 8, %s20
      %s215 = smul.u32 8, %s20
      %p216 = scmp.lt.s32.totalorder %s19, 1
      %s217 = scalar_select %p216, %s19, 1
      %p218 = scmp.lt.s32.totalorder %s215, 7
      %s219 = scalar_select %p218, %s215, 7
      %s220 = smul.addr %s217, 8
      %s221 = sadd.s32 %s219, %s220
      %s222 = smul.addr %s221, 4
      %s223 = scalar_lea.vmem %s2, %s222
      %s224 = smul.u32 8, %s20
      %p225 = scmp.lt.s32.totalorder %s19, 1
      %s226 = scalar_select %p225, %s19, 1
      %p227 = scmp.lt.s32.totalorder %s20, 0
      %s228 = scalar_select %p227, %s20, 0
      %s229 = sadd.s32 %s228, %s226
      %s230 = smul.addr %s229, 2
      %s231 = scalar_lea.vmem %s3, %s230
      %v233 = vld [vmem:[%s213] sm:$0xff]
      %v234 = vld [vmem:[%s213 + $0x8] sm:$0xf]
      %v235 = vld [vmem:[%s213 + $0xc] sm:$0xff]
      %v236 = vld [vmem:[%s213 + $0x14] sm:$0xf]
      %v237 = vld [vmem:[%s213 + $0x18] sm:$0xff]
      %v238 = vld [vmem:[%s213 + $0x20] sm:$0xf]
      %v239 = vld [vmem:[%s213 + $0x24] sm:$0xff]
      %v240 = vld [vmem:[%s213 + $0x2c] sm:$0xf]
      %v241 = vld [vmem:[%s213 + $0x30] sm:$0xff]
      %v242 = vld [vmem:[%s213 + $0x38] sm:$0xf]
      %v243 = vld [vmem:[%s213 + $0x3c] sm:$0xff]
      %v244 = vld [vmem:[%s213 + $0x44] sm:$0xf]
      %v245 = vld [vmem:[%s213 + $0x48] sm:$0xff]
      %v246 = vld [vmem:[%s213 + $0x50] sm:$0xf]
      %v247 = vld [vmem:[%s213 + $0x54] sm:$0xff]
      %v248 = vld [vmem:[%s213 + $0x5c] sm:$0xf]
      %v249 = vld [vmem:[%s1] sm:$0xf]
      %v250 = vld [vmem:[%s1 + $0x4] sm:$0xf]
      %v251 = vld [vmem:[%s1 + $0x8] sm:$0xf]
      %v252 = vld [vmem:[%s1 + $0xc] sm:$0xf]
      %v253 = vld [vmem:[%s1 + $0x10] sm:$0xf]
      %v254 = vld [vmem:[%s1 + $0x14] sm:$0xf]
      %v255 = vld [vmem:[%s1 + $0x18] sm:$0xf]
      %v256 = vld [vmem:[%s1 + $0x1c] sm:$0xf]
      %v257 = vld [vmem:[%s1 + $0x20] sm:$0xf]
      %v258 = vld [vmem:[%s1 + $0x24] sm:$0xf]
      %v259 = vld [vmem:[%s1 + $0x28] sm:$0xf]
      %v260 = vld [vmem:[%s1 + $0x2c] sm:$0xf]
      %v261 = vld [vmem:[%s1 + $0x30] sm:$0xf]
      %v262 = vld [vmem:[%s1 + $0x34] sm:$0xf]
      %v263 = vld [vmem:[%s1 + $0x38] sm:$0xf]
      %v264 = vld [vmem:[%s1 + $0x3c] sm:$0xf]
      %v265 = vld [vmem:[%s1 + $0x40] sm:$0xf]
      %v266 = vld [vmem:[%s1 + $0x44] sm:$0xf]
      %v267 = vld [vmem:[%s1 + $0x48] sm:$0xf]
      %v268 = vld [vmem:[%s1 + $0x4c] sm:$0xf]
      %v269 = vld [vmem:[%s1 + $0x50] sm:$0xf]
      %v270 = vld [vmem:[%s1 + $0x54] sm:$0xf]
      %v271 = vld [vmem:[%s1 + $0x58] sm:$0xf]
      %v272 = vld [vmem:[%s1 + $0x5c] sm:$0xf]
      %v273 = vld [vmem:[%s1 + $0x60] sm:$0xf]
      %v274 = vld [vmem:[%s1 + $0x64] sm:$0xf]
      %v275 = vld [vmem:[%s1 + $0x68] sm:$0xf]
      %v276 = vld [vmem:[%s1 + $0x6c] sm:$0xf]
      %v277 = vld [vmem:[%s1 + $0x70] sm:$0xf]
      %v278 = vld [vmem:[%s1 + $0x74] sm:$0xf]
      %v279 = vld [vmem:[%s1 + $0x78] sm:$0xf]
      %v280 = vld [vmem:[%s1 + $0x7c] sm:$0xf]
      %v281 = vld [vmem:[%s1 + $0x80] sm:$0xf]
      %v282 = vld [vmem:[%s1 + $0x84] sm:$0xf]
      %v283 = vld [vmem:[%s1 + $0x88] sm:$0xf]
      %v284 = vld [vmem:[%s1 + $0x8c] sm:$0xf]
      %v285 = vld [vmem:[%s1 + $0x90] sm:$0xf]
      %v286 = vld [vmem:[%s1 + $0x94] sm:$0xf]
      %v287 = vld [vmem:[%s1 + $0x98] sm:$0xf]
      %v288 = vld [vmem:[%s1 + $0x9c] sm:$0xf]
      %v289 = vld [vmem:[%s1 + $0xa0] sm:$0xf]
      %v290 = vld [vmem:[%s1 + $0xa4] sm:$0xf]
      %v291 = vld [vmem:[%s1 + $0xa8] sm:$0xf]
      %v292 = vld [vmem:[%s1 + $0xac] sm:$0xf]
      %v293 = vld [vmem:[%s1 + $0xb0] sm:$0xf]
      %v294 = vld [vmem:[%s1 + $0xb4] sm:$0xf]
      %v295 = vld [vmem:[%s1 + $0xb8] sm:$0xf]
      %v296 = vld [vmem:[%s1 + $0xbc] sm:$0xf]
      %v313 = vunpack.c.l.b16 %v233
      %v314 = vunpack.c.h.b16 %v233
      %v315 = vunpack.c.l.b16 %v234
      %v316 = vunpack.c.l.b16 %v235
      %v317 = vunpack.c.h.b16 %v235
      %v318 = vunpack.c.l.b16 %v236
      %v319 = vunpack.c.l.b16 %v237
      %v320 = vunpack.c.h.b16 %v237
      %v321 = vunpack.c.l.b16 %v238
      %v322 = vunpack.c.l.b16 %v239
      %v323 = vunpack.c.h.b16 %v239
      %v324 = vunpack.c.l.b16 %v240
      %v325 = vunpack.c.l.b16 %v241
      %v326 = vunpack.c.h.b16 %v241
      %v327 = vunpack.c.l.b16 %v242
      %v328 = vunpack.c.l.b16 %v243
      %v329 = vunpack.c.h.b16 %v243
      %v330 = vunpack.c.l.b16 %v244
      %v331 = vunpack.c.l.b16 %v245
      %v332 = vunpack.c.h.b16 %v245
      %v333 = vunpack.c.l.b16 %v246
      %v334 = vunpack.c.l.b16 %v247
      %v335 = vunpack.c.h.b16 %v247
      %v336 = vunpack.c.l.b16 %v248
      %v337 = vpack.c.b16 %v316, %v313
      %v338 = vpack.c.b16 %v317, %v314
      %v339 = vpack.c.b16 %v318, %v315
      %v340 = vpack.c.b16 %v322, %v319
      %v341 = vpack.c.b16 %v323, %v320
      %v342 = vpack.c.b16 %v324, %v321
      %v343 = vpack.c.b16 %v328, %v325
      %v344 = vpack.c.b16 %v329, %v326
      %v345 = vpack.c.b16 %v330, %v327
      %v346 = vpack.c.b16 %v334, %v331
      %v347 = vpack.c.b16 %v335, %v332
      %v348 = vpack.c.b16 %v336, %v333
      %v409 = vunpack.c.l.b16 %v249
      %v410 = vunpack.c.l.b16 %v250
      %v411 = vunpack.c.l.b16 %v251
      %v412 = vunpack.c.l.b16 %v252
      %v413 = vunpack.c.l.b16 %v253
      %v414 = vunpack.c.l.b16 %v254
      %v415 = vunpack.c.l.b16 %v255
      %v416 = vunpack.c.l.b16 %v256
      %v417 = vunpack.c.l.b16 %v257
      %v418 = vunpack.c.l.b16 %v258
      %v419 = vunpack.c.l.b16 %v259
      %v420 = vunpack.c.l.b16 %v260
      %v421 = vunpack.c.l.b16 %v261
      %v422 = vunpack.c.l.b16 %v262
      %v423 = vunpack.c.l.b16 %v263
      %v424 = vunpack.c.l.b16 %v264
      %v425 = vunpack.c.l.b16 %v265
      %v426 = vunpack.c.l.b16 %v266
      %v427 = vunpack.c.l.b16 %v267
      %v428 = vunpack.c.l.b16 %v268
      %v429 = vunpack.c.l.b16 %v269
      %v430 = vunpack.c.l.b16 %v270
      %v431 = vunpack.c.l.b16 %v271
      %v432 = vunpack.c.l.b16 %v272
      %v433 = vunpack.c.l.b16 %v273
      %v434 = vunpack.c.l.b16 %v274
      %v435 = vunpack.c.l.b16 %v275
      %v436 = vunpack.c.l.b16 %v276
      %v437 = vunpack.c.l.b16 %v277
      %v438 = vunpack.c.l.b16 %v278
      %v439 = vunpack.c.l.b16 %v279
      %v440 = vunpack.c.l.b16 %v280
      %v441 = vunpack.c.l.b16 %v281
      %v442 = vunpack.c.l.b16 %v282
      %v443 = vunpack.c.l.b16 %v283
      %v444 = vunpack.c.l.b16 %v284
      %v445 = vunpack.c.l.b16 %v285
      %v446 = vunpack.c.l.b16 %v286
      %v447 = vunpack.c.l.b16 %v287
      %v448 = vunpack.c.l.b16 %v288
      %v449 = vunpack.c.l.b16 %v289
      %v450 = vunpack.c.l.b16 %v290
      %v451 = vunpack.c.l.b16 %v291
      %v452 = vunpack.c.l.b16 %v292
      %v453 = vunpack.c.l.b16 %v293
      %v454 = vunpack.c.l.b16 %v294
      %v455 = vunpack.c.l.b16 %v295
      %v456 = vunpack.c.l.b16 %v296
      %v457 = vpack.c.b16 %v410, %v409
      %v458 = vpack.c.b16 %v412, %v411
      %v459 = vpack.c.b16 %v414, %v413
      %v460 = vpack.c.b16 %v416, %v415
      %v461 = vpack.c.b16 %v418, %v417
      %v462 = vpack.c.b16 %v420, %v419
      %v463 = vpack.c.b16 %v422, %v421
      %v464 = vpack.c.b16 %v424, %v423
      %v465 = vpack.c.b16 %v426, %v425
      %v466 = vpack.c.b16 %v428, %v427
      %v467 = vpack.c.b16 %v430, %v429
      %v468 = vpack.c.b16 %v432, %v431
      %v469 = vpack.c.b16 %v434, %v433
      %v470 = vpack.c.b16 %v436, %v435
      %v471 = vpack.c.b16 %v438, %v437
      %v472 = vpack.c.b16 %v440, %v439
      %v473 = vpack.c.b16 %v442, %v441
      %v474 = vpack.c.b16 %v444, %v443
      %v475 = vpack.c.b16 %v446, %v445
      %v476 = vpack.c.b16 %v448, %v447
      %v477 = vpack.c.b16 %v450, %v449
      %v478 = vpack.c.b16 %v452, %v451
      %v479 = vpack.c.b16 %v454, %v453
      %v480 = vpack.c.b16 %v456, %v455
      %505 = vmatprep.subr.bf16.mxu0 0
      %506 = vmatpush1.bf16.msra.mxu0 %v457
      %507 = vmatprep.subr.bf16.mxu0 0
      %508 = vmatpush1.bf16.msra.mxu0 %v458
      %509 = vmatprep.subr.bf16.mxu0 0
      %510 = vmatpush1.bf16.msra.mxu0 %v459
      %511 = vmatprep.subr.bf16.mxu0 0
      %512 = vmatpush1.bf16.msra.mxu0 %v460
      %513 = vmatprep.subr.bf16.mxu0 0
      %514 = vmatpush1.bf16.msra.mxu0 %v461
      %515 = vmatprep.subr.bf16.mxu0 0
      %516 = vmatpush1.bf16.msra.mxu0 %v462
      %517 = vmatprep.subr.bf16.mxu0 0
      %518 = vmatpush1.bf16.msra.mxu0 %v463
      %519 = vmatprep.subr.bf16.mxu0 0
      %520 = vmatpush1.bf16.msra.mxu0 %v464
      %521 = vmatprep.subr.bf16.mxu0 0
      %522 = vmatpush1.bf16.msra.mxu0 %v465
      %523 = vmatprep.subr.bf16.mxu0 0
      %524 = vmatpush1.bf16.msra.mxu0 %v466
      %525 = vmatprep.subr.bf16.mxu0 0
      %526 = vmatpush1.bf16.msra.mxu0 %v467
      %527 = vmatprep.subr.bf16.mxu0 0
      %528 = vmatpush1.bf16.msra.mxu0 %v468
      %529 = vmatprep.subr.bf16.mxu0 0
      %530 = vmatpush1.bf16.msra.mxu0 %v469
      %531 = vmatprep.subr.bf16.mxu0 0
      %532 = vmatpush1.bf16.msra.mxu0 %v470
      %533 = vmatprep.subr.bf16.mxu0 0
      %534 = vmatpush1.bf16.msra.mxu0 %v471
      %535 = vmatprep.subr.bf16.mxu0 0
      %536 = vmatpush1.bf16.msra.mxu0 %v472
      %537 = vmatprep.mubr.bf16.mxu0 %v338
      %538 = vmatmul.mubr.bf16.gmra.mrb[0].mxu0 %v337
      %v539 = vpop.f32.mrb[0].mxu0
      %v540 = vadd.f32 0.0, %v539
      %v541 = vpop.f32.mrb[0].mxu0
      %v542 = vpop.f32.mrb[0].mxu0
      %v543 = vadd.f32 0.0, %v542
      %v544 = vpop.f32.mrb[0].mxu0
      %545 = vmatprep.mubr.bf16.mxu0 %v341
      %546 = vmatmul.mubr.bf16.gmra.mrb[0].mxu0 %v340
      %v547 = vpop.f32.mrb[0].mxu0
      %v548 = vadd.f32 0.0, %v547
      %v549 = vpop.f32.mrb[0].mxu0
      %v550 = vpop.f32.mrb[0].mxu0
      %v551 = vadd.f32 0.0, %v550
      %v552 = vpop.f32.mrb[0].mxu0
      %553 = vmatprep.mubr.bf16.mxu0 %v344
      %554 = vmatmul.mubr.bf16.gmra.mrb[0].mxu0 %v343
      %v555 = vpop.f32.mrb[0].mxu0
      %v556 = vadd.f32 0.0, %v555
      %v557 = vpop.f32.mrb[0].mxu0
      %v558 = vpop.f32.mrb[0].mxu0
      %v559 = vadd.f32 0.0, %v558
      %v560 = vpop.f32.mrb[0].mxu0
      %561 = vmatprep.mubr.bf16.mxu0 %v347
      %562 = vmatmul.mubr.bf16.gmra.mrb[0].mxu0 %v346
      %v563 = vpop.f32.mrb[0].mxu0
      %v564 = vadd.f32 0.0, %v563
      %v565 = vpop.f32.mrb[0].mxu0
      %v566 = vpop.f32.mrb[0].mxu0
      %v567 = vadd.f32 0.0, %v566
      %v568 = vpop.f32.mrb[0].mxu0
      %569 = vdwg.mxu0
      %570 = vmatprep.subr.bf16.mxu0 0
      %571 = vmatpush1.bf16.msra.mxu0 %v473
      %572 = vmatprep.subr.bf16.mxu0 0
      %573 = vmatpush1.bf16.msra.mxu0 %v474
      %574 = vmatprep.subr.bf16.mxu0 0
      %575 = vmatpush1.bf16.msra.mxu0 %v475
      %576 = vmatprep.subr.bf16.mxu0 0
      %577 = vmatpush1.bf16.msra.mxu0 %v476
      %578 = vmatprep.subr.bf16.mxu0 0
      %579 = vmatpush1.bf16.msra.mxu0 %v477
      %580 = vmatprep.subr.bf16.mxu0 0
      %581 = vmatpush1.bf16.msra.mxu0 %v478
      %582 = vmatprep.subr.bf16.mxu0 0
      %583 = vmatpush1.bf16.msra.mxu0 %v479
      %584 = vmatprep.subr.bf16.mxu0 0
      %585 = vmatpush1.bf16.msra.mxu0 %v480
      %586 = vmatprep.subr.bf16.mxu0 0
      %587 = vmatpush1.bf16.msra.mxu0 0
      %588 = vmatprep.subr.bf16.mxu0 0
      %589 = vmatpush1.bf16.msra.mxu0 0
      %590 = vmatprep.subr.bf16.mxu0 0
      %591 = vmatpush1.bf16.msra.mxu0 0
      %592 = vmatprep.subr.bf16.mxu0 0
      %593 = vmatpush1.bf16.msra.mxu0 0
      %594 = vmatprep.subr.bf16.mxu0 0
      %595 = vmatpush1.bf16.msra.mxu0 0
      %596 = vmatprep.subr.bf16.mxu0 0
      %597 = vmatpush1.bf16.msra.mxu0 0
      %598 = vmatprep.subr.bf16.mxu0 0
      %599 = vmatpush1.bf16.msra.mxu0 0
      %600 = vmatprep.subr.bf16.mxu0 0
      %601 = vmatpush1.bf16.msra.mxu0 0
      %602 = vmatprep.mubr.bf16.mxu0 0
      %603 = vmatmul.mubr.bf16.gmra.mrb[0].mxu0 %v339
      %v604 = vpop.f32.mrb[0].mxu0
      %v605 = vadd.f32 %v540, %v604
      %v606 = vpop.f32.mrb[0].mxu0
      %v607 = vpop.f32.mrb[0].mxu0
      %v608 = vadd.f32 %v543, %v607
      %v609 = vpop.f32.mrb[0].mxu0
      %610 = vmatprep.mubr.bf16.mxu0 0
      %611 = vmatmul.mubr.bf16.gmra.mrb[0].mxu0 %v342
      %v612 = vpop.f32.mrb[0].mxu0
      %v613 = vadd.f32 %v548, %v612
      %v614 = vpop.f32.mrb[0].mxu0
      %v615 = vpop.f32.mrb[0].mxu0
      %v616 = vadd.f32 %v551, %v615
      %v617 = vpop.f32.mrb[0].mxu0
      %618 = vmatprep.mubr.bf16.mxu0 0
      %619 = vmatmul.mubr.bf16.gmra.mrb[0].mxu0 %v345
      %v620 = vpop.f32.mrb[0].mxu0
      %v621 = vadd.f32 %v556, %v620
      %v622 = vpop.f32.mrb[0].mxu0
      %v623 = vpop.f32.mrb[0].mxu0
      %v624 = vadd.f32 %v559, %v623
      %v625 = vpop.f32.mrb[0].mxu0
      %626 = vmatprep.mubr.bf16.mxu0 0
      %627 = vmatmul.mubr.bf16.gmra.mrb[0].mxu0 %v348
      %v628 = vpop.f32.mrb[0].mxu0
      %v629 = vadd.f32 %v564, %v628
      %v630 = vpop.f32.mrb[0].mxu0
      %v631 = vpop.f32.mrb[0].mxu0
      %v632 = vadd.f32 %v567, %v631
      %v633 = vpop.f32.mrb[0].mxu0
      %634 = vdwg.mxu0
      %v635 = vpack.c.bf16 %v608, %v605
      %v636 = vpack.c.bf16 %v616, %v613
      %v637 = vpack.c.bf16 %v624, %v621
      %v638 = vpack.c.bf16 %v632, %v629
      %v643 = vunpack.c.l.b16 %v635
      %v644 = vunpack.c.h.b16 %v635
      %v645 = vunpack.c.l.b16 %v636
      %v646 = vunpack.c.h.b16 %v636
      %v647 = vunpack.c.l.b16 %v637
      %v648 = vunpack.c.h.b16 %v637
      %v649 = vunpack.c.l.b16 %v638
      %v650 = vunpack.c.h.b16 %v638
      %v651 = vpack.c.b16 %v643, %v643
      %v652 = vpack.c.b16 %v644, %v644
      %v653 = vpack.c.b16 %v645, %v645
      %v654 = vpack.c.b16 %v646, %v646
      %v655 = vpack.c.b16 %v647, %v647
      %v656 = vpack.c.b16 %v648, %v648
      %v657 = vpack.c.b16 %v649, %v649
      %v658 = vpack.c.b16 %v650, %v650
      %vm667 = vcmask 519168
      %668 = vst.msk [vmem:[%s223] sm:$0xf] %vm667, %v651
      %669 = vst.msk [vmem:[%s223 + $0x4] sm:$0xf] %vm667, %v652
      %670 = vst.msk [vmem:[%s223 + $0x8] sm:$0xf] %vm667, %v653
      %671 = vst.msk [vmem:[%s223 + $0xc] sm:$0xf] %vm667, %v654
      %672 = vst.msk [vmem:[%s223 + $0x10] sm:$0xf] %vm667, %v655
      %673 = vst.msk [vmem:[%s223 + $0x14] sm:$0xf] %vm667, %v656
      %674 = vst.msk [vmem:[%s223 + $0x18] sm:$0xf] %vm667, %v657
      %675 = vst.msk [vmem:[%s223 + $0x1c] sm:$0xf] %vm667, %v658
      %vm676 = vcmask 523264
      %v677 = vsel %vm676, %v605, 0.0
      %v678 = vsel %vm676, %v608, 0.0
      %v679 = vadd.f32 %v677, %v678
      %v680 = vsel %vm676, %v613, 0.0
      %v681 = vadd.f32 %v679, %v680
      %v682 = vsel %vm676, %v616, 0.0
      %v683 = vadd.f32 %v681, %v682
      %v684 = vsel %vm676, %v621, 0.0
      %v685 = vadd.f32 %v683, %v684
      %v686 = vsel %vm676, %v624, 0.0
      %v687 = vadd.f32 %v685, %v686
      %v688 = vsel %vm676, %v629, 0.0
      %v689 = vadd.f32 %v687, %v688
      %v690 = vsel %vm676, %v632, 0.0
      %v691 = vadd.f32 %v689, %v690
      %v692 = vrot.slane %v691, 4
      %v693 = vadd.f32 %v691, %v692
      %v694 = vrot.slane %v693, 2
      %v695 = vadd.f32 %v693, %v694
      %v696 = vrot.slane %v695, 1
      %v697 = vadd.f32 %v695, %v696
      %vm698 = vcmask 516096
      %699 = vst.msk [vmem:[%s231] sm:$0x1] %vm698, %v697
      %v700 = vmul.f32 %v605, %v605
      %v701 = vmul.f32 %v608, %v608
      %v702 = vmul.f32 %v613, %v613
      %v703 = vmul.f32 %v616, %v616
      %v704 = vmul.f32 %v621, %v621
      %v705 = vmul.f32 %v624, %v624
      %v706 = vmul.f32 %v629, %v629
      %v707 = vmul.f32 %v632, %v632
      %v708 = vsel %vm676, %v700, 0.0
      %v709 = vsel %vm676, %v701, 0.0
      %v710 = vadd.f32 %v708, %v709
      %v711 = vsel %vm676, %v702, 0.0
      %v712 = vadd.f32 %v710, %v711
      %v713 = vsel %vm676, %v703, 0.0
      %v714 = vadd.f32 %v712, %v713
      %v715 = vsel %vm676, %v704, 0.0
      %v716 = vadd.f32 %v714, %v715
      %v717 = vsel %vm676, %v705, 0.0
      %v718 = vadd.f32 %v716, %v717
      %v719 = vsel %vm676, %v706, 0.0
      %v720 = vadd.f32 %v718, %v719
      %v721 = vsel %vm676, %v707, 0.0
      %v722 = vadd.f32 %v720, %v721
      %v723 = vrot.slane %v722, 4
      %v724 = vadd.f32 %v722, %v723
      %v725 = vrot.slane %v724, 2
      %v726 = vadd.f32 %v724, %v725
      %v727 = vrot.slane %v726, 1
      %v728 = vadd.f32 %v726, %v727
      %729 = vst.msk [vmem:[%s231 + $0x1] sm:$0x1] %vm698, %v728
      %s730 = smul.u32 8, %s20
      %p731 = scmp.lt.s32.totalorder %s19, 1
      %s732 = scalar_select %p731, %s19, 1
      %p733 = scmp.lt.s32.totalorder %s730, 7
      %s734 = scalar_select %p733, %s730, 7
      %s735 = smul.addr %s732, 8
      %s736 = sadd.s32 %s734, %s735
      %s737 = smul.addr %s736, 4
      %s738 = scalar_lea.vmem %s2, %s737
      %p739 = scmp.lt.s32.totalorder %s19, 1
      %s740 = scalar_select %p739, %s19, 1
      %p741 = scmp.lt.s32.totalorder %s20, 0
      %s742 = scalar_select %p741, %s20, 0
      %s743 = sadd.s32 %s742, %s740
      %s744 = smul.addr %s743, 2
      %s745 = scalar_lea.vmem %s3, %s744
      // Predicated region
      $region29: #{refine_subnet_forward.26} parent=27 // pred_check
        %p746 = pneg %p96
      $region30: #{refine_subnet_forward.26} parent=27 // pred_check_branch
        %748 = sbr.rel (%p746) target = $region32
      $region31: #{refine_subnet_forward.26} parent=27 // pred_region
        %s749 = smul.u32 8, %s20
      $region32: #{refine_subnet_forward.26} parent=27 // pred_fallthru
        _
      // Predicated region
      $region33: #{refine_subnet_forward.26} parent=27 // pred_check
        %p750 = pneg %p124
      $region34: #{refine_subnet_forward.26} parent=27 // pred_check_branch
        %752 = sbr.rel (%p750) target = $region36
      $region35: #{refine_subnet_forward.26} parent=27 // pred_region
        _
      $region36: #{refine_subnet_forward.26} parent=27 // pred_fallthru
        _
    $region28: #{refine_subnet_forward.26} parent=5 // pred_fallthru
      _
    %p753 = scmp.le.s32.totalorder 2, %s10
    // Predicated region
    $region37: #{refine_subnet_forward.26} parent=5 // pred_check
      %p754 = pneg %p753
    $region38: #{refine_subnet_forward.26} parent=5 // pred_check_branch
      %756 = sbr.rel (%p754) target = $region40
    $region39: #{refine_subnet_forward.26} parent=5 // pred_region
      %s757 = ssub.s32 %s10, 2
      // Predicated region
      $region41: #{refine_subnet_forward.26} parent=39 // pred_check
        %p758 = pneg %p102
      $region42: #{refine_subnet_forward.26} parent=39 // pred_check_branch
        %760 = sbr.rel (%p758) target = $region44
      $region43: #{refine_subnet_forward.26} parent=39 // pred_region
        %s761 = smul.u32 8, %s22
        %p762 = scmp.lt.s32.totalorder %s21, 1
        %s763 = scalar_select %p762, %s21, 1
        %p764 = scmp.lt.s32.totalorder %s761, 7
        %s765 = scalar_select %p764, %s761, 7
        %s766 = smul.addr %s763, 8
        %s767 = sadd.s32 %s765, %s766
        %s768 = smul.addr %s767, 4
        %s769 = scalar_lea.vmem %s2, %s768
      $region44: #{refine_subnet_forward.26} parent=39 // pred_fallthru
        _
      // Predicated region
      $region45: #{refine_subnet_forward.26} parent=39 // pred_check
        %p770 = pneg %p130
      $region46: #{refine_subnet_forward.26} parent=39 // pred_check_branch
        %772 = sbr.rel (%p770) target = $region48
      $region47: #{refine_subnet_forward.26} parent=39 // pred_region
        %p773 = scmp.lt.s32.totalorder %s21, 1
        %s774 = scalar_select %p773, %s21, 1
        %p775 = scmp.lt.s32.totalorder %s22, 0
        %s776 = scalar_select %p775, %s22, 0
        %s777 = sadd.s32 %s776, %s774
        %s778 = smul.addr %s777, 2
        %s779 = scalar_lea.vmem %s3, %s778
      $region48: #{refine_subnet_forward.26} parent=39 // pred_fallthru
        _
    $region40: #{refine_subnet_forward.26} parent=5 // pred_fallthru
      _
  $region6: #{refine_subnet_forward.26} parent=0 // loop_footer
    %s14 = sadd.s32 1, %s10
  $region7: #{refine_subnet_forward.26} parent=0 // loop_footer_branch
    %9 = sbr.rel target = $region3
  $region8: #{refine_subnet_forward.26} parent=0 // loop_exit
    _

// kernel: refine_subnet_forward.29
$region0: #{refine_subnet_forward.29}
  #allocation0 [shape = 'u32[]', space=smem, size = 0x4, offset = 0x4, fixed_abs, tag = 'smem constant byte address 0x4 - core index']
  #allocation1 [shape = 'u32[144,128]{1,0:T(1,128)}', space=vmem, size = 0x12000, scoped, tag = 'internal scratch']
  %s0 = inlined_call_operand.vmem [shape: bf16[2,16,128], index: 0, kind: input, shape index: {}]
  %s1 = inlined_call_operand.vmem [shape: f32[2,2,128], index: 1, kind: input, shape index: {}]
  %s2 = inlined_call_operand.vmem [shape: bf16[2,16,128], index: 2, kind: output, shape index: {}]
  %s3 = sld [smem:[#allocation0]]
  $region41: #{refine_subnet_forward.29} parent=0
    _
  %s5 = ssub.s32 1, %s3
  %s6 = scalar_select 0, %s5, %s3
  loop: start=0, step=1, limit=4
  $region2: #{refine_subnet_forward.29} parent=0 // loop_pre_header
    _
  $region3: #{refine_subnet_forward.29} parent=0 // loop_header
    %s8 = sphi 0, %s12
    %p9 = scmp.ge.s32.totalorder %s8, 4
    %s15 = sphi 0, %s27
    %s16 = sphi 0, %s23
    %s17 = sphi 0, %s15
    %s18 = sphi 0, %s16
    %s19 = sphi 0, %s17
    %s20 = sphi 0, %s18
    %s32 = sphi 0, %s34
    %s35 = sphi 0, %s32
    %s36 = sphi 0, %s35
    %s52 = sphi 0, %s36
    %s58 = sphi 0, %s60
    %s61 = sphi 0, %s58
    %s62 = sphi 0, %s61
    %s78 = sphi 0, %s62
    %s86 = sphi 0, %s88
    %s89 = sphi 0, %s86
    %s90 = sphi 0, %s89
    %s106 = sphi 0, %s90
  $region4: #{refine_subnet_forward.29} parent=0 // loop_header_branch
    %11 = sbr.rel (%p9) target = $region8
  $region5: #{refine_subnet_forward.29} parent=0 // loop_body
    %s13 = ssub.s32 %s8, 1
    %s14 = ssub.s32 %s8, 2
    %s21 = sadd.s32 1, %s16
    %p22 = scmp.ge.s32.totalorder %s21, 1
    %s23 = scalar_select %p22, 0, %s21
    %s24 = sadd.s32 1, %s15
    %s25 = scalar_select %p22, %s24, %s15
    %p26 = scmp.ge.s32.totalorder %s25, 2
    %s27 = scalar_select %p26, 0, %s25
    %s28 = ssub.s32 %s15, %s27
    %s29 = ssub.s32 %s16, %s23
    %s30 = sor.u32 %s28, %s29
    %p31 = scmp.eq.s32.totalorder %s30, 0
    %s33 = sadd.s32 %s32, 1
    %s34 = scalar_select %p31, %s32, %s33
    %p37 = pneg %p31
    %p38 = scmp.eq.s32.totalorder %s8, 1
    %p39 = por %p37, %p38
    %p40 = scmp.ne.s32.totalorder %s32, %s35
    %p41 = scmp.eq.s32.totalorder %s8, 0
    %p42 = por %p40, %p41
    %p43 = scmp.ne.s32.totalorder %s32, %s35
    %p44 = scmp.eq.s32.totalorder %s13, 1
    %p45 = por %p43, %p44
    %p46 = scmp.ne.s32.totalorder %s35, %s36
    %p47 = scmp.eq.s32.totalorder %s13, 0
    %p48 = por %p46, %p47
    %p49 = scmp.ne.s32.totalorder %s35, %s36
    %p50 = scmp.eq.s32.totalorder %s14, 1
    %p51 = por %p49, %p50
    %p53 = scmp.ne.s32.totalorder %s36, %s52
    %p54 = scmp.eq.s32.totalorder %s14, 0
    %p55 = por %p53, %p54
    %s56 = ssub.s32 %s15, %s27
    %p57 = scmp.eq.s32.totalorder %s56, 0
    %s59 = sadd.s32 %s58, 1
    %s60 = scalar_select %p57, %s58, %s59
    %p63 = pneg %p57
    %p64 = scmp.eq.s32.totalorder %s8, 1
    %p65 = por %p63, %p64
    %p66 = scmp.ne.s32.totalorder %s58, %s61
    %p67 = scmp.eq.s32.totalorder %s8, 0
    %p68 = por %p66, %p67
    %p69 = scmp.ne.s32.totalorder %s58, %s61
    %p70 = scmp.eq.s32.totalorder %s13, 1
    %p71 = por %p69, %p70
    %p72 = scmp.ne.s32.totalorder %s61, %s62
    %p73 = scmp.eq.s32.totalorder %s13, 0
    %p74 = por %p72, %p73
    %p75 = scmp.ne.s32.totalorder %s61, %s62
    %p76 = scmp.eq.s32.totalorder %s14, 1
    %p77 = por %p75, %p76
    %p79 = scmp.ne.s32.totalorder %s62, %s78
    %p80 = scmp.eq.s32.totalorder %s14, 0
    %p81 = por %p79, %p80
    %s82 = ssub.s32 %s15, %s27
    %s83 = ssub.s32 %s16, %s23
    %s84 = sor.u32 %s82, %s83
    %p85 = scmp.eq.s32.totalorder %s84, 0
    %s87 = sadd.s32 %s86, 1
    %s88 = scalar_select %p85, %s86, %s87
    %p91 = pneg %p85
    %p92 = scmp.eq.s32.totalorder %s8, 1
    %p93 = por %p91, %p92
    %p94 = scmp.ne.s32.totalorder %s86, %s89
    %p95 = scmp.eq.s32.totalorder %s8, 0
    %p96 = por %p94, %p95
    %p97 = scmp.ne.s32.totalorder %s86, %s89
    %p98 = scmp.eq.s32.totalorder %s13, 1
    %p99 = por %p97, %p98
    %p100 = scmp.ne.s32.totalorder %s89, %s90
    %p101 = scmp.eq.s32.totalorder %s13, 0
    %p102 = por %p100, %p101
    %p103 = scmp.ne.s32.totalorder %s89, %s90
    %p104 = scmp.eq.s32.totalorder %s14, 1
    %p105 = por %p103, %p104
    %p107 = scmp.ne.s32.totalorder %s90, %s106
    %p108 = scmp.eq.s32.totalorder %s14, 0
    %p109 = por %p107, %p108
    %p110 = scmp.le.s32.totalorder 1, %s8
    %p111 = scmp.lt.s32.totalorder %s8, 3
    %p112 = pnand %p110, %p111
    %p113 = pneg %p112
    // Predicated region
    $region9: #{refine_subnet_forward.29} parent=5 // pred_check
      _
    $region10: #{refine_subnet_forward.29} parent=5 // pred_check_branch
      %115 = sbr.rel (%p112) target = $region12
    $region11: #{refine_subnet_forward.29} parent=5 // pred_region
      %s116 = ssub.s32 %s8, 1
    $region12: #{refine_subnet_forward.29} parent=5 // pred_fallthru
      _
    %p117 = scmp.lt.s32.totalorder %s8, 2
    // Predicated region
    $region13: #{refine_subnet_forward.29} parent=5 // pred_check
      %p118 = pneg %p117
    $region14: #{refine_subnet_forward.29} parent=5 // pred_check_branch
      %120 = sbr.rel (%p118) target = $region16
    $region15: #{refine_subnet_forward.29} parent=5 // pred_region
      // Predicated region
      $region17: #{refine_subnet_forward.29} parent=15 // pred_check
        %p121 = pneg %p42
      $region18: #{refine_subnet_forward.29} parent=15 // pred_check_branch
        %123 = sbr.rel (%p121) target = $region20
      $region19: #{refine_subnet_forward.29} parent=15 // pred_region
        %s124 = smul.u32 2, %s16
        %p125 = scmp.lt.s32.totalorder %s15, 1
        %s126 = scalar_select %p125, %s15, 1
        %p127 = scmp.lt.s32.totalorder %s124, 1
        %s128 = scalar_select %p127, %s124, 1
        %s129 = smul.addr %s126, 2
        %s130 = sadd.s32 %s128, %s129
        %s131 = smul.addr %s130, 4
        %s132 = scalar_lea.vmem %s0, %s131
        %s133 = smul.u32 2, %s16
      $region20: #{refine_subnet_forward.29} parent=15 // pred_fallthru
        _
      // Predicated region
      $region21: #{refine_subnet_forward.29} parent=15 // pred_check
        %p134 = pneg %p68
      $region22: #{refine_subnet_forward.29} parent=15 // pred_check_branch
        %136 = sbr.rel (%p134) target = $region24
      $region23: #{refine_subnet_forward.29} parent=15 // pred_region
        %p137 = scmp.lt.s32.totalorder %s15, 1
        %s138 = scalar_select %p137, %s15, 1
        %s139 = smul.addr %s138, 2
        %s140 = scalar_lea.vmem %s1, %s139
      $region24: #{refine_subnet_forward.29} parent=15 // pred_fallthru
        _
    $region16: #{refine_subnet_forward.29} parent=5 // pred_fallthru
      _
    %p141 = scmp.le.s32.totalorder 1, %s8
    %p142 = scmp.lt.s32.totalorder %s8, 3
    %p143 = pnand %p141, %p142
    %p144 = pneg %p143
    // Predicated region
    $region25: #{refine_subnet_forward.29} parent=5 // pred_check
      _
    $region26: #{refine_subnet_forward.29} parent=5 // pred_check_branch
      %146 = sbr.rel (%p143) target = $region28
    $region27: #{refine_subnet_forward.29} parent=5 // pred_region
      %s147 = ssub.s32 %s8, 1
      %s148 = smul.u32 2, %s18
      %p149 = scmp.lt.s32.totalorder %s17, 1
      %s150 = scalar_select %p149, %s17, 1
      %p151 = scmp.lt.s32.totalorder %s148, 1
      %s152 = scalar_select %p151, %s148, 1
      %s153 = smul.addr %s150, 2
      %s154 = sadd.s32 %s152, %s153
      %s155 = smul.addr %s154, 4
      %s156 = scalar_lea.vmem %s0, %s155
      %p157 = pneg %p48
      %p158 = pneg %p45
      %p159 = scmp.lt.s32.totalorder %s17, 1
      %s160 = scalar_select %p159, %s17, 1
      %s161 = smul.addr %s160, 2
      %s162 = scalar_lea.vmem %s1, %s161
      %p163 = pneg %p74
      %p164 = pneg %p71
      %p165 = pneg %p102
      %p166 = pneg %p99
      %s167 = smul.u32 2, %s18
      %p168 = scmp.lt.s32.totalorder %s17, 1
      %s169 = scalar_select %p168, %s17, 1
      %p170 = scmp.lt.s32.totalorder %s167, 1
      %s171 = scalar_select %p170, %s167, 1
      %s172 = smul.addr %s169, 2
      %s173 = sadd.s32 %s171, %s172
      %s174 = smul.addr %s173, 4
      %s175 = scalar_lea.vmem %s2, %s174
      %s176 = smul.u32 2, %s18
      %p177 = scmp.lt.s32.totalorder %s17, 1
      %s178 = scalar_select %p177, %s17, 1
      %p179 = scmp.lt.s32.totalorder %s176, 1
      %s180 = scalar_select %p179, %s176, 1
      %s181 = smul.addr %s178, 2
      %s182 = sadd.s32 %s180, %s181
      %s183 = smul.addr %s182, 4
      %s184 = scalar_lea.vmem %s0, %s183
      %s185 = smul.u32 2, %s18
      %p186 = scmp.lt.s32.totalorder %s17, 1
      %s187 = scalar_select %p186, %s17, 1
      %s188 = smul.addr %s187, 2
      %s189 = scalar_lea.vmem %s1, %s188
      %s190 = smul.u32 2, %s18
      %p191 = scmp.lt.s32.totalorder %s17, 1
      %s192 = scalar_select %p191, %s17, 1
      %p193 = scmp.lt.s32.totalorder %s190, 1
      %s194 = scalar_select %p193, %s190, 1
      %s195 = smul.addr %s192, 2
      %s196 = sadd.s32 %s194, %s195
      %s197 = smul.addr %s196, 4
      %s198 = scalar_lea.vmem %s2, %s197
      %s199 = smul.u32 2, %s18
      %v200 = vld [vmem:[%s184] sm:$0xf]
      %v201 = vld [vmem:[%s184 + $0x4] sm:$0xf]
      %v202 = vunpack.c.l.bf16 %v200
      %v203 = vunpack.c.l.bf16 %v201
      %v204 = vld [vmem:[%s189] sm:$0x1]
      %v205 = vlaneseq
      %v206 = vshrl.u32 %v205, 7
      %v207 = vsub.s32 0, %v206
      %v208 = vrot.slane %v204, %v207
      %v209 = vmul.f32 %v202, %v208
      %v210 = vmul.f32 %v203, %v208
      %v211 = vld [vmem:[%s189 + $0x1] sm:$0x1]
      %v212 = vlaneseq
      %v213 = vshrl.u32 %v212, 7
      %v214 = vsub.s32 0, %v213
      %v215 = vrot.slane %v211, %v214
      %v216 = vadd.f32 %v209, %v215
      %v217 = vadd.f32 %v210, %v215
      %v218 = vmax.f32 %v216, 0.0
      %v219 = vmax.f32 %v217, 0.0
      %v220 = vpack.c.bf16 %v219, %v218
      %v222 = vunpack.c.l.b16 %v220
      %v223 = vunpack.c.h.b16 %v220
      %v224 = vpack.c.b16 %v222, %v222
      %v225 = vpack.c.b16 %v223, %v223
      %228 = vst [vmem:[%s198] sm:$0xf] %v224
      %229 = vst [vmem:[%s198 + $0x4] sm:$0xf] %v225
      %s230 = smul.u32 2, %s18
      %p231 = scmp.lt.s32.totalorder %s17, 1
      %s232 = scalar_select %p231, %s17, 1
      %p233 = scmp.lt.s32.totalorder %s230, 1
      %s234 = scalar_select %p233, %s230, 1
      %s235 = smul.addr %s232, 2
      %s236 = sadd.s32 %s234, %s235
      %s237 = smul.addr %s236, 4
      %s238 = scalar_lea.vmem %s2, %s237
      // Predicated region
      $region29: #{refine_subnet_forward.29} parent=27 // pred_check
        %p239 = pneg %p99
      $region30: #{refine_subnet_forward.29} parent=27 // pred_check_branch
        %241 = sbr.rel (%p239) target = $region32
      $region31: #{refine_subnet_forward.29} parent=27 // pred_region
        %s242 = smul.u32 2, %s18
      $region32: #{refine_subnet_forward.29} parent=27 // pred_fallthru
        _
    $region28: #{refine_subnet_forward.29} parent=5 // pred_fallthru
      _
    %p243 = scmp.le.s32.totalorder 2, %s8
    // Predicated region
    $region33: #{refine_subnet_forward.29} parent=5 // pred_check
      %p244 = pneg %p243
    $region34: #{refine_subnet_forward.29} parent=5 // pred_check_branch
      %246 = sbr.rel (%p244) target = $region36
    $region35: #{refine_subnet_forward.29} parent=5 // pred_region
      %s247 = ssub.s32 %s8, 2
      // Predicated region
      $region37: #{refine_subnet_forward.29} parent=35 // pred_check
        %p248 = pneg %p105
      $region38: #{refine_subnet_forward.29} parent=35 // pred_check_branch
        %250 = sbr.rel (%p248) target = $region40
      $region39: #{refine_subnet_forward.29} parent=35 // pred_region
        %s251 = smul.u32 2, %s20
        %p252 = scmp.lt.s32.totalorder %s19, 1
        %s253 = scalar_select %p252, %s19, 1
        %p254 = scmp.lt.s32.totalorder %s251, 1
        %s255 = scalar_select %p254, %s251, 1
        %s256 = smul.addr %s253, 2
        %s257 = sadd.s32 %s255, %s256
        %s258 = smul.addr %s257, 4
        %s259 = scalar_lea.vmem %s2, %s258
      $region40: #{refine_subnet_forward.29} parent=35 // pred_fallthru
        _
    $region36: #{refine_subnet_forward.29} parent=5 // pred_fallthru
      _
  $region6: #{refine_subnet_forward.29} parent=0 // loop_footer
    %s12 = sadd.s32 1, %s8
  $region7: #{refine_subnet_forward.29} parent=0 // loop_footer_branch
    %7 = sbr.rel target = $region3
  $region8: #{refine_subnet_forward.29} parent=0 // loop_exit
    _

// kernel: refine_subnet_forward.28
$region0: #{refine_subnet_forward.28}
  #allocation0 [shape = 'u32[]', space=smem, size = 0x4, offset = 0x4, fixed_abs, tag = 'smem constant byte address 0x4 - core index']
  #allocation1 [shape = 'u32[144,128]{1,0:T(1,128)}', space=vmem, size = 0x12000, scoped, tag = 'internal scratch']
  %s0 = inlined_call_operand.vmem [shape: bf16[2,16,640], index: 0, kind: input, shape index: {}]
  %s1 = inlined_call_operand.vmem [shape: bf16[640,128], index: 1, kind: input, shape index: {}]
  %s2 = inlined_call_operand.vmem [shape: bf16[2,16,128], index: 2, kind: output, shape index: {0}]
  %s3 = inlined_call_operand.vmem [shape: f32[2,1,2,128], index: 3, kind: output, shape index: {1}]
  %4 = xla_tuple %s2, %s3
  %s5 = sld [smem:[#allocation0]]
  $region49: #{refine_subnet_forward.28} parent=0
    _
  %s7 = ssub.s32 1, %s5
  %s8 = scalar_select 0, %s7, %s5
  loop: start=0, step=1, limit=4
  $region2: #{refine_subnet_forward.28} parent=0 // loop_pre_header
    _
  $region3: #{refine_subnet_forward.28} parent=0 // loop_header
    %s10 = sphi 0, %s14
    %p11 = scmp.ge.s32.totalorder %s10, 4
    %s17 = sphi 0, %s29
    %s18 = sphi 0, %s25
    %s19 = sphi 0, %s17
    %s20 = sphi 0, %s18
    %s21 = sphi 0, %s19
    %s22 = sphi 0, %s20
    %s34 = sphi 0, %s36
    %s37 = sphi 0, %s34
    %s38 = sphi 0, %s37
    %s54 = sphi 0, %s38
    %s58 = sphi 0, %s58
    %s60 = sphi 0, %s58
    %s61 = sphi 0, %s60
    %s75 = sphi 0, %s61
    %s83 = sphi 0, %s85
    %s86 = sphi 0, %s83
    %s87 = sphi 0, %s86
    %s103 = sphi 0, %s87
    %s111 = sphi 0, %s113
    %s114 = sphi 0, %s111
    %s115 = sphi 0, %s114
    %s131 = sphi 0, %s115
  $region4: #{refine_subnet_forward.28} parent=0 // loop_header_branch
    %13 = sbr.rel (%p11) target = $region8
  $region5: #{refine_subnet_forward.28} parent=0 // loop_body
    %s15 = ssub.s32 %s10, 1
    %s16 = ssub.s32 %s10, 2
    %s23 = sadd.s32 1, %s18
    %p24 = scmp.ge.s32.totalorder %s23, 1
    %s25 = scalar_select %p24, 0, %s23
    %s26 = sadd.s32 1, %s17
    %s27 = scalar_select %p24, %s26, %s17
    %p28 = scmp.ge.s32.totalorder %s27, 2
    %s29 = scalar_select %p28, 0, %s27
    %s30 = ssub.s32 %s17, %s29
    %s31 = ssub.s32 %s18, %s25
    %s32 = sor.u32 %s30, %s31
    %p33 = scmp.eq.s32.totalorder %s32, 0
    %s35 = sadd.s32 %s34, 1
    %s36 = scalar_select %p33, %s34, %s35
    %p39 = pneg %p33
    %p40 = scmp.eq.s32.totalorder %s10, 1
    %p41 = por %p39, %p40
    %p42 = scmp.ne.s32.totalorder %s34, %s37
    %p43 = scmp.eq.s32.totalorder %s10, 0
    %p44 = por %p42, %p43
    %p45 = scmp.ne.s32.totalorder %s34, %s37
    %p46 = scmp.eq.s32.totalorder %s15, 1
    %p47 = por %p45, %p46
    %p48 = scmp.ne.s32.totalorder %s37, %s38
    %p49 = scmp.eq.s32.totalorder %s15, 0
    %p50 = por %p48, %p49
    %p51 = scmp.ne.s32.totalorder %s37, %s38
    %p52 = scmp.eq.s32.totalorder %s16, 1
    %p53 = por %p51, %p52
    %p55 = scmp.ne.s32.totalorder %s38, %s54
    %p56 = scmp.eq.s32.totalorder %s16, 0
    %p57 = por %p55, %p56
    %s59 = sadd.s32 %s58, 1
    %p62 = scmp.eq.s32.totalorder %s10, 1
    %p63 = scmp.ne.s32.totalorder %s58, %s60
    %p64 = scmp.eq.s32.totalorder %s10, 0
    %p65 = por %p63, %p64
    %p66 = scmp.ne.s32.totalorder %s58, %s60
    %p67 = scmp.eq.s32.totalorder %s15, 1
    %p68 = por %p66, %p67
    %p69 = scmp.ne.s32.totalorder %s60, %s61
    %p70 = scmp.eq.s32.totalorder %s15, 0
    %p71 = por %p69, %p70
    %p72 = scmp.ne.s32.totalorder %s60, %s61
    %p73 = scmp.eq.s32.totalorder %s16, 1
    %p74 = por %p72, %p73
    %p76 = scmp.ne.s32.totalorder %s61, %s75
    %p77 = scmp.eq.s32.totalorder %s16, 0
    %p78 = por %p76, %p77
    %s79 = ssub.s32 %s17, %s29
    %s80 = ssub.s32 %s18, %s25
    %s81 = sor.u32 %s79, %s80
    %p82 = scmp.eq.s32.totalorder %s81, 0
    %s84 = sadd.s32 %s83, 1
    %s85 = scalar_select %p82, %s83, %s84
    %p88 = pneg %p82
    %p89 = scmp.eq.s32.totalorder %s10, 1
    %p90 = por %p88, %p89
    %p91 = scmp.ne.s32.totalorder %s83, %s86
    %p92 = scmp.eq.s32.totalorder %s10, 0
    %p93 = por %p91, %p92
    %p94 = scmp.ne.s32.totalorder %s83, %s86
    %p95 = scmp.eq.s32.totalorder %s15, 1
    %p96 = por %p94, %p95
    %p97 = scmp.ne.s32.totalorder %s86, %s87
    %p98 = scmp.eq.s32.totalorder %s15, 0
    %p99 = por %p97, %p98
    %p100 = scmp.ne.s32.totalorder %s86, %s87
    %p101 = scmp.eq.s32.totalorder %s16, 1
    %p102 = por %p100, %p101
    %p104 = scmp.ne.s32.totalorder %s87, %s103
    %p105 = scmp.eq.s32.totalorder %s16, 0
    %p106 = por %p104, %p105
    %s107 = ssub.s32 %s17, %s29
    %s108 = ssub.s32 %s18, %s25
    %s109 = sor.u32 %s107, %s108
    %p110 = scmp.eq.s32.totalorder %s109, 0
    %s112 = sadd.s32 %s111, 1
    %s113 = scalar_select %p110, %s111, %s112
    %p116 = pneg %p110
    %p117 = scmp.eq.s32.totalorder %s10, 1
    %p118 = por %p116, %p117
    %p119 = scmp.ne.s32.totalorder %s111, %s114
    %p120 = scmp.eq.s32.totalorder %s10, 0
    %p121 = por %p119, %p120
    %p122 = scmp.ne.s32.totalorder %s111, %s114
    %p123 = scmp.eq.s32.totalorder %s15, 1
    %p124 = por %p122, %p123
    %p125 = scmp.ne.s32.totalorder %s114, %s115
    %p126 = scmp.eq.s32.totalorder %s15, 0
    %p127 = por %p125, %p126
    %p128 = scmp.ne.s32.totalorder %s114, %s115
    %p129 = scmp.eq.s32.totalorder %s16, 1
    %p130 = por %p128, %p129
    %p132 = scmp.ne.s32.totalorder %s115, %s131
    %p133 = scmp.eq.s32.totalorder %s16, 0
    %p134 = por %p132, %p133
    %p135 = scmp.le.s32.totalorder 1, %s10
    %p136 = scmp.lt.s32.totalorder %s10, 3
    %p137 = pnand %p135, %p136
    %p138 = pneg %p137
    // Predicated region
    $region9: #{refine_subnet_forward.28} parent=5 // pred_check
      _
    $region10: #{refine_subnet_forward.28} parent=5 // pred_check_branch
      %140 = sbr.rel (%p137) target = $region12
    $region11: #{refine_subnet_forward.28} parent=5 // pred_region
      %s141 = ssub.s32 %s10, 1
      // Predicated region
      $region13: #{refine_subnet_forward.28} parent=11 // pred_check
        %p142 = pneg %p71
      $region14: #{refine_subnet_forward.28} parent=11 // pred_check_branch
        %144 = sbr.rel (%p142) target = $region16
      $region15: #{refine_subnet_forward.28} parent=11 // pred_region
        _
      $region16: #{refine_subnet_forward.28} parent=11 // pred_fallthru
        _
    $region12: #{refine_subnet_forward.28} parent=5 // pred_fallthru
      _
    %p145 = scmp.lt.s32.totalorder %s10, 2
    // Predicated region
    $region17: #{refine_subnet_forward.28} parent=5 // pred_check
      %p146 = pneg %p145
    $region18: #{refine_subnet_forward.28} parent=5 // pred_check_branch
      %148 = sbr.rel (%p146) target = $region20
    $region19: #{refine_subnet_forward.28} parent=5 // pred_region
      // Predicated region
      $region21: #{refine_subnet_forward.28} parent=19 // pred_check
        %p149 = pneg %p44
      $region22: #{refine_subnet_forward.28} parent=19 // pred_check_branch
        %151 = sbr.rel (%p149) target = $region24
      $region23: #{refine_subnet_forward.28} parent=19 // pred_region
        %s152 = smul.u32 2, %s18
        %p153 = scmp.lt.s32.totalorder %s17, 1
        %s154 = scalar_select %p153, %s17, 1
        %p155 = scmp.lt.s32.totalorder %s152, 1
        %s156 = scalar_select %p155, %s152, 1
        %s157 = smul.addr %s156, 5
        %s158 = smul.addr %s154, 10
        %s159 = sadd.s32 %s157, %s158
        %s160 = smul.addr %s159, 4
        %s161 = scalar_lea.vmem %s0, %s160
        %s162 = smul.u32 2, %s18
      $region24: #{refine_subnet_forward.28} parent=19 // pred_fallthru
        _
    $region20: #{refine_subnet_forward.28} parent=5 // pred_fallthru
      _
    %p163 = scmp.le.s32.totalorder 1, %s10
    %p164 = scmp.lt.s32.totalorder %s10, 3
    %p165 = pnand %p163, %p164
    %p166 = pneg %p165
    // Predicated region
    $region25: #{refine_subnet_forward.28} parent=5 // pred_check
      _
    $region26: #{refine_subnet_forward.28} parent=5 // pred_check_branch
      %168 = sbr.rel (%p165) target = $region28
    $region27: #{refine_subnet_forward.28} parent=5 // pred_region
      %s169 = ssub.s32 %s10, 1
      %s170 = smul.u32 2, %s20
      %p171 = scmp.lt.s32.totalorder %s19, 1
      %s172 = scalar_select %p171, %s19, 1
      %p173 = scmp.lt.s32.totalorder %s170, 1
      %s174 = scalar_select %p173, %s170, 1
      %s175 = smul.addr %s174, 5
      %s176 = smul.addr %s172, 10
      %s177 = sadd.s32 %s175, %s176
      %s178 = smul.addr %s177, 4
      %s179 = scalar_lea.vmem %s0, %s178
      %p180 = pneg %p50
      %p181 = pneg %p47
      %p182 = pneg %p71
      %p183 = pneg %p68
      %p184 = pneg %p99
      %p185 = pneg %p96
      %s186 = smul.u32 2, %s20
      %p187 = scmp.lt.s32.totalorder %s19, 1
      %s188 = scalar_select %p187, %s19, 1
      %p189 = scmp.lt.s32.totalorder %s186, 1
      %s190 = scalar_select %p189, %s186, 1
      %s191 = smul.addr %s188, 2
      %s192 = sadd.s32 %s190, %s191
      %s193 = smul.addr %s192, 4
      %s194 = scalar_lea.vmem %s2, %s193
      %p195 = pneg %p127
      %p196 = pneg %p124
      %p197 = scmp.lt.s32.totalorder %s19, 1
      %s198 = scalar_select %p197, %s19, 1
      %p199 = scmp.lt.s32.totalorder %s20, 0
      %s200 = scalar_select %p199, %s20, 0
      %s201 = sadd.s32 %s200, %s198
      %s202 = smul.addr %s201, 2
      %s203 = scalar_lea.vmem %s3, %s202
      %s204 = smul.u32 2, %s20
      %p205 = scmp.lt.s32.totalorder %s19, 1
      %s206 = scalar_select %p205, %s19, 1
      %p207 = scmp.lt.s32.totalorder %s204, 1
      %s208 = scalar_select %p207, %s204, 1
      %s209 = smul.addr %s208, 5
      %s210 = smul.addr %s206, 10
      %s211 = sadd.s32 %s209, %s210
      %s212 = smul.addr %s211, 4
      %s213 = scalar_lea.vmem %s0, %s212
      %s214 = smul.u32 2, %s20
      %s215 = smul.u32 2, %s20
      %p216 = scmp.lt.s32.totalorder %s19, 1
      %s217 = scalar_select %p216, %s19, 1
      %p218 = scmp.lt.s32.totalorder %s215, 1
      %s219 = scalar_select %p218, %s215, 1
      %s220 = smul.addr %s217, 2
      %s221 = sadd.s32 %s219, %s220
      %s222 = smul.addr %s221, 4
      %s223 = scalar_lea.vmem %s2, %s222
      %s224 = smul.u32 2, %s20
      %p225 = scmp.lt.s32.totalorder %s19, 1
      %s226 = scalar_select %p225, %s19, 1
      %p227 = scmp.lt.s32.totalorder %s20, 0
      %s228 = scalar_select %p227, %s20, 0
      %s229 = sadd.s32 %s228, %s226
      %s230 = smul.addr %s229, 2
      %s231 = scalar_lea.vmem %s3, %s230
      %v233 = vld [vmem:[%s213] sm:$0xff]
      %v234 = vld [vmem:[%s213 + $0x8] sm:$0xff]
      %v235 = vld [vmem:[%s213 + $0x10] sm:$0xf]
      %v236 = vld [vmem:[%s213 + $0x14] sm:$0xff]
      %v237 = vld [vmem:[%s213 + $0x1c] sm:$0xff]
      %v238 = vld [vmem:[%s213 + $0x24] sm:$0xf]
      %v239 = vld [vmem:[%s1] sm:$0xf]
      %v240 = vld [vmem:[%s1 + $0x4] sm:$0xf]
      %v241 = vld [vmem:[%s1 + $0x8] sm:$0xf]
      %v242 = vld [vmem:[%s1 + $0xc] sm:$0xf]
      %v243 = vld [vmem:[%s1 + $0x10] sm:$0xf]
      %v244 = vld [vmem:[%s1 + $0x14] sm:$0xf]
      %v245 = vld [vmem:[%s1 + $0x18] sm:$0xf]
      %v246 = vld [vmem:[%s1 + $0x1c] sm:$0xf]
      %v247 = vld [vmem:[%s1 + $0x20] sm:$0xf]
      %v248 = vld [vmem:[%s1 + $0x24] sm:$0xf]
      %v249 = vld [vmem:[%s1 + $0x28] sm:$0xf]
      %v250 = vld [vmem:[%s1 + $0x2c] sm:$0xf]
      %v251 = vld [vmem:[%s1 + $0x30] sm:$0xf]
      %v252 = vld [vmem:[%s1 + $0x34] sm:$0xf]
      %v253 = vld [vmem:[%s1 + $0x38] sm:$0xf]
      %v254 = vld [vmem:[%s1 + $0x3c] sm:$0xf]
      %v255 = vld [vmem:[%s1 + $0x40] sm:$0xf]
      %v256 = vld [vmem:[%s1 + $0x44] sm:$0xf]
      %v257 = vld [vmem:[%s1 + $0x48] sm:$0xf]
      %v258 = vld [vmem:[%s1 + $0x4c] sm:$0xf]
      %v259 = vld [vmem:[%s1 + $0x50] sm:$0xf]
      %v260 = vld [vmem:[%s1 + $0x54] sm:$0xf]
      %v261 = vld [vmem:[%s1 + $0x58] sm:$0xf]
      %v262 = vld [vmem:[%s1 + $0x5c] sm:$0xf]
      %v263 = vld [vmem:[%s1 + $0x60] sm:$0xf]
      %v264 = vld [vmem:[%s1 + $0x64] sm:$0xf]
      %v265 = vld [vmem:[%s1 + $0x68] sm:$0xf]
      %v266 = vld [vmem:[%s1 + $0x6c] sm:$0xf]
      %v267 = vld [vmem:[%s1 + $0x70] sm:$0xf]
      %v268 = vld [vmem:[%s1 + $0x74] sm:$0xf]
      %v269 = vld [vmem:[%s1 + $0x78] sm:$0xf]
      %v270 = vld [vmem:[%s1 + $0x7c] sm:$0xf]
      %v271 = vld [vmem:[%s1 + $0x80] sm:$0xf]
      %v272 = vld [vmem:[%s1 + $0x84] sm:$0xf]
      %v273 = vld [vmem:[%s1 + $0x88] sm:$0xf]
      %v274 = vld [vmem:[%s1 + $0x8c] sm:$0xf]
      %v275 = vld [vmem:[%s1 + $0x90] sm:$0xf]
      %v276 = vld [vmem:[%s1 + $0x94] sm:$0xf]
      %v277 = vld [vmem:[%s1 + $0x98] sm:$0xf]
      %v278 = vld [vmem:[%s1 + $0x9c] sm:$0xf]
      %v279 = vld [vmem:[%s1 + $0xa0] sm:$0xf]
      %v280 = vld [vmem:[%s1 + $0xa4] sm:$0xf]
      %v281 = vld [vmem:[%s1 + $0xa8] sm:$0xf]
      %v282 = vld [vmem:[%s1 + $0xac] sm:$0xf]
      %v283 = vld [vmem:[%s1 + $0xb0] sm:$0xf]
      %v284 = vld [vmem:[%s1 + $0xb4] sm:$0xf]
      %v285 = vld [vmem:[%s1 + $0xb8] sm:$0xf]
      %v286 = vld [vmem:[%s1 + $0xbc] sm:$0xf]
      %v287 = vld [vmem:[%s1 + $0xc0] sm:$0xf]
      %v288 = vld [vmem:[%s1 + $0xc4] sm:$0xf]
      %v289 = vld [vmem:[%s1 + $0xc8] sm:$0xf]
      %v290 = vld [vmem:[%s1 + $0xcc] sm:$0xf]
      %v291 = vld [vmem:[%s1 + $0xd0] sm:$0xf]
      %v292 = vld [vmem:[%s1 + $0xd4] sm:$0xf]
      %v293 = vld [vmem:[%s1 + $0xd8] sm:$0xf]
      %v294 = vld [vmem:[%s1 + $0xdc] sm:$0xf]
      %v295 = vld [vmem:[%s1 + $0xe0] sm:$0xf]
      %v296 = vld [vmem:[%s1 + $0xe4] sm:$0xf]
      %v297 = vld [vmem:[%s1 + $0xe8] sm:$0xf]
      %v298 = vld [vmem:[%s1 + $0xec] sm:$0xf]
      %v299 = vld [vmem:[%s1 + $0xf0] sm:$0xf]
      %v300 = vld [vmem:[%s1 + $0xf4] sm:$0xf]
      %v301 = vld [vmem:[%s1 + $0xf8] sm:$0xf]
      %v302 = vld [vmem:[%s1 + $0xfc] sm:$0xf]
      %v303 = vld [vmem:[%s1 + $0x100] sm:$0xf]
      %v304 = vld [vmem:[%s1 + $0x104] sm:$0xf]
      %v305 = vld [vmem:[%s1 + $0x108] sm:$0xf]
      %v306 = vld [vmem:[%s1 + $0x10c] sm:$0xf]
      %v307 = vld [vmem:[%s1 + $0x110] sm:$0xf]
      %v308 = vld [vmem:[%s1 + $0x114] sm:$0xf]
      %v309 = vld [vmem:[%s1 + $0x118] sm:$0xf]
      %v310 = vld [vmem:[%s1 + $0x11c] sm:$0xf]
      %v311 = vld [vmem:[%s1 + $0x120] sm:$0xf]
      %v312 = vld [vmem:[%s1 + $0x124] sm:$0xf]
      %v313 = vld [vmem:[%s1 + $0x128] sm:$0xf]
      %v314 = vld [vmem:[%s1 + $0x12c] sm:$0xf]
      %v315 = vld [vmem:[%s1 + $0x130] sm:$0xf]
      %v316 = vld [vmem:[%s1 + $0x134] sm:$0xf]
      %v317 = vld [vmem:[%s1 + $0x138] sm:$0xf]
      %v318 = vld [vmem:[%s1 + $0x13c] sm:$0xf]
      %v325 = vunpack.c.l.b16 %v233
      %v326 = vunpack.c.h.b16 %v233
      %v327 = vunpack.c.l.b16 %v234
      %v328 = vunpack.c.h.b16 %v234
      %v329 = vunpack.c.l.b16 %v235
      %v330 = vunpack.c.l.b16 %v236
      %v331 = vunpack.c.h.b16 %v236
      %v332 = vunpack.c.l.b16 %v237
      %v333 = vunpack.c.h.b16 %v237
      %v334 = vunpack.c.l.b16 %v238
      %v335 = vpack.c.b16 %v330, %v325
      %v336 = vpack.c.b16 %v331, %v326
      %v337 = vpack.c.b16 %v332, %v327
      %v338 = vpack.c.b16 %v333, %v328
      %v339 = vpack.c.b16 %v334, %v329
      %v425 = vunpack.c.l.b16 %v239
      %v426 = vunpack.c.l.b16 %v240
      %v427 = vunpack.c.l.b16 %v241
      %v428 = vunpack.c.l.b16 %v242
      %v429 = vunpack.c.l.b16 %v243
      %v430 = vunpack.c.l.b16 %v244
      %v431 = vunpack.c.l.b16 %v245
      %v432 = vunpack.c.l.b16 %v246
      %v433 = vunpack.c.l.b16 %v247
      %v434 = vunpack.c.l.b16 %v248
      %v435 = vunpack.c.l.b16 %v249
      %v436 = vunpack.c.l.b16 %v250
      %v437 = vunpack.c.l.b16 %v251
      %v438 = vunpack.c.l.b16 %v252
      %v439 = vunpack.c.l.b16 %v253
      %v440 = vunpack.c.l.b16 %v254
      %v441 = vunpack.c.l.b16 %v255
      %v442 = vunpack.c.l.b16 %v256
      %v443 = vunpack.c.l.b16 %v257
      %v444 = vunpack.c.l.b16 %v258
      %v445 = vunpack.c.l.b16 %v259
      %v446 = vunpack.c.l.b16 %v260
      %v447 = vunpack.c.l.b16 %v261
      %v448 = vunpack.c.l.b16 %v262
      %v449 = vunpack.c.l.b16 %v263
      %v450 = vunpack.c.l.b16 %v264
      %v451 = vunpack.c.l.b16 %v265
      %v452 = vunpack.c.l.b16 %v266
      %v453 = vunpack.c.l.b16 %v267
      %v454 = vunpack.c.l.b16 %v268
      %v455 = vunpack.c.l.b16 %v269
      %v456 = vunpack.c.l.b16 %v270
      %v457 = vunpack.c.l.b16 %v271
      %v458 = vunpack.c.l.b16 %v272
      %v459 = vunpack.c.l.b16 %v273
      %v460 = vunpack.c.l.b16 %v274
      %v461 = vunpack.c.l.b16 %v275
      %v462 = vunpack.c.l.b16 %v276
      %v463 = vunpack.c.l.b16 %v277
      %v464 = vunpack.c.l.b16 %v278
      %v465 = vunpack.c.l.b16 %v279
      %v466 = vunpack.c.l.b16 %v280
      %v467 = vunpack.c.l.b16 %v281
      %v468 = vunpack.c.l.b16 %v282
      %v469 = vunpack.c.l.b16 %v283
      %v470 = vunpack.c.l.b16 %v284
      %v471 = vunpack.c.l.b16 %v285
      %v472 = vunpack.c.l.b16 %v286
      %v473 = vunpack.c.l.b16 %v287
      %v474 = vunpack.c.l.b16 %v288
      %v475 = vunpack.c.l.b16 %v289
      %v476 = vunpack.c.l.b16 %v290
      %v477 = vunpack.c.l.b16 %v291
      %v478 = vunpack.c.l.b16 %v292
      %v479 = vunpack.c.l.b16 %v293
      %v480 = vunpack.c.l.b16 %v294
      %v481 = vunpack.c.l.b16 %v295
      %v482 = vunpack.c.l.b16 %v296
      %v483 = vunpack.c.l.b16 %v297
      %v484 = vunpack.c.l.b16 %v298
      %v485 = vunpack.c.l.b16 %v299
      %v486 = vunpack.c.l.b16 %v300
      %v487 = vunpack.c.l.b16 %v301
      %v488 = vunpack.c.l.b16 %v302
      %v489 = vunpack.c.l.b16 %v303
      %v490 = vunpack.c.l.b16 %v304
      %v491 = vunpack.c.l.b16 %v305
      %v492 = vunpack.c.l.b16 %v306
      %v493 = vunpack.c.l.b16 %v307
      %v494 = vunpack.c.l.b16 %v308
      %v495 = vunpack.c.l.b16 %v309
      %v496 = vunpack.c.l.b16 %v310
      %v497 = vunpack.c.l.b16 %v311
      %v498 = vunpack.c.l.b16 %v312
      %v499 = vunpack.c.l.b16 %v313
      %v500 = vunpack.c.l.b16 %v314
      %v501 = vunpack.c.l.b16 %v315
      %v502 = vunpack.c.l.b16 %v316
      %v503 = vunpack.c.l.b16 %v317
      %v504 = vunpack.c.l.b16 %v318
      %v505 = vpack.c.b16 %v426, %v425
      %v506 = vpack.c.b16 %v428, %v427
      %v507 = vpack.c.b16 %v430, %v429
      %v508 = vpack.c.b16 %v432, %v431
      %v509 = vpack.c.b16 %v434, %v433
      %v510 = vpack.c.b16 %v436, %v435
      %v511 = vpack.c.b16 %v438, %v437
      %v512 = vpack.c.b16 %v440, %v439
      %v513 = vpack.c.b16 %v442, %v441
      %v514 = vpack.c.b16 %v444, %v443
      %v515 = vpack.c.b16 %v446, %v445
      %v516 = vpack.c.b16 %v448, %v447
      %v517 = vpack.c.b16 %v450, %v449
      %v518 = vpack.c.b16 %v452, %v451
      %v519 = vpack.c.b16 %v454, %v453
      %v520 = vpack.c.b16 %v456, %v455
      %v521 = vpack.c.b16 %v458, %v457
      %v522 = vpack.c.b16 %v460, %v459
      %v523 = vpack.c.b16 %v462, %v461
      %v524 = vpack.c.b16 %v464, %v463
      %v525 = vpack.c.b16 %v466, %v465
      %v526 = vpack.c.b16 %v468, %v467
      %v527 = vpack.c.b16 %v470, %v469
      %v528 = vpack.c.b16 %v472, %v471
      %v529 = vpack.c.b16 %v474, %v473
      %v530 = vpack.c.b16 %v476, %v475
      %v531 = vpack.c.b16 %v478, %v477
      %v532 = vpack.c.b16 %v480, %v479
      %v533 = vpack.c.b16 %v482, %v481
      %v534 = vpack.c.b16 %v484, %v483
      %v535 = vpack.c.b16 %v486, %v485
      %v536 = vpack.c.b16 %v488, %v487
      %v537 = vpack.c.b16 %v490, %v489
      %v538 = vpack.c.b16 %v492, %v491
      %v539 = vpack.c.b16 %v494, %v493
      %v540 = vpack.c.b16 %v496, %v495
      %v541 = vpack.c.b16 %v498, %v497
      %v542 = vpack.c.b16 %v500, %v499
      %v543 = vpack.c.b16 %v502, %v501
      %v544 = vpack.c.b16 %v504, %v503
      %585 = vmatprep.subr.bf16.mxu0 0
      %586 = vmatpush1.bf16.msra.mxu0 %v505
      %587 = vmatprep.subr.bf16.mxu0 0
      %588 = vmatpush1.bf16.msra.mxu0 %v506
      %589 = vmatprep.subr.bf16.mxu0 0
      %590 = vmatpush1.bf16.msra.mxu0 %v507
      %591 = vmatprep.subr.bf16.mxu0 0
      %592 = vmatpush1.bf16.msra.mxu0 %v508
      %593 = vmatprep.subr.bf16.mxu0 0
      %594 = vmatpush1.bf16.msra.mxu0 %v509
      %595 = vmatprep.subr.bf16.mxu0 0
      %596 = vmatpush1.bf16.msra.mxu0 %v510
      %597 = vmatprep.subr.bf16.mxu0 0
      %598 = vmatpush1.bf16.msra.mxu0 %v511
      %599 = vmatprep.subr.bf16.mxu0 0
      %600 = vmatpush1.bf16.msra.mxu0 %v512
      %601 = vmatprep.subr.bf16.mxu0 0
      %602 = vmatpush1.bf16.msra.mxu0 %v513
      %603 = vmatprep.subr.bf16.mxu0 0
      %604 = vmatpush1.bf16.msra.mxu0 %v514
      %605 = vmatprep.subr.bf16.mxu0 0
      %606 = vmatpush1.bf16.msra.mxu0 %v515
      %607 = vmatprep.subr.bf16.mxu0 0
      %608 = vmatpush1.bf16.msra.mxu0 %v516
      %609 = vmatprep.subr.bf16.mxu0 0
      %610 = vmatpush1.bf16.msra.mxu0 %v517
      %611 = vmatprep.subr.bf16.mxu0 0
      %612 = vmatpush1.bf16.msra.mxu0 %v518
      %613 = vmatprep.subr.bf16.mxu0 0
      %614 = vmatpush1.bf16.msra.mxu0 %v519
      %615 = vmatprep.subr.bf16.mxu0 0
      %616 = vmatpush1.bf16.msra.mxu0 %v520
      %617 = vmatprep.mubr.bf16.mxu0 %v336
      %618 = vmatmul.mubr.bf16.gmra.mrb[0].mxu0 %v335
      %v619 = vpop.f32.mrb[0].mxu0
      %v620 = vadd.f32 0.0, %v619
      %v621 = vpop.f32.mrb[0].mxu0
      %v622 = vpop.f32.mrb[0].mxu0
      %v623 = vadd.f32 0.0, %v622
      %v624 = vpop.f32.mrb[0].mxu0
      %625 = vdwg.mxu0
      %626 = vmatprep.subr.bf16.mxu0 0
      %627 = vmatpush1.bf16.msra.mxu0 %v521
      %628 = vmatprep.subr.bf16.mxu0 0
      %629 = vmatpush1.bf16.msra.mxu0 %v522
      %630 = vmatprep.subr.bf16.mxu0 0
      %631 = vmatpush1.bf16.msra.mxu0 %v523
      %632 = vmatprep.subr.bf16.mxu0 0
      %633 = vmatpush1.bf16.msra.mxu0 %v524
      %634 = vmatprep.subr.bf16.mxu0 0
      %635 = vmatpush1.bf16.msra.mxu0 %v525
      %636 = vmatprep.subr.bf16.mxu0 0
      %637 = vmatpush1.bf16.msra.mxu0 %v526
      %638 = vmatprep.subr.bf16.mxu0 0
      %639 = vmatpush1.bf16.msra.mxu0 %v527
      %640 = vmatprep.subr.bf16.mxu0 0
      %641 = vmatpush1.bf16.msra.mxu0 %v528
      %642 = vmatprep.subr.bf16.mxu0 0
      %643 = vmatpush1.bf16.msra.mxu0 %v529
      %644 = vmatprep.subr.bf16.mxu0 0
      %645 = vmatpush1.bf16.msra.mxu0 %v530
      %646 = vmatprep.subr.bf16.mxu0 0
      %647 = vmatpush1.bf16.msra.mxu0 %v531
      %648 = vmatprep.subr.bf16.mxu0 0
      %649 = vmatpush1.bf16.msra.mxu0 %v532
      %650 = vmatprep.subr.bf16.mxu0 0
      %651 = vmatpush1.bf16.msra.mxu0 %v533
      %652 = vmatprep.subr.bf16.mxu0 0
      %653 = vmatpush1.bf16.msra.mxu0 %v534
      %654 = vmatprep.subr.bf16.mxu0 0
      %655 = vmatpush1.bf16.msra.mxu0 %v535
      %656 = vmatprep.subr.bf16.mxu0 0
      %657 = vmatpush1.bf16.msra.mxu0 %v536
      %658 = vmatprep.mubr.bf16.mxu0 %v338
      %659 = vmatmul.mubr.bf16.gmra.mrb[0].mxu0 %v337
      %v660 = vpop.f32.mrb[0].mxu0
      %v661 = vadd.f32 %v620, %v660
      %v662 = vpop.f32.mrb[0].mxu0
      %v663 = vpop.f32.mrb[0].mxu0
      %v664 = vadd.f32 %v623, %v663
      %v665 = vpop.f32.mrb[0].mxu0
      %666 = vdwg.mxu0
      %667 = vmatprep.subr.bf16.mxu0 0
      %668 = vmatpush1.bf16.msra.mxu0 %v537
      %669 = vmatprep.subr.bf16.mxu0 0
      %670 = vmatpush1.bf16.msra.mxu0 %v538
      %671 = vmatprep.subr.bf16.mxu0 0
      %672 = vmatpush1.bf16.msra.mxu0 %v539
      %673 = vmatprep.subr.bf16.mxu0 0
      %674 = vmatpush1.bf16.msra.mxu0 %v540
      %675 = vmatprep.subr.bf16.mxu0 0
      %676 = vmatpush1.bf16.msra.mxu0 %v541
      %677 = vmatprep.subr.bf16.mxu0 0
      %678 = vmatpush1.bf16.msra.mxu0 %v542
      %679 = vmatprep.subr.bf16.mxu0 0
      %680 = vmatpush1.bf16.msra.mxu0 %v543
      %681 = vmatprep.subr.bf16.mxu0 0
      %682 = vmatpush1.bf16.msra.mxu0 %v544
      %683 = vmatprep.subr.bf16.mxu0 0
      %684 = vmatpush1.bf16.msra.mxu0 0
      %685 = vmatprep.subr.bf16.mxu0 0
      %686 = vmatpush1.bf16.msra.mxu0 0
      %687 = vmatprep.subr.bf16.mxu0 0
      %688 = vmatpush1.bf16.msra.mxu0 0
      %689 = vmatprep.subr.bf16.mxu0 0
      %690 = vmatpush1.bf16.msra.mxu0 0
      %691 = vmatprep.subr.bf16.mxu0 0
      %692 = vmatpush1.bf16.msra.mxu0 0
      %693 = vmatprep.subr.bf16.mxu0 0
      %694 = vmatpush1.bf16.msra.mxu0 0
      %695 = vmatprep.subr.bf16.mxu0 0
      %696 = vmatpush1.bf16.msra.mxu0 0
      %697 = vmatprep.subr.bf16.mxu0 0
      %698 = vmatpush1.bf16.msra.mxu0 0
      %699 = vmatprep.mubr.bf16.mxu0 0
      %700 = vmatmul.mubr.bf16.gmra.mrb[0].mxu0 %v339
      %v701 = vpop.f32.mrb[0].mxu0
      %v702 = vadd.f32 %v661, %v701
      %v703 = vpop.f32.mrb[0].mxu0
      %v704 = vpop.f32.mrb[0].mxu0
      %v705 = vadd.f32 %v664, %v704
      %v706 = vpop.f32.mrb[0].mxu0
      %707 = vdwg.mxu0
      %v708 = vpack.c.bf16 %v705, %v702
      %v710 = vunpack.c.l.b16 %v708
      %v711 = vunpack.c.h.b16 %v708
      %v712 = vpack.c.b16 %v710, %v710
      %v713 = vpack.c.b16 %v711, %v711
      %716 = vst [vmem:[%s223] sm:$0xf] %v712
      %717 = vst [vmem:[%s223 + $0x4] sm:$0xf] %v713
      %v718 = vadd.f32 %v702, %v705
      %v719 = vrot.slane %v718, 4
      %v720 = vadd.f32 %v718, %v719
      %v721 = vrot.slane %v720, 2
      %v722 = vadd.f32 %v720, %v721
      %v723 = vrot.slane %v722, 1
      %v724 = vadd.f32 %v722, %v723
      %725 = vst [vmem:[%s231] sm:$0x1] %v724
      %v726 = vmul.f32 %v702, %v702
      %v727 = vmul.f32 %v705, %v705
      %v728 = vadd.f32 %v726, %v727
      %v729 = vrot.slane %v728, 4
      %v730 = vadd.f32 %v728, %v729
      %v731 = vrot.slane %v730, 2
      %v732 = vadd.f32 %v730, %v731
      %v733 = vrot.slane %v732, 1
      %v734 = vadd.f32 %v732, %v733
      %735 = vst [vmem:[%s231 + $0x1] sm:$0x1] %v734
      %s736 = smul.u32 2, %s20
      %p737 = scmp.lt.s32.totalorder %s19, 1
      %s738 = scalar_select %p737, %s19, 1
      %p739 = scmp.lt.s32.totalorder %s736, 1
      %s740 = scalar_select %p739, %s736, 1
      %s741 = smul.addr %s738, 2
      %s742 = sadd.s32 %s740, %s741
      %s743 = smul.addr %s742, 4
      %s744 = scalar_lea.vmem %s2, %s743
      %p745 = scmp.lt.s32.totalorder %s19, 1
      %s746 = scalar_select %p745, %s19, 1
      %p747 = scmp.lt.s32.totalorder %s20, 0
      %s748 = scalar_select %p747, %s20, 0
      %s749 = sadd.s32 %s748, %s746
      %s750 = smul.addr %s749, 2
      %s751 = scalar_lea.vmem %s3, %s750
      // Predicated region
      $region29: #{refine_subnet_forward.28} parent=27 // pred_check
        %p752 = pneg %p96
      $region30: #{refine_subnet_forward.28} parent=27 // pred_check_branch
        %754 = sbr.rel (%p752) target = $region32
      $region31: #{refine_subnet_forward.28} parent=27 // pred_region
        %s755 = smul.u32 2, %s20
      $region32: #{refine_subnet_forward.28} parent=27 // pred_fallthru
        _
      // Predicated region
      $region33: #{refine_subnet_forward.28} parent=27 // pred_check
        %p756 = pneg %p124
      $region34: #{refine_subnet_forward.28} parent=27 // pred_check_branch
        %758 = sbr.rel (%p756) target = $region36
      $region35: #{refine_subnet_forward.28} parent=27 // pred_region
        _
      $region36: #{refine_subnet_forward.28} parent=27 // pred_fallthru
        _
    $region28: #{refine_subnet_forward.28} parent=5 // pred_fallthru
      _
    %p759 = scmp.le.s32.totalorder 2, %s10
    // Predicated region
    $region37: #{refine_subnet_forward.28} parent=5 // pred_check
      %p760 = pneg %p759
    $region38: #{refine_subnet_forward.28} parent=5 // pred_check_branch
      %762 = sbr.rel (%p760) target = $region40
    $region39: #{refine_subnet_forward.28} parent=5 // pred_region
      %s763 = ssub.s32 %s10, 2
      // Predicated region
      $region41: #{refine_subnet_forward.28} parent=39 // pred_check
        %p764 = pneg %p102
      $region42: #{refine_subnet_forward.28} parent=39 // pred_check_branch
        %766 = sbr.rel (%p764) target = $region44
      $region43: #{refine_subnet_forward.28} parent=39 // pred_region
        %s767 = smul.u32 2, %s22
        %p768 = scmp.lt.s32.totalorder %s21, 1
        %s769 = scalar_select %p768, %s21, 1
        %p770 = scmp.lt.s32.totalorder %s767, 1
        %s771 = scalar_select %p770, %s767, 1
        %s772 = smul.addr %s769, 2
        %s773 = sadd.s32 %s771, %s772
        %s774 = smul.addr %s773, 4
        %s775 = scalar_lea.vmem %s2, %s774
      $region44: #{refine_subnet_forward.28} parent=39 // pred_fallthru
        _
      // Predicated region
      $region45: #{refine_subnet_forward.28} parent=39 // pred_check
        %p776 = pneg %p130
      $region46: #{refine_subnet_forward.28} parent=39 // pred_check_branch
        %778 = sbr.rel (%p776) target = $region48
      $region47: #{refine_subnet_forward.28} parent=39 // pred_region
        %p779 = scmp.lt.s32.totalorder %s21, 1
        %s780 = scalar_select %p779, %s21, 1
        %p781 = scmp.lt.s32.totalorder %s22, 0
        %s782 = scalar_select %p781, %s22, 0
        %s783 = sadd.s32 %s782, %s780
        %s784 = smul.addr %s783, 2
        %s785 = scalar_lea.vmem %s3, %s784
      $region48: #{refine_subnet_forward.28} parent=39 // pred_fallthru
        _
    $region40: #{refine_subnet_forward.28} parent=5 // pred_fallthru
      _
  $region6: #{refine_subnet_forward.28} parent=0 // loop_footer
    %s14 = sadd.s32 1, %s10
  $region7: #{refine_subnet_forward.28} parent=0 // loop_footer_branch
    %9 = sbr.rel target = $region3
  $region8: #{refine_subnet_forward.28} parent=0 // loop_exit
    _

// kernel: refine_subnet_forward.33
$region0: #{refine_subnet_forward.33}
  #allocation0 [shape = 'u32[]', space=smem, size = 0x4, offset = 0x4, fixed_abs, tag = 'smem constant byte address 0x4 - core index']
  #allocation1 [shape = 'u32[144,128]{1,0:T(1,128)}', space=vmem, size = 0x12000, scoped, tag = 'internal scratch']
  %s0 = inlined_call_operand.vmem [shape: bf16[2,16,128], index: 0, kind: input, shape index: {}]
  %s1 = inlined_call_operand.vmem [shape: f32[2,2,128], index: 1, kind: input, shape index: {}]
  %s2 = inlined_call_operand.vmem [shape: bf16[2,16,128], index: 2, kind: input, shape index: {}]
  %s3 = inlined_call_operand.vmem [shape: bf16[2,16,128], index: 3, kind: output, shape index: {}]
  %s4 = sld [smem:[#allocation0]]
  $region45: #{refine_subnet_forward.33} parent=0
    _
  %s6 = ssub.s32 1, %s4
  %s7 = scalar_select 0, %s6, %s4
  loop: start=0, step=1, limit=4
  $region2: #{refine_subnet_forward.33} parent=0 // loop_pre_header
    _
  $region3: #{refine_subnet_forward.33} parent=0 // loop_header
    %s9 = sphi 0, %s13
    %p10 = scmp.ge.s32.totalorder %s9, 4
    %s16 = sphi 0, %s28
    %s17 = sphi 0, %s24
    %s18 = sphi 0, %s16
    %s19 = sphi 0, %s17
    %s20 = sphi 0, %s18
    %s21 = sphi 0, %s19
    %s33 = sphi 0, %s35
    %s36 = sphi 0, %s33
    %s37 = sphi 0, %s36
    %s53 = sphi 0, %s37
    %s59 = sphi 0, %s61
    %s62 = sphi 0, %s59
    %s63 = sphi 0, %s62
    %s79 = sphi 0, %s63
    %s87 = sphi 0, %s89
    %s90 = sphi 0, %s87
    %s91 = sphi 0, %s90
    %s107 = sphi 0, %s91
    %s115 = sphi 0, %s117
    %s118 = sphi 0, %s115
    %s119 = sphi 0, %s118
    %s135 = sphi 0, %s119
  $region4: #{refine_subnet_forward.33} parent=0 // loop_header_branch
    %12 = sbr.rel (%p10) target = $region8
  $region5: #{refine_subnet_forward.33} parent=0 // loop_body
    %s14 = ssub.s32 %s9, 1
    %s15 = ssub.s32 %s9, 2
    %s22 = sadd.s32 1, %s17
    %p23 = scmp.ge.s32.totalorder %s22, 1
    %s24 = scalar_select %p23, 0, %s22
    %s25 = sadd.s32 1, %s16
    %s26 = scalar_select %p23, %s25, %s16
    %p27 = scmp.ge.s32.totalorder %s26, 2
    %s28 = scalar_select %p27, 0, %s26
    %s29 = ssub.s32 %s16, %s28
    %s30 = ssub.s32 %s17, %s24
    %s31 = sor.u32 %s29, %s30
    %p32 = scmp.eq.s32.totalorder %s31, 0
    %s34 = sadd.s32 %s33, 1
    %s35 = scalar_select %p32, %s33, %s34
    %p38 = pneg %p32
    %p39 = scmp.eq.s32.totalorder %s9, 1
    %p40 = por %p38, %p39
    %p41 = scmp.ne.s32.totalorder %s33, %s36
    %p42 = scmp.eq.s32.totalorder %s9, 0
    %p43 = por %p41, %p42
    %p44 = scmp.ne.s32.totalorder %s33, %s36
    %p45 = scmp.eq.s32.totalorder %s14, 1
    %p46 = por %p44, %p45
    %p47 = scmp.ne.s32.totalorder %s36, %s37
    %p48 = scmp.eq.s32.totalorder %s14, 0
    %p49 = por %p47, %p48
    %p50 = scmp.ne.s32.totalorder %s36, %s37
    %p51 = scmp.eq.s32.totalorder %s15, 1
    %p52 = por %p50, %p51
    %p54 = scmp.ne.s32.totalorder %s37, %s53
    %p55 = scmp.eq.s32.totalorder %s15, 0
    %p56 = por %p54, %p55
    %s57 = ssub.s32 %s16, %s28
    %p58 = scmp.eq.s32.totalorder %s57, 0
    %s60 = sadd.s32 %s59, 1
    %s61 = scalar_select %p58, %s59, %s60
    %p64 = pneg %p58
    %p65 = scmp.eq.s32.totalorder %s9, 1
    %p66 = por %p64, %p65
    %p67 = scmp.ne.s32.totalorder %s59, %s62
    %p68 = scmp.eq.s32.totalorder %s9, 0
    %p69 = por %p67, %p68
    %p70 = scmp.ne.s32.totalorder %s59, %s62
    %p71 = scmp.eq.s32.totalorder %s14, 1
    %p72 = por %p70, %p71
    %p73 = scmp.ne.s32.totalorder %s62, %s63
    %p74 = scmp.eq.s32.totalorder %s14, 0
    %p75 = por %p73, %p74
    %p76 = scmp.ne.s32.totalorder %s62, %s63
    %p77 = scmp.eq.s32.totalorder %s15, 1
    %p78 = por %p76, %p77
    %p80 = scmp.ne.s32.totalorder %s63, %s79
    %p81 = scmp.eq.s32.totalorder %s15, 0
    %p82 = por %p80, %p81
    %s83 = ssub.s32 %s16, %s28
    %s84 = ssub.s32 %s17, %s24
    %s85 = sor.u32 %s83, %s84
    %p86 = scmp.eq.s32.totalorder %s85, 0
    %s88 = sadd.s32 %s87, 1
    %s89 = scalar_select %p86, %s87, %s88
    %p92 = pneg %p86
    %p93 = scmp.eq.s32.totalorder %s9, 1
    %p94 = por %p92, %p93
    %p95 = scmp.ne.s32.totalorder %s87, %s90
    %p96 = scmp.eq.s32.totalorder %s9, 0
    %p97 = por %p95, %p96
    %p98 = scmp.ne.s32.totalorder %s87, %s90
    %p99 = scmp.eq.s32.totalorder %s14, 1
    %p100 = por %p98, %p99
    %p101 = scmp.ne.s32.totalorder %s90, %s91
    %p102 = scmp.eq.s32.totalorder %s14, 0
    %p103 = por %p101, %p102
    %p104 = scmp.ne.s32.totalorder %s90, %s91
    %p105 = scmp.eq.s32.totalorder %s15, 1
    %p106 = por %p104, %p105
    %p108 = scmp.ne.s32.totalorder %s91, %s107
    %p109 = scmp.eq.s32.totalorder %s15, 0
    %p110 = por %p108, %p109
    %s111 = ssub.s32 %s16, %s28
    %s112 = ssub.s32 %s17, %s24
    %s113 = sor.u32 %s111, %s112
    %p114 = scmp.eq.s32.totalorder %s113, 0
    %s116 = sadd.s32 %s115, 1
    %s117 = scalar_select %p114, %s115, %s116
    %p120 = pneg %p114
    %p121 = scmp.eq.s32.totalorder %s9, 1
    %p122 = por %p120, %p121
    %p123 = scmp.ne.s32.totalorder %s115, %s118
    %p124 = scmp.eq.s32.totalorder %s9, 0
    %p125 = por %p123, %p124
    %p126 = scmp.ne.s32.totalorder %s115, %s118
    %p127 = scmp.eq.s32.totalorder %s14, 1
    %p128 = por %p126, %p127
    %p129 = scmp.ne.s32.totalorder %s118, %s119
    %p130 = scmp.eq.s32.totalorder %s14, 0
    %p131 = por %p129, %p130
    %p132 = scmp.ne.s32.totalorder %s118, %s119
    %p133 = scmp.eq.s32.totalorder %s15, 1
    %p134 = por %p132, %p133
    %p136 = scmp.ne.s32.totalorder %s119, %s135
    %p137 = scmp.eq.s32.totalorder %s15, 0
    %p138 = por %p136, %p137
    %p139 = scmp.le.s32.totalorder 1, %s9
    %p140 = scmp.lt.s32.totalorder %s9, 3
    %p141 = pnand %p139, %p140
    %p142 = pneg %p141
    // Predicated region
    $region9: #{refine_subnet_forward.33} parent=5 // pred_check
      _
    $region10: #{refine_subnet_forward.33} parent=5 // pred_check_branch
      %144 = sbr.rel (%p141) target = $region12
    $region11: #{refine_subnet_forward.33} parent=5 // pred_region
      %s145 = ssub.s32 %s9, 1
    $region12: #{refine_subnet_forward.33} parent=5 // pred_fallthru
      _
    %p146 = scmp.lt.s32.totalorder %s9, 2
    // Predicated region
    $region13: #{refine_subnet_forward.33} parent=5 // pred_check
      %p147 = pneg %p146
    $region14: #{refine_subnet_forward.33} parent=5 // pred_check_branch
      %149 = sbr.rel (%p147) target = $region16
    $region15: #{refine_subnet_forward.33} parent=5 // pred_region
      // Predicated region
      $region17: #{refine_subnet_forward.33} parent=15 // pred_check
        %p150 = pneg %p43
      $region18: #{refine_subnet_forward.33} parent=15 // pred_check_branch
        %152 = sbr.rel (%p150) target = $region20
      $region19: #{refine_subnet_forward.33} parent=15 // pred_region
        %s153 = smul.u32 2, %s17
        %p154 = scmp.lt.s32.totalorder %s16, 1
        %s155 = scalar_select %p154, %s16, 1
        %p156 = scmp.lt.s32.totalorder %s153, 1
        %s157 = scalar_select %p156, %s153, 1
        %s158 = smul.addr %s155, 2
        %s159 = sadd.s32 %s157, %s158
        %s160 = smul.addr %s159, 4
        %s161 = scalar_lea.vmem %s0, %s160
        %s162 = smul.u32 2, %s17
      $region20: #{refine_subnet_forward.33} parent=15 // pred_fallthru
        _
      // Predicated region
      $region21: #{refine_subnet_forward.33} parent=15 // pred_check
        %p163 = pneg %p69
      $region22: #{refine_subnet_forward.33} parent=15 // pred_check_branch
        %165 = sbr.rel (%p163) target = $region24
      $region23: #{refine_subnet_forward.33} parent=15 // pred_region
        %p166 = scmp.lt.s32.totalorder %s16, 1
        %s167 = scalar_select %p166, %s16, 1
        %s168 = smul.addr %s167, 2
        %s169 = scalar_lea.vmem %s1, %s168
      $region24: #{refine_subnet_forward.33} parent=15 // pred_fallthru
        _
      // Predicated region
      $region25: #{refine_subnet_forward.33} parent=15 // pred_check
        %p170 = pneg %p97
      $region26: #{refine_subnet_forward.33} parent=15 // pred_check_branch
        %172 = sbr.rel (%p170) target = $region28
      $region27: #{refine_subnet_forward.33} parent=15 // pred_region
        %s173 = smul.u32 2, %s17
        %p174 = scmp.lt.s32.totalorder %s16, 1
        %s175 = scalar_select %p174, %s16, 1
        %p176 = scmp.lt.s32.totalorder %s173, 1
        %s177 = scalar_select %p176, %s173, 1
        %s178 = smul.addr %s175, 2
        %s179 = sadd.s32 %s177, %s178
        %s180 = smul.addr %s179, 4
        %s181 = scalar_lea.vmem %s2, %s180
        %s182 = smul.u32 2, %s17
      $region28: #{refine_subnet_forward.33} parent=15 // pred_fallthru
        _
    $region16: #{refine_subnet_forward.33} parent=5 // pred_fallthru
      _
    %p183 = scmp.le.s32.totalorder 1, %s9
    %p184 = scmp.lt.s32.totalorder %s9, 3
    %p185 = pnand %p183, %p184
    %p186 = pneg %p185
    // Predicated region
    $region29: #{refine_subnet_forward.33} parent=5 // pred_check
      _
    $region30: #{refine_subnet_forward.33} parent=5 // pred_check_branch
      %188 = sbr.rel (%p185) target = $region32
    $region31: #{refine_subnet_forward.33} parent=5 // pred_region
      %s189 = ssub.s32 %s9, 1
      %s190 = smul.u32 2, %s19
      %p191 = scmp.lt.s32.totalorder %s18, 1
      %s192 = scalar_select %p191, %s18, 1
      %p193 = scmp.lt.s32.totalorder %s190, 1
      %s194 = scalar_select %p193, %s190, 1
      %s195 = smul.addr %s192, 2
      %s196 = sadd.s32 %s194, %s195
      %s197 = smul.addr %s196, 4
      %s198 = scalar_lea.vmem %s0, %s197
      %p199 = pneg %p49
      %p200 = pneg %p46
      %p201 = scmp.lt.s32.totalorder %s18, 1
      %s202 = scalar_select %p201, %s18, 1
      %s203 = smul.addr %s202, 2
      %s204 = scalar_lea.vmem %s1, %s203
      %p205 = pneg %p75
      %p206 = pneg %p72
      %s207 = smul.u32 2, %s19
      %p208 = scmp.lt.s32.totalorder %s18, 1
      %s209 = scalar_select %p208, %s18, 1
      %p210 = scmp.lt.s32.totalorder %s207, 1
      %s211 = scalar_select %p210, %s207, 1
      %s212 = smul.addr %s209, 2
      %s213 = sadd.s32 %s211, %s212
      %s214 = smul.addr %s213, 4
      %s215 = scalar_lea.vmem %s2, %s214
      %p216 = pneg %p103
      %p217 = pneg %p100
      %p218 = pneg %p131
      %p219 = pneg %p128
      %s220 = smul.u32 2, %s19
      %p221 = scmp.lt.s32.totalorder %s18, 1
      %s222 = scalar_select %p221, %s18, 1
      %p223 = scmp.lt.s32.totalorder %s220, 1
      %s224 = scalar_select %p223, %s220, 1
      %s225 = smul.addr %s222, 2
      %s226 = sadd.s32 %s224, %s225
      %s227 = smul.addr %s226, 4
      %s228 = scalar_lea.vmem %s3, %s227
      %s229 = smul.u32 2, %s19
      %p230 = scmp.lt.s32.totalorder %s18, 1
      %s231 = scalar_select %p230, %s18, 1
      %p232 = scmp.lt.s32.totalorder %s229, 1
      %s233 = scalar_select %p232, %s229, 1
      %s234 = smul.addr %s231, 2
      %s235 = sadd.s32 %s233, %s234
      %s236 = smul.addr %s235, 4
      %s237 = scalar_lea.vmem %s0, %s236
      %s238 = smul.u32 2, %s19
      %p239 = scmp.lt.s32.totalorder %s18, 1
      %s240 = scalar_select %p239, %s18, 1
      %s241 = smul.addr %s240, 2
      %s242 = scalar_lea.vmem %s1, %s241
      %s243 = smul.u32 2, %s19
      %p244 = scmp.lt.s32.totalorder %s18, 1
      %s245 = scalar_select %p244, %s18, 1
      %p246 = scmp.lt.s32.totalorder %s243, 1
      %s247 = scalar_select %p246, %s243, 1
      %s248 = smul.addr %s245, 2
      %s249 = sadd.s32 %s247, %s248
      %s250 = smul.addr %s249, 4
      %s251 = scalar_lea.vmem %s2, %s250
      %s252 = smul.u32 2, %s19
      %s253 = smul.u32 2, %s19
      %p254 = scmp.lt.s32.totalorder %s18, 1
      %s255 = scalar_select %p254, %s18, 1
      %p256 = scmp.lt.s32.totalorder %s253, 1
      %s257 = scalar_select %p256, %s253, 1
      %s258 = smul.addr %s255, 2
      %s259 = sadd.s32 %s257, %s258
      %s260 = smul.addr %s259, 4
      %s261 = scalar_lea.vmem %s3, %s260
      %s262 = smul.u32 2, %s19
      %v263 = vld [vmem:[%s237] sm:$0xf]
      %v264 = vld [vmem:[%s237 + $0x4] sm:$0xf]
      %v265 = vunpack.c.l.bf16 %v263
      %v266 = vunpack.c.l.bf16 %v264
      %v267 = vld [vmem:[%s242] sm:$0x1]
      %v268 = vlaneseq
      %v269 = vshrl.u32 %v268, 7
      %v270 = vsub.s32 0, %v269
      %v271 = vrot.slane %v267, %v270
      %v272 = vmul.f32 %v265, %v271
      %v273 = vmul.f32 %v266, %v271
      %v274 = vld [vmem:[%s242 + $0x1] sm:$0x1]
      %v275 = vlaneseq
      %v276 = vshrl.u32 %v275, 7
      %v277 = vsub.s32 0, %v276
      %v278 = vrot.slane %v274, %v277
      %v279 = vadd.f32 %v272, %v278
      %v280 = vadd.f32 %v273, %v278
      %v281 = vld [vmem:[%s251] sm:$0xf]
      %v282 = vld [vmem:[%s251 + $0x4] sm:$0xf]
      %v283 = vunpack.c.l.bf16 %v281
      %v284 = vunpack.c.l.bf16 %v282
      %v285 = vadd.f32 %v279, %v283
      %v286 = vadd.f32 %v280, %v284
      %v287 = vpack.c.bf16 %v286, %v285
      %v289 = vunpack.c.l.b16 %v287
      %v290 = vunpack.c.h.b16 %v287
      %v291 = vpack.c.b16 %v289, %v289
      %v292 = vpack.c.b16 %v290, %v290
      %295 = vst [vmem:[%s261] sm:$0xf] %v291
      %296 = vst [vmem:[%s261 + $0x4] sm:$0xf] %v292
      %s297 = smul.u32 2, %s19
      %p298 = scmp.lt.s32.totalorder %s18, 1
      %s299 = scalar_select %p298, %s18, 1
      %p300 = scmp.lt.s32.totalorder %s297, 1
      %s301 = scalar_select %p300, %s297, 1
      %s302 = smul.addr %s299, 2
      %s303 = sadd.s32 %s301, %s302
      %s304 = smul.addr %s303, 4
      %s305 = scalar_lea.vmem %s3, %s304
      // Predicated region
      $region33: #{refine_subnet_forward.33} parent=31 // pred_check
        %p306 = pneg %p128
      $region34: #{refine_subnet_forward.33} parent=31 // pred_check_branch
        %308 = sbr.rel (%p306) target = $region36
      $region35: #{refine_subnet_forward.33} parent=31 // pred_region
        %s309 = smul.u32 2, %s19
      $region36: #{refine_subnet_forward.33} parent=31 // pred_fallthru
        _
    $region32: #{refine_subnet_forward.33} parent=5 // pred_fallthru
      _
    %p310 = scmp.le.s32.totalorder 2, %s9
    // Predicated region
    $region37: #{refine_subnet_forward.33} parent=5 // pred_check
      %p311 = pneg %p310
    $region38: #{refine_subnet_forward.33} parent=5 // pred_check_branch
      %313 = sbr.rel (%p311) target = $region40
    $region39: #{refine_subnet_forward.33} parent=5 // pred_region
      %s314 = ssub.s32 %s9, 2
      // Predicated region
      $region41: #{refine_subnet_forward.33} parent=39 // pred_check
        %p315 = pneg %p134
      $region42: #{refine_subnet_forward.33} parent=39 // pred_check_branch
        %317 = sbr.rel (%p315) target = $region44
      $region43: #{refine_subnet_forward.33} parent=39 // pred_region
        %s318 = smul.u32 2, %s21
        %p319 = scmp.lt.s32.totalorder %s20, 1
        %s320 = scalar_select %p319, %s20, 1
        %p321 = scmp.lt.s32.totalorder %s318, 1
        %s322 = scalar_select %p321, %s318, 1
        %s323 = smul.addr %s320, 2
        %s324 = sadd.s32 %s322, %s323
        %s325 = smul.addr %s324, 4
        %s326 = scalar_lea.vmem %s3, %s325
      $region44: #{refine_subnet_forward.33} parent=39 // pred_fallthru
        _
    $region40: #{refine_subnet_forward.33} parent=5 // pred_fallthru
      _
  $region6: #{refine_subnet_forward.33} parent=0 // loop_footer
    %s13 = sadd.s32 1, %s9
  $region7: #{refine_subnet_forward.33} parent=0 // loop_footer_branch
    %8 = sbr.rel target = $region3
  $region8: #{refine_subnet_forward.33} parent=0 // loop_exit
    _

// kernel: refine_subnet_forward.30
$region0: #{refine_subnet_forward.30}
  #allocation0 [shape = 'u32[]', space=smem, size = 0x4, offset = 0x4, fixed_abs, tag = 'smem constant byte address 0x4 - core index']
  #allocation1 [shape = 'u32[144,128]{1,0:T(1,128)}', space=vmem, size = 0x12000, scoped, tag = 'internal scratch']
  %s0 = inlined_call_operand.vmem [shape: bf16[2,16,1152], index: 0, kind: input, shape index: {}]
  %s1 = inlined_call_operand.vmem [shape: bf16[1152,128], index: 1, kind: input, shape index: {}]
  %s2 = inlined_call_operand.vmem [shape: bf16[2,16,128], index: 2, kind: output, shape index: {0}]
  %s3 = inlined_call_operand.vmem [shape: f32[2,1,2,128], index: 3, kind: output, shape index: {1}]
  %4 = xla_tuple %s2, %s3
  %s5 = sld [smem:[#allocation0]]
  $region49: #{refine_subnet_forward.30} parent=0
    _
  %s7 = ssub.s32 1, %s5
  %s8 = scalar_select 0, %s7, %s5
  loop: start=0, step=1, limit=4
  $region2: #{refine_subnet_forward.30} parent=0 // loop_pre_header
    _
  $region3: #{refine_subnet_forward.30} parent=0 // loop_header
    %s10 = sphi 0, %s14
    %p11 = scmp.ge.s32.totalorder %s10, 4
    %s17 = sphi 0, %s29
    %s18 = sphi 0, %s25
    %s19 = sphi 0, %s17
    %s20 = sphi 0, %s18
    %s21 = sphi 0, %s19
    %s22 = sphi 0, %s20
    %s34 = sphi 0, %s36
    %s37 = sphi 0, %s34
    %s38 = sphi 0, %s37
    %s54 = sphi 0, %s38
    %s58 = sphi 0, %s58
    %s60 = sphi 0, %s58
    %s61 = sphi 0, %s60
    %s75 = sphi 0, %s61
    %s83 = sphi 0, %s85
    %s86 = sphi 0, %s83
    %s87 = sphi 0, %s86
    %s103 = sphi 0, %s87
    %s111 = sphi 0, %s113
    %s114 = sphi 0, %s111
    %s115 = sphi 0, %s114
    %s131 = sphi 0, %s115
  $region4: #{refine_subnet_forward.30} parent=0 // loop_header_branch
    %13 = sbr.rel (%p11) target = $region8
  $region5: #{refine_subnet_forward.30} parent=0 // loop_body
    %s15 = ssub.s32 %s10, 1
    %s16 = ssub.s32 %s10, 2
    %s23 = sadd.s32 1, %s18
    %p24 = scmp.ge.s32.totalorder %s23, 1
    %s25 = scalar_select %p24, 0, %s23
    %s26 = sadd.s32 1, %s17
    %s27 = scalar_select %p24, %s26, %s17
    %p28 = scmp.ge.s32.totalorder %s27, 2
    %s29 = scalar_select %p28, 0, %s27
    %s30 = ssub.s32 %s17, %s29
    %s31 = ssub.s32 %s18, %s25
    %s32 = sor.u32 %s30, %s31
    %p33 = scmp.eq.s32.totalorder %s32, 0
    %s35 = sadd.s32 %s34, 1
    %s36 = scalar_select %p33, %s34, %s35
    %p39 = pneg %p33
    %p40 = scmp.eq.s32.totalorder %s10, 1
    %p41 = por %p39, %p40
    %p42 = scmp.ne.s32.totalorder %s34, %s37
    %p43 = scmp.eq.s32.totalorder %s10, 0
    %p44 = por %p42, %p43
    %p45 = scmp.ne.s32.totalorder %s34, %s37
    %p46 = scmp.eq.s32.totalorder %s15, 1
    %p47 = por %p45, %p46
    %p48 = scmp.ne.s32.totalorder %s37, %s38
    %p49 = scmp.eq.s32.totalorder %s15, 0
    %p50 = por %p48, %p49
    %p51 = scmp.ne.s32.totalorder %s37, %s38
    %p52 = scmp.eq.s32.totalorder %s16, 1
    %p53 = por %p51, %p52
    %p55 = scmp.ne.s32.totalorder %s38, %s54
    %p56 = scmp.eq.s32.totalorder %s16, 0
    %p57 = por %p55, %p56
    %s59 = sadd.s32 %s58, 1
    %p62 = scmp.eq.s32.totalorder %s10, 1
    %p63 = scmp.ne.s32.totalorder %s58, %s60
    %p64 = scmp.eq.s32.totalorder %s10, 0
    %p65 = por %p63, %p64
    %p66 = scmp.ne.s32.totalorder %s58, %s60
    %p67 = scmp.eq.s32.totalorder %s15, 1
    %p68 = por %p66, %p67
    %p69 = scmp.ne.s32.totalorder %s60, %s61
    %p70 = scmp.eq.s32.totalorder %s15, 0
    %p71 = por %p69, %p70
    %p72 = scmp.ne.s32.totalorder %s60, %s61
    %p73 = scmp.eq.s32.totalorder %s16, 1
    %p74 = por %p72, %p73
    %p76 = scmp.ne.s32.totalorder %s61, %s75
    %p77 = scmp.eq.s32.totalorder %s16, 0
    %p78 = por %p76, %p77
    %s79 = ssub.s32 %s17, %s29
    %s80 = ssub.s32 %s18, %s25
    %s81 = sor.u32 %s79, %s80
    %p82 = scmp.eq.s32.totalorder %s81, 0
    %s84 = sadd.s32 %s83, 1
    %s85 = scalar_select %p82, %s83, %s84
    %p88 = pneg %p82
    %p89 = scmp.eq.s32.totalorder %s10, 1
    %p90 = por %p88, %p89
    %p91 = scmp.ne.s32.totalorder %s83, %s86
    %p92 = scmp.eq.s32.totalorder %s10, 0
    %p93 = por %p91, %p92
    %p94 = scmp.ne.s32.totalorder %s83, %s86
    %p95 = scmp.eq.s32.totalorder %s15, 1
    %p96 = por %p94, %p95
    %p97 = scmp.ne.s32.totalorder %s86, %s87
    %p98 = scmp.eq.s32.totalorder %s15, 0
    %p99 = por %p97, %p98
    %p100 = scmp.ne.s32.totalorder %s86, %s87
    %p101 = scmp.eq.s32.totalorder %s16, 1
    %p102 = por %p100, %p101
    %p104 = scmp.ne.s32.totalorder %s87, %s103
    %p105 = scmp.eq.s32.totalorder %s16, 0
    %p106 = por %p104, %p105
    %s107 = ssub.s32 %s17, %s29
    %s108 = ssub.s32 %s18, %s25
    %s109 = sor.u32 %s107, %s108
    %p110 = scmp.eq.s32.totalorder %s109, 0
    %s112 = sadd.s32 %s111, 1
    %s113 = scalar_select %p110, %s111, %s112
    %p116 = pneg %p110
    %p117 = scmp.eq.s32.totalorder %s10, 1
    %p118 = por %p116, %p117
    %p119 = scmp.ne.s32.totalorder %s111, %s114
    %p120 = scmp.eq.s32.totalorder %s10, 0
    %p121 = por %p119, %p120
    %p122 = scmp.ne.s32.totalorder %s111, %s114
    %p123 = scmp.eq.s32.totalorder %s15, 1
    %p124 = por %p122, %p123
    %p125 = scmp.ne.s32.totalorder %s114, %s115
    %p126 = scmp.eq.s32.totalorder %s15, 0
    %p127 = por %p125, %p126
    %p128 = scmp.ne.s32.totalorder %s114, %s115
    %p129 = scmp.eq.s32.totalorder %s16, 1
    %p130 = por %p128, %p129
    %p132 = scmp.ne.s32.totalorder %s115, %s131
    %p133 = scmp.eq.s32.totalorder %s16, 0
    %p134 = por %p132, %p133
    %p135 = scmp.le.s32.totalorder 1, %s10
    %p136 = scmp.lt.s32.totalorder %s10, 3
    %p137 = pnand %p135, %p136
    %p138 = pneg %p137
    // Predicated region
    $region9: #{refine_subnet_forward.30} parent=5 // pred_check
      _
    $region10: #{refine_subnet_forward.30} parent=5 // pred_check_branch
      %140 = sbr.rel (%p137) target = $region12
    $region11: #{refine_subnet_forward.30} parent=5 // pred_region
      %s141 = ssub.s32 %s10, 1
      // Predicated region
      $region13: #{refine_subnet_forward.30} parent=11 // pred_check
        %p142 = pneg %p71
      $region14: #{refine_subnet_forward.30} parent=11 // pred_check_branch
        %144 = sbr.rel (%p142) target = $region16
      $region15: #{refine_subnet_forward.30} parent=11 // pred_region
        _
      $region16: #{refine_subnet_forward.30} parent=11 // pred_fallthru
        _
    $region12: #{refine_subnet_forward.30} parent=5 // pred_fallthru
      _
    %p145 = scmp.lt.s32.totalorder %s10, 2
    // Predicated region
    $region17: #{refine_subnet_forward.30} parent=5 // pred_check
      %p146 = pneg %p145
    $region18: #{refine_subnet_forward.30} parent=5 // pred_check_branch
      %148 = sbr.rel (%p146) target = $region20
    $region19: #{refine_subnet_forward.30} parent=5 // pred_region
      // Predicated region
      $region21: #{refine_subnet_forward.30} parent=19 // pred_check
        %p149 = pneg %p44
      $region22: #{refine_subnet_forward.30} parent=19 // pred_check_branch
        %151 = sbr.rel (%p149) target = $region24
      $region23: #{refine_subnet_forward.30} parent=19 // pred_region
        %s152 = smul.u32 2, %s18
        %p153 = scmp.lt.s32.totalorder %s17, 1
        %s154 = scalar_select %p153, %s17, 1
        %p155 = scmp.lt.s32.totalorder %s152, 1
        %s156 = scalar_select %p155, %s152, 1
        %s157 = smul.addr %s156, 9
        %s158 = smul.addr %s154, 18
        %s159 = sadd.s32 %s157, %s158
        %s160 = smul.addr %s159, 4
        %s161 = scalar_lea.vmem %s0, %s160
        %s162 = smul.u32 2, %s18
      $region24: #{refine_subnet_forward.30} parent=19 // pred_fallthru
        _
    $region20: #{refine_subnet_forward.30} parent=5 // pred_fallthru
      _
    %p163 = scmp.le.s32.totalorder 1, %s10
    %p164 = scmp.lt.s32.totalorder %s10, 3
    %p165 = pnand %p163, %p164
    %p166 = pneg %p165
    // Predicated region
    $region25: #{refine_subnet_forward.30} parent=5 // pred_check
      _
    $region26: #{refine_subnet_forward.30} parent=5 // pred_check_branch
      %168 = sbr.rel (%p165) target = $region28
    $region27: #{refine_subnet_forward.30} parent=5 // pred_region
      %s169 = ssub.s32 %s10, 1
      %s170 = smul.u32 2, %s20
      %p171 = scmp.lt.s32.totalorder %s19, 1
      %s172 = scalar_select %p171, %s19, 1
      %p173 = scmp.lt.s32.totalorder %s170, 1
      %s174 = scalar_select %p173, %s170, 1
      %s175 = smul.addr %s174, 9
      %s176 = smul.addr %s172, 18
      %s177 = sadd.s32 %s175, %s176
      %s178 = smul.addr %s177, 4
      %s179 = scalar_lea.vmem %s0, %s178
      %p180 = pneg %p50
      %p181 = pneg %p47
      %p182 = pneg %p71
      %p183 = pneg %p68
      %p184 = pneg %p99
      %p185 = pneg %p96
      %s186 = smul.u32 2, %s20
      %p187 = scmp.lt.s32.totalorder %s19, 1
      %s188 = scalar_select %p187, %s19, 1
      %p189 = scmp.lt.s32.totalorder %s186, 1
      %s190 = scalar_select %p189, %s186, 1
      %s191 = smul.addr %s188, 2
      %s192 = sadd.s32 %s190, %s191
      %s193 = smul.addr %s192, 4
      %s194 = scalar_lea.vmem %s2, %s193
      %p195 = pneg %p127
      %p196 = pneg %p124
      %p197 = scmp.lt.s32.totalorder %s19, 1
      %s198 = scalar_select %p197, %s19, 1
      %p199 = scmp.lt.s32.totalorder %s20, 0
      %s200 = scalar_select %p199, %s20, 0
      %s201 = sadd.s32 %s200, %s198
      %s202 = smul.addr %s201, 2
      %s203 = scalar_lea.vmem %s3, %s202
      %s204 = smul.u32 2, %s20
      %p205 = scmp.lt.s32.totalorder %s19, 1
      %s206 = scalar_select %p205, %s19, 1
      %p207 = scmp.lt.s32.totalorder %s204, 1
      %s208 = scalar_select %p207, %s204, 1
      %s209 = smul.addr %s208, 9
      %s210 = smul.addr %s206, 18
      %s211 = sadd.s32 %s209, %s210
      %s212 = smul.addr %s211, 4
      %s213 = scalar_lea.vmem %s0, %s212
      %s214 = smul.u32 2, %s20
      %s215 = smul.u32 2, %s20
      %p216 = scmp.lt.s32.totalorder %s19, 1
      %s217 = scalar_select %p216, %s19, 1
      %p218 = scmp.lt.s32.totalorder %s215, 1
      %s219 = scalar_select %p218, %s215, 1
      %s220 = smul.addr %s217, 2
      %s221 = sadd.s32 %s219, %s220
      %s222 = smul.addr %s221, 4
      %s223 = scalar_lea.vmem %s2, %s222
      %s224 = smul.u32 2, %s20
      %p225 = scmp.lt.s32.totalorder %s19, 1
      %s226 = scalar_select %p225, %s19, 1
      %p227 = scmp.lt.s32.totalorder %s20, 0
      %s228 = scalar_select %p227, %s20, 0
      %s229 = sadd.s32 %s228, %s226
      %s230 = smul.addr %s229, 2
      %s231 = scalar_lea.vmem %s3, %s230
      %v233 = vld [vmem:[%s213] sm:$0xff]
      %v234 = vld [vmem:[%s213 + $0x8] sm:$0xff]
      %v235 = vld [vmem:[%s213 + $0x10] sm:$0xff]
      %v236 = vld [vmem:[%s213 + $0x18] sm:$0xff]
      %v237 = vld [vmem:[%s213 + $0x20] sm:$0xf]
      %v238 = vld [vmem:[%s213 + $0x24] sm:$0xff]
      %v239 = vld [vmem:[%s213 + $0x2c] sm:$0xff]
      %v240 = vld [vmem:[%s213 + $0x34] sm:$0xff]
      %v241 = vld [vmem:[%s213 + $0x3c] sm:$0xff]
      %v242 = vld [vmem:[%s213 + $0x44] sm:$0xf]
      %v243 = vld [vmem:[%s1] sm:$0xf]
      %v244 = vld [vmem:[%s1 + $0x4] sm:$0xf]
      %v245 = vld [vmem:[%s1 + $0x8] sm:$0xf]
      %v246 = vld [vmem:[%s1 + $0xc] sm:$0xf]
      %v247 = vld [vmem:[%s1 + $0x10] sm:$0xf]
      %v248 = vld [vmem:[%s1 + $0x14] sm:$0xf]
      %v249 = vld [vmem:[%s1 + $0x18] sm:$0xf]
      %v250 = vld [vmem:[%s1 + $0x1c] sm:$0xf]
      %v251 = vld [vmem:[%s1 + $0x20] sm:$0xf]
      %v252 = vld [vmem:[%s1 + $0x24] sm:$0xf]
      %v253 = vld [vmem:[%s1 + $0x28] sm:$0xf]
      %v254 = vld [vmem:[%s1 + $0x2c] sm:$0xf]
      %v255 = vld [vmem:[%s1 + $0x30] sm:$0xf]
      %v256 = vld [vmem:[%s1 + $0x34] sm:$0xf]
      %v257 = vld [vmem:[%s1 + $0x38] sm:$0xf]
      %v258 = vld [vmem:[%s1 + $0x3c] sm:$0xf]
      %v259 = vld [vmem:[%s1 + $0x40] sm:$0xf]
      %v260 = vld [vmem:[%s1 + $0x44] sm:$0xf]
      %v261 = vld [vmem:[%s1 + $0x48] sm:$0xf]
      %v262 = vld [vmem:[%s1 + $0x4c] sm:$0xf]
      %v263 = vld [vmem:[%s1 + $0x50] sm:$0xf]
      %v264 = vld [vmem:[%s1 + $0x54] sm:$0xf]
      %v265 = vld [vmem:[%s1 + $0x58] sm:$0xf]
      %v266 = vld [vmem:[%s1 + $0x5c] sm:$0xf]
      %v267 = vld [vmem:[%s1 + $0x60] sm:$0xf]
      %v268 = vld [vmem:[%s1 + $0x64] sm:$0xf]
      %v269 = vld [vmem:[%s1 + $0x68] sm:$0xf]
      %v270 = vld [vmem:[%s1 + $0x6c] sm:$0xf]
      %v271 = vld [vmem:[%s1 + $0x70] sm:$0xf]
      %v272 = vld [vmem:[%s1 + $0x74] sm:$0xf]
      %v273 = vld [vmem:[%s1 + $0x78] sm:$0xf]
      %v274 = vld [vmem:[%s1 + $0x7c] sm:$0xf]
      %v275 = vld [vmem:[%s1 + $0x80] sm:$0xf]
      %v276 = vld [vmem:[%s1 + $0x84] sm:$0xf]
      %v277 = vld [vmem:[%s1 + $0x88] sm:$0xf]
      %v278 = vld [vmem:[%s1 + $0x8c] sm:$0xf]
      %v279 = vld [vmem:[%s1 + $0x90] sm:$0xf]
      %v280 = vld [vmem:[%s1 + $0x94] sm:$0xf]
      %v281 = vld [vmem:[%s1 + $0x98] sm:$0xf]
      %v282 = vld [vmem:[%s1 + $0x9c] sm:$0xf]
      %v283 = vld [vmem:[%s1 + $0xa0] sm:$0xf]
      %v284 = vld [vmem:[%s1 + $0xa4] sm:$0xf]
      %v285 = vld [vmem:[%s1 + $0xa8] sm:$0xf]
      %v286 = vld [vmem:[%s1 + $0xac] sm:$0xf]
      %v287 = vld [vmem:[%s1 + $0xb0] sm:$0xf]
      %v288 = vld [vmem:[%s1 + $0xb4] sm:$0xf]
      %v289 = vld [vmem:[%s1 + $0xb8] sm:$0xf]
      %v290 = vld [vmem:[%s1 + $0xbc] sm:$0xf]
      %v291 = vld [vmem:[%s1 + $0xc0] sm:$0xf]
      %v292 = vld [vmem:[%s1 + $0xc4] sm:$0xf]
      %v293 = vld [vmem:[%s1 + $0xc8] sm:$0xf]
      %v294 = vld [vmem:[%s1 + $0xcc] sm:$0xf]
      %v295 = vld [vmem:[%s1 + $0xd0] sm:$0xf]
      %v296 = vld [vmem:[%s1 + $0xd4] sm:$0xf]
      %v297 = vld [vmem:[%s1 + $0xd8] sm:$0xf]
      %v298 = vld [vmem:[%s1 + $0xdc] sm:$0xf]
      %v299 = vld [vmem:[%s1 + $0xe0] sm:$0xf]
      %v300 = vld [vmem:[%s1 + $0xe4] sm:$0xf]
      %v301 = vld [vmem:[%s1 + $0xe8] sm:$0xf]
      %v302 = vld [vmem:[%s1 + $0xec] sm:$0xf]
      %v303 = vld [vmem:[%s1 + $0xf0] sm:$0xf]
      %v304 = vld [vmem:[%s1 + $0xf4] sm:$0xf]
      %v305 = vld [vmem:[%s1 + $0xf8] sm:$0xf]
      %v306 = vld [vmem:[%s1 + $0xfc] sm:$0xf]
      %v307 = vld [vmem:[%s1 + $0x100] sm:$0xf]
      %v308 = vld [vmem:[%s1 + $0x104] sm:$0xf]
      %v309 = vld [vmem:[%s1 + $0x108] sm:$0xf]
      %v310 = vld [vmem:[%s1 + $0x10c] sm:$0xf]
      %v311 = vld [vmem:[%s1 + $0x110] sm:$0xf]
      %v312 = vld [vmem:[%s1 + $0x114] sm:$0xf]
      %v313 = vld [vmem:[%s1 + $0x118] sm:$0xf]
      %v314 = vld [vmem:[%s1 + $0x11c] sm:$0xf]
      %v315 = vld [vmem:[%s1 + $0x120] sm:$0xf]
      %v316 = vld [vmem:[%s1 + $0x124] sm:$0xf]
      %v317 = vld [vmem:[%s1 + $0x128] sm:$0xf]
      %v318 = vld [vmem:[%s1 + $0x12c] sm:$0xf]
      %v319 = vld [vmem:[%s1 + $0x130] sm:$0xf]
      %v320 = vld [vmem:[%s1 + $0x134] sm:$0xf]
      %v321 = vld [vmem:[%s1 + $0x138] sm:$0xf]
      %v322 = vld [vmem:[%s1 + $0x13c] sm:$0xf]
      %v323 = vld [vmem:[%s1 + $0x140] sm:$0xf]
      %v324 = vld [vmem:[%s1 + $0x144] sm:$0xf]
      %v325 = vld [vmem:[%s1 + $0x148] sm:$0xf]
      %v326 = vld [vmem:[%s1 + $0x14c] sm:$0xf]
      %v327 = vld [vmem:[%s1 + $0x150] sm:$0xf]
      %v328 = vld [vmem:[%s1 + $0x154] sm:$0xf]
      %v329 = vld [vmem:[%s1 + $0x158] sm:$0xf]
      %v330 = vld [vmem:[%s1 + $0x15c] sm:$0xf]
      %v331 = vld [vmem:[%s1 + $0x160] sm:$0xf]
      %v332 = vld [vmem:[%s1 + $0x164] sm:$0xf]
      %v333 = vld [vmem:[%s1 + $0x168] sm:$0xf]
      %v334 = vld [vmem:[%s1 + $0x16c] sm:$0xf]
      %v335 = vld [vmem:[%s1 + $0x170] sm:$0xf]
      %v336 = vld [vmem:[%s1 + $0x174] sm:$0xf]
      %v337 = vld [vmem:[%s1 + $0x178] sm:$0xf]
      %v338 = vld [vmem:[%s1 + $0x17c] sm:$0xf]
      %v339 = vld [vmem:[%s1 + $0x180] sm:$0xf]
      %v340 = vld [vmem:[%s1 + $0x184] sm:$0xf]
      %v341 = vld [vmem:[%s1 + $0x188] sm:$0xf]
      %v342 = vld [vmem:[%s1 + $0x18c] sm:$0xf]
      %v343 = vld [vmem:[%s1 + $0x190] sm:$0xf]
      %v344 = vld [vmem:[%s1 + $0x194] sm:$0xf]
      %v345 = vld [vmem:[%s1 + $0x198] sm:$0xf]
      %v346 = vld [vmem:[%s1 + $0x19c] sm:$0xf]
      %v347 = vld [vmem:[%s1 + $0x1a0] sm:$0xf]
      %v348 = vld [vmem:[%s1 + $0x1a4] sm:$0xf]
      %v349 = vld [vmem:[%s1 + $0x1a8] sm:$0xf]
      %v350 = vld [vmem:[%s1 + $0x1ac] sm:$0xf]
      %v351 = vld [vmem:[%s1 + $0x1b0] sm:$0xf]
      %v352 = vld [vmem:[%s1 + $0x1b4] sm:$0xf]
      %v353 = vld [vmem:[%s1 + $0x1b8] sm:$0xf]
      %v354 = vld [vmem:[%s1 + $0x1bc] sm:$0xf]
      %v355 = vld [vmem:[%s1 + $0x1c0] sm:$0xf]
      %v356 = vld [vmem:[%s1 + $0x1c4] sm:$0xf]
      %v357 = vld [vmem:[%s1 + $0x1c8] sm:$0xf]
      %v358 = vld [vmem:[%s1 + $0x1cc] sm:$0xf]
      %v359 = vld [vmem:[%s1 + $0x1d0] sm:$0xf]
      %v360 = vld [vmem:[%s1 + $0x1d4] sm:$0xf]
      %v361 = vld [vmem:[%s1 + $0x1d8] sm:$0xf]
      %v362 = vld [vmem:[%s1 + $0x1dc] sm:$0xf]
      %v363 = vld [vmem:[%s1 + $0x1e0] sm:$0xf]
      %v364 = vld [vmem:[%s1 + $0x1e4] sm:$0xf]
      %v365 = vld [vmem:[%s1 + $0x1e8] sm:$0xf]
      %v366 = vld [vmem:[%s1 + $0x1ec] sm:$0xf]
      %v367 = vld [vmem:[%s1 + $0x1f0] sm:$0xf]
      %v368 = vld [vmem:[%s1 + $0x1f4] sm:$0xf]
      %v369 = vld [vmem:[%s1 + $0x1f8] sm:$0xf]
      %v370 = vld [vmem:[%s1 + $0x1fc] sm:$0xf]
      %v371 = vld [vmem:[%s1 + $0x200] sm:$0xf]
      %v372 = vld [vmem:[%s1 + $0x204] sm:$0xf]
      %v373 = vld [vmem:[%s1 + $0x208] sm:$0xf]
      %v374 = vld [vmem:[%s1 + $0x20c] sm:$0xf]
      %v375 = vld [vmem:[%s1 + $0x210] sm:$0xf]
      %v376 = vld [vmem:[%s1 + $0x214] sm:$0xf]
      %v377 = vld [vmem:[%s1 + $0x218] sm:$0xf]
      %v378 = vld [vmem:[%s1 + $0x21c] sm:$0xf]
      %v379 = vld [vmem:[%s1 + $0x220] sm:$0xf]
      %v380 = vld [vmem:[%s1 + $0x224] sm:$0xf]
      %v381 = vld [vmem:[%s1 + $0x228] sm:$0xf]
      %v382 = vld [vmem:[%s1 + $0x22c] sm:$0xf]
      %v383 = vld [vmem:[%s1 + $0x230] sm:$0xf]
      %v384 = vld [vmem:[%s1 + $0x234] sm:$0xf]
      %v385 = vld [vmem:[%s1 + $0x238] sm:$0xf]
      %v386 = vld [vmem:[%s1 + $0x23c] sm:$0xf]
      %v397 = vunpack.c.l.b16 %v233
      %v398 = vunpack.c.h.b16 %v233
      %v399 = vunpack.c.l.b16 %v234
      %v400 = vunpack.c.h.b16 %v234
      %v401 = vunpack.c.l.b16 %v235
      %v402 = vunpack.c.h.b16 %v235
      %v403 = vunpack.c.l.b16 %v236
      %v404 = vunpack.c.h.b16 %v236
      %v405 = vunpack.c.l.b16 %v237
      %v406 = vunpack.c.l.b16 %v238
      %v407 = vunpack.c.h.b16 %v238
      %v408 = vunpack.c.l.b16 %v239
      %v409 = vunpack.c.h.b16 %v239
      %v410 = vunpack.c.l.b16 %v240
      %v411 = vunpack.c.h.b16 %v240
      %v412 = vunpack.c.l.b16 %v241
      %v413 = vunpack.c.h.b16 %v241
      %v414 = vunpack.c.l.b16 %v242
      %v415 = vpack.c.b16 %v406, %v397
      %v416 = vpack.c.b16 %v407, %v398
      %v417 = vpack.c.b16 %v408, %v399
      %v418 = vpack.c.b16 %v409, %v400
      %v419 = vpack.c.b16 %v410, %v401
      %v420 = vpack.c.b16 %v411, %v402
      %v421 = vpack.c.b16 %v412, %v403
      %v422 = vpack.c.b16 %v413, %v404
      %v423 = vpack.c.b16 %v414, %v405
      %v577 = vunpack.c.l.b16 %v243
      %v578 = vunpack.c.l.b16 %v244
      %v579 = vunpack.c.l.b16 %v245
      %v580 = vunpack.c.l.b16 %v246
      %v581 = vunpack.c.l.b16 %v247
      %v582 = vunpack.c.l.b16 %v248
      %v583 = vunpack.c.l.b16 %v249
      %v584 = vunpack.c.l.b16 %v250
      %v585 = vunpack.c.l.b16 %v251
      %v586 = vunpack.c.l.b16 %v252
      %v587 = vunpack.c.l.b16 %v253
      %v588 = vunpack.c.l.b16 %v254
      %v589 = vunpack.c.l.b16 %v255
      %v590 = vunpack.c.l.b16 %v256
      %v591 = vunpack.c.l.b16 %v257
      %v592 = vunpack.c.l.b16 %v258
      %v593 = vunpack.c.l.b16 %v259
      %v594 = vunpack.c.l.b16 %v260
      %v595 = vunpack.c.l.b16 %v261
      %v596 = vunpack.c.l.b16 %v262
      %v597 = vunpack.c.l.b16 %v263
      %v598 = vunpack.c.l.b16 %v264
      %v599 = vunpack.c.l.b16 %v265
      %v600 = vunpack.c.l.b16 %v266
      %v601 = vunpack.c.l.b16 %v267
      %v602 = vunpack.c.l.b16 %v268
      %v603 = vunpack.c.l.b16 %v269
      %v604 = vunpack.c.l.b16 %v270
      %v605 = vunpack.c.l.b16 %v271
      %v606 = vunpack.c.l.b16 %v272
      %v607 = vunpack.c.l.b16 %v273
      %v608 = vunpack.c.l.b16 %v274
      %v609 = vunpack.c.l.b16 %v275
      %v610 = vunpack.c.l.b16 %v276
      %v611 = vunpack.c.l.b16 %v277
      %v612 = vunpack.c.l.b16 %v278
      %v613 = vunpack.c.l.b16 %v279
      %v614 = vunpack.c.l.b16 %v280
      %v615 = vunpack.c.l.b16 %v281
      %v616 = vunpack.c.l.b16 %v282
      %v617 = vunpack.c.l.b16 %v283
      %v618 = vunpack.c.l.b16 %v284
      %v619 = vunpack.c.l.b16 %v285
      %v620 = vunpack.c.l.b16 %v286
      %v621 = vunpack.c.l.b16 %v287
      %v622 = vunpack.c.l.b16 %v288
      %v623 = vunpack.c.l.b16 %v289
      %v624 = vunpack.c.l.b16 %v290
      %v625 = vunpack.c.l.b16 %v291
      %v626 = vunpack.c.l.b16 %v292
      %v627 = vunpack.c.l.b16 %v293
      %v628 = vunpack.c.l.b16 %v294
      %v629 = vunpack.c.l.b16 %v295
      %v630 = vunpack.c.l.b16 %v296
      %v631 = vunpack.c.l.b16 %v297
      %v632 = vunpack.c.l.b16 %v298
      %v633 = vunpack.c.l.b16 %v299
      %v634 = vunpack.c.l.b16 %v300
      %v635 = vunpack.c.l.b16 %v301
      %v636 = vunpack.c.l.b16 %v302
      %v637 = vunpack.c.l.b16 %v303
      %v638 = vunpack.c.l.b16 %v304
      %v639 = vunpack.c.l.b16 %v305
      %v640 = vunpack.c.l.b16 %v306
      %v641 = vunpack.c.l.b16 %v307
      %v642 = vunpack.c.l.b16 %v308
      %v643 = vunpack.c.l.b16 %v309
      %v644 = vunpack.c.l.b16 %v310
      %v645 = vunpack.c.l.b16 %v311
      %v646 = vunpack.c.l.b16 %v312
      %v647 = vunpack.c.l.b16 %v313
      %v648 = vunpack.c.l.b16 %v314
      %v649 = vunpack.c.l.b16 %v315
      %v650 = vunpack.c.l.b16 %v316
      %v651 = vunpack.c.l.b16 %v317
      %v652 = vunpack.c.l.b16 %v318
      %v653 = vunpack.c.l.b16 %v319
      %v654 = vunpack.c.l.b16 %v320
      %v655 = vunpack.c.l.b16 %v321
      %v656 = vunpack.c.l.b16 %v322
      %v657 = vunpack.c.l.b16 %v323
      %v658 = vunpack.c.l.b16 %v324
      %v659 = vunpack.c.l.b16 %v325
      %v660 = vunpack.c.l.b16 %v326
      %v661 = vunpack.c.l.b16 %v327
      %v662 = vunpack.c.l.b16 %v328
      %v663 = vunpack.c.l.b16 %v329
      %v664 = vunpack.c.l.b16 %v330
      %v665 = vunpack.c.l.b16 %v331
      %v666 = vunpack.c.l.b16 %v332
      %v667 = vunpack.c.l.b16 %v333
      %v668 = vunpack.c.l.b16 %v334
      %v669 = vunpack.c.l.b16 %v335
      %v670 = vunpack.c.l.b16 %v336
      %v671 = vunpack.c.l.b16 %v337
      %v672 = vunpack.c.l.b16 %v338
      %v673 = vunpack.c.l.b16 %v339
      %v674 = vunpack.c.l.b16 %v340
      %v675 = vunpack.c.l.b16 %v341
      %v676 = vunpack.c.l.b16 %v342
      %v677 = vunpack.c.l.b16 %v343
      %v678 = vunpack.c.l.b16 %v344
      %v679 = vunpack.c.l.b16 %v345
      %v680 = vunpack.c.l.b16 %v346
      %v681 = vunpack.c.l.b16 %v347
      %v682 = vunpack.c.l.b16 %v348
      %v683 = vunpack.c.l.b16 %v349
      %v684 = vunpack.c.l.b16 %v350
      %v685 = vunpack.c.l.b16 %v351
      %v686 = vunpack.c.l.b16 %v352
      %v687 = vunpack.c.l.b16 %v353
      %v688 = vunpack.c.l.b16 %v354
      %v689 = vunpack.c.l.b16 %v355
      %v690 = vunpack.c.l.b16 %v356
      %v691 = vunpack.c.l.b16 %v357
      %v692 = vunpack.c.l.b16 %v358
      %v693 = vunpack.c.l.b16 %v359
      %v694 = vunpack.c.l.b16 %v360
      %v695 = vunpack.c.l.b16 %v361
      %v696 = vunpack.c.l.b16 %v362
      %v697 = vunpack.c.l.b16 %v363
      %v698 = vunpack.c.l.b16 %v364
      %v699 = vunpack.c.l.b16 %v365
      %v700 = vunpack.c.l.b16 %v366
      %v701 = vunpack.c.l.b16 %v367
      %v702 = vunpack.c.l.b16 %v368
      %v703 = vunpack.c.l.b16 %v369
      %v704 = vunpack.c.l.b16 %v370
      %v705 = vunpack.c.l.b16 %v371
      %v706 = vunpack.c.l.b16 %v372
      %v707 = vunpack.c.l.b16 %v373
      %v708 = vunpack.c.l.b16 %v374
      %v709 = vunpack.c.l.b16 %v375
      %v710 = vunpack.c.l.b16 %v376
      %v711 = vunpack.c.l.b16 %v377
      %v712 = vunpack.c.l.b16 %v378
      %v713 = vunpack.c.l.b16 %v379
      %v714 = vunpack.c.l.b16 %v380
      %v715 = vunpack.c.l.b16 %v381
      %v716 = vunpack.c.l.b16 %v382
      %v717 = vunpack.c.l.b16 %v383
      %v718 = vunpack.c.l.b16 %v384
      %v719 = vunpack.c.l.b16 %v385
      %v720 = vunpack.c.l.b16 %v386
      %v721 = vpack.c.b16 %v578, %v577
      %v722 = vpack.c.b16 %v580, %v579
      %v723 = vpack.c.b16 %v582, %v581
      %v724 = vpack.c.b16 %v584, %v583
      %v725 = vpack.c.b16 %v586, %v585
      %v726 = vpack.c.b16 %v588, %v587
      %v727 = vpack.c.b16 %v590, %v589
      %v728 = vpack.c.b16 %v592, %v591
      %v729 = vpack.c.b16 %v594, %v593
      %v730 = vpack.c.b16 %v596, %v595
      %v731 = vpack.c.b16 %v598, %v597
      %v732 = vpack.c.b16 %v600, %v599
      %v733 = vpack.c.b16 %v602, %v601
      %v734 = vpack.c.b16 %v604, %v603
      %v735 = vpack.c.b16 %v606, %v605
      %v736 = vpack.c.b16 %v608, %v607
      %v737 = vpack.c.b16 %v610, %v609
      %v738 = vpack.c.b16 %v612, %v611
      %v739 = vpack.c.b16 %v614, %v613
      %v740 = vpack.c.b16 %v616, %v615
      %v741 = vpack.c.b16 %v618, %v617
      %v742 = vpack.c.b16 %v620, %v619
      %v743 = vpack.c.b16 %v622, %v621
      %v744 = vpack.c.b16 %v624, %v623
      %v745 = vpack.c.b16 %v626, %v625
      %v746 = vpack.c.b16 %v628, %v627
      %v747 = vpack.c.b16 %v630, %v629
      %v748 = vpack.c.b16 %v632, %v631
      %v749 = vpack.c.b16 %v634, %v633
      %v750 = vpack.c.b16 %v636, %v635
      %v751 = vpack.c.b16 %v638, %v637
      %v752 = vpack.c.b16 %v640, %v639
      %v753 = vpack.c.b16 %v642, %v641
      %v754 = vpack.c.b16 %v644, %v643
      %v755 = vpack.c.b16 %v646, %v645
      %v756 = vpack.c.b16 %v648, %v647
      %v757 = vpack.c.b16 %v650, %v649
      %v758 = vpack.c.b16 %v652, %v651
      %v759 = vpack.c.b16 %v654, %v653
      %v760 = vpack.c.b16 %v656, %v655
      %v761 = vpack.c.b16 %v658, %v657
      %v762 = vpack.c.b16 %v660, %v659
      %v763 = vpack.c.b16 %v662, %v661
      %v764 = vpack.c.b16 %v664, %v663
      %v765 = vpack.c.b16 %v666, %v665
      %v766 = vpack.c.b16 %v668, %v667
      %v767 = vpack.c.b16 %v670, %v669
      %v768 = vpack.c.b16 %v672, %v671
      %v769 = vpack.c.b16 %v674, %v673
      %v770 = vpack.c.b16 %v676, %v675
      %v771 = vpack.c.b16 %v678, %v677
      %v772 = vpack.c.b16 %v680, %v679
      %v773 = vpack.c.b16 %v682, %v681
      %v774 = vpack.c.b16 %v684, %v683
      %v775 = vpack.c.b16 %v686, %v685
      %v776 = vpack.c.b16 %v688, %v687
      %v777 = vpack.c.b16 %v690, %v689
      %v778 = vpack.c.b16 %v692, %v691
      %v779 = vpack.c.b16 %v694, %v693
      %v780 = vpack.c.b16 %v696, %v695
      %v781 = vpack.c.b16 %v698, %v697
      %v782 = vpack.c.b16 %v700, %v699
      %v783 = vpack.c.b16 %v702, %v701
      %v784 = vpack.c.b16 %v704, %v703
      %v785 = vpack.c.b16 %v706, %v705
      %v786 = vpack.c.b16 %v708, %v707
      %v787 = vpack.c.b16 %v710, %v709
      %v788 = vpack.c.b16 %v712, %v711
      %v789 = vpack.c.b16 %v714, %v713
      %v790 = vpack.c.b16 %v716, %v715
      %v791 = vpack.c.b16 %v718, %v717
      %v792 = vpack.c.b16 %v720, %v719
      %865 = vmatprep.subr.bf16.mxu0 0
      %866 = vmatpush1.bf16.msra.mxu0 %v721
      %867 = vmatprep.subr.bf16.mxu0 0
      %868 = vmatpush1.bf16.msra.mxu0 %v722
      %869 = vmatprep.subr.bf16.mxu0 0
      %870 = vmatpush1.bf16.msra.mxu0 %v723
      %871 = vmatprep.subr.bf16.mxu0 0
      %872 = vmatpush1.bf16.msra.mxu0 %v724
      %873 = vmatprep.subr.bf16.mxu0 0
      %874 = vmatpush1.bf16.msra.mxu0 %v725
      %875 = vmatprep.subr.bf16.mxu0 0
      %876 = vmatpush1.bf16.msra.mxu0 %v726
      %877 = vmatprep.subr.bf16.mxu0 0
      %878 = vmatpush1.bf16.msra.mxu0 %v727
      %879 = vmatprep.subr.bf16.mxu0 0
      %880 = vmatpush1.bf16.msra.mxu0 %v728
      %881 = vmatprep.subr.bf16.mxu0 0
      %882 = vmatpush1.bf16.msra.mxu0 %v729
      %883 = vmatprep.subr.bf16.mxu0 0
      %884 = vmatpush1.bf16.msra.mxu0 %v730
      %885 = vmatprep.subr.bf16.mxu0 0
      %886 = vmatpush1.bf16.msra.mxu0 %v731
      %887 = vmatprep.subr.bf16.mxu0 0
      %888 = vmatpush1.bf16.msra.mxu0 %v732
      %889 = vmatprep.subr.bf16.mxu0 0
      %890 = vmatpush1.bf16.msra.mxu0 %v733
      %891 = vmatprep.subr.bf16.mxu0 0
      %892 = vmatpush1.bf16.msra.mxu0 %v734
      %893 = vmatprep.subr.bf16.mxu0 0
      %894 = vmatpush1.bf16.msra.mxu0 %v735
      %895 = vmatprep.subr.bf16.mxu0 0
      %896 = vmatpush1.bf16.msra.mxu0 %v736
      %897 = vmatprep.mubr.bf16.mxu0 %v416
      %898 = vmatmul.mubr.bf16.gmra.mrb[0].mxu0 %v415
      %v899 = vpop.f32.mrb[0].mxu0
      %v900 = vadd.f32 0.0, %v899
      %v901 = vpop.f32.mrb[0].mxu0
      %v902 = vpop.f32.mrb[0].mxu0
      %v903 = vadd.f32 0.0, %v902
      %v904 = vpop.f32.mrb[0].mxu0
      %905 = vdwg.mxu0
      %906 = vmatprep.subr.bf16.mxu0 0
      %907 = vmatpush1.bf16.msra.mxu0 %v737
      %908 = vmatprep.subr.bf16.mxu0 0
      %909 = vmatpush1.bf16.msra.mxu0 %v738
      %910 = vmatprep.subr.bf16.mxu0 0
      %911 = vmatpush1.bf16.msra.mxu0 %v739
      %912 = vmatprep.subr.bf16.mxu0 0
      %913 = vmatpush1.bf16.msra.mxu0 %v740
      %914 = vmatprep.subr.bf16.mxu0 0
      %915 = vmatpush1.bf16.msra.mxu0 %v741
      %916 = vmatprep.subr.bf16.mxu0 0
      %917 = vmatpush1.bf16.msra.mxu0 %v742
      %918 = vmatprep.subr.bf16.mxu0 0
      %919 = vmatpush1.bf16.msra.mxu0 %v743
      %920 = vmatprep.subr.bf16.mxu0 0
      %921 = vmatpush1.bf16.msra.mxu0 %v744
      %922 = vmatprep.subr.bf16.mxu0 0
      %923 = vmatpush1.bf16.msra.mxu0 %v745
      %924 = vmatprep.subr.bf16.mxu0 0
      %925 = vmatpush1.bf16.msra.mxu0 %v746
      %926 = vmatprep.subr.bf16.mxu0 0
      %927 = vmatpush1.bf16.msra.mxu0 %v747
      %928 = vmatprep.subr.bf16.mxu0 0
      %929 = vmatpush1.bf16.msra.mxu0 %v748
      %930 = vmatprep.subr.bf16.mxu0 0
      %931 = vmatpush1.bf16.msra.mxu0 %v749
      %932 = vmatprep.subr.bf16.mxu0 0
      %933 = vmatpush1.bf16.msra.mxu0 %v750
      %934 = vmatprep.subr.bf16.mxu0 0
      %935 = vmatpush1.bf16.msra.mxu0 %v751
      %936 = vmatprep.subr.bf16.mxu0 0
      %937 = vmatpush1.bf16.msra.mxu0 %v752
      %938 = vmatprep.mubr.bf16.mxu0 %v418
      %939 = vmatmul.mubr.bf16.gmra.mrb[0].mxu0 %v417
      %v940 = vpop.f32.mrb[0].mxu0
      %v941 = vadd.f32 %v900, %v940
      %v942 = vpop.f32.mrb[0].mxu0
      %v943 = vpop.f32.mrb[0].mxu0
      %v944 = vadd.f32 %v903, %v943
      %v945 = vpop.f32.mrb[0].mxu0
      %946 = vdwg.mxu0
      %947 = vmatprep.subr.bf16.mxu0 0
      %948 = vmatpush1.bf16.msra.mxu0 %v753
      %949 = vmatprep.subr.bf16.mxu0 0
      %950 = vmatpush1.bf16.msra.mxu0 %v754
      %951 = vmatprep.subr.bf16.mxu0 0
      %952 = vmatpush1.bf16.msra.mxu0 %v755
      %953 = vmatprep.subr.bf16.mxu0 0
      %954 = vmatpush1.bf16.msra.mxu0 %v756
      %955 = vmatprep.subr.bf16.mxu0 0
      %956 = vmatpush1.bf16.msra.mxu0 %v757
      %957 = vmatprep.subr.bf16.mxu0 0
      %958 = vmatpush1.bf16.msra.mxu0 %v758
      %959 = vmatprep.subr.bf16.mxu0 0
      %960 = vmatpush1.bf16.msra.mxu0 %v759
      %961 = vmatprep.subr.bf16.mxu0 0
      %962 = vmatpush1.bf16.msra.mxu0 %v760
      %963 = vmatprep.subr.bf16.mxu0 0
      %964 = vmatpush1.bf16.msra.mxu0 %v761
      %965 = vmatprep.subr.bf16.mxu0 0
      %966 = vmatpush1.bf16.msra.mxu0 %v762
      %967 = vmatprep.subr.bf16.mxu0 0
      %968 = vmatpush1.bf16.msra.mxu0 %v763
      %969 = vmatprep.subr.bf16.mxu0 0
      %970 = vmatpush1.bf16.msra.mxu0 %v764
      %971 = vmatprep.subr.bf16.mxu0 0
      %972 = vmatpush1.bf16.msra.mxu0 %v765
      %973 = vmatprep.subr.bf16.mxu0 0
      %974 = vmatpush1.bf16.msra.mxu0 %v766
      %975 = vmatprep.subr.bf16.mxu0 0
      %976 = vmatpush1.bf16.msra.mxu0 %v767
      %977 = vmatprep.subr.bf16.mxu0 0
      %978 = vmatpush1.bf16.msra.mxu0 %v768
      %979 = vmatprep.mubr.bf16.mxu0 %v420
      %980 = vmatmul.mubr.bf16.gmra.mrb[0].mxu0 %v419
      %v981 = vpop.f32.mrb[0].mxu0
      %v982 = vadd.f32 %v941, %v981
      %v983 = vpop.f32.mrb[0].mxu0
      %v984 = vpop.f32.mrb[0].mxu0
      %v985 = vadd.f32 %v944, %v984
      %v986 = vpop.f32.mrb[0].mxu0
      %987 = vdwg.mxu0
      %988 = vmatprep.subr.bf16.mxu0 0
      %989 = vmatpush1.bf16.msra.mxu0 %v769
      %990 = vmatprep.subr.bf16.mxu0 0
      %991 = vmatpush1.bf16.msra.mxu0 %v770
      %992 = vmatprep.subr.bf16.mxu0 0
      %993 = vmatpush1.bf16.msra.mxu0 %v771
      %994 = vmatprep.subr.bf16.mxu0 0
      %995 = vmatpush1.bf16.msra.mxu0 %v772
      %996 = vmatprep.subr.bf16.mxu0 0
      %997 = vmatpush1.bf16.msra.mxu0 %v773
      %998 = vmatprep.subr.bf16.mxu0 0
      %999 = vmatpush1.bf16.msra.mxu0 %v774
      %1000 = vmatprep.subr.bf16.mxu0 0
      %1001 = vmatpush1.bf16.msra.mxu0 %v775
      %1002 = vmatprep.subr.bf16.mxu0 0
      %1003 = vmatpush1.bf16.msra.mxu0 %v776
      %1004 = vmatprep.subr.bf16.mxu0 0
      %1005 = vmatpush1.bf16.msra.mxu0 %v777
      %1006 = vmatprep.subr.bf16.mxu0 0
      %1007 = vmatpush1.bf16.msra.mxu0 %v778
      %1008 = vmatprep.subr.bf16.mxu0 0
      %1009 = vmatpush1.bf16.msra.mxu0 %v779
      %1010 = vmatprep.subr.bf16.mxu0 0
      %1011 = vmatpush1.bf16.msra.mxu0 %v780
      %1012 = vmatprep.subr.bf16.mxu0 0
      %1013 = vmatpush1.bf16.msra.mxu0 %v781
      %1014 = vmatprep.subr.bf16.mxu0 0
      %1015 = vmatpush1.bf16.msra.mxu0 %v782
      %1016 = vmatprep.subr.bf16.mxu0 0
      %1017 = vmatpush1.bf16.msra.mxu0 %v783
      %1018 = vmatprep.subr.bf16.mxu0 0
      %1019 = vmatpush1.bf16.msra.mxu0 %v784
      %1020 = vmatprep.mubr.bf16.mxu0 %v422
      %1021 = vmatmul.mubr.bf16.gmra.mrb[0].mxu0 %v421
      %v1022 = vpop.f32.mrb[0].mxu0
      %v1023 = vadd.f32 %v982, %v1022
      %v1024 = vpop.f32.mrb[0].mxu0
      %v1025 = vpop.f32.mrb[0].mxu0
      %v1026 = vadd.f32 %v985, %v1025
      %v1027 = vpop.f32.mrb[0].mxu0
      %1028 = vdwg.mxu0
      %1029 = vmatprep.subr.bf16.mxu0 0
      %1030 = vmatpush1.bf16.msra.mxu0 %v785
      %1031 = vmatprep.subr.bf16.mxu0 0
      %1032 = vmatpush1.bf16.msra.mxu0 %v786
      %1033 = vmatprep.subr.bf16.mxu0 0
      %1034 = vmatpush1.bf16.msra.mxu0 %v787
      %1035 = vmatprep.subr.bf16.mxu0 0
      %1036 = vmatpush1.bf16.msra.mxu0 %v788
      %1037 = vmatprep.subr.bf16.mxu0 0
      %1038 = vmatpush1.bf16.msra.mxu0 %v789
      %1039 = vmatprep.subr.bf16.mxu0 0
      %1040 = vmatpush1.bf16.msra.mxu0 %v790
      %1041 = vmatprep.subr.bf16.mxu0 0
      %1042 = vmatpush1.bf16.msra.mxu0 %v791
      %1043 = vmatprep.subr.bf16.mxu0 0
      %1044 = vmatpush1.bf16.msra.mxu0 %v792
      %1045 = vmatprep.subr.bf16.mxu0 0
      %1046 = vmatpush1.bf16.msra.mxu0 0
      %1047 = vmatprep.subr.bf16.mxu0 0
      %1048 = vmatpush1.bf16.msra.mxu0 0
      %1049 = vmatprep.subr.bf16.mxu0 0
      %1050 = vmatpush1.bf16.msra.mxu0 0
      %1051 = vmatprep.subr.bf16.mxu0 0
      %1052 = vmatpush1.bf16.msra.mxu0 0
      %1053 = vmatprep.subr.bf16.mxu0 0
      %1054 = vmatpush1.bf16.msra.mxu0 0
      %1055 = vmatprep.subr.bf16.mxu0 0
      %1056 = vmatpush1.bf16.msra.mxu0 0
      %1057 = vmatprep.subr.bf16.mxu0 0
      %1058 = vmatpush1.bf16.msra.mxu0 0
      %1059 = vmatprep.subr.bf16.mxu0 0
      %1060 = vmatpush1.bf16.msra.mxu0 0
      %1061 = vmatprep.mubr.bf16.mxu0 0
      %1062 = vmatmul.mubr.bf16.gmra.mrb[0].mxu0 %v423
      %v1063 = vpop.f32.mrb[0].mxu0
      %v1064 = vadd.f32 %v1023, %v1063
      %v1065 = vpop.f32.mrb[0].mxu0
      %v1066 = vpop.f32.mrb[0].mxu0
      %v1067 = vadd.f32 %v1026, %v1066
      %v1068 = vpop.f32.mrb[0].mxu0
      %1069 = vdwg.mxu0
      %v1070 = vpack.c.bf16 %v1067, %v1064
      %v1072 = vunpack.c.l.b16 %v1070
      %v1073 = vunpack.c.h.b16 %v1070
      %v1074 = vpack.c.b16 %v1072, %v1072
      %v1075 = vpack.c.b16 %v1073, %v1073
      %1078 = vst [vmem:[%s223] sm:$0xf] %v1074
      %1079 = vst [vmem:[%s223 + $0x4] sm:$0xf] %v1075
      %v1080 = vadd.f32 %v1064, %v1067
      %v1081 = vrot.slane %v1080, 4
      %v1082 = vadd.f32 %v1080, %v1081
      %v1083 = vrot.slane %v1082, 2
      %v1084 = vadd.f32 %v1082, %v1083
      %v1085 = vrot.slane %v1084, 1
      %v1086 = vadd.f32 %v1084, %v1085
      %1087 = vst [vmem:[%s231] sm:$0x1] %v1086
      %v1088 = vmul.f32 %v1064, %v1064
      %v1089 = vmul.f32 %v1067, %v1067
      %v1090 = vadd.f32 %v1088, %v1089
      %v1091 = vrot.slane %v1090, 4
      %v1092 = vadd.f32 %v1090, %v1091
      %v1093 = vrot.slane %v1092, 2
      %v1094 = vadd.f32 %v1092, %v1093
      %v1095 = vrot.slane %v1094, 1
      %v1096 = vadd.f32 %v1094, %v1095
      %1097 = vst [vmem:[%s231 + $0x1] sm:$0x1] %v1096
      %s1098 = smul.u32 2, %s20
      %p1099 = scmp.lt.s32.totalorder %s19, 1
      %s1100 = scalar_select %p1099, %s19, 1
      %p1101 = scmp.lt.s32.totalorder %s1098, 1
      %s1102 = scalar_select %p1101, %s1098, 1
      %s1103 = smul.addr %s1100, 2
      %s1104 = sadd.s32 %s1102, %s1103
      %s1105 = smul.addr %s1104, 4
      %s1106 = scalar_lea.vmem %s2, %s1105
      %p1107 = scmp.lt.s32.totalorder %s19, 1
      %s1108 = scalar_select %p1107, %s19, 1
      %p1109 = scmp.lt.s32.totalorder %s20, 0
      %s1110 = scalar_select %p1109, %s20, 0
      %s1111 = sadd.s32 %s1110, %s1108
      %s1112 = smul.addr %s1111, 2
      %s1113 = scalar_lea.vmem %s3, %s1112
      // Predicated region
      $region29: #{refine_subnet_forward.30} parent=27 // pred_check
        %p1114 = pneg %p96
      $region30: #{refine_subnet_forward.30} parent=27 // pred_check_branch
        %1116 = sbr.rel (%p1114) target = $region32
      $region31: #{refine_subnet_forward.30} parent=27 // pred_region
        %s1117 = smul.u32 2, %s20
      $region32: #{refine_subnet_forward.30} parent=27 // pred_fallthru
        _
      // Predicated region
      $region33: #{refine_subnet_forward.30} parent=27 // pred_check
        %p1118 = pneg %p124
      $region34: #{refine_subnet_forward.30} parent=27 // pred_check_branch
        %1120 = sbr.rel (%p1118) target = $region36
      $region35: #{refine_subnet_forward.30} parent=27 // pred_region
        _
      $region36: #{refine_subnet_forward.30} parent=27 // pred_fallthru
        _
    $region28: #{refine_subnet_forward.30} parent=5 // pred_fallthru
      _
    %p1121 = scmp.le.s32.totalorder 2, %s10
    // Predicated region
    $region37: #{refine_subnet_forward.30} parent=5 // pred_check
      %p1122 = pneg %p1121
    $region38: #{refine_subnet_forward.30} parent=5 // pred_check_branch
      %1124 = sbr.rel (%p1122) target = $region40
    $region39: #{refine_subnet_forward.30} parent=5 // pred_region
      %s1125 = ssub.s32 %s10, 2
      // Predicated region
      $region41: #{refine_subnet_forward.30} parent=39 // pred_check
        %p1126 = pneg %p102
      $region42: #{refine_subnet_forward.30} parent=39 // pred_check_branch
        %1128 = sbr.rel (%p1126) target = $region44
      $region43: #{refine_subnet_forward.30} parent=39 // pred_region
        %s1129 = smul.u32 2, %s22
        %p1130 = scmp.lt.s32.totalorder %s21, 1
        %s1131 = scalar_select %p1130, %s21, 1
        %p1132 = scmp.lt.s32.totalorder %s1129, 1
        %s1133 = scalar_select %p1132, %s1129, 1
        %s1134 = smul.addr %s1131, 2
        %s1135 = sadd.s32 %s1133, %s1134
        %s1136 = smul.addr %s1135, 4
        %s1137 = scalar_lea.vmem %s2, %s1136
      $region44: #{refine_subnet_forward.30} parent=39 // pred_fallthru
        _
      // Predicated region
      $region45: #{refine_subnet_forward.30} parent=39 // pred_check
        %p1138 = pneg %p130
      $region46: #{refine_subnet_forward.30} parent=39 // pred_check_branch
        %1140 = sbr.rel (%p1138) target = $region48
      $region47: #{refine_subnet_forward.30} parent=39 // pred_region
        %p1141 = scmp.lt.s32.totalorder %s21, 1
        %s1142 = scalar_select %p1141, %s21, 1
        %p1143 = scmp.lt.s32.totalorder %s22, 0
        %s1144 = scalar_select %p1143, %s22, 0
        %s1145 = sadd.s32 %s1144, %s1142
        %s1146 = smul.addr %s1145, 2
        %s1147 = scalar_lea.vmem %s3, %s1146
      $region48: #{refine_subnet_forward.30} parent=39 // pred_fallthru
        _
    $region40: #{refine_subnet_forward.30} parent=5 // pred_fallthru
      _
  $region6: #{refine_subnet_forward.30} parent=0 // loop_footer
    %s14 = sadd.s32 1, %s10
  $region7: #{refine_subnet_forward.30} parent=0 // loop_footer_branch
    %9 = sbr.rel target = $region3
  $region8: #{refine_subnet_forward.30} parent=0 // loop_exit
    _

// kernel: refine_subnet_forward.42
$region0: #{refine_subnet_forward.42}
  #allocation0 [shape = 'u32[]', space=smem, size = 0x4, offset = 0x4, fixed_abs, tag = 'smem constant byte address 0x4 - core index']
  #allocation1 [shape = 'u32[144,128]{1,0:T(1,128)}', space=vmem, size = 0x12000, scoped, tag = 'internal scratch']
  %s0 = inlined_call_operand.vmem [shape: bf16[2,64,1152], index: 0, kind: input, shape index: {}]
  %s1 = inlined_call_operand.vmem [shape: bf16[1152,64], index: 1, kind: input, shape index: {}]
  %s2 = inlined_call_operand.vmem [shape: bf16[2,64,64], index: 2, kind: output, shape index: {0}]
  %s3 = inlined_call_operand.vmem [shape: f32[2,1,2,64], index: 3, kind: output, shape index: {1}]
  %4 = xla_tuple %s2, %s3
  %s5 = sld [smem:[#allocation0]]
  $region49: #{refine_subnet_forward.42} parent=0
    _
  %s7 = ssub.s32 1, %s5
  %s8 = scalar_select 0, %s7, %s5
  loop: start=0, step=1, limit=4
  $region2: #{refine_subnet_forward.42} parent=0 // loop_pre_header
    _
  $region3: #{refine_subnet_forward.42} parent=0 // loop_header
    %s10 = sphi 0, %s14
    %p11 = scmp.ge.s32.totalorder %s10, 4
    %s17 = sphi 0, %s29
    %s18 = sphi 0, %s25
    %s19 = sphi 0, %s17
    %s20 = sphi 0, %s18
    %s21 = sphi 0, %s19
    %s22 = sphi 0, %s20
    %s34 = sphi 0, %s36
    %s37 = sphi 0, %s34
    %s38 = sphi 0, %s37
    %s54 = sphi 0, %s38
    %s58 = sphi 0, %s58
    %s60 = sphi 0, %s58
    %s61 = sphi 0, %s60
    %s75 = sphi 0, %s61
    %s83 = sphi 0, %s85
    %s86 = sphi 0, %s83
    %s87 = sphi 0, %s86
    %s103 = sphi 0, %s87
    %s111 = sphi 0, %s113
    %s114 = sphi 0, %s111
    %s115 = sphi 0, %s114
    %s131 = sphi 0, %s115
  $region4: #{refine_subnet_forward.42} parent=0 // loop_header_branch
    %13 = sbr.rel (%p11) target = $region8
  $region5: #{refine_subnet_forward.42} parent=0 // loop_body
    %s15 = ssub.s32 %s10, 1
    %s16 = ssub.s32 %s10, 2
    %s23 = sadd.s32 1, %s18
    %p24 = scmp.ge.s32.totalorder %s23, 1
    %s25 = scalar_select %p24, 0, %s23
    %s26 = sadd.s32 1, %s17
    %s27 = scalar_select %p24, %s26, %s17
    %p28 = scmp.ge.s32.totalorder %s27, 2
    %s29 = scalar_select %p28, 0, %s27
    %s30 = ssub.s32 %s17, %s29
    %s31 = ssub.s32 %s18, %s25
    %s32 = sor.u32 %s30, %s31
    %p33 = scmp.eq.s32.totalorder %s32, 0
    %s35 = sadd.s32 %s34, 1
    %s36 = scalar_select %p33, %s34, %s35
    %p39 = pneg %p33
    %p40 = scmp.eq.s32.totalorder %s10, 1
    %p41 = por %p39, %p40
    %p42 = scmp.ne.s32.totalorder %s34, %s37
    %p43 = scmp.eq.s32.totalorder %s10, 0
    %p44 = por %p42, %p43
    %p45 = scmp.ne.s32.totalorder %s34, %s37
    %p46 = scmp.eq.s32.totalorder %s15, 1
    %p47 = por %p45, %p46
    %p48 = scmp.ne.s32.totalorder %s37, %s38
    %p49 = scmp.eq.s32.totalorder %s15, 0
    %p50 = por %p48, %p49
    %p51 = scmp.ne.s32.totalorder %s37, %s38
    %p52 = scmp.eq.s32.totalorder %s16, 1
    %p53 = por %p51, %p52
    %p55 = scmp.ne.s32.totalorder %s38, %s54
    %p56 = scmp.eq.s32.totalorder %s16, 0
    %p57 = por %p55, %p56
    %s59 = sadd.s32 %s58, 1
    %p62 = scmp.eq.s32.totalorder %s10, 1
    %p63 = scmp.ne.s32.totalorder %s58, %s60
    %p64 = scmp.eq.s32.totalorder %s10, 0
    %p65 = por %p63, %p64
    %p66 = scmp.ne.s32.totalorder %s58, %s60
    %p67 = scmp.eq.s32.totalorder %s15, 1
    %p68 = por %p66, %p67
    %p69 = scmp.ne.s32.totalorder %s60, %s61
    %p70 = scmp.eq.s32.totalorder %s15, 0
    %p71 = por %p69, %p70
    %p72 = scmp.ne.s32.totalorder %s60, %s61
    %p73 = scmp.eq.s32.totalorder %s16, 1
    %p74 = por %p72, %p73
    %p76 = scmp.ne.s32.totalorder %s61, %s75
    %p77 = scmp.eq.s32.totalorder %s16, 0
    %p78 = por %p76, %p77
    %s79 = ssub.s32 %s17, %s29
    %s80 = ssub.s32 %s18, %s25
    %s81 = sor.u32 %s79, %s80
    %p82 = scmp.eq.s32.totalorder %s81, 0
    %s84 = sadd.s32 %s83, 1
    %s85 = scalar_select %p82, %s83, %s84
    %p88 = pneg %p82
    %p89 = scmp.eq.s32.totalorder %s10, 1
    %p90 = por %p88, %p89
    %p91 = scmp.ne.s32.totalorder %s83, %s86
    %p92 = scmp.eq.s32.totalorder %s10, 0
    %p93 = por %p91, %p92
    %p94 = scmp.ne.s32.totalorder %s83, %s86
    %p95 = scmp.eq.s32.totalorder %s15, 1
    %p96 = por %p94, %p95
    %p97 = scmp.ne.s32.totalorder %s86, %s87
    %p98 = scmp.eq.s32.totalorder %s15, 0
    %p99 = por %p97, %p98
    %p100 = scmp.ne.s32.totalorder %s86, %s87
    %p101 = scmp.eq.s32.totalorder %s16, 1
    %p102 = por %p100, %p101
    %p104 = scmp.ne.s32.totalorder %s87, %s103
    %p105 = scmp.eq.s32.totalorder %s16, 0
    %p106 = por %p104, %p105
    %s107 = ssub.s32 %s17, %s29
    %s108 = ssub.s32 %s18, %s25
    %s109 = sor.u32 %s107, %s108
    %p110 = scmp.eq.s32.totalorder %s109, 0
    %s112 = sadd.s32 %s111, 1
    %s113 = scalar_select %p110, %s111, %s112
    %p116 = pneg %p110
    %p117 = scmp.eq.s32.totalorder %s10, 1
    %p118 = por %p116, %p117
    %p119 = scmp.ne.s32.totalorder %s111, %s114
    %p120 = scmp.eq.s32.totalorder %s10, 0
    %p121 = por %p119, %p120
    %p122 = scmp.ne.s32.totalorder %s111, %s114
    %p123 = scmp.eq.s32.totalorder %s15, 1
    %p124 = por %p122, %p123
    %p125 = scmp.ne.s32.totalorder %s114, %s115
    %p126 = scmp.eq.s32.totalorder %s15, 0
    %p127 = por %p125, %p126
    %p128 = scmp.ne.s32.totalorder %s114, %s115
    %p129 = scmp.eq.s32.totalorder %s16, 1
    %p130 = por %p128, %p129
    %p132 = scmp.ne.s32.totalorder %s115, %s131
    %p133 = scmp.eq.s32.totalorder %s16, 0
    %p134 = por %p132, %p133
    %p135 = scmp.le.s32.totalorder 1, %s10
    %p136 = scmp.lt.s32.totalorder %s10, 3
    %p137 = pnand %p135, %p136
    %p138 = pneg %p137
    // Predicated region
    $region9: #{refine_subnet_forward.42} parent=5 // pred_check
      _
    $region10: #{refine_subnet_forward.42} parent=5 // pred_check_branch
      %140 = sbr.rel (%p137) target = $region12
    $region11: #{refine_subnet_forward.42} parent=5 // pred_region
      %s141 = ssub.s32 %s10, 1
      // Predicated region
      $region13: #{refine_subnet_forward.42} parent=11 // pred_check
        %p142 = pneg %p71
      $region14: #{refine_subnet_forward.42} parent=11 // pred_check_branch
        %144 = sbr.rel (%p142) target = $region16
      $region15: #{refine_subnet_forward.42} parent=11 // pred_region
        _
      $region16: #{refine_subnet_forward.42} parent=11 // pred_fallthru
        _
    $region12: #{refine_subnet_forward.42} parent=5 // pred_fallthru
      _
    %p145 = scmp.lt.s32.totalorder %s10, 2
    // Predicated region
    $region17: #{refine_subnet_forward.42} parent=5 // pred_check
      %p146 = pneg %p145
    $region18: #{refine_subnet_forward.42} parent=5 // pred_check_branch
      %148 = sbr.rel (%p146) target = $region20
    $region19: #{refine_subnet_forward.42} parent=5 // pred_region
      // Predicated region
      $region21: #{refine_subnet_forward.42} parent=19 // pred_check
        %p149 = pneg %p44
      $region22: #{refine_subnet_forward.42} parent=19 // pred_check_branch
        %151 = sbr.rel (%p149) target = $region24
      $region23: #{refine_subnet_forward.42} parent=19 // pred_region
        %s152 = smul.u32 8, %s18
        %p153 = scmp.lt.s32.totalorder %s17, 1
        %s154 = scalar_select %p153, %s17, 1
        %p155 = scmp.lt.s32.totalorder %s152, 7
        %s156 = scalar_select %p155, %s152, 7
        %s157 = smul.addr %s156, 9
        %s158 = smul.addr %s154, 72
        %s159 = sadd.s32 %s157, %s158
        %s160 = smul.addr %s159, 4
        %s161 = scalar_lea.vmem %s0, %s160
        %s162 = smul.u32 8, %s18
      $region24: #{refine_subnet_forward.42} parent=19 // pred_fallthru
        _
    $region20: #{refine_subnet_forward.42} parent=5 // pred_fallthru
      _
    %p163 = scmp.le.s32.totalorder 1, %s10
    %p164 = scmp.lt.s32.totalorder %s10, 3
    %p165 = pnand %p163, %p164
    %p166 = pneg %p165
    // Predicated region
    $region25: #{refine_subnet_forward.42} parent=5 // pred_check
      _
    $region26: #{refine_subnet_forward.42} parent=5 // pred_check_branch
      %168 = sbr.rel (%p165) target = $region28
    $region27: #{refine_subnet_forward.42} parent=5 // pred_region
      %s169 = ssub.s32 %s10, 1
      %s170 = smul.u32 8, %s20
      %p171 = scmp.lt.s32.totalorder %s19, 1
      %s172 = scalar_select %p171, %s19, 1
      %p173 = scmp.lt.s32.totalorder %s170, 7
      %s174 = scalar_select %p173, %s170, 7
      %s175 = smul.addr %s174, 9
      %s176 = smul.addr %s172, 72
      %s177 = sadd.s32 %s175, %s176
      %s178 = smul.addr %s177, 4
      %s179 = scalar_lea.vmem %s0, %s178
      %p180 = pneg %p50
      %p181 = pneg %p47
      %p182 = pneg %p71
      %p183 = pneg %p68
      %p184 = pneg %p99
      %p185 = pneg %p96
      %s186 = smul.u32 8, %s20
      %p187 = scmp.lt.s32.totalorder %s19, 1
      %s188 = scalar_select %p187, %s19, 1
      %p189 = scmp.lt.s32.totalorder %s186, 7
      %s190 = scalar_select %p189, %s186, 7
      %s191 = smul.addr %s188, 8
      %s192 = sadd.s32 %s190, %s191
      %s193 = smul.addr %s192, 4
      %s194 = scalar_lea.vmem %s2, %s193
      %p195 = pneg %p127
      %p196 = pneg %p124
      %p197 = scmp.lt.s32.totalorder %s19, 1
      %s198 = scalar_select %p197, %s19, 1
      %p199 = scmp.lt.s32.totalorder %s20, 0
      %s200 = scalar_select %p199, %s20, 0
      %s201 = sadd.s32 %s200, %s198
      %s202 = smul.addr %s201, 2
      %s203 = scalar_lea.vmem %s3, %s202
      %s204 = smul.u32 8, %s20
      %p205 = scmp.lt.s32.totalorder %s19, 1
      %s206 = scalar_select %p205, %s19, 1
      %p207 = scmp.lt.s32.totalorder %s204, 7
      %s208 = scalar_select %p207, %s204, 7
      %s209 = smul.addr %s208, 9
      %s210 = smul.addr %s206, 72
      %s211 = sadd.s32 %s209, %s210
      %s212 = smul.addr %s211, 4
      %s213 = scalar_lea.vmem %s0, %s212
      %s214 = smul.u32 8, %s20
      %s215 = smul.u32 8, %s20
      %p216 = scmp.lt.s32.totalorder %s19, 1
      %s217 = scalar_select %p216, %s19, 1
      %p218 = scmp.lt.s32.totalorder %s215, 7
      %s219 = scalar_select %p218, %s215, 7
      %s220 = smul.addr %s217, 8
      %s221 = sadd.s32 %s219, %s220
      %s222 = smul.addr %s221, 4
      %s223 = scalar_lea.vmem %s2, %s222
      %s224 = smul.u32 8, %s20
      %p225 = scmp.lt.s32.totalorder %s19, 1
      %s226 = scalar_select %p225, %s19, 1
      %p227 = scmp.lt.s32.totalorder %s20, 0
      %s228 = scalar_select %p227, %s20, 0
      %s229 = sadd.s32 %s228, %s226
      %s230 = smul.addr %s229, 2
      %s231 = scalar_lea.vmem %s3, %s230
      %v233 = vld [vmem:[%s213] sm:$0xff]
      %v234 = vld [vmem:[%s213 + $0x8] sm:$0xff]
      %v235 = vld [vmem:[%s213 + $0x10] sm:$0xff]
      %v236 = vld [vmem:[%s213 + $0x18] sm:$0xff]
      %v237 = vld [vmem:[%s213 + $0x20] sm:$0xf]
      %v238 = vld [vmem:[%s213 + $0x24] sm:$0xff]
      %v239 = vld [vmem:[%s213 + $0x2c] sm:$0xff]
      %v240 = vld [vmem:[%s213 + $0x34] sm:$0xff]
      %v241 = vld [vmem:[%s213 + $0x3c] sm:$0xff]
      %v242 = vld [vmem:[%s213 + $0x44] sm:$0xf]
      %v243 = vld [vmem:[%s213 + $0x48] sm:$0xff]
      %v244 = vld [vmem:[%s213 + $0x50] sm:$0xff]
      %v245 = vld [vmem:[%s213 + $0x58] sm:$0xff]
      %v246 = vld [vmem:[%s213 + $0x60] sm:$0xff]
      %v247 = vld [vmem:[%s213 + $0x68] sm:$0xf]
      %v248 = vld [vmem:[%s213 + $0x6c] sm:$0xff]
      %v249 = vld [vmem:[%s213 + $0x74] sm:$0xff]
      %v250 = vld [vmem:[%s213 + $0x7c] sm:$0xff]
      %v251 = vld [vmem:[%s213 + $0x84] sm:$0xff]
      %v252 = vld [vmem:[%s213 + $0x8c] sm:$0xf]
      %v253 = vld [vmem:[%s213 + $0x90] sm:$0xff]
      %v254 = vld [vmem:[%s213 + $0x98] sm:$0xff]
      %v255 = vld [vmem:[%s213 + $0xa0] sm:$0xff]
      %v256 = vld [vmem:[%s213 + $0xa8] sm:$0xff]
      %v257 = vld [vmem:[%s213 + $0xb0] sm:$0xf]
      %v258 = vld [vmem:[%s213 + $0xb4] sm:$0xff]
      %v259 = vld [vmem:[%s213 + $0xbc] sm:$0xff]
      %v260 = vld [vmem:[%s213 + $0xc4] sm:$0xff]
      %v261 = vld [vmem:[%s213 + $0xcc] sm:$0xff]
      %v262 = vld [vmem:[%s213 + $0xd4] sm:$0xf]
      %v263 = vld [vmem:[%s213 + $0xd8] sm:$0xff]
      %v264 = vld [vmem:[%s213 + $0xe0] sm:$0xff]
      %v265 = vld [vmem:[%s213 + $0xe8] sm:$0xff]
      %v266 = vld [vmem:[%s213 + $0xf0] sm:$0xff]
      %v267 = vld [vmem:[%s213 + $0xf8] sm:$0xf]
      %v268 = vld [vmem:[%s213 + $0xfc] sm:$0xff]
      %v269 = vld [vmem:[%s213 + $0x104] sm:$0xff]
      %v270 = vld [vmem:[%s213 + $0x10c] sm:$0xff]
      %v271 = vld [vmem:[%s213 + $0x114] sm:$0xff]
      %v272 = vld [vmem:[%s213 + $0x11c] sm:$0xf]
      %v273 = vld [vmem:[%s1] sm:$0xf]
      %v274 = vld [vmem:[%s1 + $0x4] sm:$0xf]
      %v275 = vld [vmem:[%s1 + $0x8] sm:$0xf]
      %v276 = vld [vmem:[%s1 + $0xc] sm:$0xf]
      %v277 = vld [vmem:[%s1 + $0x10] sm:$0xf]
      %v278 = vld [vmem:[%s1 + $0x14] sm:$0xf]
      %v279 = vld [vmem:[%s1 + $0x18] sm:$0xf]
      %v280 = vld [vmem:[%s1 + $0x1c] sm:$0xf]
      %v281 = vld [vmem:[%s1 + $0x20] sm:$0xf]
      %v282 = vld [vmem:[%s1 + $0x24] sm:$0xf]
      %v283 = vld [vmem:[%s1 + $0x28] sm:$0xf]
      %v284 = vld [vmem:[%s1 + $0x2c] sm:$0xf]
      %v285 = vld [vmem:[%s1 + $0x30] sm:$0xf]
      %v286 = vld [vmem:[%s1 + $0x34] sm:$0xf]
      %v287 = vld [vmem:[%s1 + $0x38] sm:$0xf]
      %v288 = vld [vmem:[%s1 + $0x3c] sm:$0xf]
      %v289 = vld [vmem:[%s1 + $0x40] sm:$0xf]
      %v290 = vld [vmem:[%s1 + $0x44] sm:$0xf]
      %v291 = vld [vmem:[%s1 + $0x48] sm:$0xf]
      %v292 = vld [vmem:[%s1 + $0x4c] sm:$0xf]
      %v293 = vld [vmem:[%s1 + $0x50] sm:$0xf]
      %v294 = vld [vmem:[%s1 + $0x54] sm:$0xf]
      %v295 = vld [vmem:[%s1 + $0x58] sm:$0xf]
      %v296 = vld [vmem:[%s1 + $0x5c] sm:$0xf]
      %v297 = vld [vmem:[%s1 + $0x60] sm:$0xf]
      %v298 = vld [vmem:[%s1 + $0x64] sm:$0xf]
      %v299 = vld [vmem:[%s1 + $0x68] sm:$0xf]
      %v300 = vld [vmem:[%s1 + $0x6c] sm:$0xf]
      %v301 = vld [vmem:[%s1 + $0x70] sm:$0xf]
      %v302 = vld [vmem:[%s1 + $0x74] sm:$0xf]
      %v303 = vld [vmem:[%s1 + $0x78] sm:$0xf]
      %v304 = vld [vmem:[%s1 + $0x7c] sm:$0xf]
      %v305 = vld [vmem:[%s1 + $0x80] sm:$0xf]
      %v306 = vld [vmem:[%s1 + $0x84] sm:$0xf]
      %v307 = vld [vmem:[%s1 + $0x88] sm:$0xf]
      %v308 = vld [vmem:[%s1 + $0x8c] sm:$0xf]
      %v309 = vld [vmem:[%s1 + $0x90] sm:$0xf]
      %v310 = vld [vmem:[%s1 + $0x94] sm:$0xf]
      %v311 = vld [vmem:[%s1 + $0x98] sm:$0xf]
      %v312 = vld [vmem:[%s1 + $0x9c] sm:$0xf]
      %v313 = vld [vmem:[%s1 + $0xa0] sm:$0xf]
      %v314 = vld [vmem:[%s1 + $0xa4] sm:$0xf]
      %v315 = vld [vmem:[%s1 + $0xa8] sm:$0xf]
      %v316 = vld [vmem:[%s1 + $0xac] sm:$0xf]
      %v317 = vld [vmem:[%s1 + $0xb0] sm:$0xf]
      %v318 = vld [vmem:[%s1 + $0xb4] sm:$0xf]
      %v319 = vld [vmem:[%s1 + $0xb8] sm:$0xf]
      %v320 = vld [vmem:[%s1 + $0xbc] sm:$0xf]
      %v321 = vld [vmem:[%s1 + $0xc0] sm:$0xf]
      %v322 = vld [vmem:[%s1 + $0xc4] sm:$0xf]
      %v323 = vld [vmem:[%s1 + $0xc8] sm:$0xf]
      %v324 = vld [vmem:[%s1 + $0xcc] sm:$0xf]
      %v325 = vld [vmem:[%s1 + $0xd0] sm:$0xf]
      %v326 = vld [vmem:[%s1 + $0xd4] sm:$0xf]
      %v327 = vld [vmem:[%s1 + $0xd8] sm:$0xf]
      %v328 = vld [vmem:[%s1 + $0xdc] sm:$0xf]
      %v329 = vld [vmem:[%s1 + $0xe0] sm:$0xf]
      %v330 = vld [vmem:[%s1 + $0xe4] sm:$0xf]
      %v331 = vld [vmem:[%s1 + $0xe8] sm:$0xf]
      %v332 = vld [vmem:[%s1 + $0xec] sm:$0xf]
      %v333 = vld [vmem:[%s1 + $0xf0] sm:$0xf]
      %v334 = vld [vmem:[%s1 + $0xf4] sm:$0xf]
      %v335 = vld [vmem:[%s1 + $0xf8] sm:$0xf]
      %v336 = vld [vmem:[%s1 + $0xfc] sm:$0xf]
      %v337 = vld [vmem:[%s1 + $0x100] sm:$0xf]
      %v338 = vld [vmem:[%s1 + $0x104] sm:$0xf]
      %v339 = vld [vmem:[%s1 + $0x108] sm:$0xf]
      %v340 = vld [vmem:[%s1 + $0x10c] sm:$0xf]
      %v341 = vld [vmem:[%s1 + $0x110] sm:$0xf]
      %v342 = vld [vmem:[%s1 + $0x114] sm:$0xf]
      %v343 = vld [vmem:[%s1 + $0x118] sm:$0xf]
      %v344 = vld [vmem:[%s1 + $0x11c] sm:$0xf]
      %v345 = vld [vmem:[%s1 + $0x120] sm:$0xf]
      %v346 = vld [vmem:[%s1 + $0x124] sm:$0xf]
      %v347 = vld [vmem:[%s1 + $0x128] sm:$0xf]
      %v348 = vld [vmem:[%s1 + $0x12c] sm:$0xf]
      %v349 = vld [vmem:[%s1 + $0x130] sm:$0xf]
      %v350 = vld [vmem:[%s1 + $0x134] sm:$0xf]
      %v351 = vld [vmem:[%s1 + $0x138] sm:$0xf]
      %v352 = vld [vmem:[%s1 + $0x13c] sm:$0xf]
      %v353 = vld [vmem:[%s1 + $0x140] sm:$0xf]
      %v354 = vld [vmem:[%s1 + $0x144] sm:$0xf]
      %v355 = vld [vmem:[%s1 + $0x148] sm:$0xf]
      %v356 = vld [vmem:[%s1 + $0x14c] sm:$0xf]
      %v357 = vld [vmem:[%s1 + $0x150] sm:$0xf]
      %v358 = vld [vmem:[%s1 + $0x154] sm:$0xf]
      %v359 = vld [vmem:[%s1 + $0x158] sm:$0xf]
      %v360 = vld [vmem:[%s1 + $0x15c] sm:$0xf]
      %v361 = vld [vmem:[%s1 + $0x160] sm:$0xf]
      %v362 = vld [vmem:[%s1 + $0x164] sm:$0xf]
      %v363 = vld [vmem:[%s1 + $0x168] sm:$0xf]
      %v364 = vld [vmem:[%s1 + $0x16c] sm:$0xf]
      %v365 = vld [vmem:[%s1 + $0x170] sm:$0xf]
      %v366 = vld [vmem:[%s1 + $0x174] sm:$0xf]
      %v367 = vld [vmem:[%s1 + $0x178] sm:$0xf]
      %v368 = vld [vmem:[%s1 + $0x17c] sm:$0xf]
      %v369 = vld [vmem:[%s1 + $0x180] sm:$0xf]
      %v370 = vld [vmem:[%s1 + $0x184] sm:$0xf]
      %v371 = vld [vmem:[%s1 + $0x188] sm:$0xf]
      %v372 = vld [vmem:[%s1 + $0x18c] sm:$0xf]
      %v373 = vld [vmem:[%s1 + $0x190] sm:$0xf]
      %v374 = vld [vmem:[%s1 + $0x194] sm:$0xf]
      %v375 = vld [vmem:[%s1 + $0x198] sm:$0xf]
      %v376 = vld [vmem:[%s1 + $0x19c] sm:$0xf]
      %v377 = vld [vmem:[%s1 + $0x1a0] sm:$0xf]
      %v378 = vld [vmem:[%s1 + $0x1a4] sm:$0xf]
      %v379 = vld [vmem:[%s1 + $0x1a8] sm:$0xf]
      %v380 = vld [vmem:[%s1 + $0x1ac] sm:$0xf]
      %v381 = vld [vmem:[%s1 + $0x1b0] sm:$0xf]
      %v382 = vld [vmem:[%s1 + $0x1b4] sm:$0xf]
      %v383 = vld [vmem:[%s1 + $0x1b8] sm:$0xf]
      %v384 = vld [vmem:[%s1 + $0x1bc] sm:$0xf]
      %v385 = vld [vmem:[%s1 + $0x1c0] sm:$0xf]
      %v386 = vld [vmem:[%s1 + $0x1c4] sm:$0xf]
      %v387 = vld [vmem:[%s1 + $0x1c8] sm:$0xf]
      %v388 = vld [vmem:[%s1 + $0x1cc] sm:$0xf]
      %v389 = vld [vmem:[%s1 + $0x1d0] sm:$0xf]
      %v390 = vld [vmem:[%s1 + $0x1d4] sm:$0xf]
      %v391 = vld [vmem:[%s1 + $0x1d8] sm:$0xf]
      %v392 = vld [vmem:[%s1 + $0x1dc] sm:$0xf]
      %v393 = vld [vmem:[%s1 + $0x1e0] sm:$0xf]
      %v394 = vld [vmem:[%s1 + $0x1e4] sm:$0xf]
      %v395 = vld [vmem:[%s1 + $0x1e8] sm:$0xf]
      %v396 = vld [vmem:[%s1 + $0x1ec] sm:$0xf]
      %v397 = vld [vmem:[%s1 + $0x1f0] sm:$0xf]
      %v398 = vld [vmem:[%s1 + $0x1f4] sm:$0xf]
      %v399 = vld [vmem:[%s1 + $0x1f8] sm:$0xf]
      %v400 = vld [vmem:[%s1 + $0x1fc] sm:$0xf]
      %v401 = vld [vmem:[%s1 + $0x200] sm:$0xf]
      %v402 = vld [vmem:[%s1 + $0x204] sm:$0xf]
      %v403 = vld [vmem:[%s1 + $0x208] sm:$0xf]
      %v404 = vld [vmem:[%s1 + $0x20c] sm:$0xf]
      %v405 = vld [vmem:[%s1 + $0x210] sm:$0xf]
      %v406 = vld [vmem:[%s1 + $0x214] sm:$0xf]
      %v407 = vld [vmem:[%s1 + $0x218] sm:$0xf]
      %v408 = vld [vmem:[%s1 + $0x21c] sm:$0xf]
      %v409 = vld [vmem:[%s1 + $0x220] sm:$0xf]
      %v410 = vld [vmem:[%s1 + $0x224] sm:$0xf]
      %v411 = vld [vmem:[%s1 + $0x228] sm:$0xf]
      %v412 = vld [vmem:[%s1 + $0x22c] sm:$0xf]
      %v413 = vld [vmem:[%s1 + $0x230] sm:$0xf]
      %v414 = vld [vmem:[%s1 + $0x234] sm:$0xf]
      %v415 = vld [vmem:[%s1 + $0x238] sm:$0xf]
      %v416 = vld [vmem:[%s1 + $0x23c] sm:$0xf]
      %v457 = vunpack.c.l.b16 %v233
      %v458 = vunpack.c.h.b16 %v233
      %v459 = vunpack.c.l.b16 %v234
      %v460 = vunpack.c.h.b16 %v234
      %v461 = vunpack.c.l.b16 %v235
      %v462 = vunpack.c.h.b16 %v235
      %v463 = vunpack.c.l.b16 %v236
      %v464 = vunpack.c.h.b16 %v236
      %v465 = vunpack.c.l.b16 %v237
      %v466 = vunpack.c.l.b16 %v238
      %v467 = vunpack.c.h.b16 %v238
      %v468 = vunpack.c.l.b16 %v239
      %v469 = vunpack.c.h.b16 %v239
      %v470 = vunpack.c.l.b16 %v240
      %v471 = vunpack.c.h.b16 %v240
      %v472 = vunpack.c.l.b16 %v241
      %v473 = vunpack.c.h.b16 %v241
      %v474 = vunpack.c.l.b16 %v242
      %v475 = vunpack.c.l.b16 %v243
      %v476 = vunpack.c.h.b16 %v243
      %v477 = vunpack.c.l.b16 %v244
      %v478 = vunpack.c.h.b16 %v244
      %v479 = vunpack.c.l.b16 %v245
      %v480 = vunpack.c.h.b16 %v245
      %v481 = vunpack.c.l.b16 %v246
      %v482 = vunpack.c.h.b16 %v246
      %v483 = vunpack.c.l.b16 %v247
      %v484 = vunpack.c.l.b16 %v248
      %v485 = vunpack.c.h.b16 %v248
      %v486 = vunpack.c.l.b16 %v249
      %v487 = vunpack.c.h.b16 %v249
      %v488 = vunpack.c.l.b16 %v250
      %v489 = vunpack.c.h.b16 %v250
      %v490 = vunpack.c.l.b16 %v251
      %v491 = vunpack.c.h.b16 %v251
      %v492 = vunpack.c.l.b16 %v252
      %v493 = vunpack.c.l.b16 %v253
      %v494 = vunpack.c.h.b16 %v253
      %v495 = vunpack.c.l.b16 %v254
      %v496 = vunpack.c.h.b16 %v254
      %v497 = vunpack.c.l.b16 %v255
      %v498 = vunpack.c.h.b16 %v255
      %v499 = vunpack.c.l.b16 %v256
      %v500 = vunpack.c.h.b16 %v256
      %v501 = vunpack.c.l.b16 %v257
      %v502 = vunpack.c.l.b16 %v258
      %v503 = vunpack.c.h.b16 %v258
      %v504 = vunpack.c.l.b16 %v259
      %v505 = vunpack.c.h.b16 %v259
      %v506 = vunpack.c.l.b16 %v260
      %v507 = vunpack.c.h.b16 %v260
      %v508 = vunpack.c.l.b16 %v261
      %v509 = vunpack.c.h.b16 %v261
      %v510 = vunpack.c.l.b16 %v262
      %v511 = vunpack.c.l.b16 %v263
      %v512 = vunpack.c.h.b16 %v263
      %v513 = vunpack.c.l.b16 %v264
      %v514 = vunpack.c.h.b16 %v264
      %v515 = vunpack.c.l.b16 %v265
      %v516 = vunpack.c.h.b16 %v265
      %v517 = vunpack.c.l.b16 %v266
      %v518 = vunpack.c.h.b16 %v266
      %v519 = vunpack.c.l.b16 %v267
      %v520 = vunpack.c.l.b16 %v268
      %v521 = vunpack.c.h.b16 %v268
      %v522 = vunpack.c.l.b16 %v269
      %v523 = vunpack.c.h.b16 %v269
      %v524 = vunpack.c.l.b16 %v270
      %v525 = vunpack.c.h.b16 %v270
      %v526 = vunpack.c.l.b16 %v271
      %v527 = vunpack.c.h.b16 %v271
      %v528 = vunpack.c.l.b16 %v272
      %v529 = vpack.c.b16 %v466, %v457
      %v530 = vpack.c.b16 %v467, %v458
      %v531 = vpack.c.b16 %v468, %v459
      %v532 = vpack.c.b16 %v469, %v460
      %v533 = vpack.c.b16 %v470, %v461
      %v534 = vpack.c.b16 %v471, %v462
      %v535 = vpack.c.b16 %v472, %v463
      %v536 = vpack.c.b16 %v473, %v464
      %v537 = vpack.c.b16 %v474, %v465
      %v538 = vpack.c.b16 %v484, %v475
      %v539 = vpack.c.b16 %v485, %v476
      %v540 = vpack.c.b16 %v486, %v477
      %v541 = vpack.c.b16 %v487, %v478
      %v542 = vpack.c.b16 %v488, %v479
      %v543 = vpack.c.b16 %v489, %v480
      %v544 = vpack.c.b16 %v490, %v481
      %v545 = vpack.c.b16 %v491, %v482
      %v546 = vpack.c.b16 %v492, %v483
      %v547 = vpack.c.b16 %v502, %v493
      %v548 = vpack.c.b16 %v503, %v494
      %v549 = vpack.c.b16 %v504, %v495
      %v550 = vpack.c.b16 %v505, %v496
      %v551 = vpack.c.b16 %v506, %v497
      %v552 = vpack.c.b16 %v507, %v498
      %v553 = vpack.c.b16 %v508, %v499
      %v554 = vpack.c.b16 %v509, %v500
      %v555 = vpack.c.b16 %v510, %v501
      %v556 = vpack.c.b16 %v520, %v511
      %v557 = vpack.c.b16 %v521, %v512
      %v558 = vpack.c.b16 %v522, %v513
      %v559 = vpack.c.b16 %v523, %v514
      %v560 = vpack.c.b16 %v524, %v515
      %v561 = vpack.c.b16 %v525, %v516
      %v562 = vpack.c.b16 %v526, %v517
      %v563 = vpack.c.b16 %v527, %v518
      %v564 = vpack.c.b16 %v528, %v519
      %v745 = vunpack.c.l.b16 %v273
      %v746 = vunpack.c.l.b16 %v274
      %v747 = vunpack.c.l.b16 %v275
      %v748 = vunpack.c.l.b16 %v276
      %v749 = vunpack.c.l.b16 %v277
      %v750 = vunpack.c.l.b16 %v278
      %v751 = vunpack.c.l.b16 %v279
      %v752 = vunpack.c.l.b16 %v280
      %v753 = vunpack.c.l.b16 %v281
      %v754 = vunpack.c.l.b16 %v282
      %v755 = vunpack.c.l.b16 %v283
      %v756 = vunpack.c.l.b16 %v284
      %v757 = vunpack.c.l.b16 %v285
      %v758 = vunpack.c.l.b16 %v286
      %v759 = vunpack.c.l.b16 %v287
      %v760 = vunpack.c.l.b16 %v288
      %v761 = vunpack.c.l.b16 %v289
      %v762 = vunpack.c.l.b16 %v290
      %v763 = vunpack.c.l.b16 %v291
      %v764 = vunpack.c.l.b16 %v292
      %v765 = vunpack.c.l.b16 %v293
      %v766 = vunpack.c.l.b16 %v294
      %v767 = vunpack.c.l.b16 %v295
      %v768 = vunpack.c.l.b16 %v296
      %v769 = vunpack.c.l.b16 %v297
      %v770 = vunpack.c.l.b16 %v298
      %v771 = vunpack.c.l.b16 %v299
      %v772 = vunpack.c.l.b16 %v300
      %v773 = vunpack.c.l.b16 %v301
      %v774 = vunpack.c.l.b16 %v302
      %v775 = vunpack.c.l.b16 %v303
      %v776 = vunpack.c.l.b16 %v304
      %v777 = vunpack.c.l.b16 %v305
      %v778 = vunpack.c.l.b16 %v306
      %v779 = vunpack.c.l.b16 %v307
      %v780 = vunpack.c.l.b16 %v308
      %v781 = vunpack.c.l.b16 %v309
      %v782 = vunpack.c.l.b16 %v310
      %v783 = vunpack.c.l.b16 %v311
      %v784 = vunpack.c.l.b16 %v312
      %v785 = vunpack.c.l.b16 %v313
      %v786 = vunpack.c.l.b16 %v314
      %v787 = vunpack.c.l.b16 %v315
      %v788 = vunpack.c.l.b16 %v316
      %v789 = vunpack.c.l.b16 %v317
      %v790 = vunpack.c.l.b16 %v318
      %v791 = vunpack.c.l.b16 %v319
      %v792 = vunpack.c.l.b16 %v320
      %v793 = vunpack.c.l.b16 %v321
      %v794 = vunpack.c.l.b16 %v322
      %v795 = vunpack.c.l.b16 %v323
      %v796 = vunpack.c.l.b16 %v324
      %v797 = vunpack.c.l.b16 %v325
      %v798 = vunpack.c.l.b16 %v326
      %v799 = vunpack.c.l.b16 %v327
      %v800 = vunpack.c.l.b16 %v328
      %v801 = vunpack.c.l.b16 %v329
      %v802 = vunpack.c.l.b16 %v330
      %v803 = vunpack.c.l.b16 %v331
      %v804 = vunpack.c.l.b16 %v332
      %v805 = vunpack.c.l.b16 %v333
      %v806 = vunpack.c.l.b16 %v334
      %v807 = vunpack.c.l.b16 %v335
      %v808 = vunpack.c.l.b16 %v336
      %v809 = vunpack.c.l.b16 %v337
      %v810 = vunpack.c.l.b16 %v338
      %v811 = vunpack.c.l.b16 %v339
      %v812 = vunpack.c.l.b16 %v340
      %v813 = vunpack.c.l.b16 %v341
      %v814 = vunpack.c.l.b16 %v342
      %v815 = vunpack.c.l.b16 %v343
      %v816 = vunpack.c.l.b16 %v344
      %v817 = vunpack.c.l.b16 %v345
      %v818 = vunpack.c.l.b16 %v346
      %v819 = vunpack.c.l.b16 %v347
      %v820 = vunpack.c.l.b16 %v348
      %v821 = vunpack.c.l.b16 %v349
      %v822 = vunpack.c.l.b16 %v350
      %v823 = vunpack.c.l.b16 %v351
      %v824 = vunpack.c.l.b16 %v352
      %v825 = vunpack.c.l.b16 %v353
      %v826 = vunpack.c.l.b16 %v354
      %v827 = vunpack.c.l.b16 %v355
      %v828 = vunpack.c.l.b16 %v356
      %v829 = vunpack.c.l.b16 %v357
      %v830 = vunpack.c.l.b16 %v358
      %v831 = vunpack.c.l.b16 %v359
      %v832 = vunpack.c.l.b16 %v360
      %v833 = vunpack.c.l.b16 %v361
      %v834 = vunpack.c.l.b16 %v362
      %v835 = vunpack.c.l.b16 %v363
      %v836 = vunpack.c.l.b16 %v364
      %v837 = vunpack.c.l.b16 %v365
      %v838 = vunpack.c.l.b16 %v366
      %v839 = vunpack.c.l.b16 %v367
      %v840 = vunpack.c.l.b16 %v368
      %v841 = vunpack.c.l.b16 %v369
      %v842 = vunpack.c.l.b16 %v370
      %v843 = vunpack.c.l.b16 %v371
      %v844 = vunpack.c.l.b16 %v372
      %v845 = vunpack.c.l.b16 %v373
      %v846 = vunpack.c.l.b16 %v374
      %v847 = vunpack.c.l.b16 %v375
      %v848 = vunpack.c.l.b16 %v376
      %v849 = vunpack.c.l.b16 %v377
      %v850 = vunpack.c.l.b16 %v378
      %v851 = vunpack.c.l.b16 %v379
      %v852 = vunpack.c.l.b16 %v380
      %v853 = vunpack.c.l.b16 %v381
      %v854 = vunpack.c.l.b16 %v382
      %v855 = vunpack.c.l.b16 %v383
      %v856 = vunpack.c.l.b16 %v384
      %v857 = vunpack.c.l.b16 %v385
      %v858 = vunpack.c.l.b16 %v386
      %v859 = vunpack.c.l.b16 %v387
      %v860 = vunpack.c.l.b16 %v388
      %v861 = vunpack.c.l.b16 %v389
      %v862 = vunpack.c.l.b16 %v390
      %v863 = vunpack.c.l.b16 %v391
      %v864 = vunpack.c.l.b16 %v392
      %v865 = vunpack.c.l.b16 %v393
      %v866 = vunpack.c.l.b16 %v394
      %v867 = vunpack.c.l.b16 %v395
      %v868 = vunpack.c.l.b16 %v396
      %v869 = vunpack.c.l.b16 %v397
      %v870 = vunpack.c.l.b16 %v398
      %v871 = vunpack.c.l.b16 %v399
      %v872 = vunpack.c.l.b16 %v400
      %v873 = vunpack.c.l.b16 %v401
      %v874 = vunpack.c.l.b16 %v402
      %v875 = vunpack.c.l.b16 %v403
      %v876 = vunpack.c.l.b16 %v404
      %v877 = vunpack.c.l.b16 %v405
      %v878 = vunpack.c.l.b16 %v406
      %v879 = vunpack.c.l.b16 %v407
      %v880 = vunpack.c.l.b16 %v408
      %v881 = vunpack.c.l.b16 %v409
      %v882 = vunpack.c.l.b16 %v410
      %v883 = vunpack.c.l.b16 %v411
      %v884 = vunpack.c.l.b16 %v412
      %v885 = vunpack.c.l.b16 %v413
      %v886 = vunpack.c.l.b16 %v414
      %v887 = vunpack.c.l.b16 %v415
      %v888 = vunpack.c.l.b16 %v416
      %v889 = vpack.c.b16 %v746, %v745
      %v890 = vpack.c.b16 %v748, %v747
      %v891 = vpack.c.b16 %v750, %v749
      %v892 = vpack.c.b16 %v752, %v751
      %v893 = vpack.c.b16 %v754, %v753
      %v894 = vpack.c.b16 %v756, %v755
      %v895 = vpack.c.b16 %v758, %v757
      %v896 = vpack.c.b16 %v760, %v759
      %v897 = vpack.c.b16 %v762, %v761
      %v898 = vpack.c.b16 %v764, %v763
      %v899 = vpack.c.b16 %v766, %v765
      %v900 = vpack.c.b16 %v768, %v767
      %v901 = vpack.c.b16 %v770, %v769
      %v902 = vpack.c.b16 %v772, %v771
      %v903 = vpack.c.b16 %v774, %v773
      %v904 = vpack.c.b16 %v776, %v775
      %v905 = vpack.c.b16 %v778, %v777
      %v906 = vpack.c.b16 %v780, %v779
      %v907 = vpack.c.b16 %v782, %v781
      %v908 = vpack.c.b16 %v784, %v783
      %v909 = vpack.c.b16 %v786, %v785
      %v910 = vpack.c.b16 %v788, %v787
      %v911 = vpack.c.b16 %v790, %v789
      %v912 = vpack.c.b16 %v792, %v791
      %v913 = vpack.c.b16 %v794, %v793
      %v914 = vpack.c.b16 %v796, %v795
      %v915 = vpack.c.b16 %v798, %v797
      %v916 = vpack.c.b16 %v800, %v799
      %v917 = vpack.c.b16 %v802, %v801
      %v918 = vpack.c.b16 %v804, %v803
      %v919 = vpack.c.b16 %v806, %v805
      %v920 = vpack.c.b16 %v808, %v807
      %v921 = vpack.c.b16 %v810, %v809
      %v922 = vpack.c.b16 %v812, %v811
      %v923 = vpack.c.b16 %v814, %v813
      %v924 = vpack.c.b16 %v816, %v815
      %v925 = vpack.c.b16 %v818, %v817
      %v926 = vpack.c.b16 %v820, %v819
      %v927 = vpack.c.b16 %v822, %v821
      %v928 = vpack.c.b16 %v824, %v823
      %v929 = vpack.c.b16 %v826, %v825
      %v930 = vpack.c.b16 %v828, %v827
      %v931 = vpack.c.b16 %v830, %v829
      %v932 = vpack.c.b16 %v832, %v831
      %v933 = vpack.c.b16 %v834, %v833
      %v934 = vpack.c.b16 %v836, %v835
      %v935 = vpack.c.b16 %v838, %v837
      %v936 = vpack.c.b16 %v840, %v839
      %v937 = vpack.c.b16 %v842, %v841
      %v938 = vpack.c.b16 %v844, %v843
      %v939 = vpack.c.b16 %v846, %v845
      %v940 = vpack.c.b16 %v848, %v847
      %v941 = vpack.c.b16 %v850, %v849
      %v942 = vpack.c.b16 %v852, %v851
      %v943 = vpack.c.b16 %v854, %v853
      %v944 = vpack.c.b16 %v856, %v855
      %v945 = vpack.c.b16 %v858, %v857
      %v946 = vpack.c.b16 %v860, %v859
      %v947 = vpack.c.b16 %v862, %v861
      %v948 = vpack.c.b16 %v864, %v863
      %v949 = vpack.c.b16 %v866, %v865
      %v950 = vpack.c.b16 %v868, %v867
      %v951 = vpack.c.b16 %v870, %v869
      %v952 = vpack.c.b16 %v872, %v871
      %v953 = vpack.c.b16 %v874, %v873
      %v954 = vpack.c.b16 %v876, %v875
      %v955 = vpack.c.b16 %v878, %v877
      %v956 = vpack.c.b16 %v880, %v879
      %v957 = vpack.c.b16 %v882, %v881
      %v958 = vpack.c.b16 %v884, %v883
      %v959 = vpack.c.b16 %v886, %v885
      %v960 = vpack.c.b16 %v888, %v887
      %1033 = vmatprep.subr.bf16.mxu0 0
      %1034 = vmatpush1.bf16.msra.mxu0 %v889
      %1035 = vmatprep.subr.bf16.mxu0 0
      %1036 = vmatpush1.bf16.msra.mxu0 %v890
      %1037 = vmatprep.subr.bf16.mxu0 0
      %1038 = vmatpush1.bf16.msra.mxu0 %v891
      %1039 = vmatprep.subr.bf16.mxu0 0
      %1040 = vmatpush1.bf16.msra.mxu0 %v892
      %1041 = vmatprep.subr.bf16.mxu0 0
      %1042 = vmatpush1.bf16.msra.mxu0 %v893
      %1043 = vmatprep.subr.bf16.mxu0 0
      %1044 = vmatpush1.bf16.msra.mxu0 %v894
      %1045 = vmatprep.subr.bf16.mxu0 0
      %1046 = vmatpush1.bf16.msra.mxu0 %v895
      %1047 = vmatprep.subr.bf16.mxu0 0
      %1048 = vmatpush1.bf16.msra.mxu0 %v896
      %1049 = vmatprep.subr.bf16.mxu0 0
      %1050 = vmatpush1.bf16.msra.mxu0 %v897
      %1051 = vmatprep.subr.bf16.mxu0 0
      %1052 = vmatpush1.bf16.msra.mxu0 %v898
      %1053 = vmatprep.subr.bf16.mxu0 0
      %1054 = vmatpush1.bf16.msra.mxu0 %v899
      %1055 = vmatprep.subr.bf16.mxu0 0
      %1056 = vmatpush1.bf16.msra.mxu0 %v900
      %1057 = vmatprep.subr.bf16.mxu0 0
      %1058 = vmatpush1.bf16.msra.mxu0 %v901
      %1059 = vmatprep.subr.bf16.mxu0 0
      %1060 = vmatpush1.bf16.msra.mxu0 %v902
      %1061 = vmatprep.subr.bf16.mxu0 0
      %1062 = vmatpush1.bf16.msra.mxu0 %v903
      %1063 = vmatprep.subr.bf16.mxu0 0
      %1064 = vmatpush1.bf16.msra.mxu0 %v904
      %1065 = vmatprep.mubr.bf16.mxu0 %v530
      %1066 = vmatmul.mubr.bf16.gmra.mrb[0].mxu0 %v529
      %v1067 = vpop.f32.mrb[0].mxu0
      %v1068 = vadd.f32 0.0, %v1067
      %v1069 = vpop.f32.mrb[0].mxu0
      %v1070 = vpop.f32.mrb[0].mxu0
      %v1071 = vadd.f32 0.0, %v1070
      %v1072 = vpop.f32.mrb[0].mxu0
      %1073 = vmatprep.mubr.bf16.mxu0 %v539
      %1074 = vmatmul.mubr.bf16.gmra.mrb[0].mxu0 %v538
      %v1075 = vpop.f32.mrb[0].mxu0
      %v1076 = vadd.f32 0.0, %v1075
      %v1077 = vpop.f32.mrb[0].mxu0
      %v1078 = vpop.f32.mrb[0].mxu0
      %v1079 = vadd.f32 0.0, %v1078
      %v1080 = vpop.f32.mrb[0].mxu0
      %1081 = vmatprep.mubr.bf16.mxu0 %v548
      %1082 = vmatmul.mubr.bf16.gmra.mrb[0].mxu0 %v547
      %v1083 = vpop.f32.mrb[0].mxu0
      %v1084 = vadd.f32 0.0, %v1083
      %v1085 = vpop.f32.mrb[0].mxu0
      %v1086 = vpop.f32.mrb[0].mxu0
      %v1087 = vadd.f32 0.0, %v1086
      %v1088 = vpop.f32.mrb[0].mxu0
      %1089 = vmatprep.mubr.bf16.mxu0 %v557
      %1090 = vmatmul.mubr.bf16.gmra.mrb[0].mxu0 %v556
      %v1091 = vpop.f32.mrb[0].mxu0
      %v1092 = vadd.f32 0.0, %v1091
      %v1093 = vpop.f32.mrb[0].mxu0
      %v1094 = vpop.f32.mrb[0].mxu0
      %v1095 = vadd.f32 0.0, %v1094
      %v1096 = vpop.f32.mrb[0].mxu0
      %1097 = vdwg.mxu0
      %1098 = vmatprep.subr.bf16.mxu0 0
      %1099 = vmatpush1.bf16.msra.mxu0 %v905
      %1100 = vmatprep.subr.bf16.mxu0 0
      %1101 = vmatpush1.bf16.msra.mxu0 %v906
      %1102 = vmatprep.subr.bf16.mxu0 0
      %1103 = vmatpush1.bf16.msra.mxu0 %v907
      %1104 = vmatprep.subr.bf16.mxu0 0
      %1105 = vmatpush1.bf16.msra.mxu0 %v908
      %1106 = vmatprep.subr.bf16.mxu0 0
      %1107 = vmatpush1.bf16.msra.mxu0 %v909
      %1108 = vmatprep.subr.bf16.mxu0 0
      %1109 = vmatpush1.bf16.msra.mxu0 %v910
      %1110 = vmatprep.subr.bf16.mxu0 0
      %1111 = vmatpush1.bf16.msra.mxu0 %v911
      %1112 = vmatprep.subr.bf16.mxu0 0
      %1113 = vmatpush1.bf16.msra.mxu0 %v912
      %1114 = vmatprep.subr.bf16.mxu0 0
      %1115 = vmatpush1.bf16.msra.mxu0 %v913
      %1116 = vmatprep.subr.bf16.mxu0 0
      %1117 = vmatpush1.bf16.msra.mxu0 %v914
      %1118 = vmatprep.subr.bf16.mxu0 0
      %1119 = vmatpush1.bf16.msra.mxu0 %v915
      %1120 = vmatprep.subr.bf16.mxu0 0
      %1121 = vmatpush1.bf16.msra.mxu0 %v916
      %1122 = vmatprep.subr.bf16.mxu0 0
      %1123 = vmatpush1.bf16.msra.mxu0 %v917
      %1124 = vmatprep.subr.bf16.mxu0 0
      %1125 = vmatpush1.bf16.msra.mxu0 %v918
      %1126 = vmatprep.subr.bf16.mxu0 0
      %1127 = vmatpush1.bf16.msra.mxu0 %v919
      %1128 = vmatprep.subr.bf16.mxu0 0
      %1129 = vmatpush1.bf16.msra.mxu0 %v920
      %1130 = vmatprep.mubr.bf16.mxu0 %v532
      %1131 = vmatmul.mubr.bf16.gmra.mrb[0].mxu0 %v531
      %v1132 = vpop.f32.mrb[0].mxu0
      %v1133 = vadd.f32 %v1068, %v1132
      %v1134 = vpop.f32.mrb[0].mxu0
      %v1135 = vpop.f32.mrb[0].mxu0
      %v1136 = vadd.f32 %v1071, %v1135
      %v1137 = vpop.f32.mrb[0].mxu0
      %1138 = vmatprep.mubr.bf16.mxu0 %v541
      %1139 = vmatmul.mubr.bf16.gmra.mrb[0].mxu0 %v540
      %v1140 = vpop.f32.mrb[0].mxu0
      %v1141 = vadd.f32 %v1076, %v1140
      %v1142 = vpop.f32.mrb[0].mxu0
      %v1143 = vpop.f32.mrb[0].mxu0
      %v1144 = vadd.f32 %v1079, %v1143
      %v1145 = vpop.f32.mrb[0].mxu0
      %1146 = vmatprep.mubr.bf16.mxu0 %v550
      %1147 = vmatmul.mubr.bf16.gmra.mrb[0].mxu0 %v549
      %v1148 = vpop.f32.mrb[0].mxu0
      %v1149 = vadd.f32 %v1084, %v1148
      %v1150 = vpop.f32.mrb[0].mxu0
      %v1151 = vpop.f32.mrb[0].mxu0
      %v1152 = vadd.f32 %v1087, %v1151
      %v1153 = vpop.f32.mrb[0].mxu0
      %1154 = vmatprep.mubr.bf16.mxu0 %v559
      %1155 = vmatmul.mubr.bf16.gmra.mrb[0].mxu0 %v558
      %v1156 = vpop.f32.mrb[0].mxu0
      %v1157 = vadd.f32 %v1092, %v1156
      %v1158 = vpop.f32.mrb[0].mxu0
      %v1159 = vpop.f32.mrb[0].mxu0
      %v1160 = vadd.f32 %v1095, %v1159
      %v1161 = vpop.f32.mrb[0].mxu0
      %1162 = vdwg.mxu0
      %1163 = vmatprep.subr.bf16.mxu0 0
      %1164 = vmatpush1.bf16.msra.mxu0 %v921
      %1165 = vmatprep.subr.bf16.mxu0 0
      %1166 = vmatpush1.bf16.msra.mxu0 %v922
      %1167 = vmatprep.subr.bf16.mxu0 0
      %1168 = vmatpush1.bf16.msra.mxu0 %v923
      %1169 = vmatprep.subr.bf16.mxu0 0
      %1170 = vmatpush1.bf16.msra.mxu0 %v924
      %1171 = vmatprep.subr.bf16.mxu0 0
      %1172 = vmatpush1.bf16.msra.mxu0 %v925
      %1173 = vmatprep.subr.bf16.mxu0 0
      %1174 = vmatpush1.bf16.msra.mxu0 %v926
      %1175 = vmatprep.subr.bf16.mxu0 0
      %1176 = vmatpush1.bf16.msra.mxu0 %v927
      %1177 = vmatprep.subr.bf16.mxu0 0
      %1178 = vmatpush1.bf16.msra.mxu0 %v928
      %1179 = vmatprep.subr.bf16.mxu0 0
      %1180 = vmatpush1.bf16.msra.mxu0 %v929
      %1181 = vmatprep.subr.bf16.mxu0 0
      %1182 = vmatpush1.bf16.msra.mxu0 %v930
      %1183 = vmatprep.subr.bf16.mxu0 0
      %1184 = vmatpush1.bf16.msra.mxu0 %v931
      %1185 = vmatprep.subr.bf16.mxu0 0
      %1186 = vmatpush1.bf16.msra.mxu0 %v932
      %1187 = vmatprep.subr.bf16.mxu0 0
      %1188 = vmatpush1.bf16.msra.mxu0 %v933
      %1189 = vmatprep.subr.bf16.mxu0 0
      %1190 = vmatpush1.bf16.msra.mxu0 %v934
      %1191 = vmatprep.subr.bf16.mxu0 0
      %1192 = vmatpush1.bf16.msra.mxu0 %v935
      %1193 = vmatprep.subr.bf16.mxu0 0
      %1194 = vmatpush1.bf16.msra.mxu0 %v936
      %1195 = vmatprep.mubr.bf16.mxu0 %v534
      %1196 = vmatmul.mubr.bf16.gmra.mrb[0].mxu0 %v533
      %v1197 = vpop.f32.mrb[0].mxu0
      %v1198 = vadd.f32 %v1133, %v1197
      %v1199 = vpop.f32.mrb[0].mxu0
      %v1200 = vpop.f32.mrb[0].mxu0
      %v1201 = vadd.f32 %v1136, %v1200
      %v1202 = vpop.f32.mrb[0].mxu0
      %1203 = vmatprep.mubr.bf16.mxu0 %v543
      %1204 = vmatmul.mubr.bf16.gmra.mrb[0].mxu0 %v542
      %v1205 = vpop.f32.mrb[0].mxu0
      %v1206 = vadd.f32 %v1141, %v1205
      %v1207 = vpop.f32.mrb[0].mxu0
      %v1208 = vpop.f32.mrb[0].mxu0
      %v1209 = vadd.f32 %v1144, %v1208
      %v1210 = vpop.f32.mrb[0].mxu0
      %1211 = vmatprep.mubr.bf16.mxu0 %v552
      %1212 = vmatmul.mubr.bf16.gmra.mrb[0].mxu0 %v551
      %v1213 = vpop.f32.mrb[0].mxu0
      %v1214 = vadd.f32 %v1149, %v1213
      %v1215 = vpop.f32.mrb[0].mxu0
      %v1216 = vpop.f32.mrb[0].mxu0
      %v1217 = vadd.f32 %v1152, %v1216
      %v1218 = vpop.f32.mrb[0].mxu0
      %1219 = vmatprep.mubr.bf16.mxu0 %v561
      %1220 = vmatmul.mubr.bf16.gmra.mrb[0].mxu0 %v560
      %v1221 = vpop.f32.mrb[0].mxu0
      %v1222 = vadd.f32 %v1157, %v1221
      %v1223 = vpop.f32.mrb[0].mxu0
      %v1224 = vpop.f32.mrb[0].mxu0
      %v1225 = vadd.f32 %v1160, %v1224
      %v1226 = vpop.f32.mrb[0].mxu0
      %1227 = vdwg.mxu0
      %1228 = vmatprep.subr.bf16.mxu0 0
      %1229 = vmatpush1.bf16.msra.mxu0 %v937
      %1230 = vmatprep.subr.bf16.mxu0 0
      %1231 = vmatpush1.bf16.msra.mxu0 %v938
      %1232 = vmatprep.subr.bf16.mxu0 0
      %1233 = vmatpush1.bf16.msra.mxu0 %v939
      %1234 = vmatprep.subr.bf16.mxu0 0
      %1235 = vmatpush1.bf16.msra.mxu0 %v940
      %1236 = vmatprep.subr.bf16.mxu0 0
      %1237 = vmatpush1.bf16.msra.mxu0 %v941
      %1238 = vmatprep.subr.bf16.mxu0 0
      %1239 = vmatpush1.bf16.msra.mxu0 %v942
      %1240 = vmatprep.subr.bf16.mxu0 0
      %1241 = vmatpush1.bf16.msra.mxu0 %v943
      %1242 = vmatprep.subr.bf16.mxu0 0
      %1243 = vmatpush1.bf16.msra.mxu0 %v944
      %1244 = vmatprep.subr.bf16.mxu0 0
      %1245 = vmatpush1.bf16.msra.mxu0 %v945
      %1246 = vmatprep.subr.bf16.mxu0 0
      %1247 = vmatpush1.bf16.msra.mxu0 %v946
      %1248 = vmatprep.subr.bf16.mxu0 0
      %1249 = vmatpush1.bf16.msra.mxu0 %v947
      %1250 = vmatprep.subr.bf16.mxu0 0
      %1251 = vmatpush1.bf16.msra.mxu0 %v948
      %1252 = vmatprep.subr.bf16.mxu0 0
      %1253 = vmatpush1.bf16.msra.mxu0 %v949
      %1254 = vmatprep.subr.bf16.mxu0 0
      %1255 = vmatpush1.bf16.msra.mxu0 %v950
      %1256 = vmatprep.subr.bf16.mxu0 0
      %1257 = vmatpush1.bf16.msra.mxu0 %v951
      %1258 = vmatprep.subr.bf16.mxu0 0
      %1259 = vmatpush1.bf16.msra.mxu0 %v952
      %1260 = vmatprep.mubr.bf16.mxu0 %v536
      %1261 = vmatmul.mubr.bf16.gmra.mrb[0].mxu0 %v535
      %v1262 = vpop.f32.mrb[0].mxu0
      %v1263 = vadd.f32 %v1198, %v1262
      %v1264 = vpop.f32.mrb[0].mxu0
      %v1265 = vpop.f32.mrb[0].mxu0
      %v1266 = vadd.f32 %v1201, %v1265
      %v1267 = vpop.f32.mrb[0].mxu0
      %1268 = vmatprep.mubr.bf16.mxu0 %v545
      %1269 = vmatmul.mubr.bf16.gmra.mrb[0].mxu0 %v544
      %v1270 = vpop.f32.mrb[0].mxu0
      %v1271 = vadd.f32 %v1206, %v1270
      %v1272 = vpop.f32.mrb[0].mxu0
      %v1273 = vpop.f32.mrb[0].mxu0
      %v1274 = vadd.f32 %v1209, %v1273
      %v1275 = vpop.f32.mrb[0].mxu0
      %1276 = vmatprep.mubr.bf16.mxu0 %v554
      %1277 = vmatmul.mubr.bf16.gmra.mrb[0].mxu0 %v553
      %v1278 = vpop.f32.mrb[0].mxu0
      %v1279 = vadd.f32 %v1214, %v1278
      %v1280 = vpop.f32.mrb[0].mxu0
      %v1281 = vpop.f32.mrb[0].mxu0
      %v1282 = vadd.f32 %v1217, %v1281
      %v1283 = vpop.f32.mrb[0].mxu0
      %1284 = vmatprep.mubr.bf16.mxu0 %v563
      %1285 = vmatmul.mubr.bf16.gmra.mrb[0].mxu0 %v562
      %v1286 = vpop.f32.mrb[0].mxu0
      %v1287 = vadd.f32 %v1222, %v1286
      %v1288 = vpop.f32.mrb[0].mxu0
      %v1289 = vpop.f32.mrb[0].mxu0
      %v1290 = vadd.f32 %v1225, %v1289
      %v1291 = vpop.f32.mrb[0].mxu0
      %1292 = vdwg.mxu0
      %1293 = vmatprep.subr.bf16.mxu0 0
      %1294 = vmatpush1.bf16.msra.mxu0 %v953
      %1295 = vmatprep.subr.bf16.mxu0 0
      %1296 = vmatpush1.bf16.msra.mxu0 %v954
      %1297 = vmatprep.subr.bf16.mxu0 0
      %1298 = vmatpush1.bf16.msra.mxu0 %v955
      %1299 = vmatprep.subr.bf16.mxu0 0
      %1300 = vmatpush1.bf16.msra.mxu0 %v956
      %1301 = vmatprep.subr.bf16.mxu0 0
      %1302 = vmatpush1.bf16.msra.mxu0 %v957
      %1303 = vmatprep.subr.bf16.mxu0 0
      %1304 = vmatpush1.bf16.msra.mxu0 %v958
      %1305 = vmatprep.subr.bf16.mxu0 0
      %1306 = vmatpush1.bf16.msra.mxu0 %v959
      %1307 = vmatprep.subr.bf16.mxu0 0
      %1308 = vmatpush1.bf16.msra.mxu0 %v960
      %1309 = vmatprep.subr.bf16.mxu0 0
      %1310 = vmatpush1.bf16.msra.mxu0 0
      %1311 = vmatprep.subr.bf16.mxu0 0
      %1312 = vmatpush1.bf16.msra.mxu0 0
      %1313 = vmatprep.subr.bf16.mxu0 0
      %1314 = vmatpush1.bf16.msra.mxu0 0
      %1315 = vmatprep.subr.bf16.mxu0 0
      %1316 = vmatpush1.bf16.msra.mxu0 0
      %1317 = vmatprep.subr.bf16.mxu0 0
      %1318 = vmatpush1.bf16.msra.mxu0 0
      %1319 = vmatprep.subr.bf16.mxu0 0
      %1320 = vmatpush1.bf16.msra.mxu0 0
      %1321 = vmatprep.subr.bf16.mxu0 0
      %1322 = vmatpush1.bf16.msra.mxu0 0
      %1323 = vmatprep.subr.bf16.mxu0 0
      %1324 = vmatpush1.bf16.msra.mxu0 0
      %1325 = vmatprep.mubr.bf16.mxu0 0
      %1326 = vmatmul.mubr.bf16.gmra.mrb[0].mxu0 %v537
      %v1327 = vpop.f32.mrb[0].mxu0
      %v1328 = vadd.f32 %v1263, %v1327
      %v1329 = vpop.f32.mrb[0].mxu0
      %v1330 = vpop.f32.mrb[0].mxu0
      %v1331 = vadd.f32 %v1266, %v1330
      %v1332 = vpop.f32.mrb[0].mxu0
      %1333 = vmatprep.mubr.bf16.mxu0 0
      %1334 = vmatmul.mubr.bf16.gmra.mrb[0].mxu0 %v546
      %v1335 = vpop.f32.mrb[0].mxu0
      %v1336 = vadd.f32 %v1271, %v1335
      %v1337 = vpop.f32.mrb[0].mxu0
      %v1338 = vpop.f32.mrb[0].mxu0
      %v1339 = vadd.f32 %v1274, %v1338
      %v1340 = vpop.f32.mrb[0].mxu0
      %1341 = vmatprep.mubr.bf16.mxu0 0
      %1342 = vmatmul.mubr.bf16.gmra.mrb[0].mxu0 %v555
      %v1343 = vpop.f32.mrb[0].mxu0
      %v1344 = vadd.f32 %v1279, %v1343
      %v1345 = vpop.f32.mrb[0].mxu0
      %v1346 = vpop.f32.mrb[0].mxu0
      %v1347 = vadd.f32 %v1282, %v1346
      %v1348 = vpop.f32.mrb[0].mxu0
      %1349 = vmatprep.mubr.bf16.mxu0 0
      %1350 = vmatmul.mubr.bf16.gmra.mrb[0].mxu0 %v564
      %v1351 = vpop.f32.mrb[0].mxu0
      %v1352 = vadd.f32 %v1287, %v1351
      %v1353 = vpop.f32.mrb[0].mxu0
      %v1354 = vpop.f32.mrb[0].mxu0
      %v1355 = vadd.f32 %v1290, %v1354
      %v1356 = vpop.f32.mrb[0].mxu0
      %1357 = vdwg.mxu0
      %v1358 = vpack.c.bf16 %v1331, %v1328
      %v1359 = vpack.c.bf16 %v1339, %v1336
      %v1360 = vpack.c.bf16 %v1347, %v1344
      %v1361 = vpack.c.bf16 %v1355, %v1352
      %v1366 = vunpack.c.l.b16 %v1358
      %v1367 = vunpack.c.h.b16 %v1358
      %v1368 = vunpack.c.l.b16 %v1359
      %v1369 = vunpack.c.h.b16 %v1359
      %v1370 = vunpack.c.l.b16 %v1360
      %v1371 = vunpack.c.h.b16 %v1360
      %v1372 = vunpack.c.l.b16 %v1361
      %v1373 = vunpack.c.h.b16 %v1361
      %v1374 = vpack.c.b16 %v1366, %v1366
      %v1375 = vpack.c.b16 %v1367, %v1367
      %v1376 = vpack.c.b16 %v1368, %v1368
      %v1377 = vpack.c.b16 %v1369, %v1369
      %v1378 = vpack.c.b16 %v1370, %v1370
      %v1379 = vpack.c.b16 %v1371, %v1371
      %v1380 = vpack.c.b16 %v1372, %v1372
      %v1381 = vpack.c.b16 %v1373, %v1373
      %vm1390 = vcmask 519168
      %1391 = vst.msk [vmem:[%s223] sm:$0xf] %vm1390, %v1374
      %1392 = vst.msk [vmem:[%s223 + $0x4] sm:$0xf] %vm1390, %v1375
      %1393 = vst.msk [vmem:[%s223 + $0x8] sm:$0xf] %vm1390, %v1376
      %1394 = vst.msk [vmem:[%s223 + $0xc] sm:$0xf] %vm1390, %v1377
      %1395 = vst.msk [vmem:[%s223 + $0x10] sm:$0xf] %vm1390, %v1378
      %1396 = vst.msk [vmem:[%s223 + $0x14] sm:$0xf] %vm1390, %v1379
      %1397 = vst.msk [vmem:[%s223 + $0x18] sm:$0xf] %vm1390, %v1380
      %1398 = vst.msk [vmem:[%s223 + $0x1c] sm:$0xf] %vm1390, %v1381
      %vm1399 = vcmask 523264
      %v1400 = vsel %vm1399, %v1328, 0.0
      %v1401 = vsel %vm1399, %v1331, 0.0
      %v1402 = vadd.f32 %v1400, %v1401
      %v1403 = vsel %vm1399, %v1336, 0.0
      %v1404 = vadd.f32 %v1402, %v1403
      %v1405 = vsel %vm1399, %v1339, 0.0
      %v1406 = vadd.f32 %v1404, %v1405
      %v1407 = vsel %vm1399, %v1344, 0.0
      %v1408 = vadd.f32 %v1406, %v1407
      %v1409 = vsel %vm1399, %v1347, 0.0
      %v1410 = vadd.f32 %v1408, %v1409
      %v1411 = vsel %vm1399, %v1352, 0.0
      %v1412 = vadd.f32 %v1410, %v1411
      %v1413 = vsel %vm1399, %v1355, 0.0
      %v1414 = vadd.f32 %v1412, %v1413
      %v1415 = vrot.slane %v1414, 4
      %v1416 = vadd.f32 %v1414, %v1415
      %v1417 = vrot.slane %v1416, 2
      %v1418 = vadd.f32 %v1416, %v1417
      %v1419 = vrot.slane %v1418, 1
      %v1420 = vadd.f32 %v1418, %v1419
      %vm1421 = vcmask 516096
      %1422 = vst.msk [vmem:[%s231] sm:$0x1] %vm1421, %v1420
      %v1423 = vmul.f32 %v1328, %v1328
      %v1424 = vmul.f32 %v1331, %v1331
      %v1425 = vmul.f32 %v1336, %v1336
      %v1426 = vmul.f32 %v1339, %v1339
      %v1427 = vmul.f32 %v1344, %v1344
      %v1428 = vmul.f32 %v1347, %v1347
      %v1429 = vmul.f32 %v1352, %v1352
      %v1430 = vmul.f32 %v1355, %v1355
      %v1431 = vsel %vm1399, %v1423, 0.0
      %v1432 = vsel %vm1399, %v1424, 0.0
      %v1433 = vadd.f32 %v1431, %v1432
      %v1434 = vsel %vm1399, %v1425, 0.0
      %v1435 = vadd.f32 %v1433, %v1434
      %v1436 = vsel %vm1399, %v1426, 0.0
      %v1437 = vadd.f32 %v1435, %v1436
      %v1438 = vsel %vm1399, %v1427, 0.0
      %v1439 = vadd.f32 %v1437, %v1438
      %v1440 = vsel %vm1399, %v1428, 0.0
      %v1441 = vadd.f32 %v1439, %v1440
      %v1442 = vsel %vm1399, %v1429, 0.0
      %v1443 = vadd.f32 %v1441, %v1442
      %v1444 = vsel %vm1399, %v1430, 0.0
      %v1445 = vadd.f32 %v1443, %v1444
      %v1446 = vrot.slane %v1445, 4
      %v1447 = vadd.f32 %v1445, %v1446
      %v1448 = vrot.slane %v1447, 2
      %v1449 = vadd.f32 %v1447, %v1448
      %v1450 = vrot.slane %v1449, 1
      %v1451 = vadd.f32 %v1449, %v1450
      %1452 = vst.msk [vmem:[%s231 + $0x1] sm:$0x1] %vm1421, %v1451
      %s1453 = smul.u32 8, %s20
      %p1454 = scmp.lt.s32.totalorder %s19, 1
      %s1455 = scalar_select %p1454, %s19, 1
      %p1456 = scmp.lt.s32.totalorder %s1453, 7
      %s1457 = scalar_select %p1456, %s1453, 7
      %s1458 = smul.addr %s1455, 8
      %s1459 = sadd.s32 %s1457, %s1458
      %s1460 = smul.addr %s1459, 4
      %s1461 = scalar_lea.vmem %s2, %s1460
      %p1462 = scmp.lt.s32.totalorder %s19, 1
      %s1463 = scalar_select %p1462, %s19, 1
      %p1464 = scmp.lt.s32.totalorder %s20, 0
      %s1465 = scalar_select %p1464, %s20, 0
      %s1466 = sadd.s32 %s1465, %s1463
      %s1467 = smul.addr %s1466, 2
      %s1468 = scalar_lea.vmem %s3, %s1467
      // Predicated region
      $region29: #{refine_subnet_forward.42} parent=27 // pred_check
        %p1469 = pneg %p96
      $region30: #{refine_subnet_forward.42} parent=27 // pred_check_branch
        %1471 = sbr.rel (%p1469) target = $region32
      $region31: #{refine_subnet_forward.42} parent=27 // pred_region
        %s1472 = smul.u32 8, %s20
      $region32: #{refine_subnet_forward.42} parent=27 // pred_fallthru
        _
      // Predicated region
      $region33: #{refine_subnet_forward.42} parent=27 // pred_check
        %p1473 = pneg %p124
      $region34: #{refine_subnet_forward.42} parent=27 // pred_check_branch
        %1475 = sbr.rel (%p1473) target = $region36
      $region35: #{refine_subnet_forward.42} parent=27 // pred_region
        _
      $region36: #{refine_subnet_forward.42} parent=27 // pred_fallthru
        _
    $region28: #{refine_subnet_forward.42} parent=5 // pred_fallthru
      _
    %p1476 = scmp.le.s32.totalorder 2, %s10
    // Predicated region
    $region37: #{refine_subnet_forward.42} parent=5 // pred_check
      %p1477 = pneg %p1476
    $region38: #{refine_subnet_forward.42} parent=5 // pred_check_branch
      %1479 = sbr.rel (%p1477) target = $region40
    $region39: #{refine_subnet_forward.42} parent=5 // pred_region
      %s1480 = ssub.s32 %s10, 2
      // Predicated region
      $region41: #{refine_subnet_forward.42} parent=39 // pred_check
        %p1481 = pneg %p102
      $region42: #{refine_subnet_forward.42} parent=39 // pred_check_branch
        %1483 = sbr.rel (%p1481) target = $region44
      $region43: #{refine_subnet_forward.42} parent=39 // pred_region
        %s1484 = smul.u32 8, %s22
        %p1485 = scmp.lt.s32.totalorder %s21, 1
        %s1486 = scalar_select %p1485, %s21, 1
        %p1487 = scmp.lt.s32.totalorder %s1484, 7
        %s1488 = scalar_select %p1487, %s1484, 7
        %s1489 = smul.addr %s1486, 8
        %s1490 = sadd.s32 %s1488, %s1489
        %s1491 = smul.addr %s1490, 4
        %s1492 = scalar_lea.vmem %s2, %s1491
      $region44: #{refine_subnet_forward.42} parent=39 // pred_fallthru
        _
      // Predicated region
      $region45: #{refine_subnet_forward.42} parent=39 // pred_check
        %p1493 = pneg %p130
      $region46: #{refine_subnet_forward.42} parent=39 // pred_check_branch
        %1495 = sbr.rel (%p1493) target = $region48
      $region47: #{refine_subnet_forward.42} parent=39 // pred_region
        %p1496 = scmp.lt.s32.totalorder %s21, 1
        %s1497 = scalar_select %p1496, %s21, 1
        %p1498 = scmp.lt.s32.totalorder %s22, 0
        %s1499 = scalar_select %p1498, %s22, 0
        %s1500 = sadd.s32 %s1499, %s1497
        %s1501 = smul.addr %s1500, 2
        %s1502 = scalar_lea.vmem %s3, %s1501
      $region48: #{refine_subnet_forward.42} parent=39 // pred_fallthru
        _
    $region40: #{refine_subnet_forward.42} parent=5 // pred_fallthru
      _
  $region6: #{refine_subnet_forward.42} parent=0 // loop_footer
    %s14 = sadd.s32 1, %s10
  $region7: #{refine_subnet_forward.42} parent=0 // loop_footer_branch
    %9 = sbr.rel target = $region3
  $region8: #{refine_subnet_forward.42} parent=0 // loop_exit
    _

// kernel: refine_subnet_forward.44
$region0: #{refine_subnet_forward.44}
  #allocation0 [shape = 'u32[]', space=smem, size = 0x4, offset = 0x4, fixed_abs, tag = 'smem constant byte address 0x4 - core index']
  #allocation1 [shape = 'u32[144,128]{1,0:T(1,128)}', space=vmem, size = 0x12000, scoped, tag = 'internal scratch']
  %s0 = inlined_call_operand.vmem [shape: bf16[2,256,640], index: 0, kind: input, shape index: {}]
  %s1 = inlined_call_operand.vmem [shape: bf16[640,32], index: 1, kind: input, shape index: {}]
  %s2 = inlined_call_operand.vmem [shape: bf16[2,256,32], index: 2, kind: output, shape index: {0}]
  %s3 = inlined_call_operand.vmem [shape: f32[2,1,2,32], index: 3, kind: output, shape index: {1}]
  %4 = xla_tuple %s2, %s3
  %s5 = sld [smem:[#allocation0]]
  $region49: #{refine_subnet_forward.44} parent=0
    _
  %s7 = ssub.s32 1, %s5
  %s8 = scalar_select 0, %s7, %s5
  loop: start=0, step=1, limit=4
  $region2: #{refine_subnet_forward.44} parent=0 // loop_pre_header
    _
  $region3: #{refine_subnet_forward.44} parent=0 // loop_header
    %s10 = sphi 0, %s14
    %p11 = scmp.ge.s32.totalorder %s10, 4
    %s17 = sphi 0, %s29
    %s18 = sphi 0, %s25
    %s19 = sphi 0, %s17
    %s20 = sphi 0, %s18
    %s21 = sphi 0, %s19
    %s22 = sphi 0, %s20
    %s34 = sphi 0, %s36
    %s37 = sphi 0, %s34
    %s38 = sphi 0, %s37
    %s54 = sphi 0, %s38
    %s58 = sphi 0, %s58
    %s60 = sphi 0, %s58
    %s61 = sphi 0, %s60
    %s75 = sphi 0, %s61
    %s83 = sphi 0, %s85
    %s86 = sphi 0, %s83
    %s87 = sphi 0, %s86
    %s103 = sphi 0, %s87
    %s111 = sphi 0, %s113
    %s114 = sphi 0, %s111
    %s115 = sphi 0, %s114
    %s131 = sphi 0, %s115
  $region4: #{refine_subnet_forward.44} parent=0 // loop_header_branch
    %13 = sbr.rel (%p11) target = $region8
  $region5: #{refine_subnet_forward.44} parent=0 // loop_body
    %s15 = ssub.s32 %s10, 1
    %s16 = ssub.s32 %s10, 2
    %s23 = sadd.s32 1, %s18
    %p24 = scmp.ge.s32.totalorder %s23, 1
    %s25 = scalar_select %p24, 0, %s23
    %s26 = sadd.s32 1, %s17
    %s27 = scalar_select %p24, %s26, %s17
    %p28 = scmp.ge.s32.totalorder %s27, 2
    %s29 = scalar_select %p28, 0, %s27
    %s30 = ssub.s32 %s17, %s29
    %s31 = ssub.s32 %s18, %s25
    %s32 = sor.u32 %s30, %s31
    %p33 = scmp.eq.s32.totalorder %s32, 0
    %s35 = sadd.s32 %s34, 1
    %s36 = scalar_select %p33, %s34, %s35
    %p39 = pneg %p33
    %p40 = scmp.eq.s32.totalorder %s10, 1
    %p41 = por %p39, %p40
    %p42 = scmp.ne.s32.totalorder %s34, %s37
    %p43 = scmp.eq.s32.totalorder %s10, 0
    %p44 = por %p42, %p43
    %p45 = scmp.ne.s32.totalorder %s34, %s37
    %p46 = scmp.eq.s32.totalorder %s15, 1
    %p47 = por %p45, %p46
    %p48 = scmp.ne.s32.totalorder %s37, %s38
    %p49 = scmp.eq.s32.totalorder %s15, 0
    %p50 = por %p48, %p49
    %p51 = scmp.ne.s32.totalorder %s37, %s38
    %p52 = scmp.eq.s32.totalorder %s16, 1
    %p53 = por %p51, %p52
    %p55 = scmp.ne.s32.totalorder %s38, %s54
    %p56 = scmp.eq.s32.totalorder %s16, 0
    %p57 = por %p55, %p56
    %s59 = sadd.s32 %s58, 1
    %p62 = scmp.eq.s32.totalorder %s10, 1
    %p63 = scmp.ne.s32.totalorder %s58, %s60
    %p64 = scmp.eq.s32.totalorder %s10, 0
    %p65 = por %p63, %p64
    %p66 = scmp.ne.s32.totalorder %s58, %s60
    %p67 = scmp.eq.s32.totalorder %s15, 1
    %p68 = por %p66, %p67
    %p69 = scmp.ne.s32.totalorder %s60, %s61
    %p70 = scmp.eq.s32.totalorder %s15, 0
    %p71 = por %p69, %p70
    %p72 = scmp.ne.s32.totalorder %s60, %s61
    %p73 = scmp.eq.s32.totalorder %s16, 1
    %p74 = por %p72, %p73
    %p76 = scmp.ne.s32.totalorder %s61, %s75
    %p77 = scmp.eq.s32.totalorder %s16, 0
    %p78 = por %p76, %p77
    %s79 = ssub.s32 %s17, %s29
    %s80 = ssub.s32 %s18, %s25
    %s81 = sor.u32 %s79, %s80
    %p82 = scmp.eq.s32.totalorder %s81, 0
    %s84 = sadd.s32 %s83, 1
    %s85 = scalar_select %p82, %s83, %s84
    %p88 = pneg %p82
    %p89 = scmp.eq.s32.totalorder %s10, 1
    %p90 = por %p88, %p89
    %p91 = scmp.ne.s32.totalorder %s83, %s86
    %p92 = scmp.eq.s32.totalorder %s10, 0
    %p93 = por %p91, %p92
    %p94 = scmp.ne.s32.totalorder %s83, %s86
    %p95 = scmp.eq.s32.totalorder %s15, 1
    %p96 = por %p94, %p95
    %p97 = scmp.ne.s32.totalorder %s86, %s87
    %p98 = scmp.eq.s32.totalorder %s15, 0
    %p99 = por %p97, %p98
    %p100 = scmp.ne.s32.totalorder %s86, %s87
    %p101 = scmp.eq.s32.totalorder %s16, 1
    %p102 = por %p100, %p101
    %p104 = scmp.ne.s32.totalorder %s87, %s103
    %p105 = scmp.eq.s32.totalorder %s16, 0
    %p106 = por %p104, %p105
    %s107 = ssub.s32 %s17, %s29
    %s108 = ssub.s32 %s18, %s25
    %s109 = sor.u32 %s107, %s108
    %p110 = scmp.eq.s32.totalorder %s109, 0
    %s112 = sadd.s32 %s111, 1
    %s113 = scalar_select %p110, %s111, %s112
    %p116 = pneg %p110
    %p117 = scmp.eq.s32.totalorder %s10, 1
    %p118 = por %p116, %p117
    %p119 = scmp.ne.s32.totalorder %s111, %s114
    %p120 = scmp.eq.s32.totalorder %s10, 0
    %p121 = por %p119, %p120
    %p122 = scmp.ne.s32.totalorder %s111, %s114
    %p123 = scmp.eq.s32.totalorder %s15, 1
    %p124 = por %p122, %p123
    %p125 = scmp.ne.s32.totalorder %s114, %s115
    %p126 = scmp.eq.s32.totalorder %s15, 0
    %p127 = por %p125, %p126
    %p128 = scmp.ne.s32.totalorder %s114, %s115
    %p129 = scmp.eq.s32.totalorder %s16, 1
    %p130 = por %p128, %p129
    %p132 = scmp.ne.s32.totalorder %s115, %s131
    %p133 = scmp.eq.s32.totalorder %s16, 0
    %p134 = por %p132, %p133
    %p135 = scmp.le.s32.totalorder 1, %s10
    %p136 = scmp.lt.s32.totalorder %s10, 3
    %p137 = pnand %p135, %p136
    %p138 = pneg %p137
    // Predicated region
    $region9: #{refine_subnet_forward.44} parent=5 // pred_check
      _
    $region10: #{refine_subnet_forward.44} parent=5 // pred_check_branch
      %140 = sbr.rel (%p137) target = $region12
    $region11: #{refine_subnet_forward.44} parent=5 // pred_region
      %s141 = ssub.s32 %s10, 1
      // Predicated region
      $region13: #{refine_subnet_forward.44} parent=11 // pred_check
        %p142 = pneg %p71
      $region14: #{refine_subnet_forward.44} parent=11 // pred_check_branch
        %144 = sbr.rel (%p142) target = $region16
      $region15: #{refine_subnet_forward.44} parent=11 // pred_region
        _
      $region16: #{refine_subnet_forward.44} parent=11 // pred_fallthru
        _
    $region12: #{refine_subnet_forward.44} parent=5 // pred_fallthru
      _
    %p145 = scmp.lt.s32.totalorder %s10, 2
    // Predicated region
    $region17: #{refine_subnet_forward.44} parent=5 // pred_check
      %p146 = pneg %p145
    $region18: #{refine_subnet_forward.44} parent=5 // pred_check_branch
      %148 = sbr.rel (%p146) target = $region20
    $region19: #{refine_subnet_forward.44} parent=5 // pred_region
      // Predicated region
      $region21: #{refine_subnet_forward.44} parent=19 // pred_check
        %p149 = pneg %p44
      $region22: #{refine_subnet_forward.44} parent=19 // pred_check_branch
        %151 = sbr.rel (%p149) target = $region24
      $region23: #{refine_subnet_forward.44} parent=19 // pred_region
        %s152 = smul.u32 32, %s18
        %p153 = scmp.lt.s32.totalorder %s17, 1
        %s154 = scalar_select %p153, %s17, 1
        %p155 = scmp.lt.s32.totalorder %s152, 31
        %s156 = scalar_select %p155, %s152, 31
        %s157 = smul.addr %s156, 5
        %s158 = smul.addr %s154, 160
        %s159 = sadd.s32 %s157, %s158
        %s160 = smul.addr %s159, 4
        %s161 = scalar_lea.vmem %s0, %s160
        %s162 = smul.u32 32, %s18
      $region24: #{refine_subnet_forward.44} parent=19 // pred_fallthru
        _
    $region20: #{refine_subnet_forward.44} parent=5 // pred_fallthru
      _
    %p163 = scmp.le.s32.totalorder 1, %s10
    %p164 = scmp.lt.s32.totalorder %s10, 3
    %p165 = pnand %p163, %p164
    %p166 = pneg %p165
    // Predicated region
    $region25: #{refine_subnet_forward.44} parent=5 // pred_check
      _
    $region26: #{refine_subnet_forward.44} parent=5 // pred_check_branch
      %168 = sbr.rel (%p165) target = $region28
    $region27: #{refine_subnet_forward.44} parent=5 // pred_region
      %s169 = ssub.s32 %s10, 1
      %s170 = smul.u32 32, %s20
      %p171 = scmp.lt.s32.totalorder %s19, 1
      %s172 = scalar_select %p171, %s19, 1
      %p173 = scmp.lt.s32.totalorder %s170, 31
      %s174 = scalar_select %p173, %s170, 31
      %s175 = smul.addr %s174, 5
      %s176 = smul.addr %s172, 160
      %s177 = sadd.s32 %s175, %s176
      %s178 = smul.addr %s177, 4
      %s179 = scalar_lea.vmem %s0, %s178
      %p180 = pneg %p50
      %p181 = pneg %p47
      %p182 = pneg %p71
      %p183 = pneg %p68
      %p184 = pneg %p99
      %p185 = pneg %p96
      %s186 = smul.u32 32, %s20
      %p187 = scmp.lt.s32.totalorder %s19, 1
      %s188 = scalar_select %p187, %s19, 1
      %p189 = scmp.lt.s32.totalorder %s186, 31
      %s190 = scalar_select %p189, %s186, 31
      %s191 = smul.addr %s188, 32
      %s192 = sadd.s32 %s190, %s191
      %s193 = smul.addr %s192, 4
      %s194 = scalar_lea.vmem %s2, %s193
      %p195 = pneg %p127
      %p196 = pneg %p124
      %p197 = scmp.lt.s32.totalorder %s19, 1
      %s198 = scalar_select %p197, %s19, 1
      %p199 = scmp.lt.s32.totalorder %s20, 0
      %s200 = scalar_select %p199, %s20, 0
      %s201 = sadd.s32 %s200, %s198
      %s202 = smul.addr %s201, 2
      %s203 = scalar_lea.vmem %s3, %s202
      %s204 = smul.u32 32, %s20
      %p205 = scmp.lt.s32.totalorder %s19, 1
      %s206 = scalar_select %p205, %s19, 1
      %p207 = scmp.lt.s32.totalorder %s204, 31
      %s208 = scalar_select %p207, %s204, 31
      %s209 = smul.addr %s208, 5
      %s210 = smul.addr %s206, 160
      %s211 = sadd.s32 %s209, %s210
      %s212 = smul.addr %s211, 4
      %s213 = scalar_lea.vmem %s0, %s212
      %s214 = smul.u32 32, %s20
      %s215 = smul.u32 32, %s20
      %p216 = scmp.lt.s32.totalorder %s19, 1
      %s217 = scalar_select %p216, %s19, 1
      %p218 = scmp.lt.s32.totalorder %s215, 31
      %s219 = scalar_select %p218, %s215, 31
      %s220 = smul.addr %s217, 32
      %s221 = sadd.s32 %s219, %s220
      %s222 = smul.addr %s221, 4
      %s223 = scalar_lea.vmem %s2, %s222
      %s224 = smul.u32 32, %s20
      %p225 = scmp.lt.s32.totalorder %s19, 1
      %s226 = scalar_select %p225, %s19, 1
      %p227 = scmp.lt.s32.totalorder %s20, 0
      %s228 = scalar_select %p227, %s20, 0
      %s229 = sadd.s32 %s228, %s226
      %s230 = smul.addr %s229, 2
      %s231 = scalar_lea.vmem %s3, %s230
      %v233 = vld [vmem:[%s213] sm:$0xff]
      %v234 = vld [vmem:[%s213 + $0x8] sm:$0xff]
      %v235 = vld [vmem:[%s213 + $0x10] sm:$0xf]
      %v236 = vld [vmem:[%s213 + $0x14] sm:$0xff]
      %v237 = vld [vmem:[%s213 + $0x1c] sm:$0xff]
      %v238 = vld [vmem:[%s213 + $0x24] sm:$0xf]
      %v239 = vld [vmem:[%s213 + $0x28] sm:$0xff]
      %v240 = vld [vmem:[%s213 + $0x30] sm:$0xff]
      %v241 = vld [vmem:[%s213 + $0x38] sm:$0xf]
      %v242 = vld [vmem:[%s213 + $0x3c] sm:$0xff]
      %v243 = vld [vmem:[%s213 + $0x44] sm:$0xff]
      %v244 = vld [vmem:[%s213 + $0x4c] sm:$0xf]
      %v245 = vld [vmem:[%s213 + $0x50] sm:$0xff]
      %v246 = vld [vmem:[%s213 + $0x58] sm:$0xff]
      %v247 = vld [vmem:[%s213 + $0x60] sm:$0xf]
      %v248 = vld [vmem:[%s213 + $0x64] sm:$0xff]
      %v249 = vld [vmem:[%s213 + $0x6c] sm:$0xff]
      %v250 = vld [vmem:[%s213 + $0x74] sm:$0xf]
      %v251 = vld [vmem:[%s213 + $0x78] sm:$0xff]
      %v252 = vld [vmem:[%s213 + $0x80] sm:$0xff]
      %v253 = vld [vmem:[%s213 + $0x88] sm:$0xf]
      %v254 = vld [vmem:[%s213 + $0x8c] sm:$0xff]
      %v255 = vld [vmem:[%s213 + $0x94] sm:$0xff]
      %v256 = vld [vmem:[%s213 + $0x9c] sm:$0xf]
      %v257 = vld [vmem:[%s213 + $0xa0] sm:$0xff]
      %v258 = vld [vmem:[%s213 + $0xa8] sm:$0xff]
      %v259 = vld [vmem:[%s213 + $0xb0] sm:$0xf]
      %v260 = vld [vmem:[%s213 + $0xb4] sm:$0xff]
      %v261 = vld [vmem:[%s213 + $0xbc] sm:$0xff]
      %v262 = vld [vmem:[%s213 + $0xc4] sm:$0xf]
      %v263 = vld [vmem:[%s213 + $0xc8] sm:$0xff]
      %v264 = vld [vmem:[%s213 + $0xd0] sm:$0xff]
      %v265 = vld [vmem:[%s213 + $0xd8] sm:$0xf]
      %v266 = vld [vmem:[%s213 + $0xdc] sm:$0xff]
      %v267 = vld [vmem:[%s213 + $0xe4] sm:$0xff]
      %v268 = vld [vmem:[%s213 + $0xec] sm:$0xf]
      %v269 = vld [vmem:[%s213 + $0xf0] sm:$0xff]
      %v270 = vld [vmem:[%s213 + $0xf8] sm:$0xff]
      %v271 = vld [vmem:[%s213 + $0x100] sm:$0xf]
      %v272 = vld [vmem:[%s213 + $0x104] sm:$0xff]
      %v273 = vld [vmem:[%s213 + $0x10c] sm:$0xff]
      %v274 = vld [vmem:[%s213 + $0x114] sm:$0xf]
      %v275 = vld [vmem:[%s213 + $0x118] sm:$0xff]
      %v276 = vld [vmem:[%s213 + $0x120] sm:$0xff]
      %v277 = vld [vmem:[%s213 + $0x128] sm:$0xf]
      %v278 = vld [vmem:[%s213 + $0x12c] sm:$0xff]
      %v279 = vld [vmem:[%s213 + $0x134] sm:$0xff]
      %v280 = vld [vmem:[%s213 + $0x13c] sm:$0xf]
      %v281 = vld [vmem:[%s213 + $0x140] sm:$0xff]
      %v282 = vld [vmem:[%s213 + $0x148] sm:$0xff]
      %v283 = vld [vmem:[%s213 + $0x150] sm:$0xf]
      %v284 = vld [vmem:[%s213 + $0x154] sm:$0xff]
      %v285 = vld [vmem:[%s213 + $0x15c] sm:$0xff]
      %v286 = vld [vmem:[%s213 + $0x164] sm:$0xf]
      %v287 = vld [vmem:[%s213 + $0x168] sm:$0xff]
      %v288 = vld [vmem:[%s213 + $0x170] sm:$0xff]
      %v289 = vld [vmem:[%s213 + $0x178] sm:$0xf]
      %v290 = vld [vmem:[%s213 + $0x17c] sm:$0xff]
      %v291 = vld [vmem:[%s213 + $0x184] sm:$0xff]
      %v292 = vld [vmem:[%s213 + $0x18c] sm:$0xf]
      %v293 = vld [vmem:[%s213 + $0x190] sm:$0xff]
      %v294 = vld [vmem:[%s213 + $0x198] sm:$0xff]
      %v295 = vld [vmem:[%s213 + $0x1a0] sm:$0xf]
      %v296 = vld [vmem:[%s213 + $0x1a4] sm:$0xff]
      %v297 = vld [vmem:[%s213 + $0x1ac] sm:$0xff]
      %v298 = vld [vmem:[%s213 + $0x1b4] sm:$0xf]
      %v299 = vld [vmem:[%s213 + $0x1b8] sm:$0xff]
      %v300 = vld [vmem:[%s213 + $0x1c0] sm:$0xff]
      %v301 = vld [vmem:[%s213 + $0x1c8] sm:$0xf]
      %v302 = vld [vmem:[%s213 + $0x1cc] sm:$0xff]
      %v303 = vld [vmem:[%s213 + $0x1d4] sm:$0xff]
      %v304 = vld [vmem:[%s213 + $0x1dc] sm:$0xf]
      %v305 = vld [vmem:[%s213 + $0x1e0] sm:$0xff]
      %v306 = vld [vmem:[%s213 + $0x1e8] sm:$0xff]
      %v307 = vld [vmem:[%s213 + $0x1f0] sm:$0xf]
      %v308 = vld [vmem:[%s213 + $0x1f4] sm:$0xff]
      %v309 = vld [vmem:[%s213 + $0x1fc] sm:$0xff]
      %v310 = vld [vmem:[%s213 + $0x204] sm:$0xf]
      %v311 = vld [vmem:[%s213 + $0x208] sm:$0xff]
      %v312 = vld [vmem:[%s213 + $0x210] sm:$0xff]
      %v313 = vld [vmem:[%s213 + $0x218] sm:$0xf]
      %v314 = vld [vmem:[%s213 + $0x21c] sm:$0xff]
      %v315 = vld [vmem:[%s213 + $0x224] sm:$0xff]
      %v316 = vld [vmem:[%s213 + $0x22c] sm:$0xf]
      %v317 = vld [vmem:[%s213 + $0x230] sm:$0xff]
      %v318 = vld [vmem:[%s213 + $0x238] sm:$0xff]
      %v319 = vld [vmem:[%s213 + $0x240] sm:$0xf]
      %v320 = vld [vmem:[%s213 + $0x244] sm:$0xff]
      %v321 = vld [vmem:[%s213 + $0x24c] sm:$0xff]
      %v322 = vld [vmem:[%s213 + $0x254] sm:$0xf]
      %v323 = vld [vmem:[%s213 + $0x258] sm:$0xff]
      %v324 = vld [vmem:[%s213 + $0x260] sm:$0xff]
      %v325 = vld [vmem:[%s213 + $0x268] sm:$0xf]
      %v326 = vld [vmem:[%s213 + $0x26c] sm:$0xff]
      %v327 = vld [vmem:[%s213 + $0x274] sm:$0xff]
      %v328 = vld [vmem:[%s213 + $0x27c] sm:$0xf]
      %v329 = vld [vmem:[%s1] sm:$0xf]
      %v330 = vld [vmem:[%s1 + $0x4] sm:$0xf]
      %v331 = vld [vmem:[%s1 + $0x8] sm:$0xf]
      %v332 = vld [vmem:[%s1 + $0xc] sm:$0xf]
      %v333 = vld [vmem:[%s1 + $0x10] sm:$0xf]
      %v334 = vld [vmem:[%s1 + $0x14] sm:$0xf]
      %v335 = vld [vmem:[%s1 + $0x18] sm:$0xf]
      %v336 = vld [vmem:[%s1 + $0x1c] sm:$0xf]
      %v337 = vld [vmem:[%s1 + $0x20] sm:$0xf]
      %v338 = vld [vmem:[%s1 + $0x24] sm:$0xf]
      %v339 = vld [vmem:[%s1 + $0x28] sm:$0xf]
      %v340 = vld [vmem:[%s1 + $0x2c] sm:$0xf]
      %v341 = vld [vmem:[%s1 + $0x30] sm:$0xf]
      %v342 = vld [vmem:[%s1 + $0x34] sm:$0xf]
      %v343 = vld [vmem:[%s1 + $0x38] sm:$0xf]
      %v344 = vld [vmem:[%s1 + $0x3c] sm:$0xf]
      %v345 = vld [vmem:[%s1 + $0x40] sm:$0xf]
      %v346 = vld [vmem:[%s1 + $0x44] sm:$0xf]
      %v347 = vld [vmem:[%s1 + $0x48] sm:$0xf]
      %v348 = vld [vmem:[%s1 + $0x4c] sm:$0xf]
      %v349 = vld [vmem:[%s1 + $0x50] sm:$0xf]
      %v350 = vld [vmem:[%s1 + $0x54] sm:$0xf]
      %v351 = vld [vmem:[%s1 + $0x58] sm:$0xf]
      %v352 = vld [vmem:[%s1 + $0x5c] sm:$0xf]
      %v353 = vld [vmem:[%s1 + $0x60] sm:$0xf]
      %v354 = vld [vmem:[%s1 + $0x64] sm:$0xf]
      %v355 = vld [vmem:[%s1 + $0x68] sm:$0xf]
      %v356 = vld [vmem:[%s1 + $0x6c] sm:$0xf]
      %v357 = vld [vmem:[%s1 + $0x70] sm:$0xf]
      %v358 = vld [vmem:[%s1 + $0x74] sm:$0xf]
      %v359 = vld [vmem:[%s1 + $0x78] sm:$0xf]
      %v360 = vld [vmem:[%s1 + $0x7c] sm:$0xf]
      %v361 = vld [vmem:[%s1 + $0x80] sm:$0xf]
      %v362 = vld [vmem:[%s1 + $0x84] sm:$0xf]
      %v363 = vld [vmem:[%s1 + $0x88] sm:$0xf]
      %v364 = vld [vmem:[%s1 + $0x8c] sm:$0xf]
      %v365 = vld [vmem:[%s1 + $0x90] sm:$0xf]
      %v366 = vld [vmem:[%s1 + $0x94] sm:$0xf]
      %v367 = vld [vmem:[%s1 + $0x98] sm:$0xf]
      %v368 = vld [vmem:[%s1 + $0x9c] sm:$0xf]
      %v369 = vld [vmem:[%s1 + $0xa0] sm:$0xf]
      %v370 = vld [vmem:[%s1 + $0xa4] sm:$0xf]
      %v371 = vld [vmem:[%s1 + $0xa8] sm:$0xf]
      %v372 = vld [vmem:[%s1 + $0xac] sm:$0xf]
      %v373 = vld [vmem:[%s1 + $0xb0] sm:$0xf]
      %v374 = vld [vmem:[%s1 + $0xb4] sm:$0xf]
      %v375 = vld [vmem:[%s1 + $0xb8] sm:$0xf]
      %v376 = vld [vmem:[%s1 + $0xbc] sm:$0xf]
      %v377 = vld [vmem:[%s1 + $0xc0] sm:$0xf]
      %v378 = vld [vmem:[%s1 + $0xc4] sm:$0xf]
      %v379 = vld [vmem:[%s1 + $0xc8] sm:$0xf]
      %v380 = vld [vmem:[%s1 + $0xcc] sm:$0xf]
      %v381 = vld [vmem:[%s1 + $0xd0] sm:$0xf]
      %v382 = vld [vmem:[%s1 + $0xd4] sm:$0xf]
      %v383 = vld [vmem:[%s1 + $0xd8] sm:$0xf]
      %v384 = vld [vmem:[%s1 + $0xdc] sm:$0xf]
      %v385 = vld [vmem:[%s1 + $0xe0] sm:$0xf]
      %v386 = vld [vmem:[%s1 + $0xe4] sm:$0xf]
      %v387 = vld [vmem:[%s1 + $0xe8] sm:$0xf]
      %v388 = vld [vmem:[%s1 + $0xec] sm:$0xf]
      %v389 = vld [vmem:[%s1 + $0xf0] sm:$0xf]
      %v390 = vld [vmem:[%s1 + $0xf4] sm:$0xf]
      %v391 = vld [vmem:[%s1 + $0xf8] sm:$0xf]
      %v392 = vld [vmem:[%s1 + $0xfc] sm:$0xf]
      %v393 = vld [vmem:[%s1 + $0x100] sm:$0xf]
      %v394 = vld [vmem:[%s1 + $0x104] sm:$0xf]
      %v395 = vld [vmem:[%s1 + $0x108] sm:$0xf]
      %v396 = vld [vmem:[%s1 + $0x10c] sm:$0xf]
      %v397 = vld [vmem:[%s1 + $0x110] sm:$0xf]
      %v398 = vld [vmem:[%s1 + $0x114] sm:$0xf]
      %v399 = vld [vmem:[%s1 + $0x118] sm:$0xf]
      %v400 = vld [vmem:[%s1 + $0x11c] sm:$0xf]
      %v401 = vld [vmem:[%s1 + $0x120] sm:$0xf]
      %v402 = vld [vmem:[%s1 + $0x124] sm:$0xf]
      %v403 = vld [vmem:[%s1 + $0x128] sm:$0xf]
      %v404 = vld [vmem:[%s1 + $0x12c] sm:$0xf]
      %v405 = vld [vmem:[%s1 + $0x130] sm:$0xf]
      %v406 = vld [vmem:[%s1 + $0x134] sm:$0xf]
      %v407 = vld [vmem:[%s1 + $0x138] sm:$0xf]
      %v408 = vld [vmem:[%s1 + $0x13c] sm:$0xf]
      %v505 = vunpack.c.l.b16 %v233
      %v506 = vunpack.c.h.b16 %v233
      %v507 = vunpack.c.l.b16 %v234
      %v508 = vunpack.c.h.b16 %v234
      %v509 = vunpack.c.l.b16 %v235
      %v510 = vunpack.c.l.b16 %v236
      %v511 = vunpack.c.h.b16 %v236
      %v512 = vunpack.c.l.b16 %v237
      %v513 = vunpack.c.h.b16 %v237
      %v514 = vunpack.c.l.b16 %v238
      %v515 = vunpack.c.l.b16 %v239
      %v516 = vunpack.c.h.b16 %v239
      %v517 = vunpack.c.l.b16 %v240
      %v518 = vunpack.c.h.b16 %v240
      %v519 = vunpack.c.l.b16 %v241
      %v520 = vunpack.c.l.b16 %v242
      %v521 = vunpack.c.h.b16 %v242
      %v522 = vunpack.c.l.b16 %v243
      %v523 = vunpack.c.h.b16 %v243
      %v524 = vunpack.c.l.b16 %v244
      %v525 = vunpack.c.l.b16 %v245
      %v526 = vunpack.c.h.b16 %v245
      %v527 = vunpack.c.l.b16 %v246
      %v528 = vunpack.c.h.b16 %v246
      %v529 = vunpack.c.l.b16 %v247
      %v530 = vunpack.c.l.b16 %v248
      %v531 = vunpack.c.h.b16 %v248
      %v532 = vunpack.c.l.b16 %v249
      %v533 = vunpack.c.h.b16 %v249
      %v534 = vunpack.c.l.b16 %v250
      %v535 = vunpack.c.l.b16 %v251
      %v536 = vunpack.c.h.b16 %v251
      %v537 = vunpack.c.l.b16 %v252
      %v538 = vunpack.c.h.b16 %v252
      %v539 = vunpack.c.l.b16 %v253
      %v540 = vunpack.c.l.b16 %v254
      %v541 = vunpack.c.h.b16 %v254
      %v542 = vunpack.c.l.b16 %v255
      %v543 = vunpack.c.h.b16 %v255
      %v544 = vunpack.c.l.b16 %v256
      %v545 = vunpack.c.l.b16 %v257
      %v546 = vunpack.c.h.b16 %v257
      %v547 = vunpack.c.l.b16 %v258
      %v548 = vunpack.c.h.b16 %v258
      %v549 = vunpack.c.l.b16 %v259
      %v550 = vunpack.c.l.b16 %v260
      %v551 = vunpack.c.h.b16 %v260
      %v552 = vunpack.c.l.b16 %v261
      %v553 = vunpack.c.h.b16 %v261
      %v554 = vunpack.c.l.b16 %v262
      %v555 = vunpack.c.l.b16 %v263
      %v556 = vunpack.c.h.b16 %v263
      %v557 = vunpack.c.l.b16 %v264
      %v558 = vunpack.c.h.b16 %v264
      %v559 = vunpack.c.l.b16 %v265
      %v560 = vunpack.c.l.b16 %v266
      %v561 = vunpack.c.h.b16 %v266
      %v562 = vunpack.c.l.b16 %v267
      %v563 = vunpack.c.h.b16 %v267
      %v564 = vunpack.c.l.b16 %v268
      %v565 = vunpack.c.l.b16 %v269
      %v566 = vunpack.c.h.b16 %v269
      %v567 = vunpack.c.l.b16 %v270
      %v568 = vunpack.c.h.b16 %v270
      %v569 = vunpack.c.l.b16 %v271
      %v570 = vunpack.c.l.b16 %v272
      %v571 = vunpack.c.h.b16 %v272
      %v572 = vunpack.c.l.b16 %v273
      %v573 = vunpack.c.h.b16 %v273
      %v574 = vunpack.c.l.b16 %v274
      %v575 = vunpack.c.l.b16 %v275
      %v576 = vunpack.c.h.b16 %v275
      %v577 = vunpack.c.l.b16 %v276
      %v578 = vunpack.c.h.b16 %v276
      %v579 = vunpack.c.l.b16 %v277
      %v580 = vunpack.c.l.b16 %v278
      %v581 = vunpack.c.h.b16 %v278
      %v582 = vunpack.c.l.b16 %v279
      %v583 = vunpack.c.h.b16 %v279
      %v584 = vunpack.c.l.b16 %v280
      %v585 = vunpack.c.l.b16 %v281
      %v586 = vunpack.c.h.b16 %v281
      %v587 = vunpack.c.l.b16 %v282
      %v588 = vunpack.c.h.b16 %v282
      %v589 = vunpack.c.l.b16 %v283
      %v590 = vunpack.c.l.b16 %v284
      %v591 = vunpack.c.h.b16 %v284
      %v592 = vunpack.c.l.b16 %v285
      %v593 = vunpack.c.h.b16 %v285
      %v594 = vunpack.c.l.b16 %v286
      %v595 = vunpack.c.l.b16 %v287
      %v596 = vunpack.c.h.b16 %v287
      %v597 = vunpack.c.l.b16 %v288
      %v598 = vunpack.c.h.b16 %v288
      %v599 = vunpack.c.l.b16 %v289
      %v600 = vunpack.c.l.b16 %v290
      %v601 = vunpack.c.h.b16 %v290
      %v602 = vunpack.c.l.b16 %v291
      %v603 = vunpack.c.h.b16 %v291
      %v604 = vunpack.c.l.b16 %v292
      %v605 = vunpack.c.l.b16 %v293
      %v606 = vunpack.c.h.b16 %v293
      %v607 = vunpack.c.l.b16 %v294
      %v608 = vunpack.c.h.b16 %v294
      %v609 = vunpack.c.l.b16 %v295
      %v610 = vunpack.c.l.b16 %v296
      %v611 = vunpack.c.h.b16 %v296
      %v612 = vunpack.c.l.b16 %v297
      %v613 = vunpack.c.h.b16 %v297
      %v614 = vunpack.c.l.b16 %v298
      %v615 = vunpack.c.l.b16 %v299
      %v616 = vunpack.c.h.b16 %v299
      %v617 = vunpack.c.l.b16 %v300
      %v618 = vunpack.c.h.b16 %v300
      %v619 = vunpack.c.l.b16 %v301
      %v620 = vunpack.c.l.b16 %v302
      %v621 = vunpack.c.h.b16 %v302
      %v622 = vunpack.c.l.b16 %v303
      %v623 = vunpack.c.h.b16 %v303
      %v624 = vunpack.c.l.b16 %v304
      %v625 = vunpack.c.l.b16 %v305
      %v626 = vunpack.c.h.b16 %v305
      %v627 = vunpack.c.l.b16 %v306
      %v628 = vunpack.c.h.b16 %v306
      %v629 = vunpack.c.l.b16 %v307
      %v630 = vunpack.c.l.b16 %v308
      %v631 = vunpack.c.h.b16 %v308
      %v632 = vunpack.c.l.b16 %v309
      %v633 = vunpack.c.h.b16 %v309
      %v634 = vunpack.c.l.b16 %v310
      %v635 = vunpack.c.l.b16 %v311
      %v636 = vunpack.c.h.b16 %v311
      %v637 = vunpack.c.l.b16 %v312
      %v638 = vunpack.c.h.b16 %v312
      %v639 = vunpack.c.l.b16 %v313
      %v640 = vunpack.c.l.b16 %v314
      %v641 = vunpack.c.h.b16 %v314
      %v642 = vunpack.c.l.b16 %v315
      %v643 = vunpack.c.h.b16 %v315
      %v644 = vunpack.c.l.b16 %v316
      %v645 = vunpack.c.l.b16 %v317
      %v646 = vunpack.c.h.b16 %v317
      %v647 = vunpack.c.l.b16 %v318
      %v648 = vunpack.c.h.b16 %v318
      %v649 = vunpack.c.l.b16 %v319
      %v650 = vunpack.c.l.b16 %v320
      %v651 = vunpack.c.h.b16 %v320
      %v652 = vunpack.c.l.b16 %v321
      %v653 = vunpack.c.h.b16 %v321
      %v654 = vunpack.c.l.b16 %v322
      %v655 = vunpack.c.l.b16 %v323
      %v656 = vunpack.c.h.b16 %v323
      %v657 = vunpack.c.l.b16 %v324
      %v658 = vunpack.c.h.b16 %v324
      %v659 = vunpack.c.l.b16 %v325
      %v660 = vunpack.c.l.b16 %v326
      %v661 = vunpack.c.h.b16 %v326
      %v662 = vunpack.c.l.b16 %v327
      %v663 = vunpack.c.h.b16 %v327
      %v664 = vunpack.c.l.b16 %v328
      %v665 = vpack.c.b16 %v510, %v505
      %v666 = vpack.c.b16 %v511, %v506
      %v667 = vpack.c.b16 %v512, %v507
      %v668 = vpack.c.b16 %v513, %v508
      %v669 = vpack.c.b16 %v514, %v509
      %v670 = vpack.c.b16 %v520, %v515
      %v671 = vpack.c.b16 %v521, %v516
      %v672 = vpack.c.b16 %v522, %v517
      %v673 = vpack.c.b16 %v523, %v518
      %v674 = vpack.c.b16 %v524, %v519
      %v675 = vpack.c.b16 %v530, %v525
      %v676 = vpack.c.b16 %v531, %v526
      %v677 = vpack.c.b16 %v532, %v527
      %v678 = vpack.c.b16 %v533, %v528
      %v679 = vpack.c.b16 %v534, %v529
      %v680 = vpack.c.b16 %v540, %v535
      %v681 = vpack.c.b16 %v541, %v536
      %v682 = vpack.c.b16 %v542, %v537
      %v683 = vpack.c.b16 %v543, %v538
      %v684 = vpack.c.b16 %v544, %v539
      %v685 = vpack.c.b16 %v550, %v545
      %v686 = vpack.c.b16 %v551, %v546
      %v687 = vpack.c.b16 %v552, %v547
      %v688 = vpack.c.b16 %v553, %v548
      %v689 = vpack.c.b16 %v554, %v549
      %v690 = vpack.c.b16 %v560, %v555
      %v691 = vpack.c.b16 %v561, %v556
      %v692 = vpack.c.b16 %v562, %v557
      %v693 = vpack.c.b16 %v563, %v558
      %v694 = vpack.c.b16 %v564, %v559
      %v695 = vpack.c.b16 %v570, %v565
      %v696 = vpack.c.b16 %v571, %v566
      %v697 = vpack.c.b16 %v572, %v567
      %v698 = vpack.c.b16 %v573, %v568
      %v699 = vpack.c.b16 %v574, %v569
      %v700 = vpack.c.b16 %v580, %v575
      %v701 = vpack.c.b16 %v581, %v576
      %v702 = vpack.c.b16 %v582, %v577
      %v703 = vpack.c.b16 %v583, %v578
      %v704 = vpack.c.b16 %v584, %v579
      %v705 = vpack.c.b16 %v590, %v585
      %v706 = vpack.c.b16 %v591, %v586
      %v707 = vpack.c.b16 %v592, %v587
      %v708 = vpack.c.b16 %v593, %v588
      %v709 = vpack.c.b16 %v594, %v589
      %v710 = vpack.c.b16 %v600, %v595
      %v711 = vpack.c.b16 %v601, %v596
      %v712 = vpack.c.b16 %v602, %v597
      %v713 = vpack.c.b16 %v603, %v598
      %v714 = vpack.c.b16 %v604, %v599
      %v715 = vpack.c.b16 %v610, %v605
      %v716 = vpack.c.b16 %v611, %v606
      %v717 = vpack.c.b16 %v612, %v607
      %v718 = vpack.c.b16 %v613, %v608
      %v719 = vpack.c.b16 %v614, %v609
      %v720 = vpack.c.b16 %v620, %v615
      %v721 = vpack.c.b16 %v621, %v616
      %v722 = vpack.c.b16 %v622, %v617
      %v723 = vpack.c.b16 %v623, %v618
      %v724 = vpack.c.b16 %v624, %v619
      %v725 = vpack.c.b16 %v630, %v625
      %v726 = vpack.c.b16 %v631, %v626
      %v727 = vpack.c.b16 %v632, %v627
      %v728 = vpack.c.b16 %v633, %v628
      %v729 = vpack.c.b16 %v634, %v629
      %v730 = vpack.c.b16 %v640, %v635
      %v731 = vpack.c.b16 %v641, %v636
      %v732 = vpack.c.b16 %v642, %v637
      %v733 = vpack.c.b16 %v643, %v638
      %v734 = vpack.c.b16 %v644, %v639
      %v735 = vpack.c.b16 %v650, %v645
      %v736 = vpack.c.b16 %v651, %v646
      %v737 = vpack.c.b16 %v652, %v647
      %v738 = vpack.c.b16 %v653, %v648
      %v739 = vpack.c.b16 %v654, %v649
      %v740 = vpack.c.b16 %v660, %v655
      %v741 = vpack.c.b16 %v661, %v656
      %v742 = vpack.c.b16 %v662, %v657
      %v743 = vpack.c.b16 %v663, %v658
      %v744 = vpack.c.b16 %v664, %v659
      %v905 = vunpack.c.l.b16 %v329
      %v906 = vunpack.c.l.b16 %v330
      %v907 = vunpack.c.l.b16 %v331
      %v908 = vunpack.c.l.b16 %v332
      %v909 = vunpack.c.l.b16 %v333
      %v910 = vunpack.c.l.b16 %v334
      %v911 = vunpack.c.l.b16 %v335
      %v912 = vunpack.c.l.b16 %v336
      %v913 = vunpack.c.l.b16 %v337
      %v914 = vunpack.c.l.b16 %v338
      %v915 = vunpack.c.l.b16 %v339
      %v916 = vunpack.c.l.b16 %v340
      %v917 = vunpack.c.l.b16 %v341
      %v918 = vunpack.c.l.b16 %v342
      %v919 = vunpack.c.l.b16 %v343
      %v920 = vunpack.c.l.b16 %v344
      %v921 = vunpack.c.l.b16 %v345
      %v922 = vunpack.c.l.b16 %v346
      %v923 = vunpack.c.l.b16 %v347
      %v924 = vunpack.c.l.b16 %v348
      %v925 = vunpack.c.l.b16 %v349
      %v926 = vunpack.c.l.b16 %v350
      %v927 = vunpack.c.l.b16 %v351
      %v928 = vunpack.c.l.b16 %v352
      %v929 = vunpack.c.l.b16 %v353
      %v930 = vunpack.c.l.b16 %v354
      %v931 = vunpack.c.l.b16 %v355
      %v932 = vunpack.c.l.b16 %v356
      %v933 = vunpack.c.l.b16 %v357
      %v934 = vunpack.c.l.b16 %v358
      %v935 = vunpack.c.l.b16 %v359
      %v936 = vunpack.c.l.b16 %v360
      %v937 = vunpack.c.l.b16 %v361
      %v938 = vunpack.c.l.b16 %v362
      %v939 = vunpack.c.l.b16 %v363
      %v940 = vunpack.c.l.b16 %v364
      %v941 = vunpack.c.l.b16 %v365
      %v942 = vunpack.c.l.b16 %v366
      %v943 = vunpack.c.l.b16 %v367
      %v944 = vunpack.c.l.b16 %v368
      %v945 = vunpack.c.l.b16 %v369
      %v946 = vunpack.c.l.b16 %v370
      %v947 = vunpack.c.l.b16 %v371
      %v948 = vunpack.c.l.b16 %v372
      %v949 = vunpack.c.l.b16 %v373
      %v950 = vunpack.c.l.b16 %v374
      %v951 = vunpack.c.l.b16 %v375
      %v952 = vunpack.c.l.b16 %v376
      %v953 = vunpack.c.l.b16 %v377
      %v954 = vunpack.c.l.b16 %v378
      %v955 = vunpack.c.l.b16 %v379
      %v956 = vunpack.c.l.b16 %v380
      %v957 = vunpack.c.l.b16 %v381
      %v958 = vunpack.c.l.b16 %v382
      %v959 = vunpack.c.l.b16 %v383
      %v960 = vunpack.c.l.b16 %v384
      %v961 = vunpack.c.l.b16 %v385
      %v962 = vunpack.c.l.b16 %v386
      %v963 = vunpack.c.l.b16 %v387
      %v964 = vunpack.c.l.b16 %v388
      %v965 = vunpack.c.l.b16 %v389
      %v966 = vunpack.c.l.b16 %v390
      %v967 = vunpack.c.l.b16 %v391
      %v968 = vunpack.c.l.b16 %v392
      %v969 = vunpack.c.l.b16 %v393
      %v970 = vunpack.c.l.b16 %v394
      %v971 = vunpack.c.l.b16 %v395
      %v972 = vunpack.c.l.b16 %v396
      %v973 = vunpack.c.l.b16 %v397
      %v974 = vunpack.c.l.b16 %v398
      %v975 = vunpack.c.l.b16 %v399
      %v976 = vunpack.c.l.b16 %v400
      %v977 = vunpack.c.l.b16 %v401
      %v978 = vunpack.c.l.b16 %v402
      %v979 = vunpack.c.l.b16 %v403
      %v980 = vunpack.c.l.b16 %v404
      %v981 = vunpack.c.l.b16 %v405
      %v982 = vunpack.c.l.b16 %v406
      %v983 = vunpack.c.l.b16 %v407
      %v984 = vunpack.c.l.b16 %v408
      %v985 = vpack.c.b16 %v906, %v905
      %v986 = vpack.c.b16 %v908, %v907
      %v987 = vpack.c.b16 %v910, %v909
      %v988 = vpack.c.b16 %v912, %v911
      %v989 = vpack.c.b16 %v914, %v913
      %v990 = vpack.c.b16 %v916, %v915
      %v991 = vpack.c.b16 %v918, %v917
      %v992 = vpack.c.b16 %v920, %v919
      %v993 = vpack.c.b16 %v922, %v921
      %v994 = vpack.c.b16 %v924, %v923
      %v995 = vpack.c.b16 %v926, %v925
      %v996 = vpack.c.b16 %v928, %v927
      %v997 = vpack.c.b16 %v930, %v929
      %v998 = vpack.c.b16 %v932, %v931
      %v999 = vpack.c.b16 %v934, %v933
      %v1000 = vpack.c.b16 %v936, %v935
      %v1001 = vpack.c.b16 %v938, %v937
      %v1002 = vpack.c.b16 %v940, %v939
      %v1003 = vpack.c.b16 %v942, %v941
      %v1004 = vpack.c.b16 %v944, %v943
      %v1005 = vpack.c.b16 %v946, %v945
      %v1006 = vpack.c.b16 %v948, %v947
      %v1007 = vpack.c.b16 %v950, %v949
      %v1008 = vpack.c.b16 %v952, %v951
      %v1009 = vpack.c.b16 %v954, %v953
      %v1010 = vpack.c.b16 %v956, %v955
      %v1011 = vpack.c.b16 %v958, %v957
      %v1012 = vpack.c.b16 %v960, %v959
      %v1013 = vpack.c.b16 %v962, %v961
      %v1014 = vpack.c.b16 %v964, %v963
      %v1015 = vpack.c.b16 %v966, %v965
      %v1016 = vpack.c.b16 %v968, %v967
      %v1017 = vpack.c.b16 %v970, %v969
      %v1018 = vpack.c.b16 %v972, %v971
      %v1019 = vpack.c.b16 %v974, %v973
      %v1020 = vpack.c.b16 %v976, %v975
      %v1021 = vpack.c.b16 %v978, %v977
      %v1022 = vpack.c.b16 %v980, %v979
      %v1023 = vpack.c.b16 %v982, %v981
      %v1024 = vpack.c.b16 %v984, %v983
      %1065 = vmatprep.subr.bf16.mxu0 0
      %1066 = vmatpush1.bf16.msra.mxu0 %v985
      %1067 = vmatprep.subr.bf16.mxu0 0
      %1068 = vmatpush1.bf16.msra.mxu0 %v986
      %1069 = vmatprep.subr.bf16.mxu0 0
      %1070 = vmatpush1.bf16.msra.mxu0 %v987
      %1071 = vmatprep.subr.bf16.mxu0 0
      %1072 = vmatpush1.bf16.msra.mxu0 %v988
      %1073 = vmatprep.subr.bf16.mxu0 0
      %1074 = vmatpush1.bf16.msra.mxu0 %v989
      %1075 = vmatprep.subr.bf16.mxu0 0
      %1076 = vmatpush1.bf16.msra.mxu0 %v990
      %1077 = vmatprep.subr.bf16.mxu0 0
      %1078 = vmatpush1.bf16.msra.mxu0 %v991
      %1079 = vmatprep.subr.bf16.mxu0 0
      %1080 = vmatpush1.bf16.msra.mxu0 %v992
      %1081 = vmatprep.subr.bf16.mxu0 0
      %1082 = vmatpush1.bf16.msra.mxu0 %v993
      %1083 = vmatprep.subr.bf16.mxu0 0
      %1084 = vmatpush1.bf16.msra.mxu0 %v994
      %1085 = vmatprep.subr.bf16.mxu0 0
      %1086 = vmatpush1.bf16.msra.mxu0 %v995
      %1087 = vmatprep.subr.bf16.mxu0 0
      %1088 = vmatpush1.bf16.msra.mxu0 %v996
      %1089 = vmatprep.subr.bf16.mxu0 0
      %1090 = vmatpush1.bf16.msra.mxu0 %v997
      %1091 = vmatprep.subr.bf16.mxu0 0
      %1092 = vmatpush1.bf16.msra.mxu0 %v998
      %1093 = vmatprep.subr.bf16.mxu0 0
      %1094 = vmatpush1.bf16.msra.mxu0 %v999
      %1095 = vmatprep.subr.bf16.mxu0 0
      %1096 = vmatpush1.bf16.msra.mxu0 %v1000
      %1097 = vmatprep.mubr.bf16.mxu0 %v666
      %1098 = vmatmul.mubr.bf16.gmra.mrb[0].mxu0 %v665
      %v1099 = vpop.f32.mrb[0].mxu0
      %v1100 = vadd.f32 0.0, %v1099
      %v1101 = vpop.f32.mrb[0].mxu0
      %v1102 = vpop.f32.mrb[0].mxu0
      %v1103 = vadd.f32 0.0, %v1102
      %v1104 = vpop.f32.mrb[0].mxu0
      %1105 = vmatprep.mubr.bf16.mxu0 %v671
      %1106 = vmatmul.mubr.bf16.gmra.mrb[0].mxu0 %v670
      %v1107 = vpop.f32.mrb[0].mxu0
      %v1108 = vadd.f32 0.0, %v1107
      %v1109 = vpop.f32.mrb[0].mxu0
      %v1110 = vpop.f32.mrb[0].mxu0
      %v1111 = vadd.f32 0.0, %v1110
      %v1112 = vpop.f32.mrb[0].mxu0
      %1113 = vmatprep.mubr.bf16.mxu0 %v676
      %1114 = vmatmul.mubr.bf16.gmra.mrb[0].mxu0 %v675
      %v1115 = vpop.f32.mrb[0].mxu0
      %v1116 = vadd.f32 0.0, %v1115
      %v1117 = vpop.f32.mrb[0].mxu0
      %v1118 = vpop.f32.mrb[0].mxu0
      %v1119 = vadd.f32 0.0, %v1118
      %v1120 = vpop.f32.mrb[0].mxu0
      %1121 = vmatprep.mubr.bf16.mxu0 %v681
      %1122 = vmatmul.mubr.bf16.gmra.mrb[0].mxu0 %v680
      %v1123 = vpop.f32.mrb[0].mxu0
      %v1124 = vadd.f32 0.0, %v1123
      %v1125 = vpop.f32.mrb[0].mxu0
      %v1126 = vpop.f32.mrb[0].mxu0
      %v1127 = vadd.f32 0.0, %v1126
      %v1128 = vpop.f32.mrb[0].mxu0
      %1129 = vmatprep.mubr.bf16.mxu0 %v686
      %1130 = vmatmul.mubr.bf16.gmra.mrb[0].mxu0 %v685
      %v1131 = vpop.f32.mrb[0].mxu0
      %v1132 = vadd.f32 0.0, %v1131
      %v1133 = vpop.f32.mrb[0].mxu0
      %v1134 = vpop.f32.mrb[0].mxu0
      %v1135 = vadd.f32 0.0, %v1134
      %v1136 = vpop.f32.mrb[0].mxu0
      %1137 = vmatprep.mubr.bf16.mxu0 %v691
      %1138 = vmatmul.mubr.bf16.gmra.mrb[0].mxu0 %v690
      %v1139 = vpop.f32.mrb[0].mxu0
      %v1140 = vadd.f32 0.0, %v1139
      %v1141 = vpop.f32.mrb[0].mxu0
      %v1142 = vpop.f32.mrb[0].mxu0
      %v1143 = vadd.f32 0.0, %v1142
      %v1144 = vpop.f32.mrb[0].mxu0
      %1145 = vmatprep.mubr.bf16.mxu0 %v696
      %1146 = vmatmul.mubr.bf16.gmra.mrb[0].mxu0 %v695
      %v1147 = vpop.f32.mrb[0].mxu0
      %v1148 = vadd.f32 0.0, %v1147
      %v1149 = vpop.f32.mrb[0].mxu0
      %v1150 = vpop.f32.mrb[0].mxu0
      %v1151 = vadd.f32 0.0, %v1150
      %v1152 = vpop.f32.mrb[0].mxu0
      %1153 = vmatprep.mubr.bf16.mxu0 %v701
      %1154 = vmatmul.mubr.bf16.gmra.mrb[0].mxu0 %v700
      %v1155 = vpop.f32.mrb[0].mxu0
      %v1156 = vadd.f32 0.0, %v1155
      %v1157 = vpop.f32.mrb[0].mxu0
      %v1158 = vpop.f32.mrb[0].mxu0
      %v1159 = vadd.f32 0.0, %v1158
      %v1160 = vpop.f32.mrb[0].mxu0
      %1161 = vmatprep.mubr.bf16.mxu0 %v706
      %1162 = vmatmul.mubr.bf16.gmra.mrb[0].mxu0 %v705
      %v1163 = vpop.f32.mrb[0].mxu0
      %v1164 = vadd.f32 0.0, %v1163
      %v1165 = vpop.f32.mrb[0].mxu0
      %v1166 = vpop.f32.mrb[0].mxu0
      %v1167 = vadd.f32 0.0, %v1166
      %v1168 = vpop.f32.mrb[0].mxu0
      %1169 = vmatprep.mubr.bf16.mxu0 %v711
      %1170 = vmatmul.mubr.bf16.gmra.mrb[0].mxu0 %v710
      %v1171 = vpop.f32.mrb[0].mxu0
      %v1172 = vadd.f32 0.0, %v1171
      %v1173 = vpop.f32.mrb[0].mxu0
      %v1174 = vpop.f32.mrb[0].mxu0
      %v1175 = vadd.f32 0.0, %v1174
      %v1176 = vpop.f32.mrb[0].mxu0
      %1177 = vmatprep.mubr.bf16.mxu0 %v716
      %1178 = vmatmul.mubr.bf16.gmra.mrb[0].mxu0 %v715
      %v1179 = vpop.f32.mrb[0].mxu0
      %v1180 = vadd.f32 0.0, %v1179
      %v1181 = vpop.f32.mrb[0].mxu0
      %v1182 = vpop.f32.mrb[0].mxu0
      %v1183 = vadd.f32 0.0, %v1182
      %v1184 = vpop.f32.mrb[0].mxu0
      %1185 = vmatprep.mubr.bf16.mxu0 %v721
      %1186 = vmatmul.mubr.bf16.gmra.mrb[0].mxu0 %v720
      %v1187 = vpop.f32.mrb[0].mxu0
      %v1188 = vadd.f32 0.0, %v1187
      %v1189 = vpop.f32.mrb[0].mxu0
      %v1190 = vpop.f32.mrb[0].mxu0
      %v1191 = vadd.f32 0.0, %v1190
      %v1192 = vpop.f32.mrb[0].mxu0
      %1193 = vmatprep.mubr.bf16.mxu0 %v726
      %1194 = vmatmul.mubr.bf16.gmra.mrb[0].mxu0 %v725
      %v1195 = vpop.f32.mrb[0].mxu0
      %v1196 = vadd.f32 0.0, %v1195
      %v1197 = vpop.f32.mrb[0].mxu0
      %v1198 = vpop.f32.mrb[0].mxu0
      %v1199 = vadd.f32 0.0, %v1198
      %v1200 = vpop.f32.mrb[0].mxu0
      %1201 = vmatprep.mubr.bf16.mxu0 %v731
      %1202 = vmatmul.mubr.bf16.gmra.mrb[0].mxu0 %v730
      %v1203 = vpop.f32.mrb[0].mxu0
      %v1204 = vadd.f32 0.0, %v1203
      %v1205 = vpop.f32.mrb[0].mxu0
      %v1206 = vpop.f32.mrb[0].mxu0
      %v1207 = vadd.f32 0.0, %v1206
      %v1208 = vpop.f32.mrb[0].mxu0
      %1209 = vmatprep.mubr.bf16.mxu0 %v736
      %1210 = vmatmul.mubr.bf16.gmra.mrb[0].mxu0 %v735
      %v1211 = vpop.f32.mrb[0].mxu0
      %v1212 = vadd.f32 0.0, %v1211
      %v1213 = vpop.f32.mrb[0].mxu0
      %v1214 = vpop.f32.mrb[0].mxu0
      %v1215 = vadd.f32 0.0, %v1214
      %v1216 = vpop.f32.mrb[0].mxu0
      %1217 = vmatprep.mubr.bf16.mxu0 %v741
      %1218 = vmatmul.mubr.bf16.gmra.mrb[0].mxu0 %v740
      %v1219 = vpop.f32.mrb[0].mxu0
      %v1220 = vadd.f32 0.0, %v1219
      %v1221 = vpop.f32.mrb[0].mxu0
      %v1222 = vpop.f32.mrb[0].mxu0
      %v1223 = vadd.f32 0.0, %v1222
      %v1224 = vpop.f32.mrb[0].mxu0
      %1225 = vdwg.mxu0
      %1226 = vmatprep.subr.bf16.mxu0 0
      %1227 = vmatpush1.bf16.msra.mxu0 %v1001
      %1228 = vmatprep.subr.bf16.mxu0 0
      %1229 = vmatpush1.bf16.msra.mxu0 %v1002
      %1230 = vmatprep.subr.bf16.mxu0 0
      %1231 = vmatpush1.bf16.msra.mxu0 %v1003
      %1232 = vmatprep.subr.bf16.mxu0 0
      %1233 = vmatpush1.bf16.msra.mxu0 %v1004
      %1234 = vmatprep.subr.bf16.mxu0 0
      %1235 = vmatpush1.bf16.msra.mxu0 %v1005
      %1236 = vmatprep.subr.bf16.mxu0 0
      %1237 = vmatpush1.bf16.msra.mxu0 %v1006
      %1238 = vmatprep.subr.bf16.mxu0 0
      %1239 = vmatpush1.bf16.msra.mxu0 %v1007
      %1240 = vmatprep.subr.bf16.mxu0 0
      %1241 = vmatpush1.bf16.msra.mxu0 %v1008
      %1242 = vmatprep.subr.bf16.mxu0 0
      %1243 = vmatpush1.bf16.msra.mxu0 %v1009
      %1244 = vmatprep.subr.bf16.mxu0 0
      %1245 = vmatpush1.bf16.msra.mxu0 %v1010
      %1246 = vmatprep.subr.bf16.mxu0 0
      %1247 = vmatpush1.bf16.msra.mxu0 %v1011
      %1248 = vmatprep.subr.bf16.mxu0 0
      %1249 = vmatpush1.bf16.msra.mxu0 %v1012
      %1250 = vmatprep.subr.bf16.mxu0 0
      %1251 = vmatpush1.bf16.msra.mxu0 %v1013
      %1252 = vmatprep.subr.bf16.mxu0 0
      %1253 = vmatpush1.bf16.msra.mxu0 %v1014
      %1254 = vmatprep.subr.bf16.mxu0 0
      %1255 = vmatpush1.bf16.msra.mxu0 %v1015
      %1256 = vmatprep.subr.bf16.mxu0 0
      %1257 = vmatpush1.bf16.msra.mxu0 %v1016
      %1258 = vmatprep.mubr.bf16.mxu0 %v668
      %1259 = vmatmul.mubr.bf16.gmra.mrb[0].mxu0 %v667
      %v1260 = vpop.f32.mrb[0].mxu0
      %v1261 = vadd.f32 %v1100, %v1260
      %v1262 = vpop.f32.mrb[0].mxu0
      %v1263 = vpop.f32.mrb[0].mxu0
      %v1264 = vadd.f32 %v1103, %v1263
      %v1265 = vpop.f32.mrb[0].mxu0
      %1266 = vmatprep.mubr.bf16.mxu0 %v673
      %1267 = vmatmul.mubr.bf16.gmra.mrb[0].mxu0 %v672
      %v1268 = vpop.f32.mrb[0].mxu0
      %v1269 = vadd.f32 %v1108, %v1268
      %v1270 = vpop.f32.mrb[0].mxu0
      %v1271 = vpop.f32.mrb[0].mxu0
      %v1272 = vadd.f32 %v1111, %v1271
      %v1273 = vpop.f32.mrb[0].mxu0
      %1274 = vmatprep.mubr.bf16.mxu0 %v678
      %1275 = vmatmul.mubr.bf16.gmra.mrb[0].mxu0 %v677
      %v1276 = vpop.f32.mrb[0].mxu0
      %v1277 = vadd.f32 %v1116, %v1276
      %v1278 = vpop.f32.mrb[0].mxu0
      %v1279 = vpop.f32.mrb[0].mxu0
      %v1280 = vadd.f32 %v1119, %v1279
      %v1281 = vpop.f32.mrb[0].mxu0
      %1282 = vmatprep.mubr.bf16.mxu0 %v683
      %1283 = vmatmul.mubr.bf16.gmra.mrb[0].mxu0 %v682
      %v1284 = vpop.f32.mrb[0].mxu0
      %v1285 = vadd.f32 %v1124, %v1284
      %v1286 = vpop.f32.mrb[0].mxu0
      %v1287 = vpop.f32.mrb[0].mxu0
      %v1288 = vadd.f32 %v1127, %v1287
      %v1289 = vpop.f32.mrb[0].mxu0
      %1290 = vmatprep.mubr.bf16.mxu0 %v688
      %1291 = vmatmul.mubr.bf16.gmra.mrb[0].mxu0 %v687
      %v1292 = vpop.f32.mrb[0].mxu0
      %v1293 = vadd.f32 %v1132, %v1292
      %v1294 = vpop.f32.mrb[0].mxu0
      %v1295 = vpop.f32.mrb[0].mxu0
      %v1296 = vadd.f32 %v1135, %v1295
      %v1297 = vpop.f32.mrb[0].mxu0
      %1298 = vmatprep.mubr.bf16.mxu0 %v693
      %1299 = vmatmul.mubr.bf16.gmra.mrb[0].mxu0 %v692
      %v1300 = vpop.f32.mrb[0].mxu0
      %v1301 = vadd.f32 %v1140, %v1300
      %v1302 = vpop.f32.mrb[0].mxu0
      %v1303 = vpop.f32.mrb[0].mxu0
      %v1304 = vadd.f32 %v1143, %v1303
      %v1305 = vpop.f32.mrb[0].mxu0
      %1306 = vmatprep.mubr.bf16.mxu0 %v698
      %1307 = vmatmul.mubr.bf16.gmra.mrb[0].mxu0 %v697
      %v1308 = vpop.f32.mrb[0].mxu0
      %v1309 = vadd.f32 %v1148, %v1308
      %v1310 = vpop.f32.mrb[0].mxu0
      %v1311 = vpop.f32.mrb[0].mxu0
      %v1312 = vadd.f32 %v1151, %v1311
      %v1313 = vpop.f32.mrb[0].mxu0
      %1314 = vmatprep.mubr.bf16.mxu0 %v703
      %1315 = vmatmul.mubr.bf16.gmra.mrb[0].mxu0 %v702
      %v1316 = vpop.f32.mrb[0].mxu0
      %v1317 = vadd.f32 %v1156, %v1316
      %v1318 = vpop.f32.mrb[0].mxu0
      %v1319 = vpop.f32.mrb[0].mxu0
      %v1320 = vadd.f32 %v1159, %v1319
      %v1321 = vpop.f32.mrb[0].mxu0
      %1322 = vmatprep.mubr.bf16.mxu0 %v708
      %1323 = vmatmul.mubr.bf16.gmra.mrb[0].mxu0 %v707
      %v1324 = vpop.f32.mrb[0].mxu0
      %v1325 = vadd.f32 %v1164, %v1324
      %v1326 = vpop.f32.mrb[0].mxu0
      %v1327 = vpop.f32.mrb[0].mxu0
      %v1328 = vadd.f32 %v1167, %v1327
      %v1329 = vpop.f32.mrb[0].mxu0
      %1330 = vmatprep.mubr.bf16.mxu0 %v713
      %1331 = vmatmul.mubr.bf16.gmra.mrb[0].mxu0 %v712
      %v1332 = vpop.f32.mrb[0].mxu0
      %v1333 = vadd.f32 %v1172, %v1332
      %v1334 = vpop.f32.mrb[0].mxu0
      %v1335 = vpop.f32.mrb[0].mxu0
      %v1336 = vadd.f32 %v1175, %v1335
      %v1337 = vpop.f32.mrb[0].mxu0
      %1338 = vmatprep.mubr.bf16.mxu0 %v718
      %1339 = vmatmul.mubr.bf16.gmra.mrb[0].mxu0 %v717
      %v1340 = vpop.f32.mrb[0].mxu0
      %v1341 = vadd.f32 %v1180, %v1340
      %v1342 = vpop.f32.mrb[0].mxu0
      %v1343 = vpop.f32.mrb[0].mxu0
      %v1344 = vadd.f32 %v1183, %v1343
      %v1345 = vpop.f32.mrb[0].mxu0
      %1346 = vmatprep.mubr.bf16.mxu0 %v723
      %1347 = vmatmul.mubr.bf16.gmra.mrb[0].mxu0 %v722
      %v1348 = vpop.f32.mrb[0].mxu0
      %v1349 = vadd.f32 %v1188, %v1348
      %v1350 = vpop.f32.mrb[0].mxu0
      %v1351 = vpop.f32.mrb[0].mxu0
      %v1352 = vadd.f32 %v1191, %v1351
      %v1353 = vpop.f32.mrb[0].mxu0
      %1354 = vmatprep.mubr.bf16.mxu0 %v728
      %1355 = vmatmul.mubr.bf16.gmra.mrb[0].mxu0 %v727
      %v1356 = vpop.f32.mrb[0].mxu0
      %v1357 = vadd.f32 %v1196, %v1356
      %v1358 = vpop.f32.mrb[0].mxu0
      %v1359 = vpop.f32.mrb[0].mxu0
      %v1360 = vadd.f32 %v1199, %v1359
      %v1361 = vpop.f32.mrb[0].mxu0
      %1362 = vmatprep.mubr.bf16.mxu0 %v733
      %1363 = vmatmul.mubr.bf16.gmra.mrb[0].mxu0 %v732
      %v1364 = vpop.f32.mrb[0].mxu0
      %v1365 = vadd.f32 %v1204, %v1364
      %v1366 = vpop.f32.mrb[0].mxu0
      %v1367 = vpop.f32.mrb[0].mxu0
      %v1368 = vadd.f32 %v1207, %v1367
      %v1369 = vpop.f32.mrb[0].mxu0
      %1370 = vmatprep.mubr.bf16.mxu0 %v738
      %1371 = vmatmul.mubr.bf16.gmra.mrb[0].mxu0 %v737
      %v1372 = vpop.f32.mrb[0].mxu0
      %v1373 = vadd.f32 %v1212, %v1372
      %v1374 = vpop.f32.mrb[0].mxu0
      %v1375 = vpop.f32.mrb[0].mxu0
      %v1376 = vadd.f32 %v1215, %v1375
      %v1377 = vpop.f32.mrb[0].mxu0
      %1378 = vmatprep.mubr.bf16.mxu0 %v743
      %1379 = vmatmul.mubr.bf16.gmra.mrb[0].mxu0 %v742
      %v1380 = vpop.f32.mrb[0].mxu0
      %v1381 = vadd.f32 %v1220, %v1380
      %v1382 = vpop.f32.mrb[0].mxu0
      %v1383 = vpop.f32.mrb[0].mxu0
      %v1384 = vadd.f32 %v1223, %v1383
      %v1385 = vpop.f32.mrb[0].mxu0
      %1386 = vdwg.mxu0
      %1387 = vmatprep.subr.bf16.mxu0 0
      %1388 = vmatpush1.bf16.msra.mxu0 %v1017
      %1389 = vmatprep.subr.bf16.mxu0 0
      %1390 = vmatpush1.bf16.msra.mxu0 %v1018
      %1391 = vmatprep.subr.bf16.mxu0 0
      %1392 = vmatpush1.bf16.msra.mxu0 %v1019
      %1393 = vmatprep.subr.bf16.mxu0 0
      %1394 = vmatpush1.bf16.msra.mxu0 %v1020
      %1395 = vmatprep.subr.bf16.mxu0 0
      %1396 = vmatpush1.bf16.msra.mxu0 %v1021
      %1397 = vmatprep.subr.bf16.mxu0 0
      %1398 = vmatpush1.bf16.msra.mxu0 %v1022
      %1399 = vmatprep.subr.bf16.mxu0 0
      %1400 = vmatpush1.bf16.msra.mxu0 %v1023
      %1401 = vmatprep.subr.bf16.mxu0 0
      %1402 = vmatpush1.bf16.msra.mxu0 %v1024
      %1403 = vmatprep.subr.bf16.mxu0 0
      %1404 = vmatpush1.bf16.msra.mxu0 0
      %1405 = vmatprep.subr.bf16.mxu0 0
      %1406 = vmatpush1.bf16.msra.mxu0 0
      %1407 = vmatprep.subr.bf16.mxu0 0
      %1408 = vmatpush1.bf16.msra.mxu0 0
      %1409 = vmatprep.subr.bf16.mxu0 0
      %1410 = vmatpush1.bf16.msra.mxu0 0
      %1411 = vmatprep.subr.bf16.mxu0 0
      %1412 = vmatpush1.bf16.msra.mxu0 0
      %1413 = vmatprep.subr.bf16.mxu0 0
      %1414 = vmatpush1.bf16.msra.mxu0 0
      %1415 = vmatprep.subr.bf16.mxu0 0
      %1416 = vmatpush1.bf16.msra.mxu0 0
      %1417 = vmatprep.subr.bf16.mxu0 0
      %1418 = vmatpush1.bf16.msra.mxu0 0
      %1419 = vmatprep.mubr.bf16.mxu0 0
      %1420 = vmatmul.mubr.bf16.gmra.mrb[0].mxu0 %v669
      %v1421 = vpop.f32.mrb[0].mxu0
      %v1422 = vadd.f32 %v1261, %v1421
      %v1423 = vpop.f32.mrb[0].mxu0
      %v1424 = vpop.f32.mrb[0].mxu0
      %v1425 = vadd.f32 %v1264, %v1424
      %v1426 = vpop.f32.mrb[0].mxu0
      %1427 = vmatprep.mubr.bf16.mxu0 0
      %1428 = vmatmul.mubr.bf16.gmra.mrb[0].mxu0 %v674
      %v1429 = vpop.f32.mrb[0].mxu0
      %v1430 = vadd.f32 %v1269, %v1429
      %v1431 = vpop.f32.mrb[0].mxu0
      %v1432 = vpop.f32.mrb[0].mxu0
      %v1433 = vadd.f32 %v1272, %v1432
      %v1434 = vpop.f32.mrb[0].mxu0
      %1435 = vmatprep.mubr.bf16.mxu0 0
      %1436 = vmatmul.mubr.bf16.gmra.mrb[0].mxu0 %v679
      %v1437 = vpop.f32.mrb[0].mxu0
      %v1438 = vadd.f32 %v1277, %v1437
      %v1439 = vpop.f32.mrb[0].mxu0
      %v1440 = vpop.f32.mrb[0].mxu0
      %v1441 = vadd.f32 %v1280, %v1440
      %v1442 = vpop.f32.mrb[0].mxu0
      %1443 = vmatprep.mubr.bf16.mxu0 0
      %1444 = vmatmul.mubr.bf16.gmra.mrb[0].mxu0 %v684
      %v1445 = vpop.f32.mrb[0].mxu0
      %v1446 = vadd.f32 %v1285, %v1445
      %v1447 = vpop.f32.mrb[0].mxu0
      %v1448 = vpop.f32.mrb[0].mxu0
      %v1449 = vadd.f32 %v1288, %v1448
      %v1450 = vpop.f32.mrb[0].mxu0
      %1451 = vmatprep.mubr.bf16.mxu0 0
      %1452 = vmatmul.mubr.bf16.gmra.mrb[0].mxu0 %v689
      %v1453 = vpop.f32.mrb[0].mxu0
      %v1454 = vadd.f32 %v1293, %v1453
      %v1455 = vpop.f32.mrb[0].mxu0
      %v1456 = vpop.f32.mrb[0].mxu0
      %v1457 = vadd.f32 %v1296, %v1456
      %v1458 = vpop.f32.mrb[0].mxu0
      %1459 = vmatprep.mubr.bf16.mxu0 0
      %1460 = vmatmul.mubr.bf16.gmra.mrb[0].mxu0 %v694
      %v1461 = vpop.f32.mrb[0].mxu0
      %v1462 = vadd.f32 %v1301, %v1461
      %v1463 = vpop.f32.mrb[0].mxu0
      %v1464 = vpop.f32.mrb[0].mxu0
      %v1465 = vadd.f32 %v1304, %v1464
      %v1466 = vpop.f32.mrb[0].mxu0
      %1467 = vmatprep.mubr.bf16.mxu0 0
      %1468 = vmatmul.mubr.bf16.gmra.mrb[0].mxu0 %v699
      %v1469 = vpop.f32.mrb[0].mxu0
      %v1470 = vadd.f32 %v1309, %v1469
      %v1471 = vpop.f32.mrb[0].mxu0
      %v1472 = vpop.f32.mrb[0].mxu0
      %v1473 = vadd.f32 %v1312, %v1472
      %v1474 = vpop.f32.mrb[0].mxu0
      %1475 = vmatprep.mubr.bf16.mxu0 0
      %1476 = vmatmul.mubr.bf16.gmra.mrb[0].mxu0 %v704
      %v1477 = vpop.f32.mrb[0].mxu0
      %v1478 = vadd.f32 %v1317, %v1477
      %v1479 = vpop.f32.mrb[0].mxu0
      %v1480 = vpop.f32.mrb[0].mxu0
      %v1481 = vadd.f32 %v1320, %v1480
      %v1482 = vpop.f32.mrb[0].mxu0
      %1483 = vmatprep.mubr.bf16.mxu0 0
      %1484 = vmatmul.mubr.bf16.gmra.mrb[0].mxu0 %v709
      %v1485 = vpop.f32.mrb[0].mxu0
      %v1486 = vadd.f32 %v1325, %v1485
      %v1487 = vpop.f32.mrb[0].mxu0
      %v1488 = vpop.f32.mrb[0].mxu0
      %v1489 = vadd.f32 %v1328, %v1488
      %v1490 = vpop.f32.mrb[0].mxu0
      %1491 = vmatprep.mubr.bf16.mxu0 0
      %1492 = vmatmul.mubr.bf16.gmra.mrb[0].mxu0 %v714
      %v1493 = vpop.f32.mrb[0].mxu0
      %v1494 = vadd.f32 %v1333, %v1493
      %v1495 = vpop.f32.mrb[0].mxu0
      %v1496 = vpop.f32.mrb[0].mxu0
      %v1497 = vadd.f32 %v1336, %v1496
      %v1498 = vpop.f32.mrb[0].mxu0
      %1499 = vmatprep.mubr.bf16.mxu0 0
      %1500 = vmatmul.mubr.bf16.gmra.mrb[0].mxu0 %v719
      %v1501 = vpop.f32.mrb[0].mxu0
      %v1502 = vadd.f32 %v1341, %v1501
      %v1503 = vpop.f32.mrb[0].mxu0
      %v1504 = vpop.f32.mrb[0].mxu0
      %v1505 = vadd.f32 %v1344, %v1504
      %v1506 = vpop.f32.mrb[0].mxu0
      %1507 = vmatprep.mubr.bf16.mxu0 0
      %1508 = vmatmul.mubr.bf16.gmra.mrb[0].mxu0 %v724
      %v1509 = vpop.f32.mrb[0].mxu0
      %v1510 = vadd.f32 %v1349, %v1509
      %v1511 = vpop.f32.mrb[0].mxu0
      %v1512 = vpop.f32.mrb[0].mxu0
      %v1513 = vadd.f32 %v1352, %v1512
      %v1514 = vpop.f32.mrb[0].mxu0
      %1515 = vmatprep.mubr.bf16.mxu0 0
      %1516 = vmatmul.mubr.bf16.gmra.mrb[0].mxu0 %v729
      %v1517 = vpop.f32.mrb[0].mxu0
      %v1518 = vadd.f32 %v1357, %v1517
      %v1519 = vpop.f32.mrb[0].mxu0
      %v1520 = vpop.f32.mrb[0].mxu0
      %v1521 = vadd.f32 %v1360, %v1520
      %v1522 = vpop.f32.mrb[0].mxu0
      %1523 = vmatprep.mubr.bf16.mxu0 0
      %1524 = vmatmul.mubr.bf16.gmra.mrb[0].mxu0 %v734
      %v1525 = vpop.f32.mrb[0].mxu0
      %v1526 = vadd.f32 %v1365, %v1525
      %v1527 = vpop.f32.mrb[0].mxu0
      %v1528 = vpop.f32.mrb[0].mxu0
      %v1529 = vadd.f32 %v1368, %v1528
      %v1530 = vpop.f32.mrb[0].mxu0
      %1531 = vmatprep.mubr.bf16.mxu0 0
      %1532 = vmatmul.mubr.bf16.gmra.mrb[0].mxu0 %v739
      %v1533 = vpop.f32.mrb[0].mxu0
      %v1534 = vadd.f32 %v1373, %v1533
      %v1535 = vpop.f32.mrb[0].mxu0
      %v1536 = vpop.f32.mrb[0].mxu0
      %v1537 = vadd.f32 %v1376, %v1536
      %v1538 = vpop.f32.mrb[0].mxu0
      %1539 = vmatprep.mubr.bf16.mxu0 0
      %1540 = vmatmul.mubr.bf16.gmra.mrb[0].mxu0 %v744
      %v1541 = vpop.f32.mrb[0].mxu0
      %v1542 = vadd.f32 %v1381, %v1541
      %v1543 = vpop.f32.mrb[0].mxu0
      %v1544 = vpop.f32.mrb[0].mxu0
      %v1545 = vadd.f32 %v1384, %v1544
      %v1546 = vpop.f32.mrb[0].mxu0
      %1547 = vdwg.mxu0
      %v1548 = vpack.c.bf16 %v1425, %v1422
      %v1549 = vpack.c.bf16 %v1433, %v1430
      %v1550 = vpack.c.bf16 %v1441, %v1438
      %v1551 = vpack.c.bf16 %v1449, %v1446
      %v1552 = vpack.c.bf16 %v1457, %v1454
      %v1553 = vpack.c.bf16 %v1465, %v1462
      %v1554 = vpack.c.bf16 %v1473, %v1470
      %v1555 = vpack.c.bf16 %v1481, %v1478
      %v1556 = vpack.c.bf16 %v1489, %v1486
      %v1557 = vpack.c.bf16 %v1497, %v1494
      %v1558 = vpack.c.bf16 %v1505, %v1502
      %v1559 = vpack.c.bf16 %v1513, %v1510
      %v1560 = vpack.c.bf16 %v1521, %v1518
      %v1561 = vpack.c.bf16 %v1529, %v1526
      %v1562 = vpack.c.bf16 %v1537, %v1534
      %v1563 = vpack.c.bf16 %v1545, %v1542
      %v1580 = vunpack.c.l.b16 %v1548
      %v1581 = vunpack.c.h.b16 %v1548
      %v1582 = vunpack.c.l.b16 %v1549
      %v1583 = vunpack.c.h.b16 %v1549
      %v1584 = vunpack.c.l.b16 %v1550
      %v1585 = vunpack.c.h.b16 %v1550
      %v1586 = vunpack.c.l.b16 %v1551
      %v1587 = vunpack.c.h.b16 %v1551
      %v1588 = vunpack.c.l.b16 %v1552
      %v1589 = vunpack.c.h.b16 %v1552
      %v1590 = vunpack.c.l.b16 %v1553
      %v1591 = vunpack.c.h.b16 %v1553
      %v1592 = vunpack.c.l.b16 %v1554
      %v1593 = vunpack.c.h.b16 %v1554
      %v1594 = vunpack.c.l.b16 %v1555
      %v1595 = vunpack.c.h.b16 %v1555
      %v1596 = vunpack.c.l.b16 %v1556
      %v1597 = vunpack.c.h.b16 %v1556
      %v1598 = vunpack.c.l.b16 %v1557
      %v1599 = vunpack.c.h.b16 %v1557
      %v1600 = vunpack.c.l.b16 %v1558
      %v1601 = vunpack.c.h.b16 %v1558
      %v1602 = vunpack.c.l.b16 %v1559
      %v1603 = vunpack.c.h.b16 %v1559
      %v1604 = vunpack.c.l.b16 %v1560
      %v1605 = vunpack.c.h.b16 %v1560
      %v1606 = vunpack.c.l.b16 %v1561
      %v1607 = vunpack.c.h.b16 %v1561
      %v1608 = vunpack.c.l.b16 %v1562
      %v1609 = vunpack.c.h.b16 %v1562
      %v1610 = vunpack.c.l.b16 %v1563
      %v1611 = vunpack.c.h.b16 %v1563
      %v1612 = vpack.c.b16 %v1580, %v1580
      %v1613 = vpack.c.b16 %v1581, %v1581
      %v1614 = vpack.c.b16 %v1582, %v1582
      %v1615 = vpack.c.b16 %v1583, %v1583
      %v1616 = vpack.c.b16 %v1584, %v1584
      %v1617 = vpack.c.b16 %v1585, %v1585
      %v1618 = vpack.c.b16 %v1586, %v1586
      %v1619 = vpack.c.b16 %v1587, %v1587
      %v1620 = vpack.c.b16 %v1588, %v1588
      %v1621 = vpack.c.b16 %v1589, %v1589
      %v1622 = vpack.c.b16 %v1590, %v1590
      %v1623 = vpack.c.b16 %v1591, %v1591
      %v1624 = vpack.c.b16 %v1592, %v1592
      %v1625 = vpack.c.b16 %v1593, %v1593
      %v1626 = vpack.c.b16 %v1594, %v1594
      %v1627 = vpack.c.b16 %v1595, %v1595
      %v1628 = vpack.c.b16 %v1596, %v1596
      %v1629 = vpack.c.b16 %v1597, %v1597
      %v1630 = vpack.c.b16 %v1598, %v1598
      %v1631 = vpack.c.b16 %v1599, %v1599
      %v1632 = vpack.c.b16 %v1600, %v1600
      %v1633 = vpack.c.b16 %v1601, %v1601
      %v1634 = vpack.c.b16 %v1602, %v1602
      %v1635 = vpack.c.b16 %v1603, %v1603
      %v1636 = vpack.c.b16 %v1604, %v1604
      %v1637 = vpack.c.b16 %v1605, %v1605
      %v1638 = vpack.c.b16 %v1606, %v1606
      %v1639 = vpack.c.b16 %v1607, %v1607
      %v1640 = vpack.c.b16 %v1608, %v1608
      %v1641 = vpack.c.b16 %v1609, %v1609
      %v1642 = vpack.c.b16 %v1610, %v1610
      %v1643 = vpack.c.b16 %v1611, %v1611
      %vm1676 = vcmask 257024
      %1677 = vst.msk [vmem:[%s223] sm:$0xf] %vm1676, %v1612
      %1678 = vst.msk [vmem:[%s223 + $0x4] sm:$0xf] %vm1676, %v1613
      %1679 = vst.msk [vmem:[%s223 + $0x8] sm:$0xf] %vm1676, %v1614
      %1680 = vst.msk [vmem:[%s223 + $0xc] sm:$0xf] %vm1676, %v1615
      %1681 = vst.msk [vmem:[%s223 + $0x10] sm:$0xf] %vm1676, %v1616
      %1682 = vst.msk [vmem:[%s223 + $0x14] sm:$0xf] %vm1676, %v1617
      %1683 = vst.msk [vmem:[%s223 + $0x18] sm:$0xf] %vm1676, %v1618
      %1684 = vst.msk [vmem:[%s223 + $0x1c] sm:$0xf] %vm1676, %v1619
      %1685 = vst.msk [vmem:[%s223 + $0x20] sm:$0xf] %vm1676, %v1620
      %1686 = vst.msk [vmem:[%s223 + $0x24] sm:$0xf] %vm1676, %v1621
      %1687 = vst.msk [vmem:[%s223 + $0x28] sm:$0xf] %vm1676, %v1622
      %1688 = vst.msk [vmem:[%s223 + $0x2c] sm:$0xf] %vm1676, %v1623
      %1689 = vst.msk [vmem:[%s223 + $0x30] sm:$0xf] %vm1676, %v1624
      %1690 = vst.msk [vmem:[%s223 + $0x34] sm:$0xf] %vm1676, %v1625
      %1691 = vst.msk [vmem:[%s223 + $0x38] sm:$0xf] %vm1676, %v1626
      %1692 = vst.msk [vmem:[%s223 + $0x3c] sm:$0xf] %vm1676, %v1627
      %1693 = vst.msk [vmem:[%s223 + $0x40] sm:$0xf] %vm1676, %v1628
      %1694 = vst.msk [vmem:[%s223 + $0x44] sm:$0xf] %vm1676, %v1629
      %1695 = vst.msk [vmem:[%s223 + $0x48] sm:$0xf] %vm1676, %v1630
      %1696 = vst.msk [vmem:[%s223 + $0x4c] sm:$0xf] %vm1676, %v1631
      %1697 = vst.msk [vmem:[%s223 + $0x50] sm:$0xf] %vm1676, %v1632
      %1698 = vst.msk [vmem:[%s223 + $0x54] sm:$0xf] %vm1676, %v1633
      %1699 = vst.msk [vmem:[%s223 + $0x58] sm:$0xf] %vm1676, %v1634
      %1700 = vst.msk [vmem:[%s223 + $0x5c] sm:$0xf] %vm1676, %v1635
      %1701 = vst.msk [vmem:[%s223 + $0x60] sm:$0xf] %vm1676, %v1636
      %1702 = vst.msk [vmem:[%s223 + $0x64] sm:$0xf] %vm1676, %v1637
      %1703 = vst.msk [vmem:[%s223 + $0x68] sm:$0xf] %vm1676, %v1638
      %1704 = vst.msk [vmem:[%s223 + $0x6c] sm:$0xf] %vm1676, %v1639
      %1705 = vst.msk [vmem:[%s223 + $0x70] sm:$0xf] %vm1676, %v1640
      %1706 = vst.msk [vmem:[%s223 + $0x74] sm:$0xf] %vm1676, %v1641
      %1707 = vst.msk [vmem:[%s223 + $0x78] sm:$0xf] %vm1676, %v1642
      %1708 = vst.msk [vmem:[%s223 + $0x7c] sm:$0xf] %vm1676, %v1643
      %vm1709 = vcmask 261120
      %v1710 = vsel %vm1709, %v1422, 0.0
      %v1711 = vsel %vm1709, %v1425, 0.0
      %v1712 = vadd.f32 %v1710, %v1711
      %v1713 = vsel %vm1709, %v1430, 0.0
      %v1714 = vadd.f32 %v1712, %v1713
      %v1715 = vsel %vm1709, %v1433, 0.0
      %v1716 = vadd.f32 %v1714, %v1715
      %v1717 = vsel %vm1709, %v1438, 0.0
      %v1718 = vadd.f32 %v1716, %v1717
      %v1719 = vsel %vm1709, %v1441, 0.0
      %v1720 = vadd.f32 %v1718, %v1719
      %v1721 = vsel %vm1709, %v1446, 0.0
      %v1722 = vadd.f32 %v1720, %v1721
      %v1723 = vsel %vm1709, %v1449, 0.0
      %v1724 = vadd.f32 %v1722, %v1723
      %v1725 = vsel %vm1709, %v1454, 0.0
      %v1726 = vadd.f32 %v1724, %v1725
      %v1727 = vsel %vm1709, %v1457, 0.0
      %v1728 = vadd.f32 %v1726, %v1727
      %v1729 = vsel %vm1709, %v1462, 0.0
      %v1730 = vadd.f32 %v1728, %v1729
      %v1731 = vsel %vm1709, %v1465, 0.0
      %v1732 = vadd.f32 %v1730, %v1731
      %v1733 = vsel %vm1709, %v1470, 0.0
      %v1734 = vadd.f32 %v1732, %v1733
      %v1735 = vsel %vm1709, %v1473, 0.0
      %v1736 = vadd.f32 %v1734, %v1735
      %v1737 = vsel %vm1709, %v1478, 0.0
      %v1738 = vadd.f32 %v1736, %v1737
      %v1739 = vsel %vm1709, %v1481, 0.0
      %v1740 = vadd.f32 %v1738, %v1739
      %v1741 = vsel %vm1709, %v1486, 0.0
      %v1742 = vadd.f32 %v1740, %v1741
      %v1743 = vsel %vm1709, %v1489, 0.0
      %v1744 = vadd.f32 %v1742, %v1743
      %v1745 = vsel %vm1709, %v1494, 0.0
      %v1746 = vadd.f32 %v1744, %v1745
      %v1747 = vsel %vm1709, %v1497, 0.0
      %v1748 = vadd.f32 %v1746, %v1747
      %v1749 = vsel %vm1709, %v1502, 0.0
      %v1750 = vadd.f32 %v1748, %v1749
      %v1751 = vsel %vm1709, %v1505, 0.0
      %v1752 = vadd.f32 %v1750, %v1751
      %v1753 = vsel %vm1709, %v1510, 0.0
      %v1754 = vadd.f32 %v1752, %v1753
      %v1755 = vsel %vm1709, %v1513, 0.0
      %v1756 = vadd.f32 %v1754, %v1755
      %v1757 = vsel %vm1709, %v1518, 0.0
      %v1758 = vadd.f32 %v1756, %v1757
      %v1759 = vsel %vm1709, %v1521, 0.0
      %v1760 = vadd.f32 %v1758, %v1759
      %v1761 = vsel %vm1709, %v1526, 0.0
      %v1762 = vadd.f32 %v1760, %v1761
      %v1763 = vsel %vm1709, %v1529, 0.0
      %v1764 = vadd.f32 %v1762, %v1763
      %v1765 = vsel %vm1709, %v1534, 0.0
      %v1766 = vadd.f32 %v1764, %v1765
      %v1767 = vsel %vm1709, %v1537, 0.0
      %v1768 = vadd.f32 %v1766, %v1767
      %v1769 = vsel %vm1709, %v1542, 0.0
      %v1770 = vadd.f32 %v1768, %v1769
      %v1771 = vsel %vm1709, %v1545, 0.0
      %v1772 = vadd.f32 %v1770, %v1771
      %v1773 = vrot.slane %v1772, 4
      %v1774 = vadd.f32 %v1772, %v1773
      %v1775 = vrot.slane %v1774, 2
      %v1776 = vadd.f32 %v1774, %v1775
      %v1777 = vrot.slane %v1776, 1
      %v1778 = vadd.f32 %v1776, %v1777
      %vm1779 = vcmask 253952
      %1780 = vst.msk [vmem:[%s231] sm:$0x1] %vm1779, %v1778
      %v1781 = vmul.f32 %v1422, %v1422
      %v1782 = vmul.f32 %v1425, %v1425
      %v1783 = vmul.f32 %v1430, %v1430
      %v1784 = vmul.f32 %v1433, %v1433
      %v1785 = vmul.f32 %v1438, %v1438
      %v1786 = vmul.f32 %v1441, %v1441
      %v1787 = vmul.f32 %v1446, %v1446
      %v1788 = vmul.f32 %v1449, %v1449
      %v1789 = vmul.f32 %v1454, %v1454
      %v1790 = vmul.f32 %v1457, %v1457
      %v1791 = vmul.f32 %v1462, %v1462
      %v1792 = vmul.f32 %v1465, %v1465
      %v1793 = vmul.f32 %v1470, %v1470
      %v1794 = vmul.f32 %v1473, %v1473
      %v1795 = vmul.f32 %v1478, %v1478
      %v1796 = vmul.f32 %v1481, %v1481
      %v1797 = vmul.f32 %v1486, %v1486
      %v1798 = vmul.f32 %v1489, %v1489
      %v1799 = vmul.f32 %v1494, %v1494
      %v1800 = vmul.f32 %v1497, %v1497
      %v1801 = vmul.f32 %v1502, %v1502
      %v1802 = vmul.f32 %v1505, %v1505
      %v1803 = vmul.f32 %v1510, %v1510
      %v1804 = vmul.f32 %v1513, %v1513
      %v1805 = vmul.f32 %v1518, %v1518
      %v1806 = vmul.f32 %v1521, %v1521
      %v1807 = vmul.f32 %v1526, %v1526
      %v1808 = vmul.f32 %v1529, %v1529
      %v1809 = vmul.f32 %v1534, %v1534
      %v1810 = vmul.f32 %v1537, %v1537
      %v1811 = vmul.f32 %v1542, %v1542
      %v1812 = vmul.f32 %v1545, %v1545
      %v1813 = vsel %vm1709, %v1781, 0.0
      %v1814 = vsel %vm1709, %v1782, 0.0
      %v1815 = vadd.f32 %v1813, %v1814
      %v1816 = vsel %vm1709, %v1783, 0.0
      %v1817 = vadd.f32 %v1815, %v1816
      %v1818 = vsel %vm1709, %v1784, 0.0
      %v1819 = vadd.f32 %v1817, %v1818
      %v1820 = vsel %vm1709, %v1785, 0.0
      %v1821 = vadd.f32 %v1819, %v1820
      %v1822 = vsel %vm1709, %v1786, 0.0
      %v1823 = vadd.f32 %v1821, %v1822
      %v1824 = vsel %vm1709, %v1787, 0.0
      %v1825 = vadd.f32 %v1823, %v1824
      %v1826 = vsel %vm1709, %v1788, 0.0
      %v1827 = vadd.f32 %v1825, %v1826
      %v1828 = vsel %vm1709, %v1789, 0.0
      %v1829 = vadd.f32 %v1827, %v1828
      %v1830 = vsel %vm1709, %v1790, 0.0
      %v1831 = vadd.f32 %v1829, %v1830
      %v1832 = vsel %vm1709, %v1791, 0.0
      %v1833 = vadd.f32 %v1831, %v1832
      %v1834 = vsel %vm1709, %v1792, 0.0
      %v1835 = vadd.f32 %v1833, %v1834
      %v1836 = vsel %vm1709, %v1793, 0.0
      %v1837 = vadd.f32 %v1835, %v1836
      %v1838 = vsel %vm1709, %v1794, 0.0
      %v1839 = vadd.f32 %v1837, %v1838
      %v1840 = vsel %vm1709, %v1795, 0.0
      %v1841 = vadd.f32 %v1839, %v1840
      %v1842 = vsel %vm1709, %v1796, 0.0
      %v1843 = vadd.f32 %v1841, %v1842
      %v1844 = vsel %vm1709, %v1797, 0.0
      %v1845 = vadd.f32 %v1843, %v1844
      %v1846 = vsel %vm1709, %v1798, 0.0
      %v1847 = vadd.f32 %v1845, %v1846
      %v1848 = vsel %vm1709, %v1799, 0.0
      %v1849 = vadd.f32 %v1847, %v1848
      %v1850 = vsel %vm1709, %v1800, 0.0
      %v1851 = vadd.f32 %v1849, %v1850
      %v1852 = vsel %vm1709, %v1801, 0.0
      %v1853 = vadd.f32 %v1851, %v1852
      %v1854 = vsel %vm1709, %v1802, 0.0
      %v1855 = vadd.f32 %v1853, %v1854
      %v1856 = vsel %vm1709, %v1803, 0.0
      %v1857 = vadd.f32 %v1855, %v1856
      %v1858 = vsel %vm1709, %v1804, 0.0
      %v1859 = vadd.f32 %v1857, %v1858
      %v1860 = vsel %vm1709, %v1805, 0.0
      %v1861 = vadd.f32 %v1859, %v1860
      %v1862 = vsel %vm1709, %v1806, 0.0
      %v1863 = vadd.f32 %v1861, %v1862
      %v1864 = vsel %vm1709, %v1807, 0.0
      %v1865 = vadd.f32 %v1863, %v1864
      %v1866 = vsel %vm1709, %v1808, 0.0
      %v1867 = vadd.f32 %v1865, %v1866
      %v1868 = vsel %vm1709, %v1809, 0.0
      %v1869 = vadd.f32 %v1867, %v1868
      %v1870 = vsel %vm1709, %v1810, 0.0
      %v1871 = vadd.f32 %v1869, %v1870
      %v1872 = vsel %vm1709, %v1811, 0.0
      %v1873 = vadd.f32 %v1871, %v1872
      %v1874 = vsel %vm1709, %v1812, 0.0
      %v1875 = vadd.f32 %v1873, %v1874
      %v1876 = vrot.slane %v1875, 4
      %v1877 = vadd.f32 %v1875, %v1876
      %v1878 = vrot.slane %v1877, 2
      %v1879 = vadd.f32 %v1877, %v1878
      %v1880 = vrot.slane %v1879, 1
      %v1881 = vadd.f32 %v1879, %v1880
      %1882 = vst.msk [vmem:[%s231 + $0x1] sm:$0x1] %vm1779, %v1881
      %s1883 = smul.u32 32, %s20
      %p1884 = scmp.lt.s32.totalorder %s19, 1
      %s1885 = scalar_select %p1884, %s19, 1
      %p1886 = scmp.lt.s32.totalorder %s1883, 31
      %s1887 = scalar_select %p1886, %s1883, 31
      %s1888 = smul.addr %s1885, 32
      %s1889 = sadd.s32 %s1887, %s1888
      %s1890 = smul.addr %s1889, 4
      %s1891 = scalar_lea.vmem %s2, %s1890
      %p1892 = scmp.lt.s32.totalorder %s19, 1
      %s1893 = scalar_select %p1892, %s19, 1
      %p1894 = scmp.lt.s32.totalorder %s20, 0
      %s1895 = scalar_select %p1894, %s20, 0
      %s1896 = sadd.s32 %s1895, %s1893
      %s1897 = smul.addr %s1896, 2
      %s1898 = scalar_lea.vmem %s3, %s1897
      // Predicated region
      $region29: #{refine_subnet_forward.44} parent=27 // pred_check
        %p1899 = pneg %p96
      $region30: #{refine_subnet_forward.44} parent=27 // pred_check_branch
        %1901 = sbr.rel (%p1899) target = $region32
      $region31: #{refine_subnet_forward.44} parent=27 // pred_region
        %s1902 = smul.u32 32, %s20
      $region32: #{refine_subnet_forward.44} parent=27 // pred_fallthru
        _
      // Predicated region
      $region33: #{refine_subnet_forward.44} parent=27 // pred_check
        %p1903 = pneg %p124
      $region34: #{refine_subnet_forward.44} parent=27 // pred_check_branch
        %1905 = sbr.rel (%p1903) target = $region36
      $region35: #{refine_subnet_forward.44} parent=27 // pred_region
        _
      $region36: #{refine_subnet_forward.44} parent=27 // pred_fallthru
        _
    $region28: #{refine_subnet_forward.44} parent=5 // pred_fallthru
      _
    %p1906 = scmp.le.s32.totalorder 2, %s10
    // Predicated region
    $region37: #{refine_subnet_forward.44} parent=5 // pred_check
      %p1907 = pneg %p1906
    $region38: #{refine_subnet_forward.44} parent=5 // pred_check_branch
      %1909 = sbr.rel (%p1907) target = $region40
    $region39: #{refine_subnet_forward.44} parent=5 // pred_region
      %s1910 = ssub.s32 %s10, 2
      // Predicated region
      $region41: #{refine_subnet_forward.44} parent=39 // pred_check
        %p1911 = pneg %p102
      $region42: #{refine_subnet_forward.44} parent=39 // pred_check_branch
        %1913 = sbr.rel (%p1911) target = $region44
      $region43: #{refine_subnet_forward.44} parent=39 // pred_region
        %s1914 = smul.u32 32, %s22
        %p1915 = scmp.lt.s32.totalorder %s21, 1
        %s1916 = scalar_select %p1915, %s21, 1
        %p1917 = scmp.lt.s32.totalorder %s1914, 31
        %s1918 = scalar_select %p1917, %s1914, 31
        %s1919 = smul.addr %s1916, 32
        %s1920 = sadd.s32 %s1918, %s1919
        %s1921 = smul.addr %s1920, 4
        %s1922 = scalar_lea.vmem %s2, %s1921
      $region44: #{refine_subnet_forward.44} parent=39 // pred_fallthru
        _
      // Predicated region
      $region45: #{refine_subnet_forward.44} parent=39 // pred_check
        %p1923 = pneg %p130
      $region46: #{refine_subnet_forward.44} parent=39 // pred_check_branch
        %1925 = sbr.rel (%p1923) target = $region48
      $region47: #{refine_subnet_forward.44} parent=39 // pred_region
        %p1926 = scmp.lt.s32.totalorder %s21, 1
        %s1927 = scalar_select %p1926, %s21, 1
        %p1928 = scmp.lt.s32.totalorder %s22, 0
        %s1929 = scalar_select %p1928, %s22, 0
        %s1930 = sadd.s32 %s1929, %s1927
        %s1931 = smul.addr %s1930, 2
        %s1932 = scalar_lea.vmem %s3, %s1931
      $region48: #{refine_subnet_forward.44} parent=39 // pred_fallthru
        _
    $region40: #{refine_subnet_forward.44} parent=5 // pred_fallthru
      _
  $region6: #{refine_subnet_forward.44} parent=0 // loop_footer
    %s14 = sadd.s32 1, %s10
  $region7: #{refine_subnet_forward.44} parent=0 // loop_footer_branch
    %9 = sbr.rel target = $region3
  $region8: #{refine_subnet_forward.44} parent=0 // loop_exit
    _

// kernel: tile.8
$region0: #{tile.8}
  #allocation0 [shape = 's32[1]{0}', space=sflag, size = 0x4, scoped, tag = 'scoped memory for tile.8']
  %s0 = inlined_call_operand.vmem [shape: f32[3], index: 0, kind: input, shape index: {}]
  %s1 = inlined_call_operand.vmem [shape: f32[2,3], index: 1, kind: output, shape index: {}]
  // Predicated region
  $region2: #{tile.8} parent=0 // pred_check
    _
  $region3: #{tile.8} parent=0 // pred_check_branch
    %3 = sbr.rel (0) target = $region5
  $region4: #{tile.8} parent=0 // pred_region
    _
  $region5: #{tile.8} parent=0 // pred_fallthru
    _
  %v4 = vld [vmem:[%s0] ss:$0 sm:$0xff]
  %5 = vst [vmem:[%s1] sm:$0x3] %v4

// kernel: tile.0
$region0: #{tile.0}
  %s0 = inlined_call_operand.vmem [shape: f32[2,3], index: 0, kind: input, shape index: {}]
  %s1 = inlined_call_operand.vmem [shape: f32[6,1], index: 1, kind: output, shape index: {}]
  $region1: #{tile.0} parent=0
    #allocation0 [shape = 'u8[4096]{0}', space=vmem, size = 0x1000, scoped, tag = 'scoped mem for input reshape']
    %s3 = sshllo.u32 0, 2
    %v4 = vld [vmem:[%s0] sm:%s3]
    %5 = vst [vmem:[#allocation0] sm:%s3] %v4
    %v6 = vld [vmem:[#allocation0] sm:$0x3]
    %vm7 = vcmask 7168
    %8 = vst.msk [vmem:[%s1] ss:$3 sm:$0x3] %vm7, %v6
    %v9 = vld [vmem:[#allocation0] sm:$0x3]
    %10 = vrot.lane.b32.xlu0 %v9, 127
    %v11 = vpop.permute.xlu0 %10
    %vm12 = vcmask 7168
    %s13 = scalar_lea.vmem %s1, 1
    %14 = vst.msk [vmem:[%s13] ss:$3 sm:$0x3] %vm12, %v11
    %v15 = vld [vmem:[#allocation0] sm:$0x3]
    %16 = vrot.lane.b32.xlu0 %v15, 126
    %v17 = vpop.permute.xlu0 %16
    %vm18 = vcmask 7168
    %s19 = scalar_lea.vmem %s1, 2
    %20 = vst.msk [vmem:[%s19] ss:$3 sm:$0x3] %vm18, %v17

// kernel: refine_subnet_forward.47
$region0: #{refine_subnet_forward.47}
  #allocation0 [shape = 'u32[]', space=smem, size = 0x4, offset = 0x4, fixed_abs, tag = 'smem constant byte address 0x4 - core index']
  #allocation1 [shape = 'u32[144,128]{1,0:T(1,128)}', space=vmem, size = 0x12000, scoped, tag = 'internal scratch']
  %s0 = inlined_call_operand.vmem [shape: bf16[6,256], index: 0, kind: input, shape index: {}]
  %s1 = inlined_call_operand.vmem [shape: f32[6,256], index: 1, kind: input, shape index: {}]
  %s2 = inlined_call_operand.vmem [shape: f32[6,1], index: 2, kind: input, shape index: {}]
  %s3 = inlined_call_operand.vmem [shape: f32[6,1], index: 3, kind: input, shape index: {}]
  %s4 = inlined_call_operand.vmem [shape: f32[6,1], index: 4, kind: input, shape index: {}]
  %s5 = inlined_call_operand.vmem [shape: f32[6,256], index: 5, kind: output, shape index: {}]
  %s6 = sld [smem:[#allocation0]]
  $region30: #{refine_subnet_forward.47} parent=0
    _
  %s8 = ssub.s32 1, %s6
  %s9 = scalar_select 0, %s8, %s6
  // Predicated region
  $region2: #{refine_subnet_forward.47} parent=0 // pred_check
    _
  $region3: #{refine_subnet_forward.47} parent=0 // pred_check_branch
    %11 = sbr.rel (0) target = $region5
  $region4: #{refine_subnet_forward.47} parent=0 // pred_region
    _
  $region5: #{refine_subnet_forward.47} parent=0 // pred_fallthru
    _
  // Predicated region
  $region6: #{refine_subnet_forward.47} parent=0 // pred_check
    _
  $region7: #{refine_subnet_forward.47} parent=0 // pred_check_branch
    %13 = sbr.rel (0) target = $region9
  $region8: #{refine_subnet_forward.47} parent=0 // pred_region
    _
  $region9: #{refine_subnet_forward.47} parent=0 // pred_fallthru
    _
  // Predicated region
  $region10: #{refine_subnet_forward.47} parent=0 // pred_check
    _
  $region11: #{refine_subnet_forward.47} parent=0 // pred_check_branch
    %15 = sbr.rel (0) target = $region13
  $region12: #{refine_subnet_forward.47} parent=0 // pred_region
    _
  $region13: #{refine_subnet_forward.47} parent=0 // pred_fallthru
    _
  // Predicated region
  $region14: #{refine_subnet_forward.47} parent=0 // pred_check
    _
  $region15: #{refine_subnet_forward.47} parent=0 // pred_check_branch
    %17 = sbr.rel (0) target = $region17
  $region16: #{refine_subnet_forward.47} parent=0 // pred_region
    _
  $region17: #{refine_subnet_forward.47} parent=0 // pred_fallthru
    _
  // Predicated region
  $region18: #{refine_subnet_forward.47} parent=0 // pred_check
    _
  $region19: #{refine_subnet_forward.47} parent=0 // pred_check_branch
    %19 = sbr.rel (0) target = $region21
  $region20: #{refine_subnet_forward.47} parent=0 // pred_region
    _
  $region21: #{refine_subnet_forward.47} parent=0 // pred_fallthru
    _
  %v20 = vld [vmem:[%s0] sm:$0x77]
  %v21 = vunpack.c.l.bf16 %v20
  %v22 = vunpack.c.h.bf16 %v20
  %v23 = vld [vmem:[%s1] sm:$0x3f]
  %v24 = vld [vmem:[%s1 + $0x8] sm:$0x3f]
  %v25 = vadd.f32 %v21, %v23
  %v26 = vadd.f32 %v22, %v24
  %v27 = vld [vmem:[%s2] sm:$0x3f]
  %29 = vset.pattern.permute.xlu0 0
  %30 = vperm.xlu0 %29, %v27
  %v31 = vpop.permute.xlu0 %30
  %v33 = vadd.f32 %v25, %v31
  %v34 = vadd.f32 %v26, %v31
  %v35 = vld [vmem:[%s3] sm:$0x3f]
  %37 = vset.pattern.permute.xlu0 0
  %38 = vperm.xlu0 %37, %v35
  %v39 = vpop.permute.xlu0 %38
  %v41 = vmax.f32 %v33, %v39
  %v42 = vmax.f32 %v34, %v39
  %v43 = vld [vmem:[%s4] sm:$0x3f]
  %45 = vset.pattern.permute.xlu0 0
  %46 = vperm.xlu0 %45, %v43
  %v47 = vpop.permute.xlu0 %46
  %v49 = vmin.f32 %v41, %v47
  %v50 = vmin.f32 %v42, %v47
  %51 = vst [vmem:[%s5] sm:$0x3f] %v49
  %52 = vst [vmem:[%s5 + $0x8] sm:$0x3f] %v50
  // Predicated region
  $region22: #{refine_subnet_forward.47} parent=0 // pred_check
    _
  $region23: #{refine_subnet_forward.47} parent=0 // pred_check_branch
    %54 = sbr.rel (0) target = $region25
  $region24: #{refine_subnet_forward.47} parent=0 // pred_region
    _
  $region25: #{refine_subnet_forward.47} parent=0 // pred_fallthru
    _
  // Predicated region
  $region26: #{refine_subnet_forward.47} parent=0 // pred_check
    _
  $region27: #{refine_subnet_forward.47} parent=0 // pred_check_branch
    %56 = sbr.rel (0) target = $region29
  $region28: #{refine_subnet_forward.47} parent=0 // pred_region
    _
  $region29: #{refine_subnet_forward.47} parent=0 // pred_fallthru
    _

// kernel: refine_subnet_forward.46
$region0: #{refine_subnet_forward.46}
  #allocation0 [shape = 'u32[]', space=smem, size = 0x4, offset = 0x4, fixed_abs, tag = 'smem constant byte address 0x4 - core index']
  #allocation1 [shape = 'u32[144,128]{1,0:T(1,128)}', space=vmem, size = 0x12000, scoped, tag = 'internal scratch']
  %s0 = inlined_call_operand.vmem [shape: bf16[2,256,384], index: 0, kind: input, shape index: {}]
  %s1 = inlined_call_operand.vmem [shape: bf16[384,3], index: 1, kind: input, shape index: {}]
  %s2 = inlined_call_operand.vmem [shape: bf16[2,256,3], index: 2, kind: output, shape index: {0}]
  %s3 = inlined_call_operand.hbm [shape: f32[2,1,2,3], index: 3, kind: output, shape index: {1}]
  %4 = xla_tuple %s2, %s3
  %s5 = sld [smem:[#allocation0]]
  $region49: #{refine_subnet_forward.46} parent=0
    _
  %s7 = ssub.s32 1, %s5
  %s8 = scalar_select 0, %s7, %s5
  $region1: #{refine_subnet_forward.46} parent=0
    #allocation2 [shape = 'u8[2048]{0}', space=vmem, size = 0x800, scoped, tag = 'output window, operand 1']
    #allocation3 [shape = 's32[2]{0}', space=sflag, size = 0x8, scoped, tag = 'scoped memory for refine_subnet_forward.46']
    %9 = vsyncpa [#allocation3], 0
    %s10 = scalar_lea.sflag [#allocation3], 1
    %11 = vsyncpa %s10, 0
    loop: start=0, step=1, limit=4
    $region2: #{refine_subnet_forward.46} parent=1 // loop_pre_header
      _
    $region3: #{refine_subnet_forward.46} parent=1 // loop_header
      %s13 = sphi 0, %s17
      %p14 = scmp.ge.s32.totalorder %s13, 4
      %s20 = sphi 0, %s32
      %s21 = sphi 0, %s28
      %s22 = sphi 0, %s20
      %s23 = sphi 0, %s21
      %s24 = sphi 0, %s22
      %s25 = sphi 0, %s23
      %s37 = sphi 0, %s39
      %s40 = sphi 0, %s37
      %s41 = sphi 0, %s40
      %s57 = sphi 0, %s41
      %s61 = sphi 0, %s61
      %s63 = sphi 0, %s61
      %s64 = sphi 0, %s63
      %s78 = sphi 0, %s64
      %s86 = sphi 0, %s88
      %s89 = sphi 0, %s86
      %s90 = sphi 0, %s89
      %s106 = sphi 0, %s90
      %s114 = sphi 0, %s116
      %s117 = sphi 0, %s114
      %s118 = sphi 0, %s117
      %s134 = sphi 0, %s118
    $region4: #{refine_subnet_forward.46} parent=1 // loop_header_branch
      %16 = sbr.rel (%p14) target = $region8
    $region5: #{refine_subnet_forward.46} parent=1 // loop_body
      %s18 = ssub.s32 %s13, 1
      %s19 = ssub.s32 %s13, 2
      %s26 = sadd.s32 1, %s21
      %p27 = scmp.ge.s32.totalorder %s26, 1
      %s28 = scalar_select %p27, 0, %s26
      %s29 = sadd.s32 1, %s20
      %s30 = scalar_select %p27, %s29, %s20
      %p31 = scmp.ge.s32.totalorder %s30, 2
      %s32 = scalar_select %p31, 0, %s30
      %s33 = ssub.s32 %s20, %s32
      %s34 = ssub.s32 %s21, %s28
      %s35 = sor.u32 %s33, %s34
      %p36 = scmp.eq.s32.totalorder %s35, 0
      %s38 = sadd.s32 %s37, 1
      %s39 = scalar_select %p36, %s37, %s38
      %p42 = pneg %p36
      %p43 = scmp.eq.s32.totalorder %s13, 1
      %p44 = por %p42, %p43
      %p45 = scmp.ne.s32.totalorder %s37, %s40
      %p46 = scmp.eq.s32.totalorder %s13, 0
      %p47 = por %p45, %p46
      %p48 = scmp.ne.s32.totalorder %s37, %s40
      %p49 = scmp.eq.s32.totalorder %s18, 1
      %p50 = por %p48, %p49
      %p51 = scmp.ne.s32.totalorder %s40, %s41
      %p52 = scmp.eq.s32.totalorder %s18, 0
      %p53 = por %p51, %p52
      %p54 = scmp.ne.s32.totalorder %s40, %s41
      %p55 = scmp.eq.s32.totalorder %s19, 1
      %p56 = por %p54, %p55
      %p58 = scmp.ne.s32.totalorder %s41, %s57
      %p59 = scmp.eq.s32.totalorder %s19, 0
      %p60 = por %p58, %p59
      %s62 = sadd.s32 %s61, 1
      %p65 = scmp.eq.s32.totalorder %s13, 1
      %p66 = scmp.ne.s32.totalorder %s61, %s63
      %p67 = scmp.eq.s32.totalorder %s13, 0
      %p68 = por %p66, %p67
      %p69 = scmp.ne.s32.totalorder %s61, %s63
      %p70 = scmp.eq.s32.totalorder %s18, 1
      %p71 = por %p69, %p70
      %p72 = scmp.ne.s32.totalorder %s63, %s64
      %p73 = scmp.eq.s32.totalorder %s18, 0
      %p74 = por %p72, %p73
      %p75 = scmp.ne.s32.totalorder %s63, %s64
      %p76 = scmp.eq.s32.totalorder %s19, 1
      %p77 = por %p75, %p76
      %p79 = scmp.ne.s32.totalorder %s64, %s78
      %p80 = scmp.eq.s32.totalorder %s19, 0
      %p81 = por %p79, %p80
      %s82 = ssub.s32 %s20, %s32
      %s83 = ssub.s32 %s21, %s28
      %s84 = sor.u32 %s82, %s83
      %p85 = scmp.eq.s32.totalorder %s84, 0
      %s87 = sadd.s32 %s86, 1
      %s88 = scalar_select %p85, %s86, %s87
      %p91 = pneg %p85
      %p92 = scmp.eq.s32.totalorder %s13, 1
      %p93 = por %p91, %p92
      %p94 = scmp.ne.s32.totalorder %s86, %s89
      %p95 = scmp.eq.s32.totalorder %s13, 0
      %p96 = por %p94, %p95
      %p97 = scmp.ne.s32.totalorder %s86, %s89
      %p98 = scmp.eq.s32.totalorder %s18, 1
      %p99 = por %p97, %p98
      %p100 = scmp.ne.s32.totalorder %s89, %s90
      %p101 = scmp.eq.s32.totalorder %s18, 0
      %p102 = por %p100, %p101
      %p103 = scmp.ne.s32.totalorder %s89, %s90
      %p104 = scmp.eq.s32.totalorder %s19, 1
      %p105 = por %p103, %p104
      %p107 = scmp.ne.s32.totalorder %s90, %s106
      %p108 = scmp.eq.s32.totalorder %s19, 0
      %p109 = por %p107, %p108
      %s110 = ssub.s32 %s20, %s32
      %s111 = ssub.s32 %s21, %s28
      %s112 = sor.u32 %s110, %s111
      %p113 = scmp.eq.s32.totalorder %s112, 0
      %s115 = sadd.s32 %s114, 1
      %s116 = scalar_select %p113, %s114, %s115
      %p119 = pneg %p113
      %p120 = scmp.eq.s32.totalorder %s13, 1
      %p121 = por %p119, %p120
      %p122 = scmp.ne.s32.totalorder %s114, %s117
      %p123 = scmp.eq.s32.totalorder %s13, 0
      %p124 = por %p122, %p123
      %p125 = scmp.ne.s32.totalorder %s114, %s117
      %p126 = scmp.eq.s32.totalorder %s18, 1
      %p127 = por %p125, %p126
      %p128 = scmp.ne.s32.totalorder %s117, %s118
      %p129 = scmp.eq.s32.totalorder %s18, 0
      %p130 = por %p128, %p129
      %p131 = scmp.ne.s32.totalorder %s117, %s118
      %p132 = scmp.eq.s32.totalorder %s19, 1
      %p133 = por %p131, %p132
      %p135 = scmp.ne.s32.totalorder %s118, %s134
      %p136 = scmp.eq.s32.totalorder %s19, 0
      %p137 = por %p135, %p136
      %p138 = scmp.le.s32.totalorder 1, %s13
      %p139 = scmp.lt.s32.totalorder %s13, 3
      %p140 = pnand %p138, %p139
      %p141 = pneg %p140
      // Predicated region
      $region9: #{refine_subnet_forward.46} parent=5 // pred_check
        _
      $region10: #{refine_subnet_forward.46} parent=5 // pred_check_branch
        %143 = sbr.rel (%p140) target = $region12
      $region11: #{refine_subnet_forward.46} parent=5 // pred_region
        %s144 = ssub.s32 %s13, 1
        // Predicated region
        $region13: #{refine_subnet_forward.46} parent=11 // pred_check
          %p145 = pneg %p74
        $region14: #{refine_subnet_forward.46} parent=11 // pred_check_branch
          %147 = sbr.rel (%p145) target = $region16
        $region15: #{refine_subnet_forward.46} parent=11 // pred_region
          _
        $region16: #{refine_subnet_forward.46} parent=11 // pred_fallthru
          _
      $region12: #{refine_subnet_forward.46} parent=5 // pred_fallthru
        _
      %p148 = scmp.lt.s32.totalorder %s13, 2
      // Predicated region
      $region17: #{refine_subnet_forward.46} parent=5 // pred_check
        %p149 = pneg %p148
      $region18: #{refine_subnet_forward.46} parent=5 // pred_check_branch
        %151 = sbr.rel (%p149) target = $region20
      $region19: #{refine_subnet_forward.46} parent=5 // pred_region
        // Predicated region
        $region21: #{refine_subnet_forward.46} parent=19 // pred_check
          %p152 = pneg %p47
        $region22: #{refine_subnet_forward.46} parent=19 // pred_check_branch
          %154 = sbr.rel (%p152) target = $region24
        $region23: #{refine_subnet_forward.46} parent=19 // pred_region
          %s155 = smul.u32 32, %s21
          %p156 = scmp.lt.s32.totalorder %s20, 1
          %s157 = scalar_select %p156, %s20, 1
          %p158 = scmp.lt.s32.totalorder %s155, 31
          %s159 = scalar_select %p158, %s155, 31
          %s160 = smul.addr %s159, 3
          %s161 = smul.addr %s157, 96
          %s162 = sadd.s32 %s160, %s161
          %s163 = smul.addr %s162, 4
          %s164 = scalar_lea.vmem %s0, %s163
          %s165 = smul.u32 32, %s21
        $region24: #{refine_subnet_forward.46} parent=19 // pred_fallthru
          _
      $region20: #{refine_subnet_forward.46} parent=5 // pred_fallthru
        _
      %p166 = scmp.le.s32.totalorder 1, %s13
      %p167 = scmp.lt.s32.totalorder %s13, 3
      %p168 = pnand %p166, %p167
      %p169 = pneg %p168
      // Predicated region
      $region25: #{refine_subnet_forward.46} parent=5 // pred_check
        _
      $region26: #{refine_subnet_forward.46} parent=5 // pred_check_branch
        %171 = sbr.rel (%p168) target = $region28
      $region27: #{refine_subnet_forward.46} parent=5 // pred_region
        %s172 = ssub.s32 %s13, 1
        %s173 = smul.u32 32, %s23
        %p174 = scmp.lt.s32.totalorder %s22, 1
        %s175 = scalar_select %p174, %s22, 1
        %p176 = scmp.lt.s32.totalorder %s173, 31
        %s177 = scalar_select %p176, %s173, 31
        %s178 = smul.addr %s177, 3
        %s179 = smul.addr %s175, 96
        %s180 = sadd.s32 %s178, %s179
        %s181 = smul.addr %s180, 4
        %s182 = scalar_lea.vmem %s0, %s181
        %p183 = pneg %p53
        %p184 = pneg %p50
        %p185 = pneg %p74
        %p186 = pneg %p71
        %p187 = pneg %p102
        %p188 = pneg %p99
        %s189 = smul.u32 32, %s23
        %p190 = scmp.lt.s32.totalorder %s22, 1
        %s191 = scalar_select %p190, %s22, 1
        %p192 = scmp.lt.s32.totalorder %s189, 31
        %s193 = scalar_select %p192, %s189, 31
        %s194 = smul.addr %s191, 32
        %s195 = sadd.s32 %s193, %s194
        %s196 = smul.addr %s195, 4
        %s197 = scalar_lea.vmem %s2, %s196
        %p198 = pneg %p130
        %p199 = pneg %p127
        %s200 = sand.u32 %s117, 1
        %s201 = scalar_lea.sflag [#allocation3], %s200
        %s202 = sand.u32 %s117, 1
        %s203 = smul.addr %s202, 2
        %s204 = scalar_lea.vmem [#allocation2], %s203
        %s205 = smul.u32 32, %s23
        %p206 = scmp.lt.s32.totalorder %s22, 1
        %s207 = scalar_select %p206, %s22, 1
        %p208 = scmp.lt.s32.totalorder %s205, 31
        %s209 = scalar_select %p208, %s205, 31
        %s210 = smul.addr %s209, 3
        %s211 = smul.addr %s207, 96
        %s212 = sadd.s32 %s210, %s211
        %s213 = smul.addr %s212, 4
        %s214 = scalar_lea.vmem %s0, %s213
        %s215 = smul.u32 32, %s23
        %s216 = smul.u32 32, %s23
        %p217 = scmp.lt.s32.totalorder %s22, 1
        %s218 = scalar_select %p217, %s22, 1
        %p219 = scmp.lt.s32.totalorder %s216, 31
        %s220 = scalar_select %p219, %s216, 31
        %s221 = smul.addr %s218, 32
        %s222 = sadd.s32 %s220, %s221
        %s223 = smul.addr %s222, 4
        %s224 = scalar_lea.vmem %s2, %s223
        %s225 = smul.u32 32, %s23
        %v227 = vld [vmem:[%s214] sm:$0xff]
        %v228 = vld [vmem:[%s214 + $0x8] sm:$0xf]
        %v229 = vld [vmem:[%s214 + $0xc] sm:$0xff]
        %v230 = vld [vmem:[%s214 + $0x14] sm:$0xf]
        %v231 = vld [vmem:[%s214 + $0x18] sm:$0xff]
        %v232 = vld [vmem:[%s214 + $0x20] sm:$0xf]
        %v233 = vld [vmem:[%s214 + $0x24] sm:$0xff]
        %v234 = vld [vmem:[%s214 + $0x2c] sm:$0xf]
        %v235 = vld [vmem:[%s214 + $0x30] sm:$0xff]
        %v236 = vld [vmem:[%s214 + $0x38] sm:$0xf]
        %v237 = vld [vmem:[%s214 + $0x3c] sm:$0xff]
        %v238 = vld [vmem:[%s214 + $0x44] sm:$0xf]
        %v239 = vld [vmem:[%s214 + $0x48] sm:$0xff]
        %v240 = vld [vmem:[%s214 + $0x50] sm:$0xf]
        %v241 = vld [vmem:[%s214 + $0x54] sm:$0xff]
        %v242 = vld [vmem:[%s214 + $0x5c] sm:$0xf]
        %v243 = vld [vmem:[%s214 + $0x60] sm:$0xff]
        %v244 = vld [vmem:[%s214 + $0x68] sm:$0xf]
        %v245 = vld [vmem:[%s214 + $0x6c] sm:$0xff]
        %v246 = vld [vmem:[%s214 + $0x74] sm:$0xf]
        %v247 = vld [vmem:[%s214 + $0x78] sm:$0xff]
        %v248 = vld [vmem:[%s214 + $0x80] sm:$0xf]
        %v249 = vld [vmem:[%s214 + $0x84] sm:$0xff]
        %v250 = vld [vmem:[%s214 + $0x8c] sm:$0xf]
        %v251 = vld [vmem:[%s214 + $0x90] sm:$0xff]
        %v252 = vld [vmem:[%s214 + $0x98] sm:$0xf]
        %v253 = vld [vmem:[%s214 + $0x9c] sm:$0xff]
        %v254 = vld [vmem:[%s214 + $0xa4] sm:$0xf]
        %v255 = vld [vmem:[%s214 + $0xa8] sm:$0xff]
        %v256 = vld [vmem:[%s214 + $0xb0] sm:$0xf]
        %v257 = vld [vmem:[%s214 + $0xb4] sm:$0xff]
        %v258 = vld [vmem:[%s214 + $0xbc] sm:$0xf]
        %v259 = vld [vmem:[%s214 + $0xc0] sm:$0xff]
        %v260 = vld [vmem:[%s214 + $0xc8] sm:$0xf]
        %v261 = vld [vmem:[%s214 + $0xcc] sm:$0xff]
        %v262 = vld [vmem:[%s214 + $0xd4] sm:$0xf]
        %v263 = vld [vmem:[%s214 + $0xd8] sm:$0xff]
        %v264 = vld [vmem:[%s214 + $0xe0] sm:$0xf]
        %v265 = vld [vmem:[%s214 + $0xe4] sm:$0xff]
        %v266 = vld [vmem:[%s214 + $0xec] sm:$0xf]
        %v267 = vld [vmem:[%s214 + $0xf0] sm:$0xff]
        %v268 = vld [vmem:[%s214 + $0xf8] sm:$0xf]
        %v269 = vld [vmem:[%s214 + $0xfc] sm:$0xff]
        %v270 = vld [vmem:[%s214 + $0x104] sm:$0xf]
        %v271 = vld [vmem:[%s214 + $0x108] sm:$0xff]
        %v272 = vld [vmem:[%s214 + $0x110] sm:$0xf]
        %v273 = vld [vmem:[%s214 + $0x114] sm:$0xff]
        %v274 = vld [vmem:[%s214 + $0x11c] sm:$0xf]
        %v275 = vld [vmem:[%s214 + $0x120] sm:$0xff]
        %v276 = vld [vmem:[%s214 + $0x128] sm:$0xf]
        %v277 = vld [vmem:[%s214 + $0x12c] sm:$0xff]
        %v278 = vld [vmem:[%s214 + $0x134] sm:$0xf]
        %v279 = vld [vmem:[%s214 + $0x138] sm:$0xff]
        %v280 = vld [vmem:[%s214 + $0x140] sm:$0xf]
        %v281 = vld [vmem:[%s214 + $0x144] sm:$0xff]
        %v282 = vld [vmem:[%s214 + $0x14c] sm:$0xf]
        %v283 = vld [vmem:[%s214 + $0x150] sm:$0xff]
        %v284 = vld [vmem:[%s214 + $0x158] sm:$0xf]
        %v285 = vld [vmem:[%s214 + $0x15c] sm:$0xff]
        %v286 = vld [vmem:[%s214 + $0x164] sm:$0xf]
        %v287 = vld [vmem:[%s214 + $0x168] sm:$0xff]
        %v288 = vld [vmem:[%s214 + $0x170] sm:$0xf]
        %v289 = vld [vmem:[%s214 + $0x174] sm:$0xff]
        %v290 = vld [vmem:[%s214 + $0x17c] sm:$0xf]
        %v291 = vld [vmem:[%s1] sm:$0xf]
        %v292 = vld [vmem:[%s1 + $0x4] sm:$0xf]
        %v293 = vld [vmem:[%s1 + $0x8] sm:$0xf]
        %v294 = vld [vmem:[%s1 + $0xc] sm:$0xf]
        %v295 = vld [vmem:[%s1 + $0x10] sm:$0xf]
        %v296 = vld [vmem:[%s1 + $0x14] sm:$0xf]
        %v297 = vld [vmem:[%s1 + $0x18] sm:$0xf]
        %v298 = vld [vmem:[%s1 + $0x1c] sm:$0xf]
        %v299 = vld [vmem:[%s1 + $0x20] sm:$0xf]
        %v300 = vld [vmem:[%s1 + $0x24] sm:$0xf]
        %v301 = vld [vmem:[%s1 + $0x28] sm:$0xf]
        %v302 = vld [vmem:[%s1 + $0x2c] sm:$0xf]
        %v303 = vld [vmem:[%s1 + $0x30] sm:$0xf]
        %v304 = vld [vmem:[%s1 + $0x34] sm:$0xf]
        %v305 = vld [vmem:[%s1 + $0x38] sm:$0xf]
        %v306 = vld [vmem:[%s1 + $0x3c] sm:$0xf]
        %v307 = vld [vmem:[%s1 + $0x40] sm:$0xf]
        %v308 = vld [vmem:[%s1 + $0x44] sm:$0xf]
        %v309 = vld [vmem:[%s1 + $0x48] sm:$0xf]
        %v310 = vld [vmem:[%s1 + $0x4c] sm:$0xf]
        %v311 = vld [vmem:[%s1 + $0x50] sm:$0xf]
        %v312 = vld [vmem:[%s1 + $0x54] sm:$0xf]
        %v313 = vld [vmem:[%s1 + $0x58] sm:$0xf]
        %v314 = vld [vmem:[%s1 + $0x5c] sm:$0xf]
        %v315 = vld [vmem:[%s1 + $0x60] sm:$0xf]
        %v316 = vld [vmem:[%s1 + $0x64] sm:$0xf]
        %v317 = vld [vmem:[%s1 + $0x68] sm:$0xf]
        %v318 = vld [vmem:[%s1 + $0x6c] sm:$0xf]
        %v319 = vld [vmem:[%s1 + $0x70] sm:$0xf]
        %v320 = vld [vmem:[%s1 + $0x74] sm:$0xf]
        %v321 = vld [vmem:[%s1 + $0x78] sm:$0xf]
        %v322 = vld [vmem:[%s1 + $0x7c] sm:$0xf]
        %v323 = vld [vmem:[%s1 + $0x80] sm:$0xf]
        %v324 = vld [vmem:[%s1 + $0x84] sm:$0xf]
        %v325 = vld [vmem:[%s1 + $0x88] sm:$0xf]
        %v326 = vld [vmem:[%s1 + $0x8c] sm:$0xf]
        %v327 = vld [vmem:[%s1 + $0x90] sm:$0xf]
        %v328 = vld [vmem:[%s1 + $0x94] sm:$0xf]
        %v329 = vld [vmem:[%s1 + $0x98] sm:$0xf]
        %v330 = vld [vmem:[%s1 + $0x9c] sm:$0xf]
        %v331 = vld [vmem:[%s1 + $0xa0] sm:$0xf]
        %v332 = vld [vmem:[%s1 + $0xa4] sm:$0xf]
        %v333 = vld [vmem:[%s1 + $0xa8] sm:$0xf]
        %v334 = vld [vmem:[%s1 + $0xac] sm:$0xf]
        %v335 = vld [vmem:[%s1 + $0xb0] sm:$0xf]
        %v336 = vld [vmem:[%s1 + $0xb4] sm:$0xf]
        %v337 = vld [vmem:[%s1 + $0xb8] sm:$0xf]
        %v338 = vld [vmem:[%s1 + $0xbc] sm:$0xf]
        %v403 = vunpack.c.l.b16 %v227
        %v404 = vunpack.c.h.b16 %v227
        %v405 = vunpack.c.l.b16 %v228
        %v406 = vunpack.c.l.b16 %v229
        %v407 = vunpack.c.h.b16 %v229
        %v408 = vunpack.c.l.b16 %v230
        %v409 = vunpack.c.l.b16 %v231
        %v410 = vunpack.c.h.b16 %v231
        %v411 = vunpack.c.l.b16 %v232
        %v412 = vunpack.c.l.b16 %v233
        %v413 = vunpack.c.h.b16 %v233
        %v414 = vunpack.c.l.b16 %v234
        %v415 = vunpack.c.l.b16 %v235
        %v416 = vunpack.c.h.b16 %v235
        %v417 = vunpack.c.l.b16 %v236
        %v418 = vunpack.c.l.b16 %v237
        %v419 = vunpack.c.h.b16 %v237
        %v420 = vunpack.c.l.b16 %v238
        %v421 = vunpack.c.l.b16 %v239
        %v422 = vunpack.c.h.b16 %v239
        %v423 = vunpack.c.l.b16 %v240
        %v424 = vunpack.c.l.b16 %v241
        %v425 = vunpack.c.h.b16 %v241
        %v426 = vunpack.c.l.b16 %v242
        %v427 = vunpack.c.l.b16 %v243
        %v428 = vunpack.c.h.b16 %v243
        %v429 = vunpack.c.l.b16 %v244
        %v430 = vunpack.c.l.b16 %v245
        %v431 = vunpack.c.h.b16 %v245
        %v432 = vunpack.c.l.b16 %v246
        %v433 = vunpack.c.l.b16 %v247
        %v434 = vunpack.c.h.b16 %v247
        %v435 = vunpack.c.l.b16 %v248
        %v436 = vunpack.c.l.b16 %v249
        %v437 = vunpack.c.h.b16 %v249
        %v438 = vunpack.c.l.b16 %v250
        %v439 = vunpack.c.l.b16 %v251
        %v440 = vunpack.c.h.b16 %v251
        %v441 = vunpack.c.l.b16 %v252
        %v442 = vunpack.c.l.b16 %v253
        %v443 = vunpack.c.h.b16 %v253
        %v444 = vunpack.c.l.b16 %v254
        %v445 = vunpack.c.l.b16 %v255
        %v446 = vunpack.c.h.b16 %v255
        %v447 = vunpack.c.l.b16 %v256
        %v448 = vunpack.c.l.b16 %v257
        %v449 = vunpack.c.h.b16 %v257
        %v450 = vunpack.c.l.b16 %v258
        %v451 = vunpack.c.l.b16 %v259
        %v452 = vunpack.c.h.b16 %v259
        %v453 = vunpack.c.l.b16 %v260
        %v454 = vunpack.c.l.b16 %v261
        %v455 = vunpack.c.h.b16 %v261
        %v456 = vunpack.c.l.b16 %v262
        %v457 = vunpack.c.l.b16 %v263
        %v458 = vunpack.c.h.b16 %v263
        %v459 = vunpack.c.l.b16 %v264
        %v460 = vunpack.c.l.b16 %v265
        %v461 = vunpack.c.h.b16 %v265
        %v462 = vunpack.c.l.b16 %v266
        %v463 = vunpack.c.l.b16 %v267
        %v464 = vunpack.c.h.b16 %v267
        %v465 = vunpack.c.l.b16 %v268
        %v466 = vunpack.c.l.b16 %v269
        %v467 = vunpack.c.h.b16 %v269
        %v468 = vunpack.c.l.b16 %v270
        %v469 = vunpack.c.l.b16 %v271
        %v470 = vunpack.c.h.b16 %v271
        %v471 = vunpack.c.l.b16 %v272
        %v472 = vunpack.c.l.b16 %v273
        %v473 = vunpack.c.h.b16 %v273
        %v474 = vunpack.c.l.b16 %v274
        %v475 = vunpack.c.l.b16 %v275
        %v476 = vunpack.c.h.b16 %v275
        %v477 = vunpack.c.l.b16 %v276
        %v478 = vunpack.c.l.b16 %v277
        %v479 = vunpack.c.h.b16 %v277
        %v480 = vunpack.c.l.b16 %v278
        %v481 = vunpack.c.l.b16 %v279
        %v482 = vunpack.c.h.b16 %v279
        %v483 = vunpack.c.l.b16 %v280
        %v484 = vunpack.c.l.b16 %v281
        %v485 = vunpack.c.h.b16 %v281
        %v486 = vunpack.c.l.b16 %v282
        %v487 = vunpack.c.l.b16 %v283
        %v488 = vunpack.c.h.b16 %v283
        %v489 = vunpack.c.l.b16 %v284
        %v490 = vunpack.c.l.b16 %v285
        %v491 = vunpack.c.h.b16 %v285
        %v492 = vunpack.c.l.b16 %v286
        %v493 = vunpack.c.l.b16 %v287
        %v494 = vunpack.c.h.b16 %v287
        %v495 = vunpack.c.l.b16 %v288
        %v496 = vunpack.c.l.b16 %v289
        %v497 = vunpack.c.h.b16 %v289
        %v498 = vunpack.c.l.b16 %v290
        %v499 = vpack.c.b16 %v406, %v403
        %v500 = vpack.c.b16 %v407, %v404
        %v501 = vpack.c.b16 %v408, %v405
        %v502 = vpack.c.b16 %v412, %v409
        %v503 = vpack.c.b16 %v413, %v410
        %v504 = vpack.c.b16 %v414, %v411
        %v505 = vpack.c.b16 %v418, %v415
        %v506 = vpack.c.b16 %v419, %v416
        %v507 = vpack.c.b16 %v420, %v417
        %v508 = vpack.c.b16 %v424, %v421
        %v509 = vpack.c.b16 %v425, %v422
        %v510 = vpack.c.b16 %v426, %v423
        %v511 = vpack.c.b16 %v430, %v427
        %v512 = vpack.c.b16 %v431, %v428
        %v513 = vpack.c.b16 %v432, %v429
        %v514 = vpack.c.b16 %v436, %v433
        %v515 = vpack.c.b16 %v437, %v434
        %v516 = vpack.c.b16 %v438, %v435
        %v517 = vpack.c.b16 %v442, %v439
        %v518 = vpack.c.b16 %v443, %v440
        %v519 = vpack.c.b16 %v444, %v441
        %v520 = vpack.c.b16 %v448, %v445
        %v521 = vpack.c.b16 %v449, %v446
        %v522 = vpack.c.b16 %v450, %v447
        %v523 = vpack.c.b16 %v454, %v451
        %v524 = vpack.c.b16 %v455, %v452
        %v525 = vpack.c.b16 %v456, %v453
        %v526 = vpack.c.b16 %v460, %v457
        %v527 = vpack.c.b16 %v461, %v458
        %v528 = vpack.c.b16 %v462, %v459
        %v529 = vpack.c.b16 %v466, %v463
        %v530 = vpack.c.b16 %v467, %v464
        %v531 = vpack.c.b16 %v468, %v465
        %v532 = vpack.c.b16 %v472, %v469
        %v533 = vpack.c.b16 %v473, %v470
        %v534 = vpack.c.b16 %v474, %v471
        %v535 = vpack.c.b16 %v478, %v475
        %v536 = vpack.c.b16 %v479, %v476
        %v537 = vpack.c.b16 %v480, %v477
        %v538 = vpack.c.b16 %v484, %v481
        %v539 = vpack.c.b16 %v485, %v482
        %v540 = vpack.c.b16 %v486, %v483
        %v541 = vpack.c.b16 %v490, %v487
        %v542 = vpack.c.b16 %v491, %v488
        %v543 = vpack.c.b16 %v492, %v489
        %v544 = vpack.c.b16 %v496, %v493
        %v545 = vpack.c.b16 %v497, %v494
        %v546 = vpack.c.b16 %v498, %v495
        %v643 = vunpack.c.l.b16 %v291
        %v644 = vunpack.c.l.b16 %v292
        %v645 = vunpack.c.l.b16 %v293
        %v646 = vunpack.c.l.b16 %v294
        %v647 = vunpack.c.l.b16 %v295
        %v648 = vunpack.c.l.b16 %v296
        %v649 = vunpack.c.l.b16 %v297
        %v650 = vunpack.c.l.b16 %v298
        %v651 = vunpack.c.l.b16 %v299
        %v652 = vunpack.c.l.b16 %v300
        %v653 = vunpack.c.l.b16 %v301
        %v654 = vunpack.c.l.b16 %v302
        %v655 = vunpack.c.l.b16 %v303
        %v656 = vunpack.c.l.b16 %v304
        %v657 = vunpack.c.l.b16 %v305
        %v658 = vunpack.c.l.b16 %v306
        %v659 = vunpack.c.l.b16 %v307
        %v660 = vunpack.c.l.b16 %v308
        %v661 = vunpack.c.l.b16 %v309
        %v662 = vunpack.c.l.b16 %v310
        %v663 = vunpack.c.l.b16 %v311
        %v664 = vunpack.c.l.b16 %v312
        %v665 = vunpack.c.l.b16 %v313
        %v666 = vunpack.c.l.b16 %v314
        %v667 = vunpack.c.l.b16 %v315
        %v668 = vunpack.c.l.b16 %v316
        %v669 = vunpack.c.l.b16 %v317
        %v670 = vunpack.c.l.b16 %v318
        %v671 = vunpack.c.l.b16 %v319
        %v672 = vunpack.c.l.b16 %v320
        %v673 = vunpack.c.l.b16 %v321
        %v674 = vunpack.c.l.b16 %v322
        %v675 = vunpack.c.l.b16 %v323
        %v676 = vunpack.c.l.b16 %v324
        %v677 = vunpack.c.l.b16 %v325
        %v678 = vunpack.c.l.b16 %v326
        %v679 = vunpack.c.l.b16 %v327
        %v680 = vunpack.c.l.b16 %v328
        %v681 = vunpack.c.l.b16 %v329
        %v682 = vunpack.c.l.b16 %v330
        %v683 = vunpack.c.l.b16 %v331
        %v684 = vunpack.c.l.b16 %v332
        %v685 = vunpack.c.l.b16 %v333
        %v686 = vunpack.c.l.b16 %v334
        %v687 = vunpack.c.l.b16 %v335
        %v688 = vunpack.c.l.b16 %v336
        %v689 = vunpack.c.l.b16 %v337
        %v690 = vunpack.c.l.b16 %v338
        %v691 = vpack.c.b16 %v644, %v643
        %v692 = vpack.c.b16 %v646, %v645
        %v693 = vpack.c.b16 %v648, %v647
        %v694 = vpack.c.b16 %v650, %v649
        %v695 = vpack.c.b16 %v652, %v651
        %v696 = vpack.c.b16 %v654, %v653
        %v697 = vpack.c.b16 %v656, %v655
        %v698 = vpack.c.b16 %v658, %v657
        %v699 = vpack.c.b16 %v660, %v659
        %v700 = vpack.c.b16 %v662, %v661
        %v701 = vpack.c.b16 %v664, %v663
        %v702 = vpack.c.b16 %v666, %v665
        %v703 = vpack.c.b16 %v668, %v667
        %v704 = vpack.c.b16 %v670, %v669
        %v705 = vpack.c.b16 %v672, %v671
        %v706 = vpack.c.b16 %v674, %v673
        %v707 = vpack.c.b16 %v676, %v675
        %v708 = vpack.c.b16 %v678, %v677
        %v709 = vpack.c.b16 %v680, %v679
        %v710 = vpack.c.b16 %v682, %v681
        %v711 = vpack.c.b16 %v684, %v683
        %v712 = vpack.c.b16 %v686, %v685
        %v713 = vpack.c.b16 %v688, %v687
        %v714 = vpack.c.b16 %v690, %v689
        %739 = vmatprep.subr.bf16.mxu0 0
        %740 = vmatpush1.bf16.msra.mxu0 %v691
        %741 = vmatprep.subr.bf16.mxu0 0
        %742 = vmatpush1.bf16.msra.mxu0 %v692
        %743 = vmatprep.subr.bf16.mxu0 0
        %744 = vmatpush1.bf16.msra.mxu0 %v693
        %745 = vmatprep.subr.bf16.mxu0 0
        %746 = vmatpush1.bf16.msra.mxu0 %v694
        %747 = vmatprep.subr.bf16.mxu0 0
        %748 = vmatpush1.bf16.msra.mxu0 %v695
        %749 = vmatprep.subr.bf16.mxu0 0
        %750 = vmatpush1.bf16.msra.mxu0 %v696
        %751 = vmatprep.subr.bf16.mxu0 0
        %752 = vmatpush1.bf16.msra.mxu0 %v697
        %753 = vmatprep.subr.bf16.mxu0 0
        %754 = vmatpush1.bf16.msra.mxu0 %v698
        %755 = vmatprep.subr.bf16.mxu0 0
        %756 = vmatpush1.bf16.msra.mxu0 %v699
        %757 = vmatprep.subr.bf16.mxu0 0
        %758 = vmatpush1.bf16.msra.mxu0 %v700
        %759 = vmatprep.subr.bf16.mxu0 0
        %760 = vmatpush1.bf16.msra.mxu0 %v701
        %761 = vmatprep.subr.bf16.mxu0 0
        %762 = vmatpush1.bf16.msra.mxu0 %v702
        %763 = vmatprep.subr.bf16.mxu0 0
        %764 = vmatpush1.bf16.msra.mxu0 %v703
        %765 = vmatprep.subr.bf16.mxu0 0
        %766 = vmatpush1.bf16.msra.mxu0 %v704
        %767 = vmatprep.subr.bf16.mxu0 0
        %768 = vmatpush1.bf16.msra.mxu0 %v705
        %769 = vmatprep.subr.bf16.mxu0 0
        %770 = vmatpush1.bf16.msra.mxu0 %v706
        %771 = vmatprep.mubr.bf16.mxu0 %v500
        %772 = vmatmul.mubr.bf16.gmra.mrb[0].mxu0 %v499
        %v773 = vpop.f32.mrb[0].mxu0
        %v774 = vadd.f32 0.0, %v773
        %v775 = vpop.f32.mrb[0].mxu0
        %v776 = vpop.f32.mrb[0].mxu0
        %v777 = vadd.f32 0.0, %v776
        %v778 = vpop.f32.mrb[0].mxu0
        %779 = vmatprep.mubr.bf16.mxu0 %v503
        %780 = vmatmul.mubr.bf16.gmra.mrb[0].mxu0 %v502
        %v781 = vpop.f32.mrb[0].mxu0
        %v782 = vadd.f32 0.0, %v781
        %v783 = vpop.f32.mrb[0].mxu0
        %v784 = vpop.f32.mrb[0].mxu0
        %v785 = vadd.f32 0.0, %v784
        %v786 = vpop.f32.mrb[0].mxu0
        %787 = vmatprep.mubr.bf16.mxu0 %v506
        %788 = vmatmul.mubr.bf16.gmra.mrb[0].mxu0 %v505
        %v789 = vpop.f32.mrb[0].mxu0
        %v790 = vadd.f32 0.0, %v789
        %v791 = vpop.f32.mrb[0].mxu0
        %v792 = vpop.f32.mrb[0].mxu0
        %v793 = vadd.f32 0.0, %v792
        %v794 = vpop.f32.mrb[0].mxu0
        %795 = vmatprep.mubr.bf16.mxu0 %v509
        %796 = vmatmul.mubr.bf16.gmra.mrb[0].mxu0 %v508
        %v797 = vpop.f32.mrb[0].mxu0
        %v798 = vadd.f32 0.0, %v797
        %v799 = vpop.f32.mrb[0].mxu0
        %v800 = vpop.f32.mrb[0].mxu0
        %v801 = vadd.f32 0.0, %v800
        %v802 = vpop.f32.mrb[0].mxu0
        %803 = vmatprep.mubr.bf16.mxu0 %v512
        %804 = vmatmul.mubr.bf16.gmra.mrb[0].mxu0 %v511
        %v805 = vpop.f32.mrb[0].mxu0
        %v806 = vadd.f32 0.0, %v805
        %v807 = vpop.f32.mrb[0].mxu0
        %v808 = vpop.f32.mrb[0].mxu0
        %v809 = vadd.f32 0.0, %v808
        %v810 = vpop.f32.mrb[0].mxu0
        %811 = vmatprep.mubr.bf16.mxu0 %v515
        %812 = vmatmul.mubr.bf16.gmra.mrb[0].mxu0 %v514
        %v813 = vpop.f32.mrb[0].mxu0
        %v814 = vadd.f32 0.0, %v813
        %v815 = vpop.f32.mrb[0].mxu0
        %v816 = vpop.f32.mrb[0].mxu0
        %v817 = vadd.f32 0.0, %v816
        %v818 = vpop.f32.mrb[0].mxu0
        %819 = vmatprep.mubr.bf16.mxu0 %v518
        %820 = vmatmul.mubr.bf16.gmra.mrb[0].mxu0 %v517
        %v821 = vpop.f32.mrb[0].mxu0
        %v822 = vadd.f32 0.0, %v821
        %v823 = vpop.f32.mrb[0].mxu0
        %v824 = vpop.f32.mrb[0].mxu0
        %v825 = vadd.f32 0.0, %v824
        %v826 = vpop.f32.mrb[0].mxu0
        %827 = vmatprep.mubr.bf16.mxu0 %v521
        %828 = vmatmul.mubr.bf16.gmra.mrb[0].mxu0 %v520
        %v829 = vpop.f32.mrb[0].mxu0
        %v830 = vadd.f32 0.0, %v829
        %v831 = vpop.f32.mrb[0].mxu0
        %v832 = vpop.f32.mrb[0].mxu0
        %v833 = vadd.f32 0.0, %v832
        %v834 = vpop.f32.mrb[0].mxu0
        %835 = vmatprep.mubr.bf16.mxu0 %v524
        %836 = vmatmul.mubr.bf16.gmra.mrb[0].mxu0 %v523
        %v837 = vpop.f32.mrb[0].mxu0
        %v838 = vadd.f32 0.0, %v837
        %v839 = vpop.f32.mrb[0].mxu0
        %v840 = vpop.f32.mrb[0].mxu0
        %v841 = vadd.f32 0.0, %v840
        %v842 = vpop.f32.mrb[0].mxu0
        %843 = vmatprep.mubr.bf16.mxu0 %v527
        %844 = vmatmul.mubr.bf16.gmra.mrb[0].mxu0 %v526
        %v845 = vpop.f32.mrb[0].mxu0
        %v846 = vadd.f32 0.0, %v845
        %v847 = vpop.f32.mrb[0].mxu0
        %v848 = vpop.f32.mrb[0].mxu0
        %v849 = vadd.f32 0.0, %v848
        %v850 = vpop.f32.mrb[0].mxu0
        %851 = vmatprep.mubr.bf16.mxu0 %v530
        %852 = vmatmul.mubr.bf16.gmra.mrb[0].mxu0 %v529
        %v853 = vpop.f32.mrb[0].mxu0
        %v854 = vadd.f32 0.0, %v853
        %v855 = vpop.f32.mrb[0].mxu0
        %v856 = vpop.f32.mrb[0].mxu0
        %v857 = vadd.f32 0.0, %v856
        %v858 = vpop.f32.mrb[0].mxu0
        %859 = vmatprep.mubr.bf16.mxu0 %v533
        %860 = vmatmul.mubr.bf16.gmra.mrb[0].mxu0 %v532
        %v861 = vpop.f32.mrb[0].mxu0
        %v862 = vadd.f32 0.0, %v861
        %v863 = vpop.f32.mrb[0].mxu0
        %v864 = vpop.f32.mrb[0].mxu0
        %v865 = vadd.f32 0.0, %v864
        %v866 = vpop.f32.mrb[0].mxu0
        %867 = vmatprep.mubr.bf16.mxu0 %v536
        %868 = vmatmul.mubr.bf16.gmra.mrb[0].mxu0 %v535
        %v869 = vpop.f32.mrb[0].mxu0
        %v870 = vadd.f32 0.0, %v869
        %v871 = vpop.f32.mrb[0].mxu0
        %v872 = vpop.f32.mrb[0].mxu0
        %v873 = vadd.f32 0.0, %v872
        %v874 = vpop.f32.mrb[0].mxu0
        %875 = vmatprep.mubr.bf16.mxu0 %v539
        %876 = vmatmul.mubr.bf16.gmra.mrb[0].mxu0 %v538
        %v877 = vpop.f32.mrb[0].mxu0
        %v878 = vadd.f32 0.0, %v877
        %v879 = vpop.f32.mrb[0].mxu0
        %v880 = vpop.f32.mrb[0].mxu0
        %v881 = vadd.f32 0.0, %v880
        %v882 = vpop.f32.mrb[0].mxu0
        %883 = vmatprep.mubr.bf16.mxu0 %v542
        %884 = vmatmul.mubr.bf16.gmra.mrb[0].mxu0 %v541
        %v885 = vpop.f32.mrb[0].mxu0
        %v886 = vadd.f32 0.0, %v885
        %v887 = vpop.f32.mrb[0].mxu0
        %v888 = vpop.f32.mrb[0].mxu0
        %v889 = vadd.f32 0.0, %v888
        %v890 = vpop.f32.mrb[0].mxu0
        %891 = vmatprep.mubr.bf16.mxu0 %v545
        %892 = vmatmul.mubr.bf16.gmra.mrb[0].mxu0 %v544
        %v893 = vpop.f32.mrb[0].mxu0
        %v894 = vadd.f32 0.0, %v893
        %v895 = vpop.f32.mrb[0].mxu0
        %v896 = vpop.f32.mrb[0].mxu0
        %v897 = vadd.f32 0.0, %v896
        %v898 = vpop.f32.mrb[0].mxu0
        %899 = vdwg.mxu0
        %900 = vmatprep.subr.bf16.mxu0 0
        %901 = vmatpush1.bf16.msra.mxu0 %v707
        %902 = vmatprep.subr.bf16.mxu0 0
        %903 = vmatpush1.bf16.msra.mxu0 %v708
        %904 = vmatprep.subr.bf16.mxu0 0
        %905 = vmatpush1.bf16.msra.mxu0 %v709
        %906 = vmatprep.subr.bf16.mxu0 0
        %907 = vmatpush1.bf16.msra.mxu0 %v710
        %908 = vmatprep.subr.bf16.mxu0 0
        %909 = vmatpush1.bf16.msra.mxu0 %v711
        %910 = vmatprep.subr.bf16.mxu0 0
        %911 = vmatpush1.bf16.msra.mxu0 %v712
        %912 = vmatprep.subr.bf16.mxu0 0
        %913 = vmatpush1.bf16.msra.mxu0 %v713
        %914 = vmatprep.subr.bf16.mxu0 0
        %915 = vmatpush1.bf16.msra.mxu0 %v714
        %916 = vmatprep.subr.bf16.mxu0 0
        %917 = vmatpush1.bf16.msra.mxu0 0
        %918 = vmatprep.subr.bf16.mxu0 0
        %919 = vmatpush1.bf16.msra.mxu0 0
        %920 = vmatprep.subr.bf16.mxu0 0
        %921 = vmatpush1.bf16.msra.mxu0 0
        %922 = vmatprep.subr.bf16.mxu0 0
        %923 = vmatpush1.bf16.msra.mxu0 0
        %924 = vmatprep.subr.bf16.mxu0 0
        %925 = vmatpush1.bf16.msra.mxu0 0
        %926 = vmatprep.subr.bf16.mxu0 0
        %927 = vmatpush1.bf16.msra.mxu0 0
        %928 = vmatprep.subr.bf16.mxu0 0
        %929 = vmatpush1.bf16.msra.mxu0 0
        %930 = vmatprep.subr.bf16.mxu0 0
        %931 = vmatpush1.bf16.msra.mxu0 0
        %932 = vmatprep.mubr.bf16.mxu0 0
        %933 = vmatmul.mubr.bf16.gmra.mrb[0].mxu0 %v501
        %v934 = vpop.f32.mrb[0].mxu0
        %v935 = vadd.f32 %v774, %v934
        %v936 = vpop.f32.mrb[0].mxu0
        %v937 = vpop.f32.mrb[0].mxu0
        %v938 = vadd.f32 %v777, %v937
        %v939 = vpop.f32.mrb[0].mxu0
        %940 = vmatprep.mubr.bf16.mxu0 0
        %941 = vmatmul.mubr.bf16.gmra.mrb[0].mxu0 %v504
        %v942 = vpop.f32.mrb[0].mxu0
        %v943 = vadd.f32 %v782, %v942
        %v944 = vpop.f32.mrb[0].mxu0
        %v945 = vpop.f32.mrb[0].mxu0
        %v946 = vadd.f32 %v785, %v945
        %v947 = vpop.f32.mrb[0].mxu0
        %948 = vmatprep.mubr.bf16.mxu0 0
        %949 = vmatmul.mubr.bf16.gmra.mrb[0].mxu0 %v507
        %v950 = vpop.f32.mrb[0].mxu0
        %v951 = vadd.f32 %v790, %v950
        %v952 = vpop.f32.mrb[0].mxu0
        %v953 = vpop.f32.mrb[0].mxu0
        %v954 = vadd.f32 %v793, %v953
        %v955 = vpop.f32.mrb[0].mxu0
        %956 = vmatprep.mubr.bf16.mxu0 0
        %957 = vmatmul.mubr.bf16.gmra.mrb[0].mxu0 %v510
        %v958 = vpop.f32.mrb[0].mxu0
        %v959 = vadd.f32 %v798, %v958
        %v960 = vpop.f32.mrb[0].mxu0
        %v961 = vpop.f32.mrb[0].mxu0
        %v962 = vadd.f32 %v801, %v961
        %v963 = vpop.f32.mrb[0].mxu0
        %964 = vmatprep.mubr.bf16.mxu0 0
        %965 = vmatmul.mubr.bf16.gmra.mrb[0].mxu0 %v513
        %v966 = vpop.f32.mrb[0].mxu0
        %v967 = vadd.f32 %v806, %v966
        %v968 = vpop.f32.mrb[0].mxu0
        %v969 = vpop.f32.mrb[0].mxu0
        %v970 = vadd.f32 %v809, %v969
        %v971 = vpop.f32.mrb[0].mxu0
        %972 = vmatprep.mubr.bf16.mxu0 0
        %973 = vmatmul.mubr.bf16.gmra.mrb[0].mxu0 %v516
        %v974 = vpop.f32.mrb[0].mxu0
        %v975 = vadd.f32 %v814, %v974
        %v976 = vpop.f32.mrb[0].mxu0
        %v977 = vpop.f32.mrb[0].mxu0
        %v978 = vadd.f32 %v817, %v977
        %v979 = vpop.f32.mrb[0].mxu0
        %980 = vmatprep.mubr.bf16.mxu0 0
        %981 = vmatmul.mubr.bf16.gmra.mrb[0].mxu0 %v519
        %v982 = vpop.f32.mrb[0].mxu0
        %v983 = vadd.f32 %v822, %v982
        %v984 = vpop.f32.mrb[0].mxu0
        %v985 = vpop.f32.mrb[0].mxu0
        %v986 = vadd.f32 %v825, %v985
        %v987 = vpop.f32.mrb[0].mxu0
        %988 = vmatprep.mubr.bf16.mxu0 0
        %989 = vmatmul.mubr.bf16.gmra.mrb[0].mxu0 %v522
        %v990 = vpop.f32.mrb[0].mxu0
        %v991 = vadd.f32 %v830, %v990
        %v992 = vpop.f32.mrb[0].mxu0
        %v993 = vpop.f32.mrb[0].mxu0
        %v994 = vadd.f32 %v833, %v993
        %v995 = vpop.f32.mrb[0].mxu0
        %996 = vmatprep.mubr.bf16.mxu0 0
        %997 = vmatmul.mubr.bf16.gmra.mrb[0].mxu0 %v525
        %v998 = vpop.f32.mrb[0].mxu0
        %v999 = vadd.f32 %v838, %v998
        %v1000 = vpop.f32.mrb[0].mxu0
        %v1001 = vpop.f32.mrb[0].mxu0
        %v1002 = vadd.f32 %v841, %v1001
        %v1003 = vpop.f32.mrb[0].mxu0
        %1004 = vmatprep.mubr.bf16.mxu0 0
        %1005 = vmatmul.mubr.bf16.gmra.mrb[0].mxu0 %v528
        %v1006 = vpop.f32.mrb[0].mxu0
        %v1007 = vadd.f32 %v846, %v1006
        %v1008 = vpop.f32.mrb[0].mxu0
        %v1009 = vpop.f32.mrb[0].mxu0
        %v1010 = vadd.f32 %v849, %v1009
        %v1011 = vpop.f32.mrb[0].mxu0
        %1012 = vmatprep.mubr.bf16.mxu0 0
        %1013 = vmatmul.mubr.bf16.gmra.mrb[0].mxu0 %v531
        %v1014 = vpop.f32.mrb[0].mxu0
        %v1015 = vadd.f32 %v854, %v1014
        %v1016 = vpop.f32.mrb[0].mxu0
        %v1017 = vpop.f32.mrb[0].mxu0
        %v1018 = vadd.f32 %v857, %v1017
        %v1019 = vpop.f32.mrb[0].mxu0
        %1020 = vmatprep.mubr.bf16.mxu0 0
        %1021 = vmatmul.mubr.bf16.gmra.mrb[0].mxu0 %v534
        %v1022 = vpop.f32.mrb[0].mxu0
        %v1023 = vadd.f32 %v862, %v1022
        %v1024 = vpop.f32.mrb[0].mxu0
        %v1025 = vpop.f32.mrb[0].mxu0
        %v1026 = vadd.f32 %v865, %v1025
        %v1027 = vpop.f32.mrb[0].mxu0
        %1028 = vmatprep.mubr.bf16.mxu0 0
        %1029 = vmatmul.mubr.bf16.gmra.mrb[0].mxu0 %v537
        %v1030 = vpop.f32.mrb[0].mxu0
        %v1031 = vadd.f32 %v870, %v1030
        %v1032 = vpop.f32.mrb[0].mxu0
        %v1033 = vpop.f32.mrb[0].mxu0
        %v1034 = vadd.f32 %v873, %v1033
        %v1035 = vpop.f32.mrb[0].mxu0
        %1036 = vmatprep.mubr.bf16.mxu0 0
        %1037 = vmatmul.mubr.bf16.gmra.mrb[0].mxu0 %v540
        %v1038 = vpop.f32.mrb[0].mxu0
        %v1039 = vadd.f32 %v878, %v1038
        %v1040 = vpop.f32.mrb[0].mxu0
        %v1041 = vpop.f32.mrb[0].mxu0
        %v1042 = vadd.f32 %v881, %v1041
        %v1043 = vpop.f32.mrb[0].mxu0
        %1044 = vmatprep.mubr.bf16.mxu0 0
        %1045 = vmatmul.mubr.bf16.gmra.mrb[0].mxu0 %v543
        %v1046 = vpop.f32.mrb[0].mxu0
        %v1047 = vadd.f32 %v886, %v1046
        %v1048 = vpop.f32.mrb[0].mxu0
        %v1049 = vpop.f32.mrb[0].mxu0
        %v1050 = vadd.f32 %v889, %v1049
        %v1051 = vpop.f32.mrb[0].mxu0
        %1052 = vmatprep.mubr.bf16.mxu0 0
        %1053 = vmatmul.mubr.bf16.gmra.mrb[0].mxu0 %v546
        %v1054 = vpop.f32.mrb[0].mxu0
        %v1055 = vadd.f32 %v894, %v1054
        %v1056 = vpop.f32.mrb[0].mxu0
        %v1057 = vpop.f32.mrb[0].mxu0
        %v1058 = vadd.f32 %v897, %v1057
        %v1059 = vpop.f32.mrb[0].mxu0
        %1060 = vdwg.mxu0
        %v1061 = vpack.c.bf16 %v938, %v935
        %v1062 = vpack.c.bf16 %v946, %v943
        %v1063 = vpack.c.bf16 %v954, %v951
        %v1064 = vpack.c.bf16 %v962, %v959
        %v1065 = vpack.c.bf16 %v970, %v967
        %v1066 = vpack.c.bf16 %v978, %v975
        %v1067 = vpack.c.bf16 %v986, %v983
        %v1068 = vpack.c.bf16 %v994, %v991
        %v1069 = vpack.c.bf16 %v1002, %v999
        %v1070 = vpack.c.bf16 %v1010, %v1007
        %v1071 = vpack.c.bf16 %v1018, %v1015
        %v1072 = vpack.c.bf16 %v1026, %v1023
        %v1073 = vpack.c.bf16 %v1034, %v1031
        %v1074 = vpack.c.bf16 %v1042, %v1039
        %v1075 = vpack.c.bf16 %v1050, %v1047
        %v1076 = vpack.c.bf16 %v1058, %v1055
        %v1093 = vunpack.c.l.b16 %v1061
        %v1094 = vunpack.c.h.b16 %v1061
        %v1095 = vunpack.c.l.b16 %v1062
        %v1096 = vunpack.c.h.b16 %v1062
        %v1097 = vunpack.c.l.b16 %v1063
        %v1098 = vunpack.c.h.b16 %v1063
        %v1099 = vunpack.c.l.b16 %v1064
        %v1100 = vunpack.c.h.b16 %v1064
        %v1101 = vunpack.c.l.b16 %v1065
        %v1102 = vunpack.c.h.b16 %v1065
        %v1103 = vunpack.c.l.b16 %v1066
        %v1104 = vunpack.c.h.b16 %v1066
        %v1105 = vunpack.c.l.b16 %v1067
        %v1106 = vunpack.c.h.b16 %v1067
        %v1107 = vunpack.c.l.b16 %v1068
        %v1108 = vunpack.c.h.b16 %v1068
        %v1109 = vunpack.c.l.b16 %v1069
        %v1110 = vunpack.c.h.b16 %v1069
        %v1111 = vunpack.c.l.b16 %v1070
        %v1112 = vunpack.c.h.b16 %v1070
        %v1113 = vunpack.c.l.b16 %v1071
        %v1114 = vunpack.c.h.b16 %v1071
        %v1115 = vunpack.c.l.b16 %v1072
        %v1116 = vunpack.c.h.b16 %v1072
        %v1117 = vunpack.c.l.b16 %v1073
        %v1118 = vunpack.c.h.b16 %v1073
        %v1119 = vunpack.c.l.b16 %v1074
        %v1120 = vunpack.c.h.b16 %v1074
        %v1121 = vunpack.c.l.b16 %v1075
        %v1122 = vunpack.c.h.b16 %v1075
        %v1123 = vunpack.c.l.b16 %v1076
        %v1124 = vunpack.c.h.b16 %v1076
        %v1125 = vpack.c.b16 %v1093, %v1093
        %v1126 = vpack.c.b16 %v1094, %v1094
        %v1127 = vpack.c.b16 %v1095, %v1095
        %v1128 = vpack.c.b16 %v1096, %v1096
        %v1129 = vpack.c.b16 %v1097, %v1097
        %v1130 = vpack.c.b16 %v1098, %v1098
        %v1131 = vpack.c.b16 %v1099, %v1099
        %v1132 = vpack.c.b16 %v1100, %v1100
        %v1133 = vpack.c.b16 %v1101, %v1101
        %v1134 = vpack.c.b16 %v1102, %v1102
        %v1135 = vpack.c.b16 %v1103, %v1103
        %v1136 = vpack.c.b16 %v1104, %v1104
        %v1137 = vpack.c.b16 %v1105, %v1105
        %v1138 = vpack.c.b16 %v1106, %v1106
        %v1139 = vpack.c.b16 %v1107, %v1107
        %v1140 = vpack.c.b16 %v1108, %v1108
        %v1141 = vpack.c.b16 %v1109, %v1109
        %v1142 = vpack.c.b16 %v1110, %v1110
        %v1143 = vpack.c.b16 %v1111, %v1111
        %v1144 = vpack.c.b16 %v1112, %v1112
        %v1145 = vpack.c.b16 %v1113, %v1113
        %v1146 = vpack.c.b16 %v1114, %v1114
        %v1147 = vpack.c.b16 %v1115, %v1115
        %v1148 = vpack.c.b16 %v1116, %v1116
        %v1149 = vpack.c.b16 %v1117, %v1117
        %v1150 = vpack.c.b16 %v1118, %v1118
        %v1151 = vpack.c.b16 %v1119, %v1119
        %v1152 = vpack.c.b16 %v1120, %v1120
        %v1153 = vpack.c.b16 %v1121, %v1121
        %v1154 = vpack.c.b16 %v1122, %v1122
        %v1155 = vpack.c.b16 %v1123, %v1123
        %v1156 = vpack.c.b16 %v1124, %v1124
        %vm1189 = vcmask 19456
        %1190 = vst.msk [vmem:[%s224] sm:$0xf] %vm1189, %v1125
        %1191 = vst.msk [vmem:[%s224 + $0x4] sm:$0xf] %vm1189, %v1126
        %1192 = vst.msk [vmem:[%s224 + $0x8] sm:$0xf] %vm1189, %v1127
        %1193 = vst.msk [vmem:[%s224 + $0xc] sm:$0xf] %vm1189, %v1128
        %1194 = vst.msk [vmem:[%s224 + $0x10] sm:$0xf] %vm1189, %v1129
        %1195 = vst.msk [vmem:[%s224 + $0x14] sm:$0xf] %vm1189, %v1130
        %1196 = vst.msk [vmem:[%s224 + $0x18] sm:$0xf] %vm1189, %v1131
        %1197 = vst.msk [vmem:[%s224 + $0x1c] sm:$0xf] %vm1189, %v1132
        %1198 = vst.msk [vmem:[%s224 + $0x20] sm:$0xf] %vm1189, %v1133
        %1199 = vst.msk [vmem:[%s224 + $0x24] sm:$0xf] %vm1189, %v1134
        %1200 = vst.msk [vmem:[%s224 + $0x28] sm:$0xf] %vm1189, %v1135
        %1201 = vst.msk [vmem:[%s224 + $0x2c] sm:$0xf] %vm1189, %v1136
        %1202 = vst.msk [vmem:[%s224 + $0x30] sm:$0xf] %vm1189, %v1137
        %1203 = vst.msk [vmem:[%s224 + $0x34] sm:$0xf] %vm1189, %v1138
        %1204 = vst.msk [vmem:[%s224 + $0x38] sm:$0xf] %vm1189, %v1139
        %1205 = vst.msk [vmem:[%s224 + $0x3c] sm:$0xf] %vm1189, %v1140
        %1206 = vst.msk [vmem:[%s224 + $0x40] sm:$0xf] %vm1189, %v1141
        %1207 = vst.msk [vmem:[%s224 + $0x44] sm:$0xf] %vm1189, %v1142
        %1208 = vst.msk [vmem:[%s224 + $0x48] sm:$0xf] %vm1189, %v1143
        %1209 = vst.msk [vmem:[%s224 + $0x4c] sm:$0xf] %vm1189, %v1144
        %1210 = vst.msk [vmem:[%s224 + $0x50] sm:$0xf] %vm1189, %v1145
        %1211 = vst.msk [vmem:[%s224 + $0x54] sm:$0xf] %vm1189, %v1146
        %1212 = vst.msk [vmem:[%s224 + $0x58] sm:$0xf] %vm1189, %v1147
        %1213 = vst.msk [vmem:[%s224 + $0x5c] sm:$0xf] %vm1189, %v1148
        %1214 = vst.msk [vmem:[%s224 + $0x60] sm:$0xf] %vm1189, %v1149
        %1215 = vst.msk [vmem:[%s224 + $0x64] sm:$0xf] %vm1189, %v1150
        %1216 = vst.msk [vmem:[%s224 + $0x68] sm:$0xf] %vm1189, %v1151
        %1217 = vst.msk [vmem:[%s224 + $0x6c] sm:$0xf] %vm1189, %v1152
        %1218 = vst.msk [vmem:[%s224 + $0x70] sm:$0xf] %vm1189, %v1153
        %1219 = vst.msk [vmem:[%s224 + $0x74] sm:$0xf] %vm1189, %v1154
        %1220 = vst.msk [vmem:[%s224 + $0x78] sm:$0xf] %vm1189, %v1155
        %1221 = vst.msk [vmem:[%s224 + $0x7c] sm:$0xf] %vm1189, %v1156
        %vm1222 = vcmask 23552
        %v1223 = vsel %vm1222, %v935, 0.0
        %v1224 = vsel %vm1222, %v938, 0.0
        %v1225 = vadd.f32 %v1223, %v1224
        %v1226 = vsel %vm1222, %v943, 0.0
        %v1227 = vadd.f32 %v1225, %v1226
        %v1228 = vsel %vm1222, %v946, 0.0
        %v1229 = vadd.f32 %v1227, %v1228
        %v1230 = vsel %vm1222, %v951, 0.0
        %v1231 = vadd.f32 %v1229, %v1230
        %v1232 = vsel %vm1222, %v954, 0.0
        %v1233 = vadd.f32 %v1231, %v1232
        %v1234 = vsel %vm1222, %v959, 0.0
        %v1235 = vadd.f32 %v1233, %v1234
        %v1236 = vsel %vm1222, %v962, 0.0
        %v1237 = vadd.f32 %v1235, %v1236
        %v1238 = vsel %vm1222, %v967, 0.0
        %v1239 = vadd.f32 %v1237, %v1238
        %v1240 = vsel %vm1222, %v970, 0.0
        %v1241 = vadd.f32 %v1239, %v1240
        %v1242 = vsel %vm1222, %v975, 0.0
        %v1243 = vadd.f32 %v1241, %v1242
        %v1244 = vsel %vm1222, %v978, 0.0
        %v1245 = vadd.f32 %v1243, %v1244
        %v1246 = vsel %vm1222, %v983, 0.0
        %v1247 = vadd.f32 %v1245, %v1246
        %v1248 = vsel %vm1222, %v986, 0.0
        %v1249 = vadd.f32 %v1247, %v1248
        %v1250 = vsel %vm1222, %v991, 0.0
        %v1251 = vadd.f32 %v1249, %v1250
        %v1252 = vsel %vm1222, %v994, 0.0
        %v1253 = vadd.f32 %v1251, %v1252
        %v1254 = vsel %vm1222, %v999, 0.0
        %v1255 = vadd.f32 %v1253, %v1254
        %v1256 = vsel %vm1222, %v1002, 0.0
        %v1257 = vadd.f32 %v1255, %v1256
        %v1258 = vsel %vm1222, %v1007, 0.0
        %v1259 = vadd.f32 %v1257, %v1258
        %v1260 = vsel %vm1222, %v1010, 0.0
        %v1261 = vadd.f32 %v1259, %v1260
        %v1262 = vsel %vm1222, %v1015, 0.0
        %v1263 = vadd.f32 %v1261, %v1262
        %v1264 = vsel %vm1222, %v1018, 0.0
        %v1265 = vadd.f32 %v1263, %v1264
        %v1266 = vsel %vm1222, %v1023, 0.0
        %v1267 = vadd.f32 %v1265, %v1266
        %v1268 = vsel %vm1222, %v1026, 0.0
        %v1269 = vadd.f32 %v1267, %v1268
        %v1270 = vsel %vm1222, %v1031, 0.0
        %v1271 = vadd.f32 %v1269, %v1270
        %v1272 = vsel %vm1222, %v1034, 0.0
        %v1273 = vadd.f32 %v1271, %v1272
        %v1274 = vsel %vm1222, %v1039, 0.0
        %v1275 = vadd.f32 %v1273, %v1274
        %v1276 = vsel %vm1222, %v1042, 0.0
        %v1277 = vadd.f32 %v1275, %v1276
        %v1278 = vsel %vm1222, %v1047, 0.0
        %v1279 = vadd.f32 %v1277, %v1278
        %v1280 = vsel %vm1222, %v1050, 0.0
        %v1281 = vadd.f32 %v1279, %v1280
        %v1282 = vsel %vm1222, %v1055, 0.0
        %v1283 = vadd.f32 %v1281, %v1282
        %v1284 = vsel %vm1222, %v1058, 0.0
        %v1285 = vadd.f32 %v1283, %v1284
        %v1286 = vrot.slane %v1285, 4
        %v1287 = vadd.f32 %v1285, %v1286
        %v1288 = vrot.slane %v1287, 2
        %v1289 = vadd.f32 %v1287, %v1288
        %v1290 = vrot.slane %v1289, 1
        %v1291 = vadd.f32 %v1289, %v1290
        %vm1292 = vcmask 16384
        %1293 = vst.msk [vmem:[%s204] sm:$0x1] %vm1292, %v1291
        %v1294 = vmul.f32 %v935, %v935
        %v1295 = vmul.f32 %v938, %v938
        %v1296 = vmul.f32 %v943, %v943
        %v1297 = vmul.f32 %v946, %v946
        %v1298 = vmul.f32 %v951, %v951
        %v1299 = vmul.f32 %v954, %v954
        %v1300 = vmul.f32 %v959, %v959
        %v1301 = vmul.f32 %v962, %v962
        %v1302 = vmul.f32 %v967, %v967
        %v1303 = vmul.f32 %v970, %v970
        %v1304 = vmul.f32 %v975, %v975
        %v1305 = vmul.f32 %v978, %v978
        %v1306 = vmul.f32 %v983, %v983
        %v1307 = vmul.f32 %v986, %v986
        %v1308 = vmul.f32 %v991, %v991
        %v1309 = vmul.f32 %v994, %v994
        %v1310 = vmul.f32 %v999, %v999
        %v1311 = vmul.f32 %v1002, %v1002
        %v1312 = vmul.f32 %v1007, %v1007
        %v1313 = vmul.f32 %v1010, %v1010
        %v1314 = vmul.f32 %v1015, %v1015
        %v1315 = vmul.f32 %v1018, %v1018
        %v1316 = vmul.f32 %v1023, %v1023
        %v1317 = vmul.f32 %v1026, %v1026
        %v1318 = vmul.f32 %v1031, %v1031
        %v1319 = vmul.f32 %v1034, %v1034
        %v1320 = vmul.f32 %v1039, %v1039
        %v1321 = vmul.f32 %v1042, %v1042
        %v1322 = vmul.f32 %v1047, %v1047
        %v1323 = vmul.f32 %v1050, %v1050
        %v1324 = vmul.f32 %v1055, %v1055
        %v1325 = vmul.f32 %v1058, %v1058
        %v1326 = vsel %vm1222, %v1294, 0.0
        %v1327 = vsel %vm1222, %v1295, 0.0
        %v1328 = vadd.f32 %v1326, %v1327
        %v1329 = vsel %vm1222, %v1296, 0.0
        %v1330 = vadd.f32 %v1328, %v1329
        %v1331 = vsel %vm1222, %v1297, 0.0
        %v1332 = vadd.f32 %v1330, %v1331
        %v1333 = vsel %vm1222, %v1298, 0.0
        %v1334 = vadd.f32 %v1332, %v1333
        %v1335 = vsel %vm1222, %v1299, 0.0
        %v1336 = vadd.f32 %v1334, %v1335
        %v1337 = vsel %vm1222, %v1300, 0.0
        %v1338 = vadd.f32 %v1336, %v1337
        %v1339 = vsel %vm1222, %v1301, 0.0
        %v1340 = vadd.f32 %v1338, %v1339
        %v1341 = vsel %vm1222, %v1302, 0.0
        %v1342 = vadd.f32 %v1340, %v1341
        %v1343 = vsel %vm1222, %v1303, 0.0
        %v1344 = vadd.f32 %v1342, %v1343
        %v1345 = vsel %vm1222, %v1304, 0.0
        %v1346 = vadd.f32 %v1344, %v1345
        %v1347 = vsel %vm1222, %v1305, 0.0
        %v1348 = vadd.f32 %v1346, %v1347
        %v1349 = vsel %vm1222, %v1306, 0.0
        %v1350 = vadd.f32 %v1348, %v1349
        %v1351 = vsel %vm1222, %v1307, 0.0
        %v1352 = vadd.f32 %v1350, %v1351
        %v1353 = vsel %vm1222, %v1308, 0.0
        %v1354 = vadd.f32 %v1352, %v1353
        %v1355 = vsel %vm1222, %v1309, 0.0
        %v1356 = vadd.f32 %v1354, %v1355
        %v1357 = vsel %vm1222, %v1310, 0.0
        %v1358 = vadd.f32 %v1356, %v1357
        %v1359 = vsel %vm1222, %v1311, 0.0
        %v1360 = vadd.f32 %v1358, %v1359
        %v1361 = vsel %vm1222, %v1312, 0.0
        %v1362 = vadd.f32 %v1360, %v1361
        %v1363 = vsel %vm1222, %v1313, 0.0
        %v1364 = vadd.f32 %v1362, %v1363
        %v1365 = vsel %vm1222, %v1314, 0.0
        %v1366 = vadd.f32 %v1364, %v1365
        %v1367 = vsel %vm1222, %v1315, 0.0
        %v1368 = vadd.f32 %v1366, %v1367
        %v1369 = vsel %vm1222, %v1316, 0.0
        %v1370 = vadd.f32 %v1368, %v1369
        %v1371 = vsel %vm1222, %v1317, 0.0
        %v1372 = vadd.f32 %v1370, %v1371
        %v1373 = vsel %vm1222, %v1318, 0.0
        %v1374 = vadd.f32 %v1372, %v1373
        %v1375 = vsel %vm1222, %v1319, 0.0
        %v1376 = vadd.f32 %v1374, %v1375
        %v1377 = vsel %vm1222, %v1320, 0.0
        %v1378 = vadd.f32 %v1376, %v1377
        %v1379 = vsel %vm1222, %v1321, 0.0
        %v1380 = vadd.f32 %v1378, %v1379
        %v1381 = vsel %vm1222, %v1322, 0.0
        %v1382 = vadd.f32 %v1380, %v1381
        %v1383 = vsel %vm1222, %v1323, 0.0
        %v1384 = vadd.f32 %v1382, %v1383
        %v1385 = vsel %vm1222, %v1324, 0.0
        %v1386 = vadd.f32 %v1384, %v1385
        %v1387 = vsel %vm1222, %v1325, 0.0
        %v1388 = vadd.f32 %v1386, %v1387
        %v1389 = vrot.slane %v1388, 4
        %v1390 = vadd.f32 %v1388, %v1389
        %v1391 = vrot.slane %v1390, 2
        %v1392 = vadd.f32 %v1390, %v1391
        %v1393 = vrot.slane %v1392, 1
        %v1394 = vadd.f32 %v1392, %v1393
        %1395 = vst.msk [vmem:[%s204 + $0x1] sm:$0x1] %vm1292, %v1394
        %s1396 = smul.u32 32, %s23
        %p1397 = scmp.lt.s32.totalorder %s22, 1
        %s1398 = scalar_select %p1397, %s22, 1
        %p1399 = scmp.lt.s32.totalorder %s1396, 31
        %s1400 = scalar_select %p1399, %s1396, 31
        %s1401 = smul.addr %s1398, 32
        %s1402 = sadd.s32 %s1400, %s1401
        %s1403 = smul.addr %s1402, 4
        %s1404 = scalar_lea.vmem %s2, %s1403
        %s1405 = sand.u32 %s117, 1
        %s1406 = scalar_lea.sflag [#allocation3], %s1405
        %s1407 = sand.u32 %s117, 1
        %s1408 = smul.addr %s1407, 2
        %s1409 = scalar_lea.vmem [#allocation2], %s1408
        // Predicated region
        $region29: #{refine_subnet_forward.46} parent=27 // pred_check
          %p1410 = pneg %p99
        $region30: #{refine_subnet_forward.46} parent=27 // pred_check_branch
          %1412 = sbr.rel (%p1410) target = $region32
        $region31: #{refine_subnet_forward.46} parent=27 // pred_region
          %s1413 = smul.u32 32, %s23
        $region32: #{refine_subnet_forward.46} parent=27 // pred_fallthru
          _
        // Predicated region
        $region33: #{refine_subnet_forward.46} parent=27 // pred_check
          %p1414 = pneg %p127
        $region34: #{refine_subnet_forward.46} parent=27 // pred_check_branch
          %1416 = sbr.rel (%p1414) target = $region36
        $region35: #{refine_subnet_forward.46} parent=27 // pred_region
          %s1418 = ssub.s32 32, 32
          %1419 = vsyncadd %s1406, %s1418
          %s1420 = sadd.s32 %s23, %s22
          %s1421 = smul.addr %s1420, 32
          %s1422 = scalar_lea.hbm %s3, %s1421
          %s1424 = sshll.u32 %s1409, 4
          %s1425 = int_to_ptr.vmem [resolvable:$true] %s1424
          %1427 = dma.vmem_to_hbm [thread:$0]  %s1425, 32, %s1422, %s1406
        $region36: #{refine_subnet_forward.46} parent=27 // pred_fallthru
          _
      $region28: #{refine_subnet_forward.46} parent=5 // pred_fallthru
        _
      %p1428 = scmp.le.s32.totalorder 2, %s13
      // Predicated region
      $region37: #{refine_subnet_forward.46} parent=5 // pred_check
        %p1429 = pneg %p1428
      $region38: #{refine_subnet_forward.46} parent=5 // pred_check_branch
        %1431 = sbr.rel (%p1429) target = $region40
      $region39: #{refine_subnet_forward.46} parent=5 // pred_region
        %s1432 = ssub.s32 %s13, 2
        // Predicated region
        $region41: #{refine_subnet_forward.46} parent=39 // pred_check
          %p1433 = pneg %p105
        $region42: #{refine_subnet_forward.46} parent=39 // pred_check_branch
          %1435 = sbr.rel (%p1433) target = $region44
        $region43: #{refine_subnet_forward.46} parent=39 // pred_region
          %s1436 = smul.u32 32, %s25
          %p1437 = scmp.lt.s32.totalorder %s24, 1
          %s1438 = scalar_select %p1437, %s24, 1
          %p1439 = scmp.lt.s32.totalorder %s1436, 31
          %s1440 = scalar_select %p1439, %s1436, 31
          %s1441 = smul.addr %s1438, 32
          %s1442 = sadd.s32 %s1440, %s1441
          %s1443 = smul.addr %s1442, 4
          %s1444 = scalar_lea.vmem %s2, %s1443
        $region44: #{refine_subnet_forward.46} parent=39 // pred_fallthru
          _
        // Predicated region
        $region45: #{refine_subnet_forward.46} parent=39 // pred_check
          %p1445 = pneg %p133
        $region46: #{refine_subnet_forward.46} parent=39 // pred_check_branch
          %1447 = sbr.rel (%p1445) target = $region48
        $region47: #{refine_subnet_forward.46} parent=39 // pred_region
          %s1448 = sand.u32 %s118, 1
          %s1449 = scalar_lea.sflag [#allocation3], %s1448
          %s1450 = sand.u32 %s118, 1
          %s1451 = smul.addr %s1450, 2
          %s1452 = scalar_lea.vmem [#allocation2], %s1451
          %1453 = dma.done %s1449, 32
        $region48: #{refine_subnet_forward.46} parent=39 // pred_fallthru
          _
      $region40: #{refine_subnet_forward.46} parent=5 // pred_fallthru
        _
    $region6: #{refine_subnet_forward.46} parent=1 // loop_footer
      %s17 = sadd.s32 1, %s13
    $region7: #{refine_subnet_forward.46} parent=1 // loop_footer_branch
      %12 = sbr.rel target = $region3
    $region8: #{refine_subnet_forward.46} parent=1 // loop_exit
      _
    %1454 = vsyncpa [#allocation3], 1
    %s1455 = scalar_lea.sflag [#allocation3], 1
    %1456 = vsyncpa %s1455, 1

</llo_original>
